<compile_context>
chip_gen: v6e
topology: v6e:2x2x1
jax: 0.10.0
libtpu: 0.0.40
codegen_flags: <defaults>
</compile_context>

<pallas_src>
import functools

import jax
import jax.numpy as jnp
from jax.experimental import pallas as pl
from jax.experimental.pallas import tpu as pltpu

HIDDEN = 48    # trajectory encoding / latent size (logical)
EMBED = 16     # per-timestep embedding size
HP = 128       # lane-padded hidden slab width


def _mm(a, b):
    return jnp.dot(a, b, preferred_element_type=jnp.float32)


# --------------------------------------------------------------------------
# Single fused kernel: encoder-x + encoder-y + latent head + decoder rollout.
# --------------------------------------------------------------------------
def _desire_sgm_kernel(
        # data inputs
        srcx_ref, slen_ref, tgtx_ref, tlen_ref, eps_ref, pos0_ref,
        # past-encoder weights
        xw_emb_ref, xb_emb_ref, xw_i_ref, xb_i_ref, xw_h_ref, xb_h_ref,
        # future-encoder weights
        yw_emb_ref, yb_emb_ref, yw_i_ref, yb_i_ref, yw_h_ref, yb_h_ref,
        # latent head weights
        w_lx_ref, w_ly_ref, b_l_ref,
        # decoder weights
        w_hxe_ref, w_ze_ref, b_e_ref, dw_i_ref, db_i_ref, dw_h_ref, db_h_ref,
        w_out_ref, b_out_ref,
        # outputs
        hx_ref, mu_ref, sigma_ref, z_ref, yrel_ref, yabs_ref,
        # scratch
        hdec_scr,
        *, Te, Ty, Td, Na, Nc):
    Hp = HP
    B = Na * Nc

    def gru_encode(x_ref, lens_ref, w_emb_ref, b_emb_ref,
                   w_i_ref, b_i_ref, w_h_ref, b_h_ref, T):
        x = x_ref[...]                                         # [T*Na, 2]
        # K=2 embedding done on the VPU: two broadcast FMAs + ReLU.
        e = jnp.maximum(x[:, 0:1] * w_emb_ref[0:1, :]
                        + x[:, 1:2] * w_emb_ref[1:2, :]
                        + b_emb_ref[...], 0.0)                 # [T*Na, E]
        # Input-gate projection for ALL timesteps at once (hoisted).
        gi_all = _mm(e, w_i_ref[...]) + b_i_ref[...]           # [T*Na, 3*Hp]
        w_h = w_h_ref[...]
        b_h = b_h_ref[...]
        lens = lens_ref[...]                                   # [Na, 1] int32
        h = jnp.zeros((Na, Hp), jnp.float32)
        for t in range(T):                                     # unrolled recurrence
            gi = gi_all[t * Na:(t + 1) * Na, :]                # sublane-aligned slice
            gh = _mm(h, w_h) + b_h                             # one MXU op / step
            r = jax.nn.sigmoid(gi[:, 0:Hp] + gh[:, 0:Hp])
            u = jax.nn.sigmoid(gi[:, Hp:2 * Hp] + gh[:, Hp:2 * Hp])
            n = jnp.tanh(gi[:, 2 * Hp:3 * Hp] + r * gh[:, 2 * Hp:3 * Hp])
            h_new = (1.0 - u) * n + u * h
            # pack_padded_sequence semantics: final hidden = hidden at len-1.
            # (lens == 0, e.g. padded agents, leaves h = 0.)
            h = jnp.where(lens > t, h_new, h)
        return h

    # Two independent GRU chains in one basic block -> scheduler overlaps the
    # serial MXU latency chains of the two encoders.
    hx = gru_encode(srcx_ref, slen_ref, xw_emb_ref, xb_emb_ref,
                    xw_i_ref, xb_i_ref, xw_h_ref, xb_h_ref, Te)
    hy = gru_encode(tgtx_ref, tlen_ref, yw_emb_ref, yb_emb_ref,
                    yw_i_ref, yb_i_ref, yw_h_ref, yb_h_ref, Ty)
    hx_ref[...] = hx                                           # [Na, Hp] lane-dense

    # ---- latent head: fused (mu | logvar), each on its own 128-lane slab ----
    g = _mm(hx, w_lx_ref[...]) + _mm(hy, w_ly_ref[...]) + b_l_ref[...]   # [Na, 2*Hp]
    mu = g[:, 0:Hp]
    sigma = jnp.exp(0.5 * g[:, Hp:2 * Hp])
    mu_ref[...] = mu
    sigma_ref[...] = sigma

    # ---- agent -> candidate broadcast: one-hot R built in-kernel; all four
    #      R-matmuls folded into one MXU pass over [mu | sigma | hxe | pos0] ----
    row = jax.lax.broadcasted_iota(jnp.int32, (B, Na), 0)
    col = jax.lax.broadcasted_iota(jnp.int32, (B, Na), 1)
    R = jnp.logical_and(row >= col * Nc, row < (col + 1) * Nc).astype(jnp.float32)
    hxe = _mm(hx, w_hxe_ref[...])                              # [Na, Hp]
    xcat = jnp.concatenate([mu, sigma, hxe, pos0_ref[...]], axis=1)   # [Na, 4*Hp]
    rx = _mm(R, xcat)                                          # [B, 4*Hp]
    mu_b = rx[:, 0:Hp]
    sig_b = rx[:, Hp:2 * Hp]
    hxe_b = rx[:, 2 * Hp:3 * Hp]
    pos = rx[:, 3 * Hp:4 * Hp]                                 # [B, Hp] (2 real lanes)

    z = mu_b + sig_b * eps_ref[...]                            # reparameterisation
    z_ref[...] = z

    # Decoder input is constant over time: embed + input-gate projection once.
    e_dec = jnp.tanh(hxe_b + _mm(z, w_ze_ref[...]) + b_e_ref[...])     # [B, Hp]
    gi = _mm(e_dec, dw_i_ref[...]) + db_i_ref[...]             # [B, 3*Hp]

    dw_h = dw_h_ref[...]
    db_h = db_h_ref[...]
    h = jnp.zeros((B, Hp), jnp.float32)
    for t in range(Td):                                        # unrolled recurrence
        gh = _mm(h, dw_h) + db_h                               # one MXU op / step
        r = jax.nn.sigmoid(gi[:, 0:Hp] + gh[:, 0:Hp])
        u = jax.nn.sigmoid(gi[:, Hp:2 * Hp] + gh[:, Hp:2 * Hp])
        n = jnp.tanh(gi[:, 2 * Hp:3 * Hp] + r * gh[:, 2 * Hp:3 * Hp])
        h = (1.0 - u) * n + u * h
        hdec_scr[pl.ds(t * B, B), :] = h                       # bound live range

    # Batched output projection (one matmul over all steps), lane-dense store.
    dy_all = _mm(hdec_scr[...], w_out_ref[...]) + b_out_ref[...]       # [Td*B, Hp]
    yrel_ref[...] = dy_all

    # Running-position accumulation: per-step lane-dense stores; dy is re-read
    # from the VMEM-resident output so only one [B, Hp] tile stays live.
    for t in range(Td):
        pos = pos + yrel_ref[pl.ds(t * B, B), :]
        yabs_ref[pl.ds(t * B, B), :] = pos


_ENC_KEYS = ("w_emb", "b_emb", "w_i", "b_i", "w_h", "b_h")
_LAT_KEYS = ("w_x", "w_y", "b")
_DEC_KEYS = ("w_hxe", "w_ze", "b_e", "w_i", "b_i", "w_h", "b_h", "w_out", "b_out")


# --------------------------------------------------------------------------
# Parameter init (synthetic weights, not a checkpoint), stored pre-padded into
# 128-lane slabs so the kernel never slices at lane offsets 48/96/144.
# --------------------------------------------------------------------------
def _pad_to(w, rows, cols):
    return jnp.pad(w, ((0, rows - w.shape[0]), (0, cols - w.shape[1])))


def _pad_segments(w, n_seg, hid=HIDDEN, hp=HP):
    """[K, n_seg*hid] -> [K, n_seg*hp]; each hid-wide segment gets its own slab."""
    segs = [jnp.pad(w[:, g * hid:(g + 1) * hid], ((0, 0), (0, hp - hid)))
            for g in range(n_seg)]
    return jnp.concatenate(segs, axis=1)


def _init_gru_encoder(key, in_dim, emb_dim, hid):
    ks = jax.random.split(key, 3)
    nrm = lambda k, s, sc: sc * jax.random.normal(k, s, jnp.float32)
    w_i = nrm(ks[1], (emb_dim, 3 * hid), emb_dim ** -0.5)
    w_h = nrm(ks[2], (hid, 3 * hid), hid ** -0.5)
    return {
        "w_emb": nrm(ks[0], (in_dim, emb_dim), in_dim ** -0.5),   # [2, 16]
        "b_emb": jnp.zeros((1, emb_dim), jnp.float32),
        "w_i": _pad_segments(w_i, 3),                             # [16, 384]
        "b_i": jnp.zeros((1, 3 * HP), jnp.float32),
        "w_h": _pad_to(_pad_segments(w_h, 3), HP, 3 * HP),        # [128, 384]
        "b_h": jnp.zeros((1, 3 * HP), jnp.float32),
    }


def _init_latent(key, hid):
    k1, k2 = jax.random.split(key, 2)
    sh = hid ** -0.5
    # mu columns scale sh, logvar columns 0.1*sh
    scale = jnp.concatenate([jnp.full((1, hid), sh, jnp.float32),
                             jnp.full((1, hid), 0.1 * sh, jnp.float32)], axis=1)
    w_x = scale * jax.random.normal(k1, (hid, 2 * hid), jnp.float32)
    w_y = scale * jax.random.normal(k2, (hid, 2 * hid), jnp.float32)
    return {
        "w_x": _pad_to(_pad_segments(w_x, 2), HP, 2 * HP),        # [128, 256]
        "w_y": _pad_to(_pad_segments(w_y, 2), HP, 2 * HP),
        "b": jnp.zeros((1, 2 * HP), jnp.float32),
    }


def _init_decoder(key, hid):
    ks = jax.random.split(key, 5)
    sh = hid ** -0.5
    nrm = lambda k, s, sc: sc * jax.random.normal(k, s, jnp.float32)
    w_i = nrm(ks[2], (hid, 3 * hid), sh)
    w_h = nrm(ks[3], (hid, 3 * hid), sh)
    return {
        "w_hxe": _pad_to(nrm(ks[0], (hid, hid), sh), HP, HP),     # [128, 128]
        "w_ze": _pad_to(nrm(ks[1], (hid, hid), sh), HP, HP),
        "b_e": jnp.zeros((1, HP), jnp.float32),
        "w_i": _pad_to(_pad_segments(w_i, 3), HP, 3 * HP),        # [128, 384]
        "b_i": jnp.zeros((1, 3 * HP), jnp.float32),
        "w_h": _pad_to(_pad_segments(w_h, 3), HP, 3 * HP),        # [128, 384]
        "b_h": jnp.zeros((1, 3 * HP), jnp.float32),
        "w_out": _pad_to(nrm(ks[4], (hid, 2), sh), HP, HP),       # [128, 128] (2 real cols)
        "b_out": jnp.zeros((1, HP), jnp.float32),
    }


def init_params(key):
    k1, k2, k3, k4 = jax.random.split(key, 4)
    return {
        "enc_x": _init_gru_encoder(k1, 2, EMBED, HIDDEN),
        "enc_y": _init_gru_encoder(k2, 2, EMBED, HIDDEN),
        "lat": _init_latent(k3, HIDDEN),
        "dec": _init_decoder(k4, HIDDEN),
    }


# --------------------------------------------------------------------------
# DESIRE_SGM.forward equivalent.
# --------------------------------------------------------------------------
def desire_sgm_forward(params, src_trajs, src_lens, tgt_trajs, tgt_lens,
                       decode_start_pos, eps, decoding_steps, num_candidates):
    Na, Te, _ = src_trajs.shape
    Ty = tgt_trajs.shape[1]
    Td = decoding_steps
    Nc = num_candidates
    Na_p = ((Na + 7) // 8) * 8          # pad agent dim to sublane multiple
    pad = Na_p - Na
    B = Na_p * Nc

    def pad_agents(a):
        return jnp.pad(a.astype(jnp.float32),
                       ((0, pad),) + ((0, 0),) * (a.ndim - 1))

    src_p = pad_agents(src_trajs)                        # [Na_p, Te, 2]
    tgt_p = pad_agents(tgt_trajs)                        # [Na_p, Ty, 2]
    slen = jnp.pad(src_lens.astype(jnp.int32), (0, pad)).reshape(Na_p, 1)
    tlen = jnp.pad(tgt_lens.astype(jnp.int32), (0, pad)).reshape(Na_p, 1)

    # time-major flattening (cheap XLA reshapes) so the kernel hoists the
    # input-side matmuls over all timesteps at once.
    src_flat = jnp.transpose(src_p, (1, 0, 2)).reshape(Te * Na_p, 2)
    tgt_flat = jnp.transpose(tgt_p, (1, 0, 2)).reshape(Ty * Na_p, 2)

    # lane-pad eps (H=48 -> 128) and start positions (2 -> 128); padded lanes
    # are zero, which keeps all padded columns identically zero in-kernel.
    eps_flat = pad_agents(eps).reshape(B, HIDDEN)        # row b -> (a=b//Nc, c=b%Nc)
    eps_flat = jnp.pad(eps_flat, ((0, 0), (0, HP - HIDDEN)))
    pos0_p = jnp.pad(pad_agents(decode_start_pos), ((0, 0), (0, HP - 2)))

    enc_x = [params["enc_x"][k] for k in _ENC_KEYS]
    enc_y = [params["enc_y"][k] for k in _ENC_KEYS]
    lat = [params["lat"][k] for k in _LAT_KEYS]
    dec = [params["dec"][k] for k in _DEC_KEYS]

    hx, mu, sigma, z, yrel, yabs = pl.pallas_call(
        functools.partial(_desire_sgm_kernel,
                          Te=Te, Ty=Ty, Td=Td, Na=Na_p, Nc=Nc),
        out_shape=(
            jax.ShapeDtypeStruct((Na_p, HP), jnp.float32),       # Hx   (padded)
            jax.ShapeDtypeStruct((Na_p, HP), jnp.float32),       # mu
            jax.ShapeDtypeStruct((Na_p, HP), jnp.float32),       # sigma
            jax.ShapeDtypeStruct((B, HP), jnp.float32),          # z
            jax.ShapeDtypeStruct((Td * B, HP), jnp.float32),     # y_rel (2 real lanes)
            jax.ShapeDtypeStruct((Td * B, HP), jnp.float32),     # y_abs (2 real lanes)
        ),
        scratch_shapes=[pltpu.VMEM((Td * B, HP), jnp.float32)],  # decoder h history
    )(src_flat, slen, tgt_flat, tlen, eps_flat, pos0_p,
      *enc_x, *enc_y, *lat, *dec)

    # lane-dense kernel outputs -> module-shaped outputs (cheap XLA ops)
    y_rel = yrel[:, :2].reshape(Td, Na_p, Nc, 2)[:, :Na]         # [Td, Na, Nc, 2]
    y_ = yabs[:, :2].reshape(Td, Na_p, Nc, 2)[:, :Na]            # start + cumsum(y_rel)
    Hx_out = hx[:Na, :HIDDEN][None]                              # [1, Na, 48]
    mu_out = mu[:Na, :HIDDEN][None]
    sigma_out = sigma[:Na, :HIDDEN][None]
    # NOTE(synk): z is per-candidate [1, Na, Nc, 48]; the original docstring
    # claims [1, Na, 48] but Nc distinct candidates require Nc latent samples.
    z_out = z[:, :HIDDEN].reshape(Na_p, Nc, HIDDEN)[:Na][None]
    return y_rel, y_, Hx_out, mu_out, sigma_out, z_out


if __name__ == "__main__":
    Na, Te, Td, Nc = 4, 8, 6, 12

    key = jax.random.PRNGKey(0)
    k1, k2, k3, k4 = jax.random.split(key, 4)
    src_trajs = jax.random.normal(k1, (Na, Te, 2), jnp.float32)
    src_lens = jnp.array([8, 6, 8, 5], dtype=jnp.int32)
    tgt_trajs = jax.random.normal(k2, (Na, Td, 2), jnp.float32)
    tgt_lens = jnp.array([6, 6, 4, 6], dtype=jnp.int32)
    decode_start_pos = jax.random.normal(k3, (Na, 2), jnp.float32)
    eps = jax.random.normal(k4, (Na, Nc, HIDDEN), jnp.float32)   # torch.randn

    params = init_params(jax.random.PRNGKey(42))

    outs = desire_sgm_forward(params, src_trajs, src_lens, tgt_trajs, tgt_lens,
                              decode_start_pos, eps, Td, Nc)
    outs = jax.block_until_ready(outs)
    y_rel, y_, Hx, mu, sigma, z = outs

    assert y_rel.shape == (Td, Na, Nc, 2)
    assert y_.shape == (Td, Na, Nc, 2)
    assert Hx.shape == (1, Na, HIDDEN)
    assert mu.shape == (1, Na, HIDDEN)
    assert sigma.shape == (1, Na, HIDDEN)
    assert z.shape == (1, Na, Nc, HIDDEN)
    assert all(bool(jnp.all(jnp.isfinite(o))) for o in outs)
    print("KERNEL_OK")
</pallas_src>

<mosaic_0001>
module attributes {stable_mosaic.version = 11 : i64} {
  func.func @_desire_sgm_kernel(%arg0: memref<64x2xf32, #tpu.memory_space<vmem>>, %arg1: memref<8x1xi32, #tpu.memory_space<vmem>>, %arg2: memref<48x2xf32, #tpu.memory_space<vmem>>, %arg3: memref<8x1xi32, #tpu.memory_space<vmem>>, %arg4: memref<96x128xf32, #tpu.memory_space<vmem>>, %arg5: memref<8x128xf32, #tpu.memory_space<vmem>>, %arg6: memref<2x16xf32, #tpu.memory_space<vmem>>, %arg7: memref<1x16xf32, #tpu.memory_space<vmem>>, %arg8: memref<16x384xf32, #tpu.memory_space<vmem>>, %arg9: memref<1x384xf32, #tpu.memory_space<vmem>>, %arg10: memref<128x384xf32, #tpu.memory_space<vmem>>, %arg11: memref<1x384xf32, #tpu.memory_space<vmem>>, %arg12: memref<2x16xf32, #tpu.memory_space<vmem>>, %arg13: memref<1x16xf32, #tpu.memory_space<vmem>>, %arg14: memref<16x384xf32, #tpu.memory_space<vmem>>, %arg15: memref<1x384xf32, #tpu.memory_space<vmem>>, %arg16: memref<128x384xf32, #tpu.memory_space<vmem>>, %arg17: memref<1x384xf32, #tpu.memory_space<vmem>>, %arg18: memref<128x256xf32, #tpu.memory_space<vmem>>, %arg19: memref<128x256xf32, #tpu.memory_space<vmem>>, %arg20: memref<1x256xf32, #tpu.memory_space<vmem>>, %arg21: memref<128x128xf32, #tpu.memory_space<vmem>>, %arg22: memref<128x128xf32, #tpu.memory_space<vmem>>, %arg23: memref<1x128xf32, #tpu.memory_space<vmem>>, %arg24: memref<128x384xf32, #tpu.memory_space<vmem>>, %arg25: memref<1x384xf32, #tpu.memory_space<vmem>>, %arg26: memref<128x384xf32, #tpu.memory_space<vmem>>, %arg27: memref<1x384xf32, #tpu.memory_space<vmem>>, %arg28: memref<128x128xf32, #tpu.memory_space<vmem>>, %arg29: memref<1x128xf32, #tpu.memory_space<vmem>>, %arg30: memref<8x128xf32, #tpu.memory_space<vmem>>, %arg31: memref<8x128xf32, #tpu.memory_space<vmem>>, %arg32: memref<8x128xf32, #tpu.memory_space<vmem>>, %arg33: memref<96x128xf32, #tpu.memory_space<vmem>>, %arg34: memref<576x128xf32, #tpu.memory_space<vmem>>, %arg35: memref<576x128xf32, #tpu.memory_space<vmem>>, %arg36: memref<576x128xf32, #tpu.memory_space<vmem>>) attributes {dimension_semantics = [], scalar_prefetch = 0 : i64, scratch_operands = 1 : i64, tpu.core_type = #tpu.core_type<tc>} {
    %c0 = arith.constant 0 : index
    %c0_0 = arith.constant 0 : index
    %0 = vector.load %arg0[%c0, %c0_0] : memref<64x2xf32, #tpu.memory_space<vmem>>, vector<64x2xf32>
    %1 = vector.extract_strided_slice %0 {offsets = [0, 0], sizes = [64, 1], strides = [1, 1]} : vector<64x2xf32> to vector<64x1xf32>
    %c0_1 = arith.constant 0 : index
    %c0_2 = arith.constant 0 : index
    %2 = vector.load %arg6[%c0_1, %c0_2] : memref<2x16xf32, #tpu.memory_space<vmem>>, vector<1x16xf32>
    %3 = vector.broadcast %1 : vector<64x1xf32> to vector<64x16xf32>
    %4 = vector.broadcast %2 : vector<1x16xf32> to vector<64x16xf32>
    %5 = arith.mulf %3, %4 : vector<64x16xf32>
    %6 = vector.extract_strided_slice %0 {offsets = [0, 1], sizes = [64, 1], strides = [1, 1]} : vector<64x2xf32> to vector<64x1xf32>
    %c1 = arith.constant 1 : index
    %c0_3 = arith.constant 0 : index
    %7 = vector.load %arg6[%c1, %c0_3] : memref<2x16xf32, #tpu.memory_space<vmem>>, vector<1x16xf32>
    %8 = vector.broadcast %6 : vector<64x1xf32> to vector<64x16xf32>
    %9 = vector.broadcast %7 : vector<1x16xf32> to vector<64x16xf32>
    %10 = arith.mulf %8, %9 : vector<64x16xf32>
    %11 = arith.addf %5, %10 : vector<64x16xf32>
    %c0_4 = arith.constant 0 : index
    %c0_5 = arith.constant 0 : index
    %12 = vector.load %arg7[%c0_4, %c0_5] : memref<1x16xf32, #tpu.memory_space<vmem>>, vector<1x16xf32>
    %13 = vector.broadcast %12 : vector<1x16xf32> to vector<64x16xf32>
    %14 = arith.addf %11, %13 : vector<64x16xf32>
    %cst = arith.constant 0.000000e+00 : f32
    %15 = vector.broadcast %cst : f32 to vector<64x16xf32>
    %16 = arith.maximumf %14, %15 : vector<64x16xf32>
    %c0_6 = arith.constant 0 : index
    %c0_7 = arith.constant 0 : index
    %17 = vector.load %arg8[%c0_6, %c0_7] : memref<16x384xf32, #tpu.memory_space<vmem>>, vector<16x384xf32>
    %cst_8 = arith.constant dense<0.000000e+00> : vector<64x384xf32>
    %18 = tpu.matmul %16, %17, %cst_8 {dimension_numbers = #tpu.dot_dimension_numbers<[1], [0], [0], [1], [0, 0, 1, 1], [], []>} : vector<64x16xf32>, vector<16x384xf32>, vector<64x384xf32> -> vector<64x384xf32>
    %c0_9 = arith.constant 0 : index
    %c0_10 = arith.constant 0 : index
    %19 = vector.load %arg9[%c0_9, %c0_10] : memref<1x384xf32, #tpu.memory_space<vmem>>, vector<1x384xf32>
    %20 = vector.broadcast %19 : vector<1x384xf32> to vector<64x384xf32>
    %21 = arith.addf %18, %20 : vector<64x384xf32>
    %c0_11 = arith.constant 0 : index
    %c0_12 = arith.constant 0 : index
    %22 = vector.load %arg10[%c0_11, %c0_12] : memref<128x384xf32, #tpu.memory_space<vmem>>, vector<128x384xf32>
    %c0_13 = arith.constant 0 : index
    %c0_14 = arith.constant 0 : index
    %23 = vector.load %arg11[%c0_13, %c0_14] : memref<1x384xf32, #tpu.memory_space<vmem>>, vector<1x384xf32>
    %c0_15 = arith.constant 0 : index
    %c0_16 = arith.constant 0 : index
    %24 = vector.load %arg1[%c0_15, %c0_16] : memref<8x1xi32, #tpu.memory_space<vmem>>, vector<8x1xi32>
    %cst_17 = arith.constant 0.000000e+00 : f32
    %25 = vector.broadcast %cst_17 : f32 to vector<8x128xf32>
    %26 = vector.extract_strided_slice %21 {offsets = [0, 0], sizes = [8, 384], strides = [1, 1]} : vector<64x384xf32> to vector<8x384xf32>
    %cst_18 = arith.constant dense<0.000000e+00> : vector<8x384xf32>
    %27 = tpu.matmul %25, %22, %cst_18 {dimension_numbers = #tpu.dot_dimension_numbers<[1], [0], [0], [1], [0, 0, 1, 1], [], []>} : vector<8x128xf32>, vector<128x384xf32>, vector<8x384xf32> -> vector<8x384xf32>
    %28 = vector.broadcast %23 : vector<1x384xf32> to vector<8x384xf32>
    %29 = arith.addf %27, %28 : vector<8x384xf32>
    %30 = vector.extract_strided_slice %26 {offsets = [0, 0], sizes = [8, 128], strides = [1, 1]} : vector<8x384xf32> to vector<8x128xf32>
    %31 = vector.extract_strided_slice %29 {offsets = [0, 0], sizes = [8, 128], strides = [1, 1]} : vector<8x384xf32> to vector<8x128xf32>
    %32 = arith.addf %30, %31 : vector<8x128xf32>
    %33 = arith.negf %32 : vector<8x128xf32>
    %34 = math.exp %33 : vector<8x128xf32>
    %cst_19 = arith.constant 1.000000e+00 : f32
    %35 = vector.broadcast %cst_19 : f32 to vector<8x128xf32>
    %36 = arith.addf %35, %34 : vector<8x128xf32>
    %37 = arith.divf %35, %36 : vector<8x128xf32>
    %38 = vector.extract_strided_slice %26 {offsets = [0, 128], sizes = [8, 128], strides = [1, 1]} : vector<8x384xf32> to vector<8x128xf32>
    %39 = vector.extract_strided_slice %29 {offsets = [0, 128], sizes = [8, 128], strides = [1, 1]} : vector<8x384xf32> to vector<8x128xf32>
    %40 = arith.addf %38, %39 : vector<8x128xf32>
    %41 = arith.negf %40 : vector<8x128xf32>
    %42 = math.exp %41 : vector<8x128xf32>
    %cst_20 = arith.constant 1.000000e+00 : f32
    %43 = vector.broadcast %cst_20 : f32 to vector<8x128xf32>
    %44 = arith.addf %43, %42 : vector<8x128xf32>
    %45 = arith.divf %43, %44 : vector<8x128xf32>
    %46 = vector.extract_strided_slice %26 {offsets = [0, 256], sizes = [8, 128], strides = [1, 1]} : vector<8x384xf32> to vector<8x128xf32>
    %47 = vector.extract_strided_slice %29 {offsets = [0, 256], sizes = [8, 128], strides = [1, 1]} : vector<8x384xf32> to vector<8x128xf32>
    %48 = arith.mulf %37, %47 : vector<8x128xf32>
    %49 = arith.addf %46, %48 : vector<8x128xf32>
    %50 = math.tanh %49 : vector<8x128xf32>
    %cst_21 = arith.constant 1.000000e+00 : f32
    %51 = vector.broadcast %cst_21 : f32 to vector<8x128xf32>
    %52 = arith.subf %51, %45 : vector<8x128xf32>
    %53 = arith.mulf %52, %50 : vector<8x128xf32>
    %54 = arith.mulf %45, %25 : vector<8x128xf32>
    %55 = arith.addf %53, %54 : vector<8x128xf32>
    %c0_i32 = arith.constant 0 : i32
    %56 = vector.broadcast %c0_i32 : i32 to vector<8x1xi32>
    %57 = arith.cmpi sgt, %24, %56 : vector<8x1xi32>
    %58 = vector.shape_cast %57 : vector<8x1xi1> to vector<8x1xi1>
    %59 = vector.broadcast %58 : vector<8x1xi1> to vector<8x128xi1>
    %60 = arith.select %59, %55, %25 : vector<8x128xi1>, vector<8x128xf32>
    %61 = vector.extract_strided_slice %21 {offsets = [8, 0], sizes = [8, 384], strides = [1, 1]} : vector<64x384xf32> to vector<8x384xf32>
    %cst_22 = arith.constant dense<0.000000e+00> : vector<8x384xf32>
    %62 = tpu.matmul %60, %22, %cst_22 {dimension_numbers = #tpu.dot_dimension_numbers<[1], [0], [0], [1], [0, 0, 1, 1], [], []>} : vector<8x128xf32>, vector<128x384xf32>, vector<8x384xf32> -> vector<8x384xf32>
    %63 = vector.broadcast %23 : vector<1x384xf32> to vector<8x384xf32>
    %64 = arith.addf %62, %63 : vector<8x384xf32>
    %65 = vector.extract_strided_slice %61 {offsets = [0, 0], sizes = [8, 128], strides = [1, 1]} : vector<8x384xf32> to vector<8x128xf32>
    %66 = vector.extract_strided_slice %64 {offsets = [0, 0], sizes = [8, 128], strides = [1, 1]} : vector<8x384xf32> to vector<8x128xf32>
    %67 = arith.addf %65, %66 : vector<8x128xf32>
    %68 = arith.negf %67 : vector<8x128xf32>
    %69 = math.exp %68 : vector<8x128xf32>
    %cst_23 = arith.constant 1.000000e+00 : f32
    %70 = vector.broadcast %cst_23 : f32 to vector<8x128xf32>
    %71 = arith.addf %70, %69 : vector<8x128xf32>
    %72 = arith.divf %70, %71 : vector<8x128xf32>
    %73 = vector.extract_strided_slice %61 {offsets = [0, 128], sizes = [8, 128], strides = [1, 1]} : vector<8x384xf32> to vector<8x128xf32>
    %74 = vector.extract_strided_slice %64 {offsets = [0, 128], sizes = [8, 128], strides = [1, 1]} : vector<8x384xf32> to vector<8x128xf32>
    %75 = arith.addf %73, %74 : vector<8x128xf32>
    %76 = arith.negf %75 : vector<8x128xf32>
    %77 = math.exp %76 : vector<8x128xf32>
    %cst_24 = arith.constant 1.000000e+00 : f32
    %78 = vector.broadcast %cst_24 : f32 to vector<8x128xf32>
    %79 = arith.addf %78, %77 : vector<8x128xf32>
    %80 = arith.divf %78, %79 : vector<8x128xf32>
    %81 = vector.extract_strided_slice %61 {offsets = [0, 256], sizes = [8, 128], strides = [1, 1]} : vector<8x384xf32> to vector<8x128xf32>
    %82 = vector.extract_strided_slice %64 {offsets = [0, 256], sizes = [8, 128], strides = [1, 1]} : vector<8x384xf32> to vector<8x128xf32>
    %83 = arith.mulf %72, %82 : vector<8x128xf32>
    %84 = arith.addf %81, %83 : vector<8x128xf32>
    %85 = math.tanh %84 : vector<8x128xf32>
    %cst_25 = arith.constant 1.000000e+00 : f32
    %86 = vector.broadcast %cst_25 : f32 to vector<8x128xf32>
    %87 = arith.subf %86, %80 : vector<8x128xf32>
    %88 = arith.mulf %87, %85 : vector<8x128xf32>
    %89 = arith.mulf %80, %60 : vector<8x128xf32>
    %90 = arith.addf %88, %89 : vector<8x128xf32>
    %c1_i32 = arith.constant 1 : i32
    %91 = vector.broadcast %c1_i32 : i32 to vector<8x1xi32>
    %92 = arith.cmpi sgt, %24, %91 : vector<8x1xi32>
    %93 = vector.shape_cast %92 : vector<8x1xi1> to vector<8x1xi1>
    %94 = vector.broadcast %93 : vector<8x1xi1> to vector<8x128xi1>
    %95 = arith.select %94, %90, %60 : vector<8x128xi1>, vector<8x128xf32>
    %96 = vector.extract_strided_slice %21 {offsets = [16, 0], sizes = [8, 384], strides = [1, 1]} : vector<64x384xf32> to vector<8x384xf32>
    %cst_26 = arith.constant dense<0.000000e+00> : vector<8x384xf32>
    %97 = tpu.matmul %95, %22, %cst_26 {dimension_numbers = #tpu.dot_dimension_numbers<[1], [0], [0], [1], [0, 0, 1, 1], [], []>} : vector<8x128xf32>, vector<128x384xf32>, vector<8x384xf32> -> vector<8x384xf32>
    %98 = vector.broadcast %23 : vector<1x384xf32> to vector<8x384xf32>
    %99 = arith.addf %97, %98 : vector<8x384xf32>
    %100 = vector.extract_strided_slice %96 {offsets = [0, 0], sizes = [8, 128], strides = [1, 1]} : vector<8x384xf32> to vector<8x128xf32>
    %101 = vector.extract_strided_slice %99 {offsets = [0, 0], sizes = [8, 128], strides = [1, 1]} : vector<8x384xf32> to vector<8x128xf32>
    %102 = arith.addf %100, %101 : vector<8x128xf32>
    %103 = arith.negf %102 : vector<8x128xf32>
    %104 = math.exp %103 : vector<8x128xf32>
    %cst_27 = arith.constant 1.000000e+00 : f32
    %105 = vector.broadcast %cst_27 : f32 to vector<8x128xf32>
    %106 = arith.addf %105, %104 : vector<8x128xf32>
    %107 = arith.divf %105, %106 : vector<8x128xf32>
    %108 = vector.extract_strided_slice %96 {offsets = [0, 128], sizes = [8, 128], strides = [1, 1]} : vector<8x384xf32> to vector<8x128xf32>
    %109 = vector.extract_strided_slice %99 {offsets = [0, 128], sizes = [8, 128], strides = [1, 1]} : vector<8x384xf32> to vector<8x128xf32>
    %110 = arith.addf %108, %109 : vector<8x128xf32>
    %111 = arith.negf %110 : vector<8x128xf32>
    %112 = math.exp %111 : vector<8x128xf32>
    %cst_28 = arith.constant 1.000000e+00 : f32
    %113 = vector.broadcast %cst_28 : f32 to vector<8x128xf32>
    %114 = arith.addf %113, %112 : vector<8x128xf32>
    %115 = arith.divf %113, %114 : vector<8x128xf32>
    %116 = vector.extract_strided_slice %96 {offsets = [0, 256], sizes = [8, 128], strides = [1, 1]} : vector<8x384xf32> to vector<8x128xf32>
    %117 = vector.extract_strided_slice %99 {offsets = [0, 256], sizes = [8, 128], strides = [1, 1]} : vector<8x384xf32> to vector<8x128xf32>
    %118 = arith.mulf %107, %117 : vector<8x128xf32>
    %119 = arith.addf %116, %118 : vector<8x128xf32>
    %120 = math.tanh %119 : vector<8x128xf32>
    %cst_29 = arith.constant 1.000000e+00 : f32
    %121 = vector.broadcast %cst_29 : f32 to vector<8x128xf32>
    %122 = arith.subf %121, %115 : vector<8x128xf32>
    %123 = arith.mulf %122, %120 : vector<8x128xf32>
    %124 = arith.mulf %115, %95 : vector<8x128xf32>
    %125 = arith.addf %123, %124 : vector<8x128xf32>
    %c2_i32 = arith.constant 2 : i32
    %126 = vector.broadcast %c2_i32 : i32 to vector<8x1xi32>
    %127 = arith.cmpi sgt, %24, %126 : vector<8x1xi32>
    %128 = vector.shape_cast %127 : vector<8x1xi1> to vector<8x1xi1>
    %129 = vector.broadcast %128 : vector<8x1xi1> to vector<8x128xi1>
    %130 = arith.select %129, %125, %95 : vector<8x128xi1>, vector<8x128xf32>
    %131 = vector.extract_strided_slice %21 {offsets = [24, 0], sizes = [8, 384], strides = [1, 1]} : vector<64x384xf32> to vector<8x384xf32>
    %cst_30 = arith.constant dense<0.000000e+00> : vector<8x384xf32>
    %132 = tpu.matmul %130, %22, %cst_30 {dimension_numbers = #tpu.dot_dimension_numbers<[1], [0], [0], [1], [0, 0, 1, 1], [], []>} : vector<8x128xf32>, vector<128x384xf32>, vector<8x384xf32> -> vector<8x384xf32>
    %133 = vector.broadcast %23 : vector<1x384xf32> to vector<8x384xf32>
    %134 = arith.addf %132, %133 : vector<8x384xf32>
    %135 = vector.extract_strided_slice %131 {offsets = [0, 0], sizes = [8, 128], strides = [1, 1]} : vector<8x384xf32> to vector<8x128xf32>
    %136 = vector.extract_strided_slice %134 {offsets = [0, 0], sizes = [8, 128], strides = [1, 1]} : vector<8x384xf32> to vector<8x128xf32>
    %137 = arith.addf %135, %136 : vector<8x128xf32>
    %138 = arith.negf %137 : vector<8x128xf32>
    %139 = math.exp %138 : vector<8x128xf32>
    %cst_31 = arith.constant 1.000000e+00 : f32
    %140 = vector.broadcast %cst_31 : f32 to vector<8x128xf32>
    %141 = arith.addf %140, %139 : vector<8x128xf32>
    %142 = arith.divf %140, %141 : vector<8x128xf32>
    %143 = vector.extract_strided_slice %131 {offsets = [0, 128], sizes = [8, 128], strides = [1, 1]} : vector<8x384xf32> to vector<8x128xf32>
    %144 = vector.extract_strided_slice %134 {offsets = [0, 128], sizes = [8, 128], strides = [1, 1]} : vector<8x384xf32> to vector<8x128xf32>
    %145 = arith.addf %143, %144 : vector<8x128xf32>
    %146 = arith.negf %145 : vector<8x128xf32>
    %147 = math.exp %146 : vector<8x128xf32>
    %cst_32 = arith.constant 1.000000e+00 : f32
    %148 = vector.broadcast %cst_32 : f32 to vector<8x128xf32>
    %149 = arith.addf %148, %147 : vector<8x128xf32>
    %150 = arith.divf %148, %149 : vector<8x128xf32>
    %151 = vector.extract_strided_slice %131 {offsets = [0, 256], sizes = [8, 128], strides = [1, 1]} : vector<8x384xf32> to vector<8x128xf32>
    %152 = vector.extract_strided_slice %134 {offsets = [0, 256], sizes = [8, 128], strides = [1, 1]} : vector<8x384xf32> to vector<8x128xf32>
    %153 = arith.mulf %142, %152 : vector<8x128xf32>
    %154 = arith.addf %151, %153 : vector<8x128xf32>
    %155 = math.tanh %154 : vector<8x128xf32>
    %cst_33 = arith.constant 1.000000e+00 : f32
    %156 = vector.broadcast %cst_33 : f32 to vector<8x128xf32>
    %157 = arith.subf %156, %150 : vector<8x128xf32>
    %158 = arith.mulf %157, %155 : vector<8x128xf32>
    %159 = arith.mulf %150, %130 : vector<8x128xf32>
    %160 = arith.addf %158, %159 : vector<8x128xf32>
    %c3_i32 = arith.constant 3 : i32
    %161 = vector.broadcast %c3_i32 : i32 to vector<8x1xi32>
    %162 = arith.cmpi sgt, %24, %161 : vector<8x1xi32>
    %163 = vector.shape_cast %162 : vector<8x1xi1> to vector<8x1xi1>
    %164 = vector.broadcast %163 : vector<8x1xi1> to vector<8x128xi1>
    %165 = arith.select %164, %160, %130 : vector<8x128xi1>, vector<8x128xf32>
    %166 = vector.extract_strided_slice %21 {offsets = [32, 0], sizes = [8, 384], strides = [1, 1]} : vector<64x384xf32> to vector<8x384xf32>
    %cst_34 = arith.constant dense<0.000000e+00> : vector<8x384xf32>
    %167 = tpu.matmul %165, %22, %cst_34 {dimension_numbers = #tpu.dot_dimension_numbers<[1], [0], [0], [1], [0, 0, 1, 1], [], []>} : vector<8x128xf32>, vector<128x384xf32>, vector<8x384xf32> -> vector<8x384xf32>
    %168 = vector.broadcast %23 : vector<1x384xf32> to vector<8x384xf32>
    %169 = arith.addf %167, %168 : vector<8x384xf32>
    %170 = vector.extract_strided_slice %166 {offsets = [0, 0], sizes = [8, 128], strides = [1, 1]} : vector<8x384xf32> to vector<8x128xf32>
    %171 = vector.extract_strided_slice %169 {offsets = [0, 0], sizes = [8, 128], strides = [1, 1]} : vector<8x384xf32> to vector<8x128xf32>
    %172 = arith.addf %170, %171 : vector<8x128xf32>
    %173 = arith.negf %172 : vector<8x128xf32>
    %174 = math.exp %173 : vector<8x128xf32>
    %cst_35 = arith.constant 1.000000e+00 : f32
    %175 = vector.broadcast %cst_35 : f32 to vector<8x128xf32>
    %176 = arith.addf %175, %174 : vector<8x128xf32>
    %177 = arith.divf %175, %176 : vector<8x128xf32>
    %178 = vector.extract_strided_slice %166 {offsets = [0, 128], sizes = [8, 128], strides = [1, 1]} : vector<8x384xf32> to vector<8x128xf32>
    %179 = vector.extract_strided_slice %169 {offsets = [0, 128], sizes = [8, 128], strides = [1, 1]} : vector<8x384xf32> to vector<8x128xf32>
    %180 = arith.addf %178, %179 : vector<8x128xf32>
    %181 = arith.negf %180 : vector<8x128xf32>
    %182 = math.exp %181 : vector<8x128xf32>
    %cst_36 = arith.constant 1.000000e+00 : f32
    %183 = vector.broadcast %cst_36 : f32 to vector<8x128xf32>
    %184 = arith.addf %183, %182 : vector<8x128xf32>
    %185 = arith.divf %183, %184 : vector<8x128xf32>
    %186 = vector.extract_strided_slice %166 {offsets = [0, 256], sizes = [8, 128], strides = [1, 1]} : vector<8x384xf32> to vector<8x128xf32>
    %187 = vector.extract_strided_slice %169 {offsets = [0, 256], sizes = [8, 128], strides = [1, 1]} : vector<8x384xf32> to vector<8x128xf32>
    %188 = arith.mulf %177, %187 : vector<8x128xf32>
    %189 = arith.addf %186, %188 : vector<8x128xf32>
    %190 = math.tanh %189 : vector<8x128xf32>
    %cst_37 = arith.constant 1.000000e+00 : f32
    %191 = vector.broadcast %cst_37 : f32 to vector<8x128xf32>
    %192 = arith.subf %191, %185 : vector<8x128xf32>
    %193 = arith.mulf %192, %190 : vector<8x128xf32>
    %194 = arith.mulf %185, %165 : vector<8x128xf32>
    %195 = arith.addf %193, %194 : vector<8x128xf32>
    %c4_i32 = arith.constant 4 : i32
    %196 = vector.broadcast %c4_i32 : i32 to vector<8x1xi32>
    %197 = arith.cmpi sgt, %24, %196 : vector<8x1xi32>
    %198 = vector.shape_cast %197 : vector<8x1xi1> to vector<8x1xi1>
    %199 = vector.broadcast %198 : vector<8x1xi1> to vector<8x128xi1>
    %200 = arith.select %199, %195, %165 : vector<8x128xi1>, vector<8x128xf32>
    %201 = vector.extract_strided_slice %21 {offsets = [40, 0], sizes = [8, 384], strides = [1, 1]} : vector<64x384xf32> to vector<8x384xf32>
    %cst_38 = arith.constant dense<0.000000e+00> : vector<8x384xf32>
    %202 = tpu.matmul %200, %22, %cst_38 {dimension_numbers = #tpu.dot_dimension_numbers<[1], [0], [0], [1], [0, 0, 1, 1], [], []>} : vector<8x128xf32>, vector<128x384xf32>, vector<8x384xf32> -> vector<8x384xf32>
    %203 = vector.broadcast %23 : vector<1x384xf32> to vector<8x384xf32>
    %204 = arith.addf %202, %203 : vector<8x384xf32>
    %205 = vector.extract_strided_slice %201 {offsets = [0, 0], sizes = [8, 128], strides = [1, 1]} : vector<8x384xf32> to vector<8x128xf32>
    %206 = vector.extract_strided_slice %204 {offsets = [0, 0], sizes = [8, 128], strides = [1, 1]} : vector<8x384xf32> to vector<8x128xf32>
    %207 = arith.addf %205, %206 : vector<8x128xf32>
    %208 = arith.negf %207 : vector<8x128xf32>
    %209 = math.exp %208 : vector<8x128xf32>
    %cst_39 = arith.constant 1.000000e+00 : f32
    %210 = vector.broadcast %cst_39 : f32 to vector<8x128xf32>
    %211 = arith.addf %210, %209 : vector<8x128xf32>
    %212 = arith.divf %210, %211 : vector<8x128xf32>
    %213 = vector.extract_strided_slice %201 {offsets = [0, 128], sizes = [8, 128], strides = [1, 1]} : vector<8x384xf32> to vector<8x128xf32>
    %214 = vector.extract_strided_slice %204 {offsets = [0, 128], sizes = [8, 128], strides = [1, 1]} : vector<8x384xf32> to vector<8x128xf32>
    %215 = arith.addf %213, %214 : vector<8x128xf32>
    %216 = arith.negf %215 : vector<8x128xf32>
    %217 = math.exp %216 : vector<8x128xf32>
    %cst_40 = arith.constant 1.000000e+00 : f32
    %218 = vector.broadcast %cst_40 : f32 to vector<8x128xf32>
    %219 = arith.addf %218, %217 : vector<8x128xf32>
    %220 = arith.divf %218, %219 : vector<8x128xf32>
    %221 = vector.extract_strided_slice %201 {offsets = [0, 256], sizes = [8, 128], strides = [1, 1]} : vector<8x384xf32> to vector<8x128xf32>
    %222 = vector.extract_strided_slice %204 {offsets = [0, 256], sizes = [8, 128], strides = [1, 1]} : vector<8x384xf32> to vector<8x128xf32>
    %223 = arith.mulf %212, %222 : vector<8x128xf32>
    %224 = arith.addf %221, %223 : vector<8x128xf32>
    %225 = math.tanh %224 : vector<8x128xf32>
    %cst_41 = arith.constant 1.000000e+00 : f32
    %226 = vector.broadcast %cst_41 : f32 to vector<8x128xf32>
    %227 = arith.subf %226, %220 : vector<8x128xf32>
    %228 = arith.mulf %227, %225 : vector<8x128xf32>
    %229 = arith.mulf %220, %200 : vector<8x128xf32>
    %230 = arith.addf %228, %229 : vector<8x128xf32>
    %c5_i32 = arith.constant 5 : i32
    %231 = vector.broadcast %c5_i32 : i32 to vector<8x1xi32>
    %232 = arith.cmpi sgt, %24, %231 : vector<8x1xi32>
    %233 = vector.shape_cast %232 : vector<8x1xi1> to vector<8x1xi1>
    %234 = vector.broadcast %233 : vector<8x1xi1> to vector<8x128xi1>
    %235 = arith.select %234, %230, %200 : vector<8x128xi1>, vector<8x128xf32>
    %236 = vector.extract_strided_slice %21 {offsets = [48, 0], sizes = [8, 384], strides = [1, 1]} : vector<64x384xf32> to vector<8x384xf32>
    %cst_42 = arith.constant dense<0.000000e+00> : vector<8x384xf32>
    %237 = tpu.matmul %235, %22, %cst_42 {dimension_numbers = #tpu.dot_dimension_numbers<[1], [0], [0], [1], [0, 0, 1, 1], [], []>} : vector<8x128xf32>, vector<128x384xf32>, vector<8x384xf32> -> vector<8x384xf32>
    %238 = vector.broadcast %23 : vector<1x384xf32> to vector<8x384xf32>
    %239 = arith.addf %237, %238 : vector<8x384xf32>
    %240 = vector.extract_strided_slice %236 {offsets = [0, 0], sizes = [8, 128], strides = [1, 1]} : vector<8x384xf32> to vector<8x128xf32>
    %241 = vector.extract_strided_slice %239 {offsets = [0, 0], sizes = [8, 128], strides = [1, 1]} : vector<8x384xf32> to vector<8x128xf32>
    %242 = arith.addf %240, %241 : vector<8x128xf32>
    %243 = arith.negf %242 : vector<8x128xf32>
    %244 = math.exp %243 : vector<8x128xf32>
    %cst_43 = arith.constant 1.000000e+00 : f32
    %245 = vector.broadcast %cst_43 : f32 to vector<8x128xf32>
    %246 = arith.addf %245, %244 : vector<8x128xf32>
    %247 = arith.divf %245, %246 : vector<8x128xf32>
    %248 = vector.extract_strided_slice %236 {offsets = [0, 128], sizes = [8, 128], strides = [1, 1]} : vector<8x384xf32> to vector<8x128xf32>
    %249 = vector.extract_strided_slice %239 {offsets = [0, 128], sizes = [8, 128], strides = [1, 1]} : vector<8x384xf32> to vector<8x128xf32>
    %250 = arith.addf %248, %249 : vector<8x128xf32>
    %251 = arith.negf %250 : vector<8x128xf32>
    %252 = math.exp %251 : vector<8x128xf32>
    %cst_44 = arith.constant 1.000000e+00 : f32
    %253 = vector.broadcast %cst_44 : f32 to vector<8x128xf32>
    %254 = arith.addf %253, %252 : vector<8x128xf32>
    %255 = arith.divf %253, %254 : vector<8x128xf32>
    %256 = vector.extract_strided_slice %236 {offsets = [0, 256], sizes = [8, 128], strides = [1, 1]} : vector<8x384xf32> to vector<8x128xf32>
    %257 = vector.extract_strided_slice %239 {offsets = [0, 256], sizes = [8, 128], strides = [1, 1]} : vector<8x384xf32> to vector<8x128xf32>
    %258 = arith.mulf %247, %257 : vector<8x128xf32>
    %259 = arith.addf %256, %258 : vector<8x128xf32>
    %260 = math.tanh %259 : vector<8x128xf32>
    %cst_45 = arith.constant 1.000000e+00 : f32
    %261 = vector.broadcast %cst_45 : f32 to vector<8x128xf32>
    %262 = arith.subf %261, %255 : vector<8x128xf32>
    %263 = arith.mulf %262, %260 : vector<8x128xf32>
    %264 = arith.mulf %255, %235 : vector<8x128xf32>
    %265 = arith.addf %263, %264 : vector<8x128xf32>
    %c6_i32 = arith.constant 6 : i32
    %266 = vector.broadcast %c6_i32 : i32 to vector<8x1xi32>
    %267 = arith.cmpi sgt, %24, %266 : vector<8x1xi32>
    %268 = vector.shape_cast %267 : vector<8x1xi1> to vector<8x1xi1>
    %269 = vector.broadcast %268 : vector<8x1xi1> to vector<8x128xi1>
    %270 = arith.select %269, %265, %235 : vector<8x128xi1>, vector<8x128xf32>
    %271 = vector.extract_strided_slice %21 {offsets = [56, 0], sizes = [8, 384], strides = [1, 1]} : vector<64x384xf32> to vector<8x384xf32>
    %cst_46 = arith.constant dense<0.000000e+00> : vector<8x384xf32>
    %272 = tpu.matmul %270, %22, %cst_46 {dimension_numbers = #tpu.dot_dimension_numbers<[1], [0], [0], [1], [0, 0, 1, 1], [], []>} : vector<8x128xf32>, vector<128x384xf32>, vector<8x384xf32> -> vector<8x384xf32>
    %273 = vector.broadcast %23 : vector<1x384xf32> to vector<8x384xf32>
    %274 = arith.addf %272, %273 : vector<8x384xf32>
    %275 = vector.extract_strided_slice %271 {offsets = [0, 0], sizes = [8, 128], strides = [1, 1]} : vector<8x384xf32> to vector<8x128xf32>
    %276 = vector.extract_strided_slice %274 {offsets = [0, 0], sizes = [8, 128], strides = [1, 1]} : vector<8x384xf32> to vector<8x128xf32>
    %277 = arith.addf %275, %276 : vector<8x128xf32>
    %278 = arith.negf %277 : vector<8x128xf32>
    %279 = math.exp %278 : vector<8x128xf32>
    %cst_47 = arith.constant 1.000000e+00 : f32
    %280 = vector.broadcast %cst_47 : f32 to vector<8x128xf32>
    %281 = arith.addf %280, %279 : vector<8x128xf32>
    %282 = arith.divf %280, %281 : vector<8x128xf32>
    %283 = vector.extract_strided_slice %271 {offsets = [0, 128], sizes = [8, 128], strides = [1, 1]} : vector<8x384xf32> to vector<8x128xf32>
    %284 = vector.extract_strided_slice %274 {offsets = [0, 128], sizes = [8, 128], strides = [1, 1]} : vector<8x384xf32> to vector<8x128xf32>
    %285 = arith.addf %283, %284 : vector<8x128xf32>
    %286 = arith.negf %285 : vector<8x128xf32>
    %287 = math.exp %286 : vector<8x128xf32>
    %cst_48 = arith.constant 1.000000e+00 : f32
    %288 = vector.broadcast %cst_48 : f32 to vector<8x128xf32>
    %289 = arith.addf %288, %287 : vector<8x128xf32>
    %290 = arith.divf %288, %289 : vector<8x128xf32>
    %291 = vector.extract_strided_slice %271 {offsets = [0, 256], sizes = [8, 128], strides = [1, 1]} : vector<8x384xf32> to vector<8x128xf32>
    %292 = vector.extract_strided_slice %274 {offsets = [0, 256], sizes = [8, 128], strides = [1, 1]} : vector<8x384xf32> to vector<8x128xf32>
    %293 = arith.mulf %282, %292 : vector<8x128xf32>
    %294 = arith.addf %291, %293 : vector<8x128xf32>
    %295 = math.tanh %294 : vector<8x128xf32>
    %cst_49 = arith.constant 1.000000e+00 : f32
    %296 = vector.broadcast %cst_49 : f32 to vector<8x128xf32>
    %297 = arith.subf %296, %290 : vector<8x128xf32>
    %298 = arith.mulf %297, %295 : vector<8x128xf32>
    %299 = arith.mulf %290, %270 : vector<8x128xf32>
    %300 = arith.addf %298, %299 : vector<8x128xf32>
    %c7_i32 = arith.constant 7 : i32
    %301 = vector.broadcast %c7_i32 : i32 to vector<8x1xi32>
    %302 = arith.cmpi sgt, %24, %301 : vector<8x1xi32>
    %303 = vector.shape_cast %302 : vector<8x1xi1> to vector<8x1xi1>
    %304 = vector.broadcast %303 : vector<8x1xi1> to vector<8x128xi1>
    %305 = arith.select %304, %300, %270 : vector<8x128xi1>, vector<8x128xf32>
    %c0_50 = arith.constant 0 : index
    %c0_51 = arith.constant 0 : index
    %306 = vector.load %arg2[%c0_50, %c0_51] : memref<48x2xf32, #tpu.memory_space<vmem>>, vector<48x2xf32>
    %307 = vector.extract_strided_slice %306 {offsets = [0, 0], sizes = [48, 1], strides = [1, 1]} : vector<48x2xf32> to vector<48x1xf32>
    %c0_52 = arith.constant 0 : index
    %c0_53 = arith.constant 0 : index
    %308 = vector.load %arg12[%c0_52, %c0_53] : memref<2x16xf32, #tpu.memory_space<vmem>>, vector<1x16xf32>
    %309 = vector.broadcast %307 : vector<48x1xf32> to vector<48x16xf32>
    %310 = vector.broadcast %308 : vector<1x16xf32> to vector<48x16xf32>
    %311 = arith.mulf %309, %310 : vector<48x16xf32>
    %312 = vector.extract_strided_slice %306 {offsets = [0, 1], sizes = [48, 1], strides = [1, 1]} : vector<48x2xf32> to vector<48x1xf32>
    %c1_54 = arith.constant 1 : index
    %c0_55 = arith.constant 0 : index
    %313 = vector.load %arg12[%c1_54, %c0_55] : memref<2x16xf32, #tpu.memory_space<vmem>>, vector<1x16xf32>
    %314 = vector.broadcast %312 : vector<48x1xf32> to vector<48x16xf32>
    %315 = vector.broadcast %313 : vector<1x16xf32> to vector<48x16xf32>
    %316 = arith.mulf %314, %315 : vector<48x16xf32>
    %317 = arith.addf %311, %316 : vector<48x16xf32>
    %c0_56 = arith.constant 0 : index
    %c0_57 = arith.constant 0 : index
    %318 = vector.load %arg13[%c0_56, %c0_57] : memref<1x16xf32, #tpu.memory_space<vmem>>, vector<1x16xf32>
    %319 = vector.broadcast %318 : vector<1x16xf32> to vector<48x16xf32>
    %320 = arith.addf %317, %319 : vector<48x16xf32>
    %cst_58 = arith.constant 0.000000e+00 : f32
    %321 = vector.broadcast %cst_58 : f32 to vector<48x16xf32>
    %322 = arith.maximumf %320, %321 : vector<48x16xf32>
    %c0_59 = arith.constant 0 : index
    %c0_60 = arith.constant 0 : index
    %323 = vector.load %arg14[%c0_59, %c0_60] : memref<16x384xf32, #tpu.memory_space<vmem>>, vector<16x384xf32>
    %cst_61 = arith.constant dense<0.000000e+00> : vector<48x384xf32>
    %324 = tpu.matmul %322, %323, %cst_61 {dimension_numbers = #tpu.dot_dimension_numbers<[1], [0], [0], [1], [0, 0, 1, 1], [], []>} : vector<48x16xf32>, vector<16x384xf32>, vector<48x384xf32> -> vector<48x384xf32>
    %c0_62 = arith.constant 0 : index
    %c0_63 = arith.constant 0 : index
    %325 = vector.load %arg15[%c0_62, %c0_63] : memref<1x384xf32, #tpu.memory_space<vmem>>, vector<1x384xf32>
    %326 = vector.broadcast %325 : vector<1x384xf32> to vector<48x384xf32>
    %327 = arith.addf %324, %326 : vector<48x384xf32>
    %c0_64 = arith.constant 0 : index
    %c0_65 = arith.constant 0 : index
    %328 = vector.load %arg16[%c0_64, %c0_65] : memref<128x384xf32, #tpu.memory_space<vmem>>, vector<128x384xf32>
    %c0_66 = arith.constant 0 : index
    %c0_67 = arith.constant 0 : index
    %329 = vector.load %arg17[%c0_66, %c0_67] : memref<1x384xf32, #tpu.memory_space<vmem>>, vector<1x384xf32>
    %c0_68 = arith.constant 0 : index
    %c0_69 = arith.constant 0 : index
    %330 = vector.load %arg3[%c0_68, %c0_69] : memref<8x1xi32, #tpu.memory_space<vmem>>, vector<8x1xi32>
    %cst_70 = arith.constant 0.000000e+00 : f32
    %331 = vector.broadcast %cst_70 : f32 to vector<8x128xf32>
    %332 = vector.extract_strided_slice %327 {offsets = [0, 0], sizes = [8, 384], strides = [1, 1]} : vector<48x384xf32> to vector<8x384xf32>
    %cst_71 = arith.constant dense<0.000000e+00> : vector<8x384xf32>
    %333 = tpu.matmul %331, %328, %cst_71 {dimension_numbers = #tpu.dot_dimension_numbers<[1], [0], [0], [1], [0, 0, 1, 1], [], []>} : vector<8x128xf32>, vector<128x384xf32>, vector<8x384xf32> -> vector<8x384xf32>
    %334 = vector.broadcast %329 : vector<1x384xf32> to vector<8x384xf32>
    %335 = arith.addf %333, %334 : vector<8x384xf32>
    %336 = vector.extract_strided_slice %332 {offsets = [0, 0], sizes = [8, 128], strides = [1, 1]} : vector<8x384xf32> to vector<8x128xf32>
    %337 = vector.extract_strided_slice %335 {offsets = [0, 0], sizes = [8, 128], strides = [1, 1]} : vector<8x384xf32> to vector<8x128xf32>
    %338 = arith.addf %336, %337 : vector<8x128xf32>
    %339 = arith.negf %338 : vector<8x128xf32>
    %340 = math.exp %339 : vector<8x128xf32>
    %cst_72 = arith.constant 1.000000e+00 : f32
    %341 = vector.broadcast %cst_72 : f32 to vector<8x128xf32>
    %342 = arith.addf %341, %340 : vector<8x128xf32>
    %343 = arith.divf %341, %342 : vector<8x128xf32>
    %344 = vector.extract_strided_slice %332 {offsets = [0, 128], sizes = [8, 128], strides = [1, 1]} : vector<8x384xf32> to vector<8x128xf32>
    %345 = vector.extract_strided_slice %335 {offsets = [0, 128], sizes = [8, 128], strides = [1, 1]} : vector<8x384xf32> to vector<8x128xf32>
    %346 = arith.addf %344, %345 : vector<8x128xf32>
    %347 = arith.negf %346 : vector<8x128xf32>
    %348 = math.exp %347 : vector<8x128xf32>
    %cst_73 = arith.constant 1.000000e+00 : f32
    %349 = vector.broadcast %cst_73 : f32 to vector<8x128xf32>
    %350 = arith.addf %349, %348 : vector<8x128xf32>
    %351 = arith.divf %349, %350 : vector<8x128xf32>
    %352 = vector.extract_strided_slice %332 {offsets = [0, 256], sizes = [8, 128], strides = [1, 1]} : vector<8x384xf32> to vector<8x128xf32>
    %353 = vector.extract_strided_slice %335 {offsets = [0, 256], sizes = [8, 128], strides = [1, 1]} : vector<8x384xf32> to vector<8x128xf32>
    %354 = arith.mulf %343, %353 : vector<8x128xf32>
    %355 = arith.addf %352, %354 : vector<8x128xf32>
    %356 = math.tanh %355 : vector<8x128xf32>
    %cst_74 = arith.constant 1.000000e+00 : f32
    %357 = vector.broadcast %cst_74 : f32 to vector<8x128xf32>
    %358 = arith.subf %357, %351 : vector<8x128xf32>
    %359 = arith.mulf %358, %356 : vector<8x128xf32>
    %360 = arith.mulf %351, %331 : vector<8x128xf32>
    %361 = arith.addf %359, %360 : vector<8x128xf32>
    %c0_i32_75 = arith.constant 0 : i32
    %362 = vector.broadcast %c0_i32_75 : i32 to vector<8x1xi32>
    %363 = arith.cmpi sgt, %330, %362 : vector<8x1xi32>
    %364 = vector.shape_cast %363 : vector<8x1xi1> to vector<8x1xi1>
    %365 = vector.broadcast %364 : vector<8x1xi1> to vector<8x128xi1>
    %366 = arith.select %365, %361, %331 : vector<8x128xi1>, vector<8x128xf32>
    %367 = vector.extract_strided_slice %327 {offsets = [8, 0], sizes = [8, 384], strides = [1, 1]} : vector<48x384xf32> to vector<8x384xf32>
    %cst_76 = arith.constant dense<0.000000e+00> : vector<8x384xf32>
    %368 = tpu.matmul %366, %328, %cst_76 {dimension_numbers = #tpu.dot_dimension_numbers<[1], [0], [0], [1], [0, 0, 1, 1], [], []>} : vector<8x128xf32>, vector<128x384xf32>, vector<8x384xf32> -> vector<8x384xf32>
    %369 = vector.broadcast %329 : vector<1x384xf32> to vector<8x384xf32>
    %370 = arith.addf %368, %369 : vector<8x384xf32>
    %371 = vector.extract_strided_slice %367 {offsets = [0, 0], sizes = [8, 128], strides = [1, 1]} : vector<8x384xf32> to vector<8x128xf32>
    %372 = vector.extract_strided_slice %370 {offsets = [0, 0], sizes = [8, 128], strides = [1, 1]} : vector<8x384xf32> to vector<8x128xf32>
    %373 = arith.addf %371, %372 : vector<8x128xf32>
    %374 = arith.negf %373 : vector<8x128xf32>
    %375 = math.exp %374 : vector<8x128xf32>
    %cst_77 = arith.constant 1.000000e+00 : f32
    %376 = vector.broadcast %cst_77 : f32 to vector<8x128xf32>
    %377 = arith.addf %376, %375 : vector<8x128xf32>
    %378 = arith.divf %376, %377 : vector<8x128xf32>
    %379 = vector.extract_strided_slice %367 {offsets = [0, 128], sizes = [8, 128], strides = [1, 1]} : vector<8x384xf32> to vector<8x128xf32>
    %380 = vector.extract_strided_slice %370 {offsets = [0, 128], sizes = [8, 128], strides = [1, 1]} : vector<8x384xf32> to vector<8x128xf32>
    %381 = arith.addf %379, %380 : vector<8x128xf32>
    %382 = arith.negf %381 : vector<8x128xf32>
    %383 = math.exp %382 : vector<8x128xf32>
    %cst_78 = arith.constant 1.000000e+00 : f32
    %384 = vector.broadcast %cst_78 : f32 to vector<8x128xf32>
    %385 = arith.addf %384, %383 : vector<8x128xf32>
    %386 = arith.divf %384, %385 : vector<8x128xf32>
    %387 = vector.extract_strided_slice %367 {offsets = [0, 256], sizes = [8, 128], strides = [1, 1]} : vector<8x384xf32> to vector<8x128xf32>
    %388 = vector.extract_strided_slice %370 {offsets = [0, 256], sizes = [8, 128], strides = [1, 1]} : vector<8x384xf32> to vector<8x128xf32>
    %389 = arith.mulf %378, %388 : vector<8x128xf32>
    %390 = arith.addf %387, %389 : vector<8x128xf32>
    %391 = math.tanh %390 : vector<8x128xf32>
    %cst_79 = arith.constant 1.000000e+00 : f32
    %392 = vector.broadcast %cst_79 : f32 to vector<8x128xf32>
    %393 = arith.subf %392, %386 : vector<8x128xf32>
    %394 = arith.mulf %393, %391 : vector<8x128xf32>
    %395 = arith.mulf %386, %366 : vector<8x128xf32>
    %396 = arith.addf %394, %395 : vector<8x128xf32>
    %c1_i32_80 = arith.constant 1 : i32
    %397 = vector.broadcast %c1_i32_80 : i32 to vector<8x1xi32>
    %398 = arith.cmpi sgt, %330, %397 : vector<8x1xi32>
    %399 = vector.shape_cast %398 : vector<8x1xi1> to vector<8x1xi1>
    %400 = vector.broadcast %399 : vector<8x1xi1> to vector<8x128xi1>
    %401 = arith.select %400, %396, %366 : vector<8x128xi1>, vector<8x128xf32>
    %402 = vector.extract_strided_slice %327 {offsets = [16, 0], sizes = [8, 384], strides = [1, 1]} : vector<48x384xf32> to vector<8x384xf32>
    %cst_81 = arith.constant dense<0.000000e+00> : vector<8x384xf32>
    %403 = tpu.matmul %401, %328, %cst_81 {dimension_numbers = #tpu.dot_dimension_numbers<[1], [0], [0], [1], [0, 0, 1, 1], [], []>} : vector<8x128xf32>, vector<128x384xf32>, vector<8x384xf32> -> vector<8x384xf32>
    %404 = vector.broadcast %329 : vector<1x384xf32> to vector<8x384xf32>
    %405 = arith.addf %403, %404 : vector<8x384xf32>
    %406 = vector.extract_strided_slice %402 {offsets = [0, 0], sizes = [8, 128], strides = [1, 1]} : vector<8x384xf32> to vector<8x128xf32>
    %407 = vector.extract_strided_slice %405 {offsets = [0, 0], sizes = [8, 128], strides = [1, 1]} : vector<8x384xf32> to vector<8x128xf32>
    %408 = arith.addf %406, %407 : vector<8x128xf32>
    %409 = arith.negf %408 : vector<8x128xf32>
    %410 = math.exp %409 : vector<8x128xf32>
    %cst_82 = arith.constant 1.000000e+00 : f32
    %411 = vector.broadcast %cst_82 : f32 to vector<8x128xf32>
    %412 = arith.addf %411, %410 : vector<8x128xf32>
    %413 = arith.divf %411, %412 : vector<8x128xf32>
    %414 = vector.extract_strided_slice %402 {offsets = [0, 128], sizes = [8, 128], strides = [1, 1]} : vector<8x384xf32> to vector<8x128xf32>
    %415 = vector.extract_strided_slice %405 {offsets = [0, 128], sizes = [8, 128], strides = [1, 1]} : vector<8x384xf32> to vector<8x128xf32>
    %416 = arith.addf %414, %415 : vector<8x128xf32>
    %417 = arith.negf %416 : vector<8x128xf32>
    %418 = math.exp %417 : vector<8x128xf32>
    %cst_83 = arith.constant 1.000000e+00 : f32
    %419 = vector.broadcast %cst_83 : f32 to vector<8x128xf32>
    %420 = arith.addf %419, %418 : vector<8x128xf32>
    %421 = arith.divf %419, %420 : vector<8x128xf32>
    %422 = vector.extract_strided_slice %402 {offsets = [0, 256], sizes = [8, 128], strides = [1, 1]} : vector<8x384xf32> to vector<8x128xf32>
    %423 = vector.extract_strided_slice %405 {offsets = [0, 256], sizes = [8, 128], strides = [1, 1]} : vector<8x384xf32> to vector<8x128xf32>
    %424 = arith.mulf %413, %423 : vector<8x128xf32>
    %425 = arith.addf %422, %424 : vector<8x128xf32>
    %426 = math.tanh %425 : vector<8x128xf32>
    %cst_84 = arith.constant 1.000000e+00 : f32
    %427 = vector.broadcast %cst_84 : f32 to vector<8x128xf32>
    %428 = arith.subf %427, %421 : vector<8x128xf32>
    %429 = arith.mulf %428, %426 : vector<8x128xf32>
    %430 = arith.mulf %421, %401 : vector<8x128xf32>
    %431 = arith.addf %429, %430 : vector<8x128xf32>
    %c2_i32_85 = arith.constant 2 : i32
    %432 = vector.broadcast %c2_i32_85 : i32 to vector<8x1xi32>
    %433 = arith.cmpi sgt, %330, %432 : vector<8x1xi32>
    %434 = vector.shape_cast %433 : vector<8x1xi1> to vector<8x1xi1>
    %435 = vector.broadcast %434 : vector<8x1xi1> to vector<8x128xi1>
    %436 = arith.select %435, %431, %401 : vector<8x128xi1>, vector<8x128xf32>
    %437 = vector.extract_strided_slice %327 {offsets = [24, 0], sizes = [8, 384], strides = [1, 1]} : vector<48x384xf32> to vector<8x384xf32>
    %cst_86 = arith.constant dense<0.000000e+00> : vector<8x384xf32>
    %438 = tpu.matmul %436, %328, %cst_86 {dimension_numbers = #tpu.dot_dimension_numbers<[1], [0], [0], [1], [0, 0, 1, 1], [], []>} : vector<8x128xf32>, vector<128x384xf32>, vector<8x384xf32> -> vector<8x384xf32>
    %439 = vector.broadcast %329 : vector<1x384xf32> to vector<8x384xf32>
    %440 = arith.addf %438, %439 : vector<8x384xf32>
    %441 = vector.extract_strided_slice %437 {offsets = [0, 0], sizes = [8, 128], strides = [1, 1]} : vector<8x384xf32> to vector<8x128xf32>
    %442 = vector.extract_strided_slice %440 {offsets = [0, 0], sizes = [8, 128], strides = [1, 1]} : vector<8x384xf32> to vector<8x128xf32>
    %443 = arith.addf %441, %442 : vector<8x128xf32>
    %444 = arith.negf %443 : vector<8x128xf32>
    %445 = math.exp %444 : vector<8x128xf32>
    %cst_87 = arith.constant 1.000000e+00 : f32
    %446 = vector.broadcast %cst_87 : f32 to vector<8x128xf32>
    %447 = arith.addf %446, %445 : vector<8x128xf32>
    %448 = arith.divf %446, %447 : vector<8x128xf32>
    %449 = vector.extract_strided_slice %437 {offsets = [0, 128], sizes = [8, 128], strides = [1, 1]} : vector<8x384xf32> to vector<8x128xf32>
    %450 = vector.extract_strided_slice %440 {offsets = [0, 128], sizes = [8, 128], strides = [1, 1]} : vector<8x384xf32> to vector<8x128xf32>
    %451 = arith.addf %449, %450 : vector<8x128xf32>
    %452 = arith.negf %451 : vector<8x128xf32>
    %453 = math.exp %452 : vector<8x128xf32>
    %cst_88 = arith.constant 1.000000e+00 : f32
    %454 = vector.broadcast %cst_88 : f32 to vector<8x128xf32>
    %455 = arith.addf %454, %453 : vector<8x128xf32>
    %456 = arith.divf %454, %455 : vector<8x128xf32>
    %457 = vector.extract_strided_slice %437 {offsets = [0, 256], sizes = [8, 128], strides = [1, 1]} : vector<8x384xf32> to vector<8x128xf32>
    %458 = vector.extract_strided_slice %440 {offsets = [0, 256], sizes = [8, 128], strides = [1, 1]} : vector<8x384xf32> to vector<8x128xf32>
    %459 = arith.mulf %448, %458 : vector<8x128xf32>
    %460 = arith.addf %457, %459 : vector<8x128xf32>
    %461 = math.tanh %460 : vector<8x128xf32>
    %cst_89 = arith.constant 1.000000e+00 : f32
    %462 = vector.broadcast %cst_89 : f32 to vector<8x128xf32>
    %463 = arith.subf %462, %456 : vector<8x128xf32>
    %464 = arith.mulf %463, %461 : vector<8x128xf32>
    %465 = arith.mulf %456, %436 : vector<8x128xf32>
    %466 = arith.addf %464, %465 : vector<8x128xf32>
    %c3_i32_90 = arith.constant 3 : i32
    %467 = vector.broadcast %c3_i32_90 : i32 to vector<8x1xi32>
    %468 = arith.cmpi sgt, %330, %467 : vector<8x1xi32>
    %469 = vector.shape_cast %468 : vector<8x1xi1> to vector<8x1xi1>
    %470 = vector.broadcast %469 : vector<8x1xi1> to vector<8x128xi1>
    %471 = arith.select %470, %466, %436 : vector<8x128xi1>, vector<8x128xf32>
    %472 = vector.extract_strided_slice %327 {offsets = [32, 0], sizes = [8, 384], strides = [1, 1]} : vector<48x384xf32> to vector<8x384xf32>
    %cst_91 = arith.constant dense<0.000000e+00> : vector<8x384xf32>
    %473 = tpu.matmul %471, %328, %cst_91 {dimension_numbers = #tpu.dot_dimension_numbers<[1], [0], [0], [1], [0, 0, 1, 1], [], []>} : vector<8x128xf32>, vector<128x384xf32>, vector<8x384xf32> -> vector<8x384xf32>
    %474 = vector.broadcast %329 : vector<1x384xf32> to vector<8x384xf32>
    %475 = arith.addf %473, %474 : vector<8x384xf32>
    %476 = vector.extract_strided_slice %472 {offsets = [0, 0], sizes = [8, 128], strides = [1, 1]} : vector<8x384xf32> to vector<8x128xf32>
    %477 = vector.extract_strided_slice %475 {offsets = [0, 0], sizes = [8, 128], strides = [1, 1]} : vector<8x384xf32> to vector<8x128xf32>
    %478 = arith.addf %476, %477 : vector<8x128xf32>
    %479 = arith.negf %478 : vector<8x128xf32>
    %480 = math.exp %479 : vector<8x128xf32>
    %cst_92 = arith.constant 1.000000e+00 : f32
    %481 = vector.broadcast %cst_92 : f32 to vector<8x128xf32>
    %482 = arith.addf %481, %480 : vector<8x128xf32>
    %483 = arith.divf %481, %482 : vector<8x128xf32>
    %484 = vector.extract_strided_slice %472 {offsets = [0, 128], sizes = [8, 128], strides = [1, 1]} : vector<8x384xf32> to vector<8x128xf32>
    %485 = vector.extract_strided_slice %475 {offsets = [0, 128], sizes = [8, 128], strides = [1, 1]} : vector<8x384xf32> to vector<8x128xf32>
    %486 = arith.addf %484, %485 : vector<8x128xf32>
    %487 = arith.negf %486 : vector<8x128xf32>
    %488 = math.exp %487 : vector<8x128xf32>
    %cst_93 = arith.constant 1.000000e+00 : f32
    %489 = vector.broadcast %cst_93 : f32 to vector<8x128xf32>
    %490 = arith.addf %489, %488 : vector<8x128xf32>
    %491 = arith.divf %489, %490 : vector<8x128xf32>
    %492 = vector.extract_strided_slice %472 {offsets = [0, 256], sizes = [8, 128], strides = [1, 1]} : vector<8x384xf32> to vector<8x128xf32>
    %493 = vector.extract_strided_slice %475 {offsets = [0, 256], sizes = [8, 128], strides = [1, 1]} : vector<8x384xf32> to vector<8x128xf32>
    %494 = arith.mulf %483, %493 : vector<8x128xf32>
    %495 = arith.addf %492, %494 : vector<8x128xf32>
    %496 = math.tanh %495 : vector<8x128xf32>
    %cst_94 = arith.constant 1.000000e+00 : f32
    %497 = vector.broadcast %cst_94 : f32 to vector<8x128xf32>
    %498 = arith.subf %497, %491 : vector<8x128xf32>
    %499 = arith.mulf %498, %496 : vector<8x128xf32>
    %500 = arith.mulf %491, %471 : vector<8x128xf32>
    %501 = arith.addf %499, %500 : vector<8x128xf32>
    %c4_i32_95 = arith.constant 4 : i32
    %502 = vector.broadcast %c4_i32_95 : i32 to vector<8x1xi32>
    %503 = arith.cmpi sgt, %330, %502 : vector<8x1xi32>
    %504 = vector.shape_cast %503 : vector<8x1xi1> to vector<8x1xi1>
    %505 = vector.broadcast %504 : vector<8x1xi1> to vector<8x128xi1>
    %506 = arith.select %505, %501, %471 : vector<8x128xi1>, vector<8x128xf32>
    %507 = vector.extract_strided_slice %327 {offsets = [40, 0], sizes = [8, 384], strides = [1, 1]} : vector<48x384xf32> to vector<8x384xf32>
    %cst_96 = arith.constant dense<0.000000e+00> : vector<8x384xf32>
    %508 = tpu.matmul %506, %328, %cst_96 {dimension_numbers = #tpu.dot_dimension_numbers<[1], [0], [0], [1], [0, 0, 1, 1], [], []>} : vector<8x128xf32>, vector<128x384xf32>, vector<8x384xf32> -> vector<8x384xf32>
    %509 = vector.broadcast %329 : vector<1x384xf32> to vector<8x384xf32>
    %510 = arith.addf %508, %509 : vector<8x384xf32>
    %511 = vector.extract_strided_slice %507 {offsets = [0, 0], sizes = [8, 128], strides = [1, 1]} : vector<8x384xf32> to vector<8x128xf32>
    %512 = vector.extract_strided_slice %510 {offsets = [0, 0], sizes = [8, 128], strides = [1, 1]} : vector<8x384xf32> to vector<8x128xf32>
    %513 = arith.addf %511, %512 : vector<8x128xf32>
    %514 = arith.negf %513 : vector<8x128xf32>
    %515 = math.exp %514 : vector<8x128xf32>
    %cst_97 = arith.constant 1.000000e+00 : f32
    %516 = vector.broadcast %cst_97 : f32 to vector<8x128xf32>
    %517 = arith.addf %516, %515 : vector<8x128xf32>
    %518 = arith.divf %516, %517 : vector<8x128xf32>
    %519 = vector.extract_strided_slice %507 {offsets = [0, 128], sizes = [8, 128], strides = [1, 1]} : vector<8x384xf32> to vector<8x128xf32>
    %520 = vector.extract_strided_slice %510 {offsets = [0, 128], sizes = [8, 128], strides = [1, 1]} : vector<8x384xf32> to vector<8x128xf32>
    %521 = arith.addf %519, %520 : vector<8x128xf32>
    %522 = arith.negf %521 : vector<8x128xf32>
    %523 = math.exp %522 : vector<8x128xf32>
    %cst_98 = arith.constant 1.000000e+00 : f32
    %524 = vector.broadcast %cst_98 : f32 to vector<8x128xf32>
    %525 = arith.addf %524, %523 : vector<8x128xf32>
    %526 = arith.divf %524, %525 : vector<8x128xf32>
    %527 = vector.extract_strided_slice %507 {offsets = [0, 256], sizes = [8, 128], strides = [1, 1]} : vector<8x384xf32> to vector<8x128xf32>
    %528 = vector.extract_strided_slice %510 {offsets = [0, 256], sizes = [8, 128], strides = [1, 1]} : vector<8x384xf32> to vector<8x128xf32>
    %529 = arith.mulf %518, %528 : vector<8x128xf32>
    %530 = arith.addf %527, %529 : vector<8x128xf32>
    %531 = math.tanh %530 : vector<8x128xf32>
    %cst_99 = arith.constant 1.000000e+00 : f32
    %532 = vector.broadcast %cst_99 : f32 to vector<8x128xf32>
    %533 = arith.subf %532, %526 : vector<8x128xf32>
    %534 = arith.mulf %533, %531 : vector<8x128xf32>
    %535 = arith.mulf %526, %506 : vector<8x128xf32>
    %536 = arith.addf %534, %535 : vector<8x128xf32>
    %c5_i32_100 = arith.constant 5 : i32
    %537 = vector.broadcast %c5_i32_100 : i32 to vector<8x1xi32>
    %538 = arith.cmpi sgt, %330, %537 : vector<8x1xi32>
    %539 = vector.shape_cast %538 : vector<8x1xi1> to vector<8x1xi1>
    %540 = vector.broadcast %539 : vector<8x1xi1> to vector<8x128xi1>
    %541 = arith.select %540, %536, %506 : vector<8x128xi1>, vector<8x128xf32>
    %c0_101 = arith.constant 0 : index
    %c0_102 = arith.constant 0 : index
    %542 = vector.load %arg30[%c0_101, %c0_102] : memref<8x128xf32, #tpu.memory_space<vmem>>, vector<8x128xf32>
    tpu.vector_store %arg30[%c0_101, %c0_102], %305 {strides = array<i32>} : memref<8x128xf32, #tpu.memory_space<vmem>>, vector<8x128xf32>,
    %c0_103 = arith.constant 0 : index
    %c0_104 = arith.constant 0 : index
    %543 = vector.load %arg18[%c0_103, %c0_104] : memref<128x256xf32, #tpu.memory_space<vmem>>, vector<128x256xf32>
    %cst_105 = arith.constant dense<0.000000e+00> : vector<8x256xf32>
    %544 = tpu.matmul %305, %543, %cst_105 {dimension_numbers = #tpu.dot_dimension_numbers<[1], [0], [0], [1], [0, 0, 1, 1], [], []>} : vector<8x128xf32>, vector<128x256xf32>, vector<8x256xf32> -> vector<8x256xf32>
    %c0_106 = arith.constant 0 : index
    %c0_107 = arith.constant 0 : index
    %545 = vector.load %arg19[%c0_106, %c0_107] : memref<128x256xf32, #tpu.memory_space<vmem>>, vector<128x256xf32>
    %cst_108 = arith.constant dense<0.000000e+00> : vector<8x256xf32>
    %546 = tpu.matmul %541, %545, %cst_108 {dimension_numbers = #tpu.dot_dimension_numbers<[1], [0], [0], [1], [0, 0, 1, 1], [], []>} : vector<8x128xf32>, vector<128x256xf32>, vector<8x256xf32> -> vector<8x256xf32>
    %547 = arith.addf %544, %546 : vector<8x256xf32>
    %c0_109 = arith.constant 0 : index
    %c0_110 = arith.constant 0 : index
    %548 = vector.load %arg20[%c0_109, %c0_110] : memref<1x256xf32, #tpu.memory_space<vmem>>, vector<1x256xf32>
    %549 = vector.broadcast %548 : vector<1x256xf32> to vector<8x256xf32>
    %550 = arith.addf %547, %549 : vector<8x256xf32>
    %551 = vector.extract_strided_slice %550 {offsets = [0, 0], sizes = [8, 128], strides = [1, 1]} : vector<8x256xf32> to vector<8x128xf32>
    %552 = vector.extract_strided_slice %550 {offsets = [0, 128], sizes = [8, 128], strides = [1, 1]} : vector<8x256xf32> to vector<8x128xf32>
    %cst_111 = arith.constant 5.000000e-01 : f32
    %553 = vector.broadcast %cst_111 : f32 to vector<8x128xf32>
    %554 = arith.mulf %553, %552 : vector<8x128xf32>
    %555 = math.exp %554 : vector<8x128xf32>
    %c0_112 = arith.constant 0 : index
    %c0_113 = arith.constant 0 : index
    %556 = vector.load %arg31[%c0_112, %c0_113] : memref<8x128xf32, #tpu.memory_space<vmem>>, vector<8x128xf32>
    tpu.vector_store %arg31[%c0_112, %c0_113], %551 {strides = array<i32>} : memref<8x128xf32, #tpu.memory_space<vmem>>, vector<8x128xf32>,
    %c0_114 = arith.constant 0 : index
    %c0_115 = arith.constant 0 : index
    %557 = vector.load %arg32[%c0_114, %c0_115] : memref<8x128xf32, #tpu.memory_space<vmem>>, vector<8x128xf32>
    tpu.vector_store %arg32[%c0_114, %c0_115], %555 {strides = array<i32>} : memref<8x128xf32, #tpu.memory_space<vmem>>, vector<8x128xf32>,
    %558 = tpu.iota {dimensions = array<i32: 0>} : vector<96x8xi32>
    %559 = tpu.iota {dimensions = array<i32: 1>} : vector<96x8xi32>
    %c12_i32 = arith.constant 12 : i32
    %560 = vector.broadcast %c12_i32 : i32 to vector<96x8xi32>
    %561 = arith.muli %559, %560 : vector<96x8xi32>
    %562 = arith.cmpi sge, %558, %561 : vector<96x8xi32>
    %c1_i32_116 = arith.constant 1 : i32
    %563 = vector.broadcast %c1_i32_116 : i32 to vector<96x8xi32>
    %564 = arith.addi %559, %563 : vector<96x8xi32>
    %c12_i32_117 = arith.constant 12 : i32
    %565 = vector.broadcast %c12_i32_117 : i32 to vector<96x8xi32>
    %566 = arith.muli %564, %565 : vector<96x8xi32>
    %567 = arith.cmpi slt, %558, %566 : vector<96x8xi32>
    %568 = arith.andi %562, %567 : vector<96x8xi1>
    %569 = arith.extui %568 : vector<96x8xi1> to vector<96x8xi32>
    %570 = arith.sitofp %569 : vector<96x8xi32> to vector<96x8xf32>
    %c0_118 = arith.constant 0 : index
    %c0_119 = arith.constant 0 : index
    %571 = vector.load %arg21[%c0_118, %c0_119] : memref<128x128xf32, #tpu.memory_space<vmem>>, vector<128x128xf32>
    %cst_120 = arith.constant dense<0.000000e+00> : vector<8x128xf32>
    %572 = tpu.matmul %305, %571, %cst_120 {dimension_numbers = #tpu.dot_dimension_numbers<[1], [0], [0], [1], [0, 0, 1, 1], [], []>} : vector<8x128xf32>, vector<128x128xf32>, vector<8x128xf32> -> vector<8x128xf32>
    %c0_121 = arith.constant 0 : index
    %c0_122 = arith.constant 0 : index
    %573 = vector.load %arg5[%c0_121, %c0_122] : memref<8x128xf32, #tpu.memory_space<vmem>>, vector<8x128xf32>
    %574 = tpu.concatenate %551, %555, %572, %573 in 1 : vector<8x128xf32>, vector<8x128xf32>, vector<8x128xf32>, vector<8x128xf32> -> vector<8x512xf32>
    %cst_123 = arith.constant dense<0.000000e+00> : vector<96x512xf32>
    %575 = tpu.matmul %570, %574, %cst_123 {dimension_numbers = #tpu.dot_dimension_numbers<[1], [0], [0], [1], [0, 0, 1, 1], [], []>} : vector<96x8xf32>, vector<8x512xf32>, vector<96x512xf32> -> vector<96x512xf32>
    %576 = vector.extract_strided_slice %575 {offsets = [0, 0], sizes = [96, 128], strides = [1, 1]} : vector<96x512xf32> to vector<96x128xf32>
    %577 = vector.extract_strided_slice %575 {offsets = [0, 128], sizes = [96, 128], strides = [1, 1]} : vector<96x512xf32> to vector<96x128xf32>
    %578 = vector.extract_strided_slice %575 {offsets = [0, 256], sizes = [96, 128], strides = [1, 1]} : vector<96x512xf32> to vector<96x128xf32>
    %579 = vector.extract_strided_slice %575 {offsets = [0, 384], sizes = [96, 128], strides = [1, 1]} : vector<96x512xf32> to vector<96x128xf32>
    %c0_124 = arith.constant 0 : index
    %c0_125 = arith.constant 0 : index
    %580 = vector.load %arg4[%c0_124, %c0_125] : memref<96x128xf32, #tpu.memory_space<vmem>>, vector<96x128xf32>
    %581 = arith.mulf %577, %580 : vector<96x128xf32>
    %582 = arith.addf %576, %581 : vector<96x128xf32>
    %c0_126 = arith.constant 0 : index
    %c0_127 = arith.constant 0 : index
    %583 = vector.load %arg33[%c0_126, %c0_127] : memref<96x128xf32, #tpu.memory_space<vmem>>, vector<96x128xf32>
    tpu.vector_store %arg33[%c0_126, %c0_127], %582 {strides = array<i32>} : memref<96x128xf32, #tpu.memory_space<vmem>>, vector<96x128xf32>,
    %c0_128 = arith.constant 0 : index
    %c0_129 = arith.constant 0 : index
    %584 = vector.load %arg22[%c0_128, %c0_129] : memref<128x128xf32, #tpu.memory_space<vmem>>, vector<128x128xf32>
    %cst_130 = arith.constant dense<0.000000e+00> : vector<96x128xf32>
    %585 = tpu.matmul %582, %584, %cst_130 {dimension_numbers = #tpu.dot_dimension_numbers<[1], [0], [0], [1], [0, 0, 1, 1], [], []>} : vector<96x128xf32>, vector<128x128xf32>, vector<96x128xf32> -> vector<96x128xf32>
    %586 = arith.addf %578, %585 : vector<96x128xf32>
    %c0_131 = arith.constant 0 : index
    %c0_132 = arith.constant 0 : index
    %587 = vector.load %arg23[%c0_131, %c0_132] : memref<1x128xf32, #tpu.memory_space<vmem>>, vector<1x128xf32>
    %588 = vector.broadcast %587 : vector<1x128xf32> to vector<96x128xf32>
    %589 = arith.addf %586, %588 : vector<96x128xf32>
    %590 = math.tanh %589 : vector<96x128xf32>
    %c0_133 = arith.constant 0 : index
    %c0_134 = arith.constant 0 : index
    %591 = vector.load %arg24[%c0_133, %c0_134] : memref<128x384xf32, #tpu.memory_space<vmem>>, vector<128x384xf32>
    %cst_135 = arith.constant dense<0.000000e+00> : vector<96x384xf32>
    %592 = tpu.matmul %590, %591, %cst_135 {dimension_numbers = #tpu.dot_dimension_numbers<[1], [0], [0], [1], [0, 0, 1, 1], [], []>} : vector<96x128xf32>, vector<128x384xf32>, vector<96x384xf32> -> vector<96x384xf32>
    %c0_136 = arith.constant 0 : index
    %c0_137 = arith.constant 0 : index
    %593 = vector.load %arg25[%c0_136, %c0_137] : memref<1x384xf32, #tpu.memory_space<vmem>>, vector<1x384xf32>
    %594 = vector.broadcast %593 : vector<1x384xf32> to vector<96x384xf32>
    %595 = arith.addf %592, %594 : vector<96x384xf32>
    %c0_138 = arith.constant 0 : index
    %c0_139 = arith.constant 0 : index
    %596 = vector.load %arg26[%c0_138, %c0_139] : memref<128x384xf32, #tpu.memory_space<vmem>>, vector<128x384xf32>
    %c0_140 = arith.constant 0 : index
    %c0_141 = arith.constant 0 : index
    %597 = vector.load %arg27[%c0_140, %c0_141] : memref<1x384xf32, #tpu.memory_space<vmem>>, vector<1x384xf32>
    %cst_142 = arith.constant 0.000000e+00 : f32
    %598 = vector.broadcast %cst_142 : f32 to vector<96x128xf32>
    %cst_143 = arith.constant dense<0.000000e+00> : vector<96x384xf32>
    %599 = tpu.matmul %598, %596, %cst_143 {dimension_numbers = #tpu.dot_dimension_numbers<[1], [0], [0], [1], [0, 0, 1, 1], [], []>} : vector<96x128xf32>, vector<128x384xf32>, vector<96x384xf32> -> vector<96x384xf32>
    %600 = vector.broadcast %597 : vector<1x384xf32> to vector<96x384xf32>
    %601 = arith.addf %599, %600 : vector<96x384xf32>
    %602 = vector.extract_strided_slice %595 {offsets = [0, 0], sizes = [96, 128], strides = [1, 1]} : vector<96x384xf32> to vector<96x128xf32>
    %603 = vector.extract_strided_slice %601 {offsets = [0, 0], sizes = [96, 128], strides = [1, 1]} : vector<96x384xf32> to vector<96x128xf32>
    %604 = arith.addf %602, %603 : vector<96x128xf32>
    %605 = arith.negf %604 : vector<96x128xf32>
    %606 = math.exp %605 : vector<96x128xf32>
    %cst_144 = arith.constant 1.000000e+00 : f32
    %607 = vector.broadcast %cst_144 : f32 to vector<96x128xf32>
    %608 = arith.addf %607, %606 : vector<96x128xf32>
    %609 = arith.divf %607, %608 : vector<96x128xf32>
    %610 = vector.extract_strided_slice %595 {offsets = [0, 128], sizes = [96, 128], strides = [1, 1]} : vector<96x384xf32> to vector<96x128xf32>
    %611 = vector.extract_strided_slice %601 {offsets = [0, 128], sizes = [96, 128], strides = [1, 1]} : vector<96x384xf32> to vector<96x128xf32>
    %612 = arith.addf %610, %611 : vector<96x128xf32>
    %613 = arith.negf %612 : vector<96x128xf32>
    %614 = math.exp %613 : vector<96x128xf32>
    %cst_145 = arith.constant 1.000000e+00 : f32
    %615 = vector.broadcast %cst_145 : f32 to vector<96x128xf32>
    %616 = arith.addf %615, %614 : vector<96x128xf32>
    %617 = arith.divf %615, %616 : vector<96x128xf32>
    %618 = vector.extract_strided_slice %595 {offsets = [0, 256], sizes = [96, 128], strides = [1, 1]} : vector<96x384xf32> to vector<96x128xf32>
    %619 = vector.extract_strided_slice %601 {offsets = [0, 256], sizes = [96, 128], strides = [1, 1]} : vector<96x384xf32> to vector<96x128xf32>
    %620 = arith.mulf %609, %619 : vector<96x128xf32>
    %621 = arith.addf %618, %620 : vector<96x128xf32>
    %622 = math.tanh %621 : vector<96x128xf32>
    %cst_146 = arith.constant 1.000000e+00 : f32
    %623 = vector.broadcast %cst_146 : f32 to vector<96x128xf32>
    %624 = arith.subf %623, %617 : vector<96x128xf32>
    %625 = arith.mulf %624, %622 : vector<96x128xf32>
    %626 = arith.mulf %617, %598 : vector<96x128xf32>
    %627 = arith.addf %625, %626 : vector<96x128xf32>
    %c0_147 = arith.constant 0 : index
    %c0_148 = arith.constant 0 : index
    %628 = vector.load %arg36[%c0_147, %c0_148] : memref<576x128xf32, #tpu.memory_space<vmem>>, vector<96x128xf32>
    tpu.vector_store %arg36[%c0_147, %c0_148], %627 {strides = array<i32>} : memref<576x128xf32, #tpu.memory_space<vmem>>, vector<96x128xf32>,
    %cst_149 = arith.constant dense<0.000000e+00> : vector<96x384xf32>
    %629 = tpu.matmul %627, %596, %cst_149 {dimension_numbers = #tpu.dot_dimension_numbers<[1], [0], [0], [1], [0, 0, 1, 1], [], []>} : vector<96x128xf32>, vector<128x384xf32>, vector<96x384xf32> -> vector<96x384xf32>
    %630 = vector.broadcast %597 : vector<1x384xf32> to vector<96x384xf32>
    %631 = arith.addf %629, %630 : vector<96x384xf32>
    %632 = vector.extract_strided_slice %595 {offsets = [0, 0], sizes = [96, 128], strides = [1, 1]} : vector<96x384xf32> to vector<96x128xf32>
    %633 = vector.extract_strided_slice %631 {offsets = [0, 0], sizes = [96, 128], strides = [1, 1]} : vector<96x384xf32> to vector<96x128xf32>
    %634 = arith.addf %632, %633 : vector<96x128xf32>
    %635 = arith.negf %634 : vector<96x128xf32>
    %636 = math.exp %635 : vector<96x128xf32>
    %cst_150 = arith.constant 1.000000e+00 : f32
    %637 = vector.broadcast %cst_150 : f32 to vector<96x128xf32>
    %638 = arith.addf %637, %636 : vector<96x128xf32>
    %639 = arith.divf %637, %638 : vector<96x128xf32>
    %640 = vector.extract_strided_slice %595 {offsets = [0, 128], sizes = [96, 128], strides = [1, 1]} : vector<96x384xf32> to vector<96x128xf32>
    %641 = vector.extract_strided_slice %631 {offsets = [0, 128], sizes = [96, 128], strides = [1, 1]} : vector<96x384xf32> to vector<96x128xf32>
    %642 = arith.addf %640, %641 : vector<96x128xf32>
    %643 = arith.negf %642 : vector<96x128xf32>
    %644 = math.exp %643 : vector<96x128xf32>
    %cst_151 = arith.constant 1.000000e+00 : f32
    %645 = vector.broadcast %cst_151 : f32 to vector<96x128xf32>
    %646 = arith.addf %645, %644 : vector<96x128xf32>
    %647 = arith.divf %645, %646 : vector<96x128xf32>
    %648 = vector.extract_strided_slice %595 {offsets = [0, 256], sizes = [96, 128], strides = [1, 1]} : vector<96x384xf32> to vector<96x128xf32>
    %649 = vector.extract_strided_slice %631 {offsets = [0, 256], sizes = [96, 128], strides = [1, 1]} : vector<96x384xf32> to vector<96x128xf32>
    %650 = arith.mulf %639, %649 : vector<96x128xf32>
    %651 = arith.addf %648, %650 : vector<96x128xf32>
    %652 = math.tanh %651 : vector<96x128xf32>
    %cst_152 = arith.constant 1.000000e+00 : f32
    %653 = vector.broadcast %cst_152 : f32 to vector<96x128xf32>
    %654 = arith.subf %653, %647 : vector<96x128xf32>
    %655 = arith.mulf %654, %652 : vector<96x128xf32>
    %656 = arith.mulf %647, %627 : vector<96x128xf32>
    %657 = arith.addf %655, %656 : vector<96x128xf32>
    %c96 = arith.constant 96 : index
    %c0_153 = arith.constant 0 : index
    %658 = vector.load %arg36[%c96, %c0_153] : memref<576x128xf32, #tpu.memory_space<vmem>>, vector<96x128xf32>
    tpu.vector_store %arg36[%c96, %c0_153], %657 {strides = array<i32>} : memref<576x128xf32, #tpu.memory_space<vmem>>, vector<96x128xf32>,
    %cst_154 = arith.constant dense<0.000000e+00> : vector<96x384xf32>
    %659 = tpu.matmul %657, %596, %cst_154 {dimension_numbers = #tpu.dot_dimension_numbers<[1], [0], [0], [1], [0, 0, 1, 1], [], []>} : vector<96x128xf32>, vector<128x384xf32>, vector<96x384xf32> -> vector<96x384xf32>
    %660 = vector.broadcast %597 : vector<1x384xf32> to vector<96x384xf32>
    %661 = arith.addf %659, %660 : vector<96x384xf32>
    %662 = vector.extract_strided_slice %595 {offsets = [0, 0], sizes = [96, 128], strides = [1, 1]} : vector<96x384xf32> to vector<96x128xf32>
    %663 = vector.extract_strided_slice %661 {offsets = [0, 0], sizes = [96, 128], strides = [1, 1]} : vector<96x384xf32> to vector<96x128xf32>
    %664 = arith.addf %662, %663 : vector<96x128xf32>
    %665 = arith.negf %664 : vector<96x128xf32>
    %666 = math.exp %665 : vector<96x128xf32>
    %cst_155 = arith.constant 1.000000e+00 : f32
    %667 = vector.broadcast %cst_155 : f32 to vector<96x128xf32>
    %668 = arith.addf %667, %666 : vector<96x128xf32>
    %669 = arith.divf %667, %668 : vector<96x128xf32>
    %670 = vector.extract_strided_slice %595 {offsets = [0, 128], sizes = [96, 128], strides = [1, 1]} : vector<96x384xf32> to vector<96x128xf32>
    %671 = vector.extract_strided_slice %661 {offsets = [0, 128], sizes = [96, 128], strides = [1, 1]} : vector<96x384xf32> to vector<96x128xf32>
    %672 = arith.addf %670, %671 : vector<96x128xf32>
    %673 = arith.negf %672 : vector<96x128xf32>
    %674 = math.exp %673 : vector<96x128xf32>
    %cst_156 = arith.constant 1.000000e+00 : f32
    %675 = vector.broadcast %cst_156 : f32 to vector<96x128xf32>
    %676 = arith.addf %675, %674 : vector<96x128xf32>
    %677 = arith.divf %675, %676 : vector<96x128xf32>
    %678 = vector.extract_strided_slice %595 {offsets = [0, 256], sizes = [96, 128], strides = [1, 1]} : vector<96x384xf32> to vector<96x128xf32>
    %679 = vector.extract_strided_slice %661 {offsets = [0, 256], sizes = [96, 128], strides = [1, 1]} : vector<96x384xf32> to vector<96x128xf32>
    %680 = arith.mulf %669, %679 : vector<96x128xf32>
    %681 = arith.addf %678, %680 : vector<96x128xf32>
    %682 = math.tanh %681 : vector<96x128xf32>
    %cst_157 = arith.constant 1.000000e+00 : f32
    %683 = vector.broadcast %cst_157 : f32 to vector<96x128xf32>
    %684 = arith.subf %683, %677 : vector<96x128xf32>
    %685 = arith.mulf %684, %682 : vector<96x128xf32>
    %686 = arith.mulf %677, %657 : vector<96x128xf32>
    %687 = arith.addf %685, %686 : vector<96x128xf32>
    %c192 = arith.constant 192 : index
    %c0_158 = arith.constant 0 : index
    %688 = vector.load %arg36[%c192, %c0_158] : memref<576x128xf32, #tpu.memory_space<vmem>>, vector<96x128xf32>
    tpu.vector_store %arg36[%c192, %c0_158], %687 {strides = array<i32>} : memref<576x128xf32, #tpu.memory_space<vmem>>, vector<96x128xf32>,
    %cst_159 = arith.constant dense<0.000000e+00> : vector<96x384xf32>
    %689 = tpu.matmul %687, %596, %cst_159 {dimension_numbers = #tpu.dot_dimension_numbers<[1], [0], [0], [1], [0, 0, 1, 1], [], []>} : vector<96x128xf32>, vector<128x384xf32>, vector<96x384xf32> -> vector<96x384xf32>
    %690 = vector.broadcast %597 : vector<1x384xf32> to vector<96x384xf32>
    %691 = arith.addf %689, %690 : vector<96x384xf32>
    %692 = vector.extract_strided_slice %595 {offsets = [0, 0], sizes = [96, 128], strides = [1, 1]} : vector<96x384xf32> to vector<96x128xf32>
    %693 = vector.extract_strided_slice %691 {offsets = [0, 0], sizes = [96, 128], strides = [1, 1]} : vector<96x384xf32> to vector<96x128xf32>
    %694 = arith.addf %692, %693 : vector<96x128xf32>
    %695 = arith.negf %694 : vector<96x128xf32>
    %696 = math.exp %695 : vector<96x128xf32>
    %cst_160 = arith.constant 1.000000e+00 : f32
    %697 = vector.broadcast %cst_160 : f32 to vector<96x128xf32>
    %698 = arith.addf %697, %696 : vector<96x128xf32>
    %699 = arith.divf %697, %698 : vector<96x128xf32>
    %700 = vector.extract_strided_slice %595 {offsets = [0, 128], sizes = [96, 128], strides = [1, 1]} : vector<96x384xf32> to vector<96x128xf32>
    %701 = vector.extract_strided_slice %691 {offsets = [0, 128], sizes = [96, 128], strides = [1, 1]} : vector<96x384xf32> to vector<96x128xf32>
    %702 = arith.addf %700, %701 : vector<96x128xf32>
    %703 = arith.negf %702 : vector<96x128xf32>
    %704 = math.exp %703 : vector<96x128xf32>
    %cst_161 = arith.constant 1.000000e+00 : f32
    %705 = vector.broadcast %cst_161 : f32 to vector<96x128xf32>
    %706 = arith.addf %705, %704 : vector<96x128xf32>
    %707 = arith.divf %705, %706 : vector<96x128xf32>
    %708 = vector.extract_strided_slice %595 {offsets = [0, 256], sizes = [96, 128], strides = [1, 1]} : vector<96x384xf32> to vector<96x128xf32>
    %709 = vector.extract_strided_slice %691 {offsets = [0, 256], sizes = [96, 128], strides = [1, 1]} : vector<96x384xf32> to vector<96x128xf32>
    %710 = arith.mulf %699, %709 : vector<96x128xf32>
    %711 = arith.addf %708, %710 : vector<96x128xf32>
    %712 = math.tanh %711 : vector<96x128xf32>
    %cst_162 = arith.constant 1.000000e+00 : f32
    %713 = vector.broadcast %cst_162 : f32 to vector<96x128xf32>
    %714 = arith.subf %713, %707 : vector<96x128xf32>
    %715 = arith.mulf %714, %712 : vector<96x128xf32>
    %716 = arith.mulf %707, %687 : vector<96x128xf32>
    %717 = arith.addf %715, %716 : vector<96x128xf32>
    %c288 = arith.constant 288 : index
    %c0_163 = arith.constant 0 : index
    %718 = vector.load %arg36[%c288, %c0_163] : memref<576x128xf32, #tpu.memory_space<vmem>>, vector<96x128xf32>
    tpu.vector_store %arg36[%c288, %c0_163], %717 {strides = array<i32>} : memref<576x128xf32, #tpu.memory_space<vmem>>, vector<96x128xf32>,
    %cst_164 = arith.constant dense<0.000000e+00> : vector<96x384xf32>
    %719 = tpu.matmul %717, %596, %cst_164 {dimension_numbers = #tpu.dot_dimension_numbers<[1], [0], [0], [1], [0, 0, 1, 1], [], []>} : vector<96x128xf32>, vector<128x384xf32>, vector<96x384xf32> -> vector<96x384xf32>
    %720 = vector.broadcast %597 : vector<1x384xf32> to vector<96x384xf32>
    %721 = arith.addf %719, %720 : vector<96x384xf32>
    %722 = vector.extract_strided_slice %595 {offsets = [0, 0], sizes = [96, 128], strides = [1, 1]} : vector<96x384xf32> to vector<96x128xf32>
    %723 = vector.extract_strided_slice %721 {offsets = [0, 0], sizes = [96, 128], strides = [1, 1]} : vector<96x384xf32> to vector<96x128xf32>
    %724 = arith.addf %722, %723 : vector<96x128xf32>
    %725 = arith.negf %724 : vector<96x128xf32>
    %726 = math.exp %725 : vector<96x128xf32>
    %cst_165 = arith.constant 1.000000e+00 : f32
    %727 = vector.broadcast %cst_165 : f32 to vector<96x128xf32>
    %728 = arith.addf %727, %726 : vector<96x128xf32>
    %729 = arith.divf %727, %728 : vector<96x128xf32>
    %730 = vector.extract_strided_slice %595 {offsets = [0, 128], sizes = [96, 128], strides = [1, 1]} : vector<96x384xf32> to vector<96x128xf32>
    %731 = vector.extract_strided_slice %721 {offsets = [0, 128], sizes = [96, 128], strides = [1, 1]} : vector<96x384xf32> to vector<96x128xf32>
    %732 = arith.addf %730, %731 : vector<96x128xf32>
    %733 = arith.negf %732 : vector<96x128xf32>
    %734 = math.exp %733 : vector<96x128xf32>
    %cst_166 = arith.constant 1.000000e+00 : f32
    %735 = vector.broadcast %cst_166 : f32 to vector<96x128xf32>
    %736 = arith.addf %735, %734 : vector<96x128xf32>
    %737 = arith.divf %735, %736 : vector<96x128xf32>
    %738 = vector.extract_strided_slice %595 {offsets = [0, 256], sizes = [96, 128], strides = [1, 1]} : vector<96x384xf32> to vector<96x128xf32>
    %739 = vector.extract_strided_slice %721 {offsets = [0, 256], sizes = [96, 128], strides = [1, 1]} : vector<96x384xf32> to vector<96x128xf32>
    %740 = arith.mulf %729, %739 : vector<96x128xf32>
    %741 = arith.addf %738, %740 : vector<96x128xf32>
    %742 = math.tanh %741 : vector<96x128xf32>
    %cst_167 = arith.constant 1.000000e+00 : f32
    %743 = vector.broadcast %cst_167 : f32 to vector<96x128xf32>
    %744 = arith.subf %743, %737 : vector<96x128xf32>
    %745 = arith.mulf %744, %742 : vector<96x128xf32>
    %746 = arith.mulf %737, %717 : vector<96x128xf32>
    %747 = arith.addf %745, %746 : vector<96x128xf32>
    %c384 = arith.constant 384 : index
    %c0_168 = arith.constant 0 : index
    %748 = vector.load %arg36[%c384, %c0_168] : memref<576x128xf32, #tpu.memory_space<vmem>>, vector<96x128xf32>
    tpu.vector_store %arg36[%c384, %c0_168], %747 {strides = array<i32>} : memref<576x128xf32, #tpu.memory_space<vmem>>, vector<96x128xf32>,
    %cst_169 = arith.constant dense<0.000000e+00> : vector<96x384xf32>
    %749 = tpu.matmul %747, %596, %cst_169 {dimension_numbers = #tpu.dot_dimension_numbers<[1], [0], [0], [1], [0, 0, 1, 1], [], []>} : vector<96x128xf32>, vector<128x384xf32>, vector<96x384xf32> -> vector<96x384xf32>
    %750 = vector.broadcast %597 : vector<1x384xf32> to vector<96x384xf32>
    %751 = arith.addf %749, %750 : vector<96x384xf32>
    %752 = vector.extract_strided_slice %595 {offsets = [0, 0], sizes = [96, 128], strides = [1, 1]} : vector<96x384xf32> to vector<96x128xf32>
    %753 = vector.extract_strided_slice %751 {offsets = [0, 0], sizes = [96, 128], strides = [1, 1]} : vector<96x384xf32> to vector<96x128xf32>
    %754 = arith.addf %752, %753 : vector<96x128xf32>
    %755 = arith.negf %754 : vector<96x128xf32>
    %756 = math.exp %755 : vector<96x128xf32>
    %cst_170 = arith.constant 1.000000e+00 : f32
    %757 = vector.broadcast %cst_170 : f32 to vector<96x128xf32>
    %758 = arith.addf %757, %756 : vector<96x128xf32>
    %759 = arith.divf %757, %758 : vector<96x128xf32>
    %760 = vector.extract_strided_slice %595 {offsets = [0, 128], sizes = [96, 128], strides = [1, 1]} : vector<96x384xf32> to vector<96x128xf32>
    %761 = vector.extract_strided_slice %751 {offsets = [0, 128], sizes = [96, 128], strides = [1, 1]} : vector<96x384xf32> to vector<96x128xf32>
    %762 = arith.addf %760, %761 : vector<96x128xf32>
    %763 = arith.negf %762 : vector<96x128xf32>
    %764 = math.exp %763 : vector<96x128xf32>
    %cst_171 = arith.constant 1.000000e+00 : f32
    %765 = vector.broadcast %cst_171 : f32 to vector<96x128xf32>
    %766 = arith.addf %765, %764 : vector<96x128xf32>
    %767 = arith.divf %765, %766 : vector<96x128xf32>
    %768 = vector.extract_strided_slice %595 {offsets = [0, 256], sizes = [96, 128], strides = [1, 1]} : vector<96x384xf32> to vector<96x128xf32>
    %769 = vector.extract_strided_slice %751 {offsets = [0, 256], sizes = [96, 128], strides = [1, 1]} : vector<96x384xf32> to vector<96x128xf32>
    %770 = arith.mulf %759, %769 : vector<96x128xf32>
    %771 = arith.addf %768, %770 : vector<96x128xf32>
    %772 = math.tanh %771 : vector<96x128xf32>
    %cst_172 = arith.constant 1.000000e+00 : f32
    %773 = vector.broadcast %cst_172 : f32 to vector<96x128xf32>
    %774 = arith.subf %773, %767 : vector<96x128xf32>
    %775 = arith.mulf %774, %772 : vector<96x128xf32>
    %776 = arith.mulf %767, %747 : vector<96x128xf32>
    %777 = arith.addf %775, %776 : vector<96x128xf32>
    %c480 = arith.constant 480 : index
    %c0_173 = arith.constant 0 : index
    %778 = vector.load %arg36[%c480, %c0_173] : memref<576x128xf32, #tpu.memory_space<vmem>>, vector<96x128xf32>
    tpu.vector_store %arg36[%c480, %c0_173], %777 {strides = array<i32>} : memref<576x128xf32, #tpu.memory_space<vmem>>, vector<96x128xf32>,
    %c0_174 = arith.constant 0 : index
    %c0_175 = arith.constant 0 : index
    %779 = vector.load %arg36[%c0_174, %c0_175] : memref<576x128xf32, #tpu.memory_space<vmem>>, vector<576x128xf32>
    %c0_176 = arith.constant 0 : index
    %c0_177 = arith.constant 0 : index
    %780 = vector.load %arg28[%c0_176, %c0_177] : memref<128x128xf32, #tpu.memory_space<vmem>>, vector<128x128xf32>
    %cst_178 = arith.constant dense<0.000000e+00> : vector<576x128xf32>
    %781 = tpu.matmul %779, %780, %cst_178 {dimension_numbers = #tpu.dot_dimension_numbers<[1], [0], [0], [1], [0, 0, 1, 1], [], []>} : vector<576x128xf32>, vector<128x128xf32>, vector<576x128xf32> -> vector<576x128xf32>
    %c0_179 = arith.constant 0 : index
    %c0_180 = arith.constant 0 : index
    %782 = vector.load %arg29[%c0_179, %c0_180] : memref<1x128xf32, #tpu.memory_space<vmem>>, vector<1x128xf32>
    %783 = vector.broadcast %782 : vector<1x128xf32> to vector<576x128xf32>
    %784 = arith.addf %781, %783 : vector<576x128xf32>
    %c0_181 = arith.constant 0 : index
    %c0_182 = arith.constant 0 : index
    %785 = vector.load %arg34[%c0_181, %c0_182] : memref<576x128xf32, #tpu.memory_space<vmem>>, vector<576x128xf32>
    tpu.vector_store %arg34[%c0_181, %c0_182], %784 {strides = array<i32>} : memref<576x128xf32, #tpu.memory_space<vmem>>, vector<576x128xf32>,
    %c0_183 = arith.constant 0 : index
    %c0_184 = arith.constant 0 : index
    %786 = vector.load %arg34[%c0_183, %c0_184] : memref<576x128xf32, #tpu.memory_space<vmem>>, vector<96x128xf32>
    %787 = arith.addf %579, %786 : vector<96x128xf32>
    %c0_185 = arith.constant 0 : index
    %c0_186 = arith.constant 0 : index
    %788 = vector.load %arg35[%c0_185, %c0_186] : memref<576x128xf32, #tpu.memory_space<vmem>>, vector<96x128xf32>
    tpu.vector_store %arg35[%c0_185, %c0_186], %787 {strides = array<i32>} : memref<576x128xf32, #tpu.memory_space<vmem>>, vector<96x128xf32>,
    %c96_187 = arith.constant 96 : index
    %c0_188 = arith.constant 0 : index
    %789 = vector.load %arg34[%c96_187, %c0_188] : memref<576x128xf32, #tpu.memory_space<vmem>>, vector<96x128xf32>
    %790 = arith.addf %787, %789 : vector<96x128xf32>
    %c96_189 = arith.constant 96 : index
    %c0_190 = arith.constant 0 : index
    %791 = vector.load %arg35[%c96_189, %c0_190] : memref<576x128xf32, #tpu.memory_space<vmem>>, vector<96x128xf32>
    tpu.vector_store %arg35[%c96_189, %c0_190], %790 {strides = array<i32>} : memref<576x128xf32, #tpu.memory_space<vmem>>, vector<96x128xf32>,
    %c192_191 = arith.constant 192 : index
    %c0_192 = arith.constant 0 : index
    %792 = vector.load %arg34[%c192_191, %c0_192] : memref<576x128xf32, #tpu.memory_space<vmem>>, vector<96x128xf32>
    %793 = arith.addf %790, %792 : vector<96x128xf32>
    %c192_193 = arith.constant 192 : index
    %c0_194 = arith.constant 0 : index
    %794 = vector.load %arg35[%c192_193, %c0_194] : memref<576x128xf32, #tpu.memory_space<vmem>>, vector<96x128xf32>
    tpu.vector_store %arg35[%c192_193, %c0_194], %793 {strides = array<i32>} : memref<576x128xf32, #tpu.memory_space<vmem>>, vector<96x128xf32>,
    %c288_195 = arith.constant 288 : index
    %c0_196 = arith.constant 0 : index
    %795 = vector.load %arg34[%c288_195, %c0_196] : memref<576x128xf32, #tpu.memory_space<vmem>>, vector<96x128xf32>
    %796 = arith.addf %793, %795 : vector<96x128xf32>
    %c288_197 = arith.constant 288 : index
    %c0_198 = arith.constant 0 : index
    %797 = vector.load %arg35[%c288_197, %c0_198] : memref<576x128xf32, #tpu.memory_space<vmem>>, vector<96x128xf32>
    tpu.vector_store %arg35[%c288_197, %c0_198], %796 {strides = array<i32>} : memref<576x128xf32, #tpu.memory_space<vmem>>, vector<96x128xf32>,
    %c384_199 = arith.constant 384 : index
    %c0_200 = arith.constant 0 : index
    %798 = vector.load %arg34[%c384_199, %c0_200] : memref<576x128xf32, #tpu.memory_space<vmem>>, vector<96x128xf32>
    %799 = arith.addf %796, %798 : vector<96x128xf32>
    %c384_201 = arith.constant 384 : index
    %c0_202 = arith.constant 0 : index
    %800 = vector.load %arg35[%c384_201, %c0_202] : memref<576x128xf32, #tpu.memory_space<vmem>>, vector<96x128xf32>
    tpu.vector_store %arg35[%c384_201, %c0_202], %799 {strides = array<i32>} : memref<576x128xf32, #tpu.memory_space<vmem>>, vector<96x128xf32>,
    %c480_203 = arith.constant 480 : index
    %c0_204 = arith.constant 0 : index
    %801 = vector.load %arg34[%c480_203, %c0_204] : memref<576x128xf32, #tpu.memory_space<vmem>>, vector<96x128xf32>
    %802 = arith.addf %799, %801 : vector<96x128xf32>
    %c480_205 = arith.constant 480 : index
    %c0_206 = arith.constant 0 : index
    %803 = vector.load %arg35[%c480_205, %c0_206] : memref<576x128xf32, #tpu.memory_space<vmem>>, vector<96x128xf32>
    tpu.vector_store %arg35[%c480_205, %c0_206], %802 {strides = array<i32>} : memref<576x128xf32, #tpu.memory_space<vmem>>, vector<96x128xf32>,
    return
  }
}

</mosaic_0001>

<llo_original>
// kernel: tpu_custom_call.1
$region0: #{tpu_custom_call.1}
  #allocation0 [shape = 'u32[]', space=smem, size = 0x4, offset = 0x4, fixed_abs, tag = 'smem constant byte address 0x4 - core index']
  #allocation1 [shape = 'u32[144,128]{1,0:T(1,128)}', space=vmem, size = 0x12000, scoped, tag = 'internal scratch']
  #allocation2 [shape = 'f32[576,128]{1,0:T(8,128)}', space=vmem, size = 0x48000, scoped, tag = 'scratch operand']
  %s0 = inlined_call_operand.smem [shape: u32[36], index: -1, kind: input, shape index: {}]
  %s1 = sld [smem:[%s0]]
  %s2 = scalar_lea.smem %s0, 1
  %s3 = sld [smem:[%s2]]
  %s4 = scalar_lea.smem %s0, 2
  %s5 = sld [smem:[%s4]]
  %s6 = scalar_lea.smem %s0, 3
  %s7 = sld [smem:[%s6]]
  %s8 = scalar_lea.smem %s0, 4
  %s9 = sld [smem:[%s8]]
  %s10 = scalar_lea.smem %s0, 5
  %s11 = sld [smem:[%s10]]
  %s12 = scalar_lea.smem %s0, 6
  %s13 = sld [smem:[%s12]]
  %s14 = scalar_lea.smem %s0, 7
  %s15 = sld [smem:[%s14]]
  %s16 = scalar_lea.smem %s0, 8
  %s17 = sld [smem:[%s16]]
  %s18 = scalar_lea.smem %s0, 9
  %s19 = sld [smem:[%s18]]
  %s20 = scalar_lea.smem %s0, 10
  %s21 = sld [smem:[%s20]]
  %s22 = scalar_lea.smem %s0, 11
  %s23 = sld [smem:[%s22]]
  %s24 = scalar_lea.smem %s0, 12
  %s25 = sld [smem:[%s24]]
  %s26 = scalar_lea.smem %s0, 13
  %s27 = sld [smem:[%s26]]
  %s28 = scalar_lea.smem %s0, 14
  %s29 = sld [smem:[%s28]]
  %s30 = scalar_lea.smem %s0, 15
  %s31 = sld [smem:[%s30]]
  %s32 = scalar_lea.smem %s0, 16
  %s33 = sld [smem:[%s32]]
  %s34 = scalar_lea.smem %s0, 17
  %s35 = sld [smem:[%s34]]
  %s36 = scalar_lea.smem %s0, 18
  %s37 = sld [smem:[%s36]]
  %s38 = scalar_lea.smem %s0, 19
  %s39 = sld [smem:[%s38]]
  %s40 = scalar_lea.smem %s0, 20
  %s41 = sld [smem:[%s40]]
  %s42 = scalar_lea.smem %s0, 21
  %s43 = sld [smem:[%s42]]
  %s44 = scalar_lea.smem %s0, 22
  %s45 = sld [smem:[%s44]]
  %s46 = scalar_lea.smem %s0, 23
  %s47 = sld [smem:[%s46]]
  %s48 = scalar_lea.smem %s0, 24
  %s49 = sld [smem:[%s48]]
  %s50 = scalar_lea.smem %s0, 25
  %s51 = sld [smem:[%s50]]
  %s52 = scalar_lea.smem %s0, 26
  %s53 = sld [smem:[%s52]]
  %s54 = scalar_lea.smem %s0, 27
  %s55 = sld [smem:[%s54]]
  %s56 = scalar_lea.smem %s0, 28
  %s57 = sld [smem:[%s56]]
  %s58 = scalar_lea.smem %s0, 29
  %s59 = sld [smem:[%s58]]
  %s60 = scalar_lea.smem %s0, 30
  %s61 = sld [smem:[%s60]]
  %s62 = scalar_lea.smem %s0, 31
  %s63 = sld [smem:[%s62]]
  %s64 = scalar_lea.smem %s0, 32
  %s65 = sld [smem:[%s64]]
  %s66 = scalar_lea.smem %s0, 33
  %s67 = sld [smem:[%s66]]
  %s68 = scalar_lea.smem %s0, 34
  %s69 = sld [smem:[%s68]]
  %s70 = scalar_lea.smem %s0, 35
  %s71 = sld [smem:[%s70]]
  %72 = xla_tuple %s61, %s63, %s65, %s67, %s69, %s71
  %s73 = sld [smem:[#allocation0]]
  $region214: #{tpu_custom_call.1} parent=0
    _
  %s75 = ssub.s32 1, %s73
  %s76 = scalar_select 0, %s75, %s73
  $region1: #{tpu_custom_call.1} parent=0
    #allocation3 [shape = 'u8[49152]{0}', space=vmem, size = 0xc000, scoped, tag = 'input window, operand 4, single buffered']
    #allocation4 [shape = 's32[1]{0}', space=sflag, size = 0x4, scoped, tag = 'scoped memory for tpu_custom_call.1']
    #allocation5 [shape = 's32[1]{0}', space=sflag, size = 0x4, scoped, tag = 'scoped memory for tpu_custom_call.1']
    #allocation6 [shape = 'u8[24576]{0}', space=vmem, size = 0x6000, scoped, tag = 'input window, operand 8, single buffered']
    #allocation7 [shape = 's32[1]{0}', space=sflag, size = 0x4, scoped, tag = 'scoped memory for tpu_custom_call.1']
    #allocation8 [shape = 'u8[196608]{0}', space=vmem, size = 0x30000, scoped, tag = 'input window, operand 10, single buffered']
    #allocation9 [shape = 'u8[24576]{0}', space=vmem, size = 0x6000, scoped, tag = 'input window, operand 14, single buffered']
    #allocation10 [shape = 's32[1]{0}', space=sflag, size = 0x4, scoped, tag = 'scoped memory for tpu_custom_call.1']
    #allocation11 [shape = 'u8[196608]{0}', space=vmem, size = 0x30000, scoped, tag = 'input window, operand 16, single buffered']
    #allocation12 [shape = 'u8[131072]{0}', space=vmem, size = 0x20000, scoped, tag = 'input window, operand 18, single buffered']
    #allocation13 [shape = 's32[1]{0}', space=sflag, size = 0x4, scoped, tag = 'scoped memory for tpu_custom_call.1']
    #allocation14 [shape = 'u8[131072]{0}', space=vmem, size = 0x20000, scoped, tag = 'input window, operand 19, single buffered']
    #allocation15 [shape = 'u8[65536]{0}', space=vmem, size = 0x10000, scoped, tag = 'input window, operand 22, single buffered']
    #allocation16 [shape = 's32[1]{0}', space=sflag, size = 0x4, scoped, tag = 'scoped memory for tpu_custom_call.1']
    #allocation17 [shape = 'u8[196608]{0}', space=vmem, size = 0x30000, scoped, tag = 'input window, operand 24, single buffered']
    #allocation18 [shape = 'u8[196608]{0}', space=vmem, size = 0x30000, scoped, tag = 'input window, operand 26, single buffered']
    #allocation19 [shape = 's32[1]{0}', space=sflag, size = 0x4, scoped, tag = 'scoped memory for tpu_custom_call.1']
    #allocation20 [shape = 'u8[65536]{0}', space=vmem, size = 0x10000, scoped, tag = 'input window, operand 28, single buffered']
    #allocation21 [shape = 'u8[4096]{0}', space=vmem, size = 0x1000, scoped, tag = 'output window, operand 0, single buffered']
    #allocation22 [shape = 'u8[4096]{0}', space=vmem, size = 0x1000, scoped, tag = 'output window, operand 1, single buffered']
    #allocation23 [shape = 's32[1]{0}', space=sflag, size = 0x4, scoped, tag = 'scoped memory for tpu_custom_call.1']
    #allocation24 [shape = 'u8[4096]{0}', space=vmem, size = 0x1000, scoped, tag = 'output window, operand 2, single buffered']
    #allocation25 [shape = 'u8[49152]{0}', space=vmem, size = 0xc000, scoped, tag = 'output window, operand 3, single buffered']
    #allocation26 [shape = 's32[1]{0}', space=sflag, size = 0x4, scoped, tag = 'scoped memory for tpu_custom_call.1']
    #allocation27 [shape = 'u8[294912]{0}', space=vmem, size = 0x48000, scoped, tag = 'output window, operand 4, single buffered']
    #allocation28 [shape = 'u8[294912]{0}', space=vmem, size = 0x48000, scoped, tag = 'output window, operand 5, single buffered']
    #allocation29 [shape = 's32[1]{0}', space=sflag, size = 0x4, scoped, tag = 'scoped memory for tpu_custom_call.1']
    %77 = vsyncpa [#allocation4], 0
    %78 = vsyncpa [#allocation7], 0
    %79 = vsyncpa [#allocation10], 0
    %80 = vsyncpa [#allocation13], 0
    %81 = vsyncpa [#allocation16], 0
    %82 = vsyncpa [#allocation19], 0
    %83 = vsyncpa [#allocation5], 0
    %84 = vsyncpa [#allocation23], 0
    %85 = vsyncpa [#allocation26], 0
    %86 = vsyncpa [#allocation29], 0
    // Predicated region
    $region2: #{tpu_custom_call.1} parent=1 // pred_check
      _
    $region3: #{tpu_custom_call.1} parent=1 // pred_check_branch
      %88 = sbr.rel (0) target = $region5
    $region4: #{tpu_custom_call.1} parent=1 // pred_region
      _
    $region5: #{tpu_custom_call.1} parent=1 // pred_fallthru
      _
    // Predicated region
    $region6: #{tpu_custom_call.1} parent=1 // pred_check
      _
    $region7: #{tpu_custom_call.1} parent=1 // pred_check_branch
      %90 = sbr.rel (0) target = $region9
    $region8: #{tpu_custom_call.1} parent=1 // pred_region
      _
    $region9: #{tpu_custom_call.1} parent=1 // pred_fallthru
      _
    // Predicated region
    $region10: #{tpu_custom_call.1} parent=1 // pred_check
      _
    $region11: #{tpu_custom_call.1} parent=1 // pred_check_branch
      %92 = sbr.rel (0) target = $region13
    $region12: #{tpu_custom_call.1} parent=1 // pred_region
      _
    $region13: #{tpu_custom_call.1} parent=1 // pred_fallthru
      _
    // Predicated region
    $region14: #{tpu_custom_call.1} parent=1 // pred_check
      _
    $region15: #{tpu_custom_call.1} parent=1 // pred_check_branch
      %94 = sbr.rel (0) target = $region17
    $region16: #{tpu_custom_call.1} parent=1 // pred_region
      _
    $region17: #{tpu_custom_call.1} parent=1 // pred_fallthru
      _
    // Predicated region
    $region18: #{tpu_custom_call.1} parent=1 // pred_check
      _
    $region19: #{tpu_custom_call.1} parent=1 // pred_check_branch
      %96 = sbr.rel (0) target = $region21
    $region20: #{tpu_custom_call.1} parent=1 // pred_region
      %s98 = ssub.s32 1536, 1536
      %99 = vsyncadd [#allocation4], %s98
      %s100 = sshll.u32 [#allocation3], 4
      %s101 = int_to_ptr.vmem [resolvable:$true] %s100
      %106 = dma.hbm_to_vmem [thread:$0]  %s9, 1536, %s101, [#allocation4], 128, 128, 8
    $region21: #{tpu_custom_call.1} parent=1 // pred_fallthru
      _
    // Predicated region
    $region22: #{tpu_custom_call.1} parent=1 // pred_check
      _
    $region23: #{tpu_custom_call.1} parent=1 // pred_check_branch
      %108 = sbr.rel (0) target = $region25
    $region24: #{tpu_custom_call.1} parent=1 // pred_region
      _
    $region25: #{tpu_custom_call.1} parent=1 // pred_fallthru
      _
    // Predicated region
    $region26: #{tpu_custom_call.1} parent=1 // pred_check
      _
    $region27: #{tpu_custom_call.1} parent=1 // pred_check_branch
      %110 = sbr.rel (0) target = $region29
    $region28: #{tpu_custom_call.1} parent=1 // pred_region
      _
    $region29: #{tpu_custom_call.1} parent=1 // pred_fallthru
      _
    // Predicated region
    $region30: #{tpu_custom_call.1} parent=1 // pred_check
      _
    $region31: #{tpu_custom_call.1} parent=1 // pred_check_branch
      %112 = sbr.rel (0) target = $region33
    $region32: #{tpu_custom_call.1} parent=1 // pred_region
      _
    $region33: #{tpu_custom_call.1} parent=1 // pred_fallthru
      _
    // Predicated region
    $region34: #{tpu_custom_call.1} parent=1 // pred_check
      _
    $region35: #{tpu_custom_call.1} parent=1 // pred_check_branch
      %114 = sbr.rel (0) target = $region37
    $region36: #{tpu_custom_call.1} parent=1 // pred_region
      %s116 = ssub.s32 768, 768
      %117 = vsyncadd [#allocation7], %s116
      %s118 = sshll.u32 [#allocation6], 4
      %s119 = int_to_ptr.vmem [resolvable:$true] %s118
      %124 = dma.hbm_to_vmem [thread:$0]  %s17, 768, %s119, [#allocation7], 384, 384, 24
    $region37: #{tpu_custom_call.1} parent=1 // pred_fallthru
      _
    // Predicated region
    $region38: #{tpu_custom_call.1} parent=1 // pred_check
      _
    $region39: #{tpu_custom_call.1} parent=1 // pred_check_branch
      %126 = sbr.rel (0) target = $region41
    $region40: #{tpu_custom_call.1} parent=1 // pred_region
      _
    $region41: #{tpu_custom_call.1} parent=1 // pred_fallthru
      _
    // Predicated region
    $region42: #{tpu_custom_call.1} parent=1 // pred_check
      _
    $region43: #{tpu_custom_call.1} parent=1 // pred_check_branch
      %128 = sbr.rel (0) target = $region45
    $region44: #{tpu_custom_call.1} parent=1 // pred_region
      %s130 = ssub.s32 6144, 6144
      %131 = vsyncadd [#allocation7], %s130
      %s132 = sshll.u32 [#allocation8], 4
      %s133 = int_to_ptr.vmem [resolvable:$true] %s132
      %138 = dma.hbm_to_vmem [thread:$0]  %s21, 6144, %s133, [#allocation7], 384, 384, 24
    $region45: #{tpu_custom_call.1} parent=1 // pred_fallthru
      _
    // Predicated region
    $region46: #{tpu_custom_call.1} parent=1 // pred_check
      _
    $region47: #{tpu_custom_call.1} parent=1 // pred_check_branch
      %140 = sbr.rel (0) target = $region49
    $region48: #{tpu_custom_call.1} parent=1 // pred_region
      _
    $region49: #{tpu_custom_call.1} parent=1 // pred_fallthru
      _
    // Predicated region
    $region50: #{tpu_custom_call.1} parent=1 // pred_check
      _
    $region51: #{tpu_custom_call.1} parent=1 // pred_check_branch
      %142 = sbr.rel (0) target = $region53
    $region52: #{tpu_custom_call.1} parent=1 // pred_region
      _
    $region53: #{tpu_custom_call.1} parent=1 // pred_fallthru
      _
    // Predicated region
    $region54: #{tpu_custom_call.1} parent=1 // pred_check
      _
    $region55: #{tpu_custom_call.1} parent=1 // pred_check_branch
      %144 = sbr.rel (0) target = $region57
    $region56: #{tpu_custom_call.1} parent=1 // pred_region
      _
    $region57: #{tpu_custom_call.1} parent=1 // pred_fallthru
      _
    // Predicated region
    $region58: #{tpu_custom_call.1} parent=1 // pred_check
      _
    $region59: #{tpu_custom_call.1} parent=1 // pred_check_branch
      %146 = sbr.rel (0) target = $region61
    $region60: #{tpu_custom_call.1} parent=1 // pred_region
      %s148 = ssub.s32 768, 768
      %149 = vsyncadd [#allocation10], %s148
      %s150 = sshll.u32 [#allocation9], 4
      %s151 = int_to_ptr.vmem [resolvable:$true] %s150
      %156 = dma.hbm_to_vmem [thread:$0]  %s29, 768, %s151, [#allocation10], 384, 384, 24
    $region61: #{tpu_custom_call.1} parent=1 // pred_fallthru
      _
    // Predicated region
    $region62: #{tpu_custom_call.1} parent=1 // pred_check
      _
    $region63: #{tpu_custom_call.1} parent=1 // pred_check_branch
      %158 = sbr.rel (0) target = $region65
    $region64: #{tpu_custom_call.1} parent=1 // pred_region
      _
    $region65: #{tpu_custom_call.1} parent=1 // pred_fallthru
      _
    // Predicated region
    $region66: #{tpu_custom_call.1} parent=1 // pred_check
      _
    $region67: #{tpu_custom_call.1} parent=1 // pred_check_branch
      %160 = sbr.rel (0) target = $region69
    $region68: #{tpu_custom_call.1} parent=1 // pred_region
      %s162 = ssub.s32 6144, 6144
      %163 = vsyncadd [#allocation10], %s162
      %s164 = sshll.u32 [#allocation11], 4
      %s165 = int_to_ptr.vmem [resolvable:$true] %s164
      %170 = dma.hbm_to_vmem [thread:$0]  %s33, 6144, %s165, [#allocation10], 384, 384, 24
    $region69: #{tpu_custom_call.1} parent=1 // pred_fallthru
      _
    // Predicated region
    $region70: #{tpu_custom_call.1} parent=1 // pred_check
      _
    $region71: #{tpu_custom_call.1} parent=1 // pred_check_branch
      %172 = sbr.rel (0) target = $region73
    $region72: #{tpu_custom_call.1} parent=1 // pred_region
      _
    $region73: #{tpu_custom_call.1} parent=1 // pred_fallthru
      _
    // Predicated region
    $region74: #{tpu_custom_call.1} parent=1 // pred_check
      _
    $region75: #{tpu_custom_call.1} parent=1 // pred_check_branch
      %174 = sbr.rel (0) target = $region77
    $region76: #{tpu_custom_call.1} parent=1 // pred_region
      %s176 = ssub.s32 4096, 4096
      %177 = vsyncadd [#allocation13], %s176
      %s178 = sshll.u32 [#allocation12], 4
      %s179 = int_to_ptr.vmem [resolvable:$true] %s178
      %184 = dma.hbm_to_vmem [thread:$0]  %s37, 4096, %s179, [#allocation13], 256, 256, 16
    $region77: #{tpu_custom_call.1} parent=1 // pred_fallthru
      _
    // Predicated region
    $region78: #{tpu_custom_call.1} parent=1 // pred_check
      _
    $region79: #{tpu_custom_call.1} parent=1 // pred_check_branch
      %186 = sbr.rel (0) target = $region81
    $region80: #{tpu_custom_call.1} parent=1 // pred_region
      %s188 = ssub.s32 4096, 4096
      %189 = vsyncadd [#allocation13], %s188
      %s190 = sshll.u32 [#allocation14], 4
      %s191 = int_to_ptr.vmem [resolvable:$true] %s190
      %196 = dma.hbm_to_vmem [thread:$0]  %s39, 4096, %s191, [#allocation13], 256, 256, 16
    $region81: #{tpu_custom_call.1} parent=1 // pred_fallthru
      _
    // Predicated region
    $region82: #{tpu_custom_call.1} parent=1 // pred_check
      _
    $region83: #{tpu_custom_call.1} parent=1 // pred_check_branch
      %198 = sbr.rel (0) target = $region85
    $region84: #{tpu_custom_call.1} parent=1 // pred_region
      _
    $region85: #{tpu_custom_call.1} parent=1 // pred_fallthru
      _
    // Predicated region
    $region86: #{tpu_custom_call.1} parent=1 // pred_check
      _
    $region87: #{tpu_custom_call.1} parent=1 // pred_check_branch
      %200 = sbr.rel (0) target = $region89
    $region88: #{tpu_custom_call.1} parent=1 // pred_region
      _
    $region89: #{tpu_custom_call.1} parent=1 // pred_fallthru
      _
    // Predicated region
    $region90: #{tpu_custom_call.1} parent=1 // pred_check
      _
    $region91: #{tpu_custom_call.1} parent=1 // pred_check_branch
      %202 = sbr.rel (0) target = $region93
    $region92: #{tpu_custom_call.1} parent=1 // pred_region
      %s204 = ssub.s32 2048, 2048
      %205 = vsyncadd [#allocation16], %s204
      %s206 = sshll.u32 [#allocation15], 4
      %s207 = int_to_ptr.vmem [resolvable:$true] %s206
      %212 = dma.hbm_to_vmem [thread:$0]  %s45, 2048, %s207, [#allocation16], 128, 128, 8
    $region93: #{tpu_custom_call.1} parent=1 // pred_fallthru
      _
    // Predicated region
    $region94: #{tpu_custom_call.1} parent=1 // pred_check
      _
    $region95: #{tpu_custom_call.1} parent=1 // pred_check_branch
      %214 = sbr.rel (0) target = $region97
    $region96: #{tpu_custom_call.1} parent=1 // pred_region
      _
    $region97: #{tpu_custom_call.1} parent=1 // pred_fallthru
      _
    // Predicated region
    $region98: #{tpu_custom_call.1} parent=1 // pred_check
      _
    $region99: #{tpu_custom_call.1} parent=1 // pred_check_branch
      %216 = sbr.rel (0) target = $region101
    $region100: #{tpu_custom_call.1} parent=1 // pred_region
      %s218 = ssub.s32 6144, 6144
      %219 = vsyncadd [#allocation16], %s218
      %s220 = sshll.u32 [#allocation17], 4
      %s221 = int_to_ptr.vmem [resolvable:$true] %s220
      %226 = dma.hbm_to_vmem [thread:$0]  %s49, 6144, %s221, [#allocation16], 384, 384, 24
    $region101: #{tpu_custom_call.1} parent=1 // pred_fallthru
      _
    // Predicated region
    $region102: #{tpu_custom_call.1} parent=1 // pred_check
      _
    $region103: #{tpu_custom_call.1} parent=1 // pred_check_branch
      %228 = sbr.rel (0) target = $region105
    $region104: #{tpu_custom_call.1} parent=1 // pred_region
      _
    $region105: #{tpu_custom_call.1} parent=1 // pred_fallthru
      _
    // Predicated region
    $region106: #{tpu_custom_call.1} parent=1 // pred_check
      _
    $region107: #{tpu_custom_call.1} parent=1 // pred_check_branch
      %230 = sbr.rel (0) target = $region109
    $region108: #{tpu_custom_call.1} parent=1 // pred_region
      %s232 = ssub.s32 6144, 6144
      %233 = vsyncadd [#allocation19], %s232
      %s234 = sshll.u32 [#allocation18], 4
      %s235 = int_to_ptr.vmem [resolvable:$true] %s234
      %240 = dma.hbm_to_vmem [thread:$0]  %s53, 6144, %s235, [#allocation19], 384, 384, 24
    $region109: #{tpu_custom_call.1} parent=1 // pred_fallthru
      _
    // Predicated region
    $region110: #{tpu_custom_call.1} parent=1 // pred_check
      _
    $region111: #{tpu_custom_call.1} parent=1 // pred_check_branch
      %242 = sbr.rel (0) target = $region113
    $region112: #{tpu_custom_call.1} parent=1 // pred_region
      _
    $region113: #{tpu_custom_call.1} parent=1 // pred_fallthru
      _
    // Predicated region
    $region114: #{tpu_custom_call.1} parent=1 // pred_check
      _
    $region115: #{tpu_custom_call.1} parent=1 // pred_check_branch
      %244 = sbr.rel (0) target = $region117
    $region116: #{tpu_custom_call.1} parent=1 // pred_region
      %s246 = ssub.s32 2048, 2048
      %247 = vsyncadd [#allocation19], %s246
      %s248 = sshll.u32 [#allocation20], 4
      %s249 = int_to_ptr.vmem [resolvable:$true] %s248
      %254 = dma.hbm_to_vmem [thread:$0]  %s57, 2048, %s249, [#allocation19], 128, 128, 8
    $region117: #{tpu_custom_call.1} parent=1 // pred_fallthru
      _
    // Predicated region
    $region118: #{tpu_custom_call.1} parent=1 // pred_check
      _
    $region119: #{tpu_custom_call.1} parent=1 // pred_check_branch
      %256 = sbr.rel (0) target = $region121
    $region120: #{tpu_custom_call.1} parent=1 // pred_region
      _
    $region121: #{tpu_custom_call.1} parent=1 // pred_fallthru
      _
    // Predicated region
    $region122: #{tpu_custom_call.1} parent=1 // pred_check
      _
    $region123: #{tpu_custom_call.1} parent=1 // pred_check_branch
      %258 = sbr.rel (0) target = $region125
    $region124: #{tpu_custom_call.1} parent=1 // pred_region
      %259 = dma.done [#allocation4], 1536
    $region125: #{tpu_custom_call.1} parent=1 // pred_fallthru
      _
    // Predicated region
    $region126: #{tpu_custom_call.1} parent=1 // pred_check
      _
    $region127: #{tpu_custom_call.1} parent=1 // pred_check_branch
      %261 = sbr.rel (0) target = $region129
    $region128: #{tpu_custom_call.1} parent=1 // pred_region
      %262 = dma.done [#allocation7], 768
    $region129: #{tpu_custom_call.1} parent=1 // pred_fallthru
      _
    // Predicated region
    $region130: #{tpu_custom_call.1} parent=1 // pred_check
      _
    $region131: #{tpu_custom_call.1} parent=1 // pred_check_branch
      %264 = sbr.rel (0) target = $region133
    $region132: #{tpu_custom_call.1} parent=1 // pred_region
      %265 = dma.done [#allocation7], 6144
    $region133: #{tpu_custom_call.1} parent=1 // pred_fallthru
      _
    // Predicated region
    $region134: #{tpu_custom_call.1} parent=1 // pred_check
      _
    $region135: #{tpu_custom_call.1} parent=1 // pred_check_branch
      %267 = sbr.rel (0) target = $region137
    $region136: #{tpu_custom_call.1} parent=1 // pred_region
      %268 = dma.done [#allocation10], 768
    $region137: #{tpu_custom_call.1} parent=1 // pred_fallthru
      _
    // Predicated region
    $region138: #{tpu_custom_call.1} parent=1 // pred_check
      _
    $region139: #{tpu_custom_call.1} parent=1 // pred_check_branch
      %270 = sbr.rel (0) target = $region141
    $region140: #{tpu_custom_call.1} parent=1 // pred_region
      %271 = dma.done [#allocation10], 6144
    $region141: #{tpu_custom_call.1} parent=1 // pred_fallthru
      _
    // Predicated region
    $region142: #{tpu_custom_call.1} parent=1 // pred_check
      _
    $region143: #{tpu_custom_call.1} parent=1 // pred_check_branch
      %273 = sbr.rel (0) target = $region145
    $region144: #{tpu_custom_call.1} parent=1 // pred_region
      %274 = dma.done [#allocation13], 4096
    $region145: #{tpu_custom_call.1} parent=1 // pred_fallthru
      _
    // Predicated region
    $region146: #{tpu_custom_call.1} parent=1 // pred_check
      _
    $region147: #{tpu_custom_call.1} parent=1 // pred_check_branch
      %276 = sbr.rel (0) target = $region149
    $region148: #{tpu_custom_call.1} parent=1 // pred_region
      %277 = dma.done [#allocation13], 4096
    $region149: #{tpu_custom_call.1} parent=1 // pred_fallthru
      _
    // Predicated region
    $region150: #{tpu_custom_call.1} parent=1 // pred_check
      _
    $region151: #{tpu_custom_call.1} parent=1 // pred_check_branch
      %279 = sbr.rel (0) target = $region153
    $region152: #{tpu_custom_call.1} parent=1 // pred_region
      %280 = dma.done [#allocation16], 2048
    $region153: #{tpu_custom_call.1} parent=1 // pred_fallthru
      _
    // Predicated region
    $region154: #{tpu_custom_call.1} parent=1 // pred_check
      _
    $region155: #{tpu_custom_call.1} parent=1 // pred_check_branch
      %282 = sbr.rel (0) target = $region157
    $region156: #{tpu_custom_call.1} parent=1 // pred_region
      %283 = dma.done [#allocation16], 6144
    $region157: #{tpu_custom_call.1} parent=1 // pred_fallthru
      _
    // Predicated region
    $region158: #{tpu_custom_call.1} parent=1 // pred_check
      _
    $region159: #{tpu_custom_call.1} parent=1 // pred_check_branch
      %285 = sbr.rel (0) target = $region161
    $region160: #{tpu_custom_call.1} parent=1 // pred_region
      %286 = dma.done [#allocation19], 6144
    $region161: #{tpu_custom_call.1} parent=1 // pred_fallthru
      _
    // Predicated region
    $region162: #{tpu_custom_call.1} parent=1 // pred_check
      _
    $region163: #{tpu_custom_call.1} parent=1 // pred_check_branch
      %288 = sbr.rel (0) target = $region165
    $region164: #{tpu_custom_call.1} parent=1 // pred_region
      %289 = dma.done [#allocation19], 2048
    $region165: #{tpu_custom_call.1} parent=1 // pred_fallthru
      _
    %v290 = vld [vmem:[%s1] sm:$0xff]
    %v291 = vld [vmem:[%s1 + $0x8] sm:$0xff]
    %v292 = vld [vmem:[%s1 + $0x10] sm:$0xff]
    %v293 = vld [vmem:[%s1 + $0x18] sm:$0xff]
    %v294 = vld [vmem:[%s1 + $0x20] sm:$0xff]
    %v295 = vld [vmem:[%s1 + $0x28] sm:$0xff]
    %v296 = vld [vmem:[%s1 + $0x30] sm:$0xff]
    %v297 = vld [vmem:[%s1 + $0x38] sm:$0xff]
    %v298 = vld [vmem:[%s13] sm:$0x1]
    %300 = vset.pattern.permute.xlu0 0
    %301 = vperm.xlu0 %300, %v290
    %v302 = vpop.permute.xlu0 %301
    %305 = vset.pattern.permute.xlu0 0
    %306 = vperm.xlu0 %305, %v291
    %v307 = vpop.permute.xlu0 %306
    %310 = vset.pattern.permute.xlu0 0
    %311 = vperm.xlu0 %310, %v292
    %v312 = vpop.permute.xlu0 %311
    %315 = vset.pattern.permute.xlu0 0
    %316 = vperm.xlu0 %315, %v293
    %v317 = vpop.permute.xlu0 %316
    %320 = vset.pattern.permute.xlu0 0
    %321 = vperm.xlu0 %320, %v294
    %v322 = vpop.permute.xlu0 %321
    %325 = vset.pattern.permute.xlu0 0
    %326 = vperm.xlu0 %325, %v295
    %v327 = vpop.permute.xlu0 %326
    %330 = vset.pattern.permute.xlu0 0
    %331 = vperm.xlu0 %330, %v296
    %v332 = vpop.permute.xlu0 %331
    %335 = vset.pattern.permute.xlu0 0
    %336 = vperm.xlu0 %335, %v297
    %v337 = vpop.permute.xlu0 %336
    %v339 = vlaneseq
    %v340 = vshrl.u32 %v339, 7
    %v341 = vsub.s32 0, %v340
    %v342 = vrot.slane %v298, %v341
    %v343 = vmul.f32 %v302, %v342
    %v344 = vmul.f32 %v307, %v342
    %v345 = vmul.f32 %v312, %v342
    %v346 = vmul.f32 %v317, %v342
    %v347 = vmul.f32 %v322, %v342
    %v348 = vmul.f32 %v327, %v342
    %v349 = vmul.f32 %v332, %v342
    %v350 = vmul.f32 %v337, %v342
    %v351 = vld [vmem:[%s13 + $0x1] sm:$0x1]
    %352 = vset.pattern.permute.xlu0 1
    %353 = vperm.xlu0 %352, %v290
    %v354 = vpop.permute.xlu0 %353
    %356 = vset.pattern.permute.xlu0 1
    %357 = vperm.xlu0 %356, %v291
    %v358 = vpop.permute.xlu0 %357
    %360 = vset.pattern.permute.xlu0 1
    %361 = vperm.xlu0 %360, %v292
    %v362 = vpop.permute.xlu0 %361
    %364 = vset.pattern.permute.xlu0 1
    %365 = vperm.xlu0 %364, %v293
    %v366 = vpop.permute.xlu0 %365
    %368 = vset.pattern.permute.xlu0 1
    %369 = vperm.xlu0 %368, %v294
    %v370 = vpop.permute.xlu0 %369
    %372 = vset.pattern.permute.xlu0 1
    %373 = vperm.xlu0 %372, %v295
    %v374 = vpop.permute.xlu0 %373
    %376 = vset.pattern.permute.xlu0 1
    %377 = vperm.xlu0 %376, %v296
    %v378 = vpop.permute.xlu0 %377
    %380 = vset.pattern.permute.xlu0 1
    %381 = vperm.xlu0 %380, %v297
    %v382 = vpop.permute.xlu0 %381
    %v384 = vlaneseq
    %v385 = vshrl.u32 %v384, 7
    %v386 = vsub.s32 0, %v385
    %v387 = vrot.slane %v351, %v386
    %v388 = vmul.f32 %v354, %v387
    %v389 = vmul.f32 %v358, %v387
    %v390 = vmul.f32 %v362, %v387
    %v391 = vmul.f32 %v366, %v387
    %v392 = vmul.f32 %v370, %v387
    %v393 = vmul.f32 %v374, %v387
    %v394 = vmul.f32 %v378, %v387
    %v395 = vmul.f32 %v382, %v387
    %v396 = vadd.f32 %v343, %v388
    %v397 = vadd.f32 %v344, %v389
    %v398 = vadd.f32 %v345, %v390
    %v399 = vadd.f32 %v346, %v391
    %v400 = vadd.f32 %v347, %v392
    %v401 = vadd.f32 %v348, %v393
    %v402 = vadd.f32 %v349, %v394
    %v403 = vadd.f32 %v350, %v395
    %v404 = vld [vmem:[%s15] sm:$0x1]
    %v406 = vlaneseq
    %v407 = vshrl.u32 %v406, 7
    %v408 = vsub.s32 0, %v407
    %v409 = vrot.slane %v404, %v408
    %v411 = vadd.f32 %v396, %v409
    %v412 = vadd.f32 %v397, %v409
    %v413 = vadd.f32 %v398, %v409
    %v414 = vadd.f32 %v399, %v409
    %v415 = vadd.f32 %v400, %v409
    %v416 = vadd.f32 %v401, %v409
    %v417 = vadd.f32 %v402, %v409
    %v418 = vadd.f32 %v403, %v409
    %v419 = vmax.f32 %v411, 0.0
    %v420 = vmax.f32 %v412, 0.0
    %v421 = vmax.f32 %v413, 0.0
    %v422 = vmax.f32 %v414, 0.0
    %v423 = vmax.f32 %v415, 0.0
    %v424 = vmax.f32 %v416, 0.0
    %v425 = vmax.f32 %v417, 0.0
    %v426 = vmax.f32 %v418, 0.0
    %v427 = vld [vmem:[#allocation6] sm:$0xff]
    %v428 = vld [vmem:[#allocation6 + $0x8] sm:$0xff]
    %v429 = vld [vmem:[#allocation6 + $0x10] sm:$0xff]
    %v430 = vld [vmem:[#allocation6 + $0x18] sm:$0xff]
    %v431 = vld [vmem:[#allocation6 + $0x20] sm:$0xff]
    %v432 = vld [vmem:[#allocation6 + $0x28] sm:$0xff]
    %v433 = vld [vmem:[%s19] sm:$0x7]
    %v435 = vlaneseq
    %v436 = vshrl.u32 %v435, 7
    %v437 = vsub.s32 0, %v436
    %v438 = vrot.slane %v433, %v437
    %v439 = vlaneseq
    %v440 = vshrl.u32 %v439, 7
    %v441 = vsub.s32 1, %v440
    %v442 = vrot.slane %v433, %v441
    %v443 = vlaneseq
    %v444 = vshrl.u32 %v443, 7
    %v445 = vsub.s32 2, %v444
    %v446 = vrot.slane %v433, %v445
    %vm450 = vcmask 130048
    %v452 = vsel %vm450, %v419, 0
    %v455 = vsel %vm450, %v420, 0
    %v458 = vsel %vm450, %v421, 0
    %v461 = vsel %vm450, %v422, 0
    %v464 = vsel %vm450, %v423, 0
    %v467 = vsel %vm450, %v424, 0
    %v470 = vsel %vm450, %v425, 0
    %v473 = vsel %vm450, %v426, 0
    %475 = vmatprep.subr.mxu0 0.0
    %476 = vmatpush1.msra.mxu0 0.0
    %477 = vmatprep.subr.mxu0 0.0
    %478 = vmatpush1.msra.mxu0 0.0
    %479 = vmatprep.subr.mxu0 0.0
    %480 = vmatpush1.msra.mxu0 0.0
    %481 = vmatprep.subr.mxu0 0.0
    %482 = vmatpush1.msra.mxu0 0.0
    %483 = vmatprep.subr.mxu0 0.0
    %484 = vmatpush1.msra.mxu0 0.0
    %485 = vmatprep.subr.mxu0 0.0
    %486 = vmatpush1.msra.mxu0 0.0
    %487 = vmatprep.subr.mxu0 0.0
    %488 = vmatpush1.msra.mxu0 0.0
    %489 = vmatprep.subr.mxu0 0.0
    %490 = vmatpush1.msra.mxu0 0.0
    %491 = vmatprep.subr.mxu0 0.0
    %492 = vmatpush1.msra.mxu0 0.0
    %493 = vmatprep.subr.mxu0 0.0
    %494 = vmatpush1.msra.mxu0 0.0
    %495 = vmatprep.subr.mxu0 0.0
    %496 = vmatpush1.msra.mxu0 0.0
    %497 = vmatprep.subr.mxu0 0.0
    %498 = vmatpush1.msra.mxu0 0.0
    %499 = vmatprep.subr.mxu0 0.0
    %500 = vmatpush1.msra.mxu0 0.0
    %501 = vmatprep.subr.mxu0 0.0
    %502 = vmatpush1.msra.mxu0 0.0
    %503 = vmatprep.subr.mxu0 %v431
    %504 = vmatpush1.msra.mxu0 %v430
    %505 = vmatprep.subr.mxu0 %v428
    %506 = vmatpush1.msra.mxu0 %v427
    %507 = vmatprep.subr.mxu0 0.0
    %508 = vmatpush2.msra.mxu0 0.0
    %509 = vmatprep.subr.mxu0 0.0
    %510 = vmatpush2.msra.mxu0 0.0
    %511 = vmatprep.subr.mxu0 0.0
    %512 = vmatpush2.msra.mxu0 0.0
    %513 = vmatprep.subr.mxu0 0.0
    %514 = vmatpush2.msra.mxu0 0.0
    %515 = vmatprep.subr.mxu0 0.0
    %516 = vmatpush2.msra.mxu0 0.0
    %517 = vmatprep.subr.mxu0 0.0
    %518 = vmatpush2.msra.mxu0 0.0
    %519 = vmatprep.subr.mxu0 0.0
    %520 = vmatpush2.msra.mxu0 0.0
    %521 = vmatprep.subr.mxu0 0.0
    %522 = vmatpush2.msra.mxu0 0.0
    %523 = vmatprep.subr.mxu0 0.0
    %524 = vmatpush2.msra.mxu0 0.0
    %525 = vmatprep.subr.mxu0 0.0
    %526 = vmatpush2.msra.mxu0 0.0
    %527 = vmatprep.subr.mxu0 0.0
    %528 = vmatpush2.msra.mxu0 0.0
    %529 = vmatprep.subr.mxu0 0.0
    %530 = vmatpush2.msra.mxu0 0.0
    %531 = vmatprep.subr.mxu0 0.0
    %532 = vmatpush2.msra.mxu0 0.0
    %533 = vmatprep.subr.mxu0 0.0
    %534 = vmatpush2.msra.mxu0 0.0
    %535 = vmatprep.subr.mxu0 0.0
    %536 = vmatpush2.msra.mxu0 0.0
    %537 = vmatprep.subr.mxu0 0.0
    %538 = vmatpush2.msra.mxu0 0.0
    %539 = vmatprep.mubr.f32.mxu0 0.0
    %540 = vmatmul.mubr.f32.gmra.mxu0 %v452
    %v541 = vpop.f32.mrf.mxu0
    %v542 = vadd.f32 %v438, %v541
    %v543 = vpop.f32.mrf.mxu0
    %v544 = vadd.f32 %v442, %v543
    %545 = vmatprep.mubr.f32.mxu0 0.0
    %546 = vmatmul.mubr.f32.gmra.mxu0 %v455
    %v547 = vpop.f32.mrf.mxu0
    %v548 = vadd.f32 %v438, %v547
    %v549 = vpop.f32.mrf.mxu0
    %v550 = vadd.f32 %v442, %v549
    %551 = vmatprep.mubr.f32.mxu0 0.0
    %552 = vmatmul.mubr.f32.gmra.mxu0 %v458
    %v553 = vpop.f32.mrf.mxu0
    %v554 = vadd.f32 %v438, %v553
    %v555 = vpop.f32.mrf.mxu0
    %v556 = vadd.f32 %v442, %v555
    %557 = vmatprep.mubr.f32.mxu0 0.0
    %558 = vmatmul.mubr.f32.gmra.mxu0 %v461
    %v559 = vpop.f32.mrf.mxu0
    %v560 = vadd.f32 %v438, %v559
    %v561 = vpop.f32.mrf.mxu0
    %v562 = vadd.f32 %v442, %v561
    %563 = vmatprep.mubr.f32.mxu0 0.0
    %564 = vmatmul.mubr.f32.gmra.mxu0 %v464
    %v565 = vpop.f32.mrf.mxu0
    %v566 = vadd.f32 %v438, %v565
    %v567 = vpop.f32.mrf.mxu0
    %v568 = vadd.f32 %v442, %v567
    %569 = vmatprep.mubr.f32.mxu0 0.0
    %570 = vmatmul.mubr.f32.gmra.mxu0 %v467
    %v571 = vpop.f32.mrf.mxu0
    %v572 = vadd.f32 %v438, %v571
    %v573 = vpop.f32.mrf.mxu0
    %v574 = vadd.f32 %v442, %v573
    %575 = vmatprep.mubr.f32.mxu0 0.0
    %576 = vmatmul.mubr.f32.gmra.mxu0 %v470
    %v577 = vpop.f32.mrf.mxu0
    %v578 = vadd.f32 %v438, %v577
    %v579 = vpop.f32.mrf.mxu0
    %v580 = vadd.f32 %v442, %v579
    %581 = vmatprep.mubr.f32.mxu0 0.0
    %582 = vmatmul.mubr.f32.gmra.mxu0 %v473
    %v583 = vpop.f32.mrf.mxu0
    %v584 = vadd.f32 %v438, %v583
    %v585 = vpop.f32.mrf.mxu0
    %v586 = vadd.f32 %v442, %v585
    %587 = vdwg.mxu0
    %588 = vmatprep.subr.mxu0 0.0
    %589 = vmatpush1.msra.mxu0 0.0
    %590 = vmatprep.subr.mxu0 0.0
    %591 = vmatpush1.msra.mxu0 0.0
    %592 = vmatprep.subr.mxu0 0.0
    %593 = vmatpush1.msra.mxu0 0.0
    %594 = vmatprep.subr.mxu0 0.0
    %595 = vmatpush1.msra.mxu0 0.0
    %596 = vmatprep.subr.mxu0 0.0
    %597 = vmatpush1.msra.mxu0 0.0
    %598 = vmatprep.subr.mxu0 0.0
    %599 = vmatpush1.msra.mxu0 0.0
    %600 = vmatprep.subr.mxu0 0.0
    %601 = vmatpush1.msra.mxu0 0.0
    %602 = vmatprep.subr.mxu0 0.0
    %603 = vmatpush1.msra.mxu0 0.0
    %604 = vmatprep.subr.mxu0 0.0
    %605 = vmatpush1.msra.mxu0 0.0
    %606 = vmatprep.subr.mxu0 0.0
    %607 = vmatpush1.msra.mxu0 0.0
    %608 = vmatprep.subr.mxu0 0.0
    %609 = vmatpush1.msra.mxu0 0.0
    %610 = vmatprep.subr.mxu0 0.0
    %611 = vmatpush1.msra.mxu0 0.0
    %612 = vmatprep.subr.mxu0 0.0
    %613 = vmatpush1.msra.mxu0 0.0
    %614 = vmatprep.subr.mxu0 0.0
    %615 = vmatpush1.msra.mxu0 0.0
    %616 = vmatprep.subr.mxu0 0.0
    %617 = vmatpush1.msra.mxu0 %v432
    %618 = vmatprep.subr.mxu0 0.0
    %619 = vmatpush1.msra.mxu0 %v429
    %620 = vmatprep.subr.mxu0 0.0
    %621 = vmatpush2.msra.mxu0 0.0
    %622 = vmatprep.subr.mxu0 0.0
    %623 = vmatpush2.msra.mxu0 0.0
    %624 = vmatprep.subr.mxu0 0.0
    %625 = vmatpush2.msra.mxu0 0.0
    %626 = vmatprep.subr.mxu0 0.0
    %627 = vmatpush2.msra.mxu0 0.0
    %628 = vmatprep.subr.mxu0 0.0
    %629 = vmatpush2.msra.mxu0 0.0
    %630 = vmatprep.subr.mxu0 0.0
    %631 = vmatpush2.msra.mxu0 0.0
    %632 = vmatprep.subr.mxu0 0.0
    %633 = vmatpush2.msra.mxu0 0.0
    %634 = vmatprep.subr.mxu0 0.0
    %635 = vmatpush2.msra.mxu0 0.0
    %636 = vmatprep.subr.mxu0 0.0
    %637 = vmatpush2.msra.mxu0 0.0
    %638 = vmatprep.subr.mxu0 0.0
    %639 = vmatpush2.msra.mxu0 0.0
    %640 = vmatprep.subr.mxu0 0.0
    %641 = vmatpush2.msra.mxu0 0.0
    %642 = vmatprep.subr.mxu0 0.0
    %643 = vmatpush2.msra.mxu0 0.0
    %644 = vmatprep.subr.mxu0 0.0
    %645 = vmatpush2.msra.mxu0 0.0
    %646 = vmatprep.subr.mxu0 0.0
    %647 = vmatpush2.msra.mxu0 0.0
    %648 = vmatprep.subr.mxu0 0.0
    %649 = vmatpush2.msra.mxu0 0.0
    %650 = vmatprep.subr.mxu0 0.0
    %651 = vmatpush2.msra.mxu0 0.0
    %652 = vmatprep.mubr.f32.mxu0 0.0
    %653 = vmatmul.mubr.f32.gmra.mxu0 %v452
    %v654 = vpop.f32.mrf.mxu0
    %v655 = vadd.f32 %v446, %v654
    %v656 = vpop.f32.mrf.mxu0
    %657 = vmatprep.mubr.f32.mxu0 0.0
    %658 = vmatmul.mubr.f32.gmra.mxu0 %v455
    %v659 = vpop.f32.mrf.mxu0
    %v660 = vadd.f32 %v446, %v659
    %v661 = vpop.f32.mrf.mxu0
    %662 = vmatprep.mubr.f32.mxu0 0.0
    %663 = vmatmul.mubr.f32.gmra.mxu0 %v458
    %v664 = vpop.f32.mrf.mxu0
    %v665 = vadd.f32 %v446, %v664
    %v666 = vpop.f32.mrf.mxu0
    %667 = vmatprep.mubr.f32.mxu0 0.0
    %668 = vmatmul.mubr.f32.gmra.mxu0 %v461
    %v669 = vpop.f32.mrf.mxu0
    %v670 = vadd.f32 %v446, %v669
    %v671 = vpop.f32.mrf.mxu0
    %672 = vmatprep.mubr.f32.mxu0 0.0
    %673 = vmatmul.mubr.f32.gmra.mxu0 %v464
    %v674 = vpop.f32.mrf.mxu0
    %v675 = vadd.f32 %v446, %v674
    %v676 = vpop.f32.mrf.mxu0
    %677 = vmatprep.mubr.f32.mxu0 0.0
    %678 = vmatmul.mubr.f32.gmra.mxu0 %v467
    %v679 = vpop.f32.mrf.mxu0
    %v680 = vadd.f32 %v446, %v679
    %v681 = vpop.f32.mrf.mxu0
    %682 = vmatprep.mubr.f32.mxu0 0.0
    %683 = vmatmul.mubr.f32.gmra.mxu0 %v470
    %v684 = vpop.f32.mrf.mxu0
    %v685 = vadd.f32 %v446, %v684
    %v686 = vpop.f32.mrf.mxu0
    %687 = vmatprep.mubr.f32.mxu0 0.0
    %688 = vmatmul.mubr.f32.gmra.mxu0 %v473
    %v689 = vpop.f32.mrf.mxu0
    %v690 = vadd.f32 %v446, %v689
    %v691 = vpop.f32.mrf.mxu0
    %692 = vdwg.mxu0
    %v693 = vld [vmem:[#allocation8] sm:$0xff]
    %v694 = vld [vmem:[#allocation8 + $0x8] sm:$0xff]
    %v695 = vld [vmem:[#allocation8 + $0x10] sm:$0xff]
    %v696 = vld [vmem:[#allocation8 + $0x18] sm:$0xff]
    %v697 = vld [vmem:[#allocation8 + $0x20] sm:$0xff]
    %v698 = vld [vmem:[#allocation8 + $0x28] sm:$0xff]
    %v699 = vld [vmem:[#allocation8 + $0x30] sm:$0xff]
    %v700 = vld [vmem:[#allocation8 + $0x38] sm:$0xff]
    %v701 = vld [vmem:[#allocation8 + $0x40] sm:$0xff]
    %v702 = vld [vmem:[#allocation8 + $0x48] sm:$0xff]
    %v703 = vld [vmem:[#allocation8 + $0x50] sm:$0xff]
    %v704 = vld [vmem:[#allocation8 + $0x58] sm:$0xff]
    %v705 = vld [vmem:[#allocation8 + $0x60] sm:$0xff]
    %v706 = vld [vmem:[#allocation8 + $0x68] sm:$0xff]
    %v707 = vld [vmem:[#allocation8 + $0x70] sm:$0xff]
    %v708 = vld [vmem:[#allocation8 + $0x78] sm:$0xff]
    %v709 = vld [vmem:[#allocation8 + $0x80] sm:$0xff]
    %v710 = vld [vmem:[#allocation8 + $0x88] sm:$0xff]
    %v711 = vld [vmem:[#allocation8 + $0x90] sm:$0xff]
    %v712 = vld [vmem:[#allocation8 + $0x98] sm:$0xff]
    %v713 = vld [vmem:[#allocation8 + $0xa0] sm:$0xff]
    %v714 = vld [vmem:[#allocation8 + $0xa8] sm:$0xff]
    %v715 = vld [vmem:[#allocation8 + $0xb0] sm:$0xff]
    %v716 = vld [vmem:[#allocation8 + $0xb8] sm:$0xff]
    %v717 = vld [vmem:[#allocation8 + $0xc0] sm:$0xff]
    %v718 = vld [vmem:[#allocation8 + $0xc8] sm:$0xff]
    %v719 = vld [vmem:[#allocation8 + $0xd0] sm:$0xff]
    %v720 = vld [vmem:[#allocation8 + $0xd8] sm:$0xff]
    %v721 = vld [vmem:[#allocation8 + $0xe0] sm:$0xff]
    %v722 = vld [vmem:[#allocation8 + $0xe8] sm:$0xff]
    %v723 = vld [vmem:[#allocation8 + $0xf0] sm:$0xff]
    %v724 = vld [vmem:[#allocation8 + $0xf8] sm:$0xff]
    %v725 = vld [vmem:[#allocation8 + $0x100] sm:$0xff]
    %v726 = vld [vmem:[#allocation8 + $0x108] sm:$0xff]
    %v727 = vld [vmem:[#allocation8 + $0x110] sm:$0xff]
    %v728 = vld [vmem:[#allocation8 + $0x118] sm:$0xff]
    %v729 = vld [vmem:[#allocation8 + $0x120] sm:$0xff]
    %v730 = vld [vmem:[#allocation8 + $0x128] sm:$0xff]
    %v731 = vld [vmem:[#allocation8 + $0x130] sm:$0xff]
    %v732 = vld [vmem:[#allocation8 + $0x138] sm:$0xff]
    %v733 = vld [vmem:[#allocation8 + $0x140] sm:$0xff]
    %v734 = vld [vmem:[#allocation8 + $0x148] sm:$0xff]
    %v735 = vld [vmem:[#allocation8 + $0x150] sm:$0xff]
    %v736 = vld [vmem:[#allocation8 + $0x158] sm:$0xff]
    %v737 = vld [vmem:[#allocation8 + $0x160] sm:$0xff]
    %v738 = vld [vmem:[#allocation8 + $0x168] sm:$0xff]
    %v739 = vld [vmem:[#allocation8 + $0x170] sm:$0xff]
    %v740 = vld [vmem:[#allocation8 + $0x178] sm:$0xff]
    %v741 = vld [vmem:[%s23] sm:$0x7]
    %v742 = vld [vmem:[%s3] sm:$0xff]
    %v744 = vlaneseq
    %v745 = vshrl.u32 %v744, 7
    %v746 = vsub.s32 0, %v745
    %v747 = vrot.slane %v741, %v746
    %v748 = vlaneseq
    %v749 = vshrl.u32 %v748, 7
    %v750 = vsub.s32 1, %v749
    %v751 = vrot.slane %v741, %v750
    %v752 = vlaneseq
    %v753 = vshrl.u32 %v752, 7
    %v754 = vsub.s32 2, %v753
    %v755 = vrot.slane %v741, %v754
    %759 = vmatprep.subr.mxu0 %v739
    %760 = vmatpush1.msra.mxu0 %v738
    %761 = vmatprep.subr.mxu0 %v736
    %762 = vmatpush1.msra.mxu0 %v735
    %763 = vmatprep.subr.mxu0 %v733
    %764 = vmatpush1.msra.mxu0 %v732
    %765 = vmatprep.subr.mxu0 %v730
    %766 = vmatpush1.msra.mxu0 %v729
    %767 = vmatprep.subr.mxu0 %v727
    %768 = vmatpush1.msra.mxu0 %v726
    %769 = vmatprep.subr.mxu0 %v724
    %770 = vmatpush1.msra.mxu0 %v723
    %771 = vmatprep.subr.mxu0 %v721
    %772 = vmatpush1.msra.mxu0 %v720
    %773 = vmatprep.subr.mxu0 %v718
    %774 = vmatpush1.msra.mxu0 %v717
    %775 = vmatprep.subr.mxu0 %v715
    %776 = vmatpush1.msra.mxu0 %v714
    %777 = vmatprep.subr.mxu0 %v712
    %778 = vmatpush1.msra.mxu0 %v711
    %779 = vmatprep.subr.mxu0 %v709
    %780 = vmatpush1.msra.mxu0 %v708
    %781 = vmatprep.subr.mxu0 %v706
    %782 = vmatpush1.msra.mxu0 %v705
    %783 = vmatprep.subr.mxu0 %v703
    %784 = vmatpush1.msra.mxu0 %v702
    %785 = vmatprep.subr.mxu0 %v700
    %786 = vmatpush1.msra.mxu0 %v699
    %787 = vmatprep.subr.mxu0 %v697
    %788 = vmatpush1.msra.mxu0 %v696
    %789 = vmatprep.subr.mxu0 %v694
    %790 = vmatpush1.msra.mxu0 %v693
    %791 = vmatprep.subr.mxu0 0.0
    %792 = vmatpush2.msra.mxu0 0.0
    %793 = vmatprep.subr.mxu0 0.0
    %794 = vmatpush2.msra.mxu0 0.0
    %795 = vmatprep.subr.mxu0 0.0
    %796 = vmatpush2.msra.mxu0 0.0
    %797 = vmatprep.subr.mxu0 0.0
    %798 = vmatpush2.msra.mxu0 0.0
    %799 = vmatprep.subr.mxu0 0.0
    %800 = vmatpush2.msra.mxu0 0.0
    %801 = vmatprep.subr.mxu0 0.0
    %802 = vmatpush2.msra.mxu0 0.0
    %803 = vmatprep.subr.mxu0 0.0
    %804 = vmatpush2.msra.mxu0 0.0
    %805 = vmatprep.subr.mxu0 0.0
    %806 = vmatpush2.msra.mxu0 0.0
    %807 = vmatprep.subr.mxu0 0.0
    %808 = vmatpush2.msra.mxu0 0.0
    %809 = vmatprep.subr.mxu0 0.0
    %810 = vmatpush2.msra.mxu0 0.0
    %811 = vmatprep.subr.mxu0 0.0
    %812 = vmatpush2.msra.mxu0 0.0
    %813 = vmatprep.subr.mxu0 0.0
    %814 = vmatpush2.msra.mxu0 0.0
    %815 = vmatprep.subr.mxu0 0.0
    %816 = vmatpush2.msra.mxu0 0.0
    %817 = vmatprep.subr.mxu0 0.0
    %818 = vmatpush2.msra.mxu0 0.0
    %819 = vmatprep.subr.mxu0 0.0
    %820 = vmatpush2.msra.mxu0 0.0
    %821 = vmatprep.subr.mxu0 0.0
    %822 = vmatpush2.msra.mxu0 0.0
    %823 = vmatprep.mubr.f32.mxu0 0.0
    %824 = vmatmul.mubr.f32.gmra.mxu0 0.0
    %v825 = vpop.f32.mrf.mxu0
    %v826 = vadd.f32 %v747, %v825
    %v827 = vpop.f32.mrf.mxu0
    %v828 = vadd.f32 %v751, %v827
    %829 = vdwg.mxu0
    %830 = vmatprep.subr.mxu0 0.0
    %831 = vmatpush1.msra.mxu0 %v740
    %832 = vmatprep.subr.mxu0 0.0
    %833 = vmatpush1.msra.mxu0 %v737
    %834 = vmatprep.subr.mxu0 0.0
    %835 = vmatpush1.msra.mxu0 %v734
    %836 = vmatprep.subr.mxu0 0.0
    %837 = vmatpush1.msra.mxu0 %v731
    %838 = vmatprep.subr.mxu0 0.0
    %839 = vmatpush1.msra.mxu0 %v728
    %840 = vmatprep.subr.mxu0 0.0
    %841 = vmatpush1.msra.mxu0 %v725
    %842 = vmatprep.subr.mxu0 0.0
    %843 = vmatpush1.msra.mxu0 %v722
    %844 = vmatprep.subr.mxu0 0.0
    %845 = vmatpush1.msra.mxu0 %v719
    %846 = vmatprep.subr.mxu0 0.0
    %847 = vmatpush1.msra.mxu0 %v716
    %848 = vmatprep.subr.mxu0 0.0
    %849 = vmatpush1.msra.mxu0 %v713
    %850 = vmatprep.subr.mxu0 0.0
    %851 = vmatpush1.msra.mxu0 %v710
    %852 = vmatprep.subr.mxu0 0.0
    %853 = vmatpush1.msra.mxu0 %v707
    %854 = vmatprep.subr.mxu0 0.0
    %855 = vmatpush1.msra.mxu0 %v704
    %856 = vmatprep.subr.mxu0 0.0
    %857 = vmatpush1.msra.mxu0 %v701
    %858 = vmatprep.subr.mxu0 0.0
    %859 = vmatpush1.msra.mxu0 %v698
    %860 = vmatprep.subr.mxu0 0.0
    %861 = vmatpush1.msra.mxu0 %v695
    %862 = vmatprep.subr.mxu0 0.0
    %863 = vmatpush2.msra.mxu0 0.0
    %864 = vmatprep.subr.mxu0 0.0
    %865 = vmatpush2.msra.mxu0 0.0
    %866 = vmatprep.subr.mxu0 0.0
    %867 = vmatpush2.msra.mxu0 0.0
    %868 = vmatprep.subr.mxu0 0.0
    %869 = vmatpush2.msra.mxu0 0.0
    %870 = vmatprep.subr.mxu0 0.0
    %871 = vmatpush2.msra.mxu0 0.0
    %872 = vmatprep.subr.mxu0 0.0
    %873 = vmatpush2.msra.mxu0 0.0
    %874 = vmatprep.subr.mxu0 0.0
    %875 = vmatpush2.msra.mxu0 0.0
    %876 = vmatprep.subr.mxu0 0.0
    %877 = vmatpush2.msra.mxu0 0.0
    %878 = vmatprep.subr.mxu0 0.0
    %879 = vmatpush2.msra.mxu0 0.0
    %880 = vmatprep.subr.mxu0 0.0
    %881 = vmatpush2.msra.mxu0 0.0
    %882 = vmatprep.subr.mxu0 0.0
    %883 = vmatpush2.msra.mxu0 0.0
    %884 = vmatprep.subr.mxu0 0.0
    %885 = vmatpush2.msra.mxu0 0.0
    %886 = vmatprep.subr.mxu0 0.0
    %887 = vmatpush2.msra.mxu0 0.0
    %888 = vmatprep.subr.mxu0 0.0
    %889 = vmatpush2.msra.mxu0 0.0
    %890 = vmatprep.subr.mxu0 0.0
    %891 = vmatpush2.msra.mxu0 0.0
    %892 = vmatprep.subr.mxu0 0.0
    %893 = vmatpush2.msra.mxu0 0.0
    %894 = vmatprep.mubr.f32.mxu0 0.0
    %895 = vmatmul.mubr.f32.gmra.mxu0 0.0
    %v896 = vpop.f32.mrf.mxu0
    %v897 = vadd.f32 %v755, %v896
    %v898 = vpop.f32.mrf.mxu0
    %899 = vdwg.mxu0
    %v900 = vadd.f32 %v542, %v826
    %v901 = vxor.u32 %v900, 2147483648
    %v902 = vmul.f32 %v901, 1.442695
    %v903 = vpow.pop %v902
    %v904 = vadd.f32 %v903, 1.0
    %v905 = vrcp.pop %v904
    %v906 = vmul.f32 1.0, %v905
    %v907 = vadd.f32 %v544, %v828
    %v908 = vxor.u32 %v907, 2147483648
    %v909 = vmul.f32 %v908, 1.442695
    %v910 = vpow.pop %v909
    %v911 = vadd.f32 %v910, 1.0
    %v912 = vrcp.pop %v911
    %v913 = vmul.f32 1.0, %v912
    %v914 = vmul.f32 %v906, %v897
    %v915 = vadd.f32 %v655, %v914
    %v916 = vtanh.pop %v915
    %v917 = vsub.f32 1.0, %v913
    %v918 = vmul.f32 %v917, %v916
    %v919 = vmul.f32 %v913, 0.0
    %v920 = vadd.f32 %v918, %v919
    %vm921 = vcmp.gt.s32.totalorder %v742, 0
    %v922 = vsel %vm921, 1, 0
    %923 = vset.pattern.permute.xlu0 0
    %924 = vperm.xlu0 %923, %v922
    %v925 = vpop.permute.xlu0 %924
    %vm926 = vcmp.eq.s32.totalorder %v925, 1
    %v927 = vsel %vm926, %v920, 0.0
    %928 = vmatprep.subr.mxu0 %v739
    %929 = vmatpush1.msra.mxu0 %v738
    %930 = vmatprep.subr.mxu0 %v736
    %931 = vmatpush1.msra.mxu0 %v735
    %932 = vmatprep.subr.mxu0 %v733
    %933 = vmatpush1.msra.mxu0 %v732
    %934 = vmatprep.subr.mxu0 %v730
    %935 = vmatpush1.msra.mxu0 %v729
    %936 = vmatprep.subr.mxu0 %v727
    %937 = vmatpush1.msra.mxu0 %v726
    %938 = vmatprep.subr.mxu0 %v724
    %939 = vmatpush1.msra.mxu0 %v723
    %940 = vmatprep.subr.mxu0 %v721
    %941 = vmatpush1.msra.mxu0 %v720
    %942 = vmatprep.subr.mxu0 %v718
    %943 = vmatpush1.msra.mxu0 %v717
    %944 = vmatprep.subr.mxu0 %v715
    %945 = vmatpush1.msra.mxu0 %v714
    %946 = vmatprep.subr.mxu0 %v712
    %947 = vmatpush1.msra.mxu0 %v711
    %948 = vmatprep.subr.mxu0 %v709
    %949 = vmatpush1.msra.mxu0 %v708
    %950 = vmatprep.subr.mxu0 %v706
    %951 = vmatpush1.msra.mxu0 %v705
    %952 = vmatprep.subr.mxu0 %v703
    %953 = vmatpush1.msra.mxu0 %v702
    %954 = vmatprep.subr.mxu0 %v700
    %955 = vmatpush1.msra.mxu0 %v699
    %956 = vmatprep.subr.mxu0 %v697
    %957 = vmatpush1.msra.mxu0 %v696
    %958 = vmatprep.subr.mxu0 %v694
    %959 = vmatpush1.msra.mxu0 %v693
    %960 = vmatprep.subr.mxu0 0.0
    %961 = vmatpush2.msra.mxu0 0.0
    %962 = vmatprep.subr.mxu0 0.0
    %963 = vmatpush2.msra.mxu0 0.0
    %964 = vmatprep.subr.mxu0 0.0
    %965 = vmatpush2.msra.mxu0 0.0
    %966 = vmatprep.subr.mxu0 0.0
    %967 = vmatpush2.msra.mxu0 0.0
    %968 = vmatprep.subr.mxu0 0.0
    %969 = vmatpush2.msra.mxu0 0.0
    %970 = vmatprep.subr.mxu0 0.0
    %971 = vmatpush2.msra.mxu0 0.0
    %972 = vmatprep.subr.mxu0 0.0
    %973 = vmatpush2.msra.mxu0 0.0
    %974 = vmatprep.subr.mxu0 0.0
    %975 = vmatpush2.msra.mxu0 0.0
    %976 = vmatprep.subr.mxu0 0.0
    %977 = vmatpush2.msra.mxu0 0.0
    %978 = vmatprep.subr.mxu0 0.0
    %979 = vmatpush2.msra.mxu0 0.0
    %980 = vmatprep.subr.mxu0 0.0
    %981 = vmatpush2.msra.mxu0 0.0
    %982 = vmatprep.subr.mxu0 0.0
    %983 = vmatpush2.msra.mxu0 0.0
    %984 = vmatprep.subr.mxu0 0.0
    %985 = vmatpush2.msra.mxu0 0.0
    %986 = vmatprep.subr.mxu0 0.0
    %987 = vmatpush2.msra.mxu0 0.0
    %988 = vmatprep.subr.mxu0 0.0
    %989 = vmatpush2.msra.mxu0 0.0
    %990 = vmatprep.subr.mxu0 0.0
    %991 = vmatpush2.msra.mxu0 0.0
    %992 = vmatprep.mubr.f32.mxu0 0.0
    %993 = vmatmul.mubr.f32.gmra.mxu0 %v927
    %v994 = vpop.f32.mrf.mxu0
    %v995 = vadd.f32 %v747, %v994
    %v996 = vpop.f32.mrf.mxu0
    %v997 = vadd.f32 %v751, %v996
    %998 = vdwg.mxu0
    %999 = vmatprep.subr.mxu0 0.0
    %1000 = vmatpush1.msra.mxu0 %v740
    %1001 = vmatprep.subr.mxu0 0.0
    %1002 = vmatpush1.msra.mxu0 %v737
    %1003 = vmatprep.subr.mxu0 0.0
    %1004 = vmatpush1.msra.mxu0 %v734
    %1005 = vmatprep.subr.mxu0 0.0
    %1006 = vmatpush1.msra.mxu0 %v731
    %1007 = vmatprep.subr.mxu0 0.0
    %1008 = vmatpush1.msra.mxu0 %v728
    %1009 = vmatprep.subr.mxu0 0.0
    %1010 = vmatpush1.msra.mxu0 %v725
    %1011 = vmatprep.subr.mxu0 0.0
    %1012 = vmatpush1.msra.mxu0 %v722
    %1013 = vmatprep.subr.mxu0 0.0
    %1014 = vmatpush1.msra.mxu0 %v719
    %1015 = vmatprep.subr.mxu0 0.0
    %1016 = vmatpush1.msra.mxu0 %v716
    %1017 = vmatprep.subr.mxu0 0.0
    %1018 = vmatpush1.msra.mxu0 %v713
    %1019 = vmatprep.subr.mxu0 0.0
    %1020 = vmatpush1.msra.mxu0 %v710
    %1021 = vmatprep.subr.mxu0 0.0
    %1022 = vmatpush1.msra.mxu0 %v707
    %1023 = vmatprep.subr.mxu0 0.0
    %1024 = vmatpush1.msra.mxu0 %v704
    %1025 = vmatprep.subr.mxu0 0.0
    %1026 = vmatpush1.msra.mxu0 %v701
    %1027 = vmatprep.subr.mxu0 0.0
    %1028 = vmatpush1.msra.mxu0 %v698
    %1029 = vmatprep.subr.mxu0 0.0
    %1030 = vmatpush1.msra.mxu0 %v695
    %1031 = vmatprep.subr.mxu0 0.0
    %1032 = vmatpush2.msra.mxu0 0.0
    %1033 = vmatprep.subr.mxu0 0.0
    %1034 = vmatpush2.msra.mxu0 0.0
    %1035 = vmatprep.subr.mxu0 0.0
    %1036 = vmatpush2.msra.mxu0 0.0
    %1037 = vmatprep.subr.mxu0 0.0
    %1038 = vmatpush2.msra.mxu0 0.0
    %1039 = vmatprep.subr.mxu0 0.0
    %1040 = vmatpush2.msra.mxu0 0.0
    %1041 = vmatprep.subr.mxu0 0.0
    %1042 = vmatpush2.msra.mxu0 0.0
    %1043 = vmatprep.subr.mxu0 0.0
    %1044 = vmatpush2.msra.mxu0 0.0
    %1045 = vmatprep.subr.mxu0 0.0
    %1046 = vmatpush2.msra.mxu0 0.0
    %1047 = vmatprep.subr.mxu0 0.0
    %1048 = vmatpush2.msra.mxu0 0.0
    %1049 = vmatprep.subr.mxu0 0.0
    %1050 = vmatpush2.msra.mxu0 0.0
    %1051 = vmatprep.subr.mxu0 0.0
    %1052 = vmatpush2.msra.mxu0 0.0
    %1053 = vmatprep.subr.mxu0 0.0
    %1054 = vmatpush2.msra.mxu0 0.0
    %1055 = vmatprep.subr.mxu0 0.0
    %1056 = vmatpush2.msra.mxu0 0.0
    %1057 = vmatprep.subr.mxu0 0.0
    %1058 = vmatpush2.msra.mxu0 0.0
    %1059 = vmatprep.subr.mxu0 0.0
    %1060 = vmatpush2.msra.mxu0 0.0
    %1061 = vmatprep.subr.mxu0 0.0
    %1062 = vmatpush2.msra.mxu0 0.0
    %1063 = vmatprep.mubr.f32.mxu0 0.0
    %1064 = vmatmul.mubr.f32.gmra.mxu0 %v927
    %v1065 = vpop.f32.mrf.mxu0
    %v1066 = vadd.f32 %v755, %v1065
    %v1067 = vpop.f32.mrf.mxu0
    %1068 = vdwg.mxu0
    %v1069 = vadd.f32 %v548, %v995
    %v1070 = vxor.u32 %v1069, 2147483648
    %v1071 = vmul.f32 %v1070, 1.442695
    %v1072 = vpow.pop %v1071
    %v1073 = vadd.f32 %v1072, 1.0
    %v1074 = vrcp.pop %v1073
    %v1075 = vmul.f32 1.0, %v1074
    %v1076 = vadd.f32 %v550, %v997
    %v1077 = vxor.u32 %v1076, 2147483648
    %v1078 = vmul.f32 %v1077, 1.442695
    %v1079 = vpow.pop %v1078
    %v1080 = vadd.f32 %v1079, 1.0
    %v1081 = vrcp.pop %v1080
    %v1082 = vmul.f32 1.0, %v1081
    %v1083 = vmul.f32 %v1075, %v1066
    %v1084 = vadd.f32 %v660, %v1083
    %v1085 = vtanh.pop %v1084
    %v1086 = vsub.f32 1.0, %v1082
    %v1087 = vmul.f32 %v1086, %v1085
    %v1088 = vmul.f32 %v1082, %v927
    %v1089 = vadd.f32 %v1087, %v1088
    %vm1090 = vcmp.gt.s32.totalorder %v742, 1
    %v1091 = vsel %vm1090, 1, 0
    %1092 = vset.pattern.permute.xlu0 0
    %1093 = vperm.xlu0 %1092, %v1091
    %v1094 = vpop.permute.xlu0 %1093
    %vm1095 = vcmp.eq.s32.totalorder %v1094, 1
    %v1096 = vsel %vm1095, %v1089, %v927
    %1097 = vmatprep.subr.mxu0 %v739
    %1098 = vmatpush1.msra.mxu0 %v738
    %1099 = vmatprep.subr.mxu0 %v736
    %1100 = vmatpush1.msra.mxu0 %v735
    %1101 = vmatprep.subr.mxu0 %v733
    %1102 = vmatpush1.msra.mxu0 %v732
    %1103 = vmatprep.subr.mxu0 %v730
    %1104 = vmatpush1.msra.mxu0 %v729
    %1105 = vmatprep.subr.mxu0 %v727
    %1106 = vmatpush1.msra.mxu0 %v726
    %1107 = vmatprep.subr.mxu0 %v724
    %1108 = vmatpush1.msra.mxu0 %v723
    %1109 = vmatprep.subr.mxu0 %v721
    %1110 = vmatpush1.msra.mxu0 %v720
    %1111 = vmatprep.subr.mxu0 %v718
    %1112 = vmatpush1.msra.mxu0 %v717
    %1113 = vmatprep.subr.mxu0 %v715
    %1114 = vmatpush1.msra.mxu0 %v714
    %1115 = vmatprep.subr.mxu0 %v712
    %1116 = vmatpush1.msra.mxu0 %v711
    %1117 = vmatprep.subr.mxu0 %v709
    %1118 = vmatpush1.msra.mxu0 %v708
    %1119 = vmatprep.subr.mxu0 %v706
    %1120 = vmatpush1.msra.mxu0 %v705
    %1121 = vmatprep.subr.mxu0 %v703
    %1122 = vmatpush1.msra.mxu0 %v702
    %1123 = vmatprep.subr.mxu0 %v700
    %1124 = vmatpush1.msra.mxu0 %v699
    %1125 = vmatprep.subr.mxu0 %v697
    %1126 = vmatpush1.msra.mxu0 %v696
    %1127 = vmatprep.subr.mxu0 %v694
    %1128 = vmatpush1.msra.mxu0 %v693
    %1129 = vmatprep.subr.mxu0 0.0
    %1130 = vmatpush2.msra.mxu0 0.0
    %1131 = vmatprep.subr.mxu0 0.0
    %1132 = vmatpush2.msra.mxu0 0.0
    %1133 = vmatprep.subr.mxu0 0.0
    %1134 = vmatpush2.msra.mxu0 0.0
    %1135 = vmatprep.subr.mxu0 0.0
    %1136 = vmatpush2.msra.mxu0 0.0
    %1137 = vmatprep.subr.mxu0 0.0
    %1138 = vmatpush2.msra.mxu0 0.0
    %1139 = vmatprep.subr.mxu0 0.0
    %1140 = vmatpush2.msra.mxu0 0.0
    %1141 = vmatprep.subr.mxu0 0.0
    %1142 = vmatpush2.msra.mxu0 0.0
    %1143 = vmatprep.subr.mxu0 0.0
    %1144 = vmatpush2.msra.mxu0 0.0
    %1145 = vmatprep.subr.mxu0 0.0
    %1146 = vmatpush2.msra.mxu0 0.0
    %1147 = vmatprep.subr.mxu0 0.0
    %1148 = vmatpush2.msra.mxu0 0.0
    %1149 = vmatprep.subr.mxu0 0.0
    %1150 = vmatpush2.msra.mxu0 0.0
    %1151 = vmatprep.subr.mxu0 0.0
    %1152 = vmatpush2.msra.mxu0 0.0
    %1153 = vmatprep.subr.mxu0 0.0
    %1154 = vmatpush2.msra.mxu0 0.0
    %1155 = vmatprep.subr.mxu0 0.0
    %1156 = vmatpush2.msra.mxu0 0.0
    %1157 = vmatprep.subr.mxu0 0.0
    %1158 = vmatpush2.msra.mxu0 0.0
    %1159 = vmatprep.subr.mxu0 0.0
    %1160 = vmatpush2.msra.mxu0 0.0
    %1161 = vmatprep.mubr.f32.mxu0 0.0
    %1162 = vmatmul.mubr.f32.gmra.mxu0 %v1096
    %v1163 = vpop.f32.mrf.mxu0
    %v1164 = vadd.f32 %v747, %v1163
    %v1165 = vpop.f32.mrf.mxu0
    %v1166 = vadd.f32 %v751, %v1165
    %1167 = vdwg.mxu0
    %1168 = vmatprep.subr.mxu0 0.0
    %1169 = vmatpush1.msra.mxu0 %v740
    %1170 = vmatprep.subr.mxu0 0.0
    %1171 = vmatpush1.msra.mxu0 %v737
    %1172 = vmatprep.subr.mxu0 0.0
    %1173 = vmatpush1.msra.mxu0 %v734
    %1174 = vmatprep.subr.mxu0 0.0
    %1175 = vmatpush1.msra.mxu0 %v731
    %1176 = vmatprep.subr.mxu0 0.0
    %1177 = vmatpush1.msra.mxu0 %v728
    %1178 = vmatprep.subr.mxu0 0.0
    %1179 = vmatpush1.msra.mxu0 %v725
    %1180 = vmatprep.subr.mxu0 0.0
    %1181 = vmatpush1.msra.mxu0 %v722
    %1182 = vmatprep.subr.mxu0 0.0
    %1183 = vmatpush1.msra.mxu0 %v719
    %1184 = vmatprep.subr.mxu0 0.0
    %1185 = vmatpush1.msra.mxu0 %v716
    %1186 = vmatprep.subr.mxu0 0.0
    %1187 = vmatpush1.msra.mxu0 %v713
    %1188 = vmatprep.subr.mxu0 0.0
    %1189 = vmatpush1.msra.mxu0 %v710
    %1190 = vmatprep.subr.mxu0 0.0
    %1191 = vmatpush1.msra.mxu0 %v707
    %1192 = vmatprep.subr.mxu0 0.0
    %1193 = vmatpush1.msra.mxu0 %v704
    %1194 = vmatprep.subr.mxu0 0.0
    %1195 = vmatpush1.msra.mxu0 %v701
    %1196 = vmatprep.subr.mxu0 0.0
    %1197 = vmatpush1.msra.mxu0 %v698
    %1198 = vmatprep.subr.mxu0 0.0
    %1199 = vmatpush1.msra.mxu0 %v695
    %1200 = vmatprep.subr.mxu0 0.0
    %1201 = vmatpush2.msra.mxu0 0.0
    %1202 = vmatprep.subr.mxu0 0.0
    %1203 = vmatpush2.msra.mxu0 0.0
    %1204 = vmatprep.subr.mxu0 0.0
    %1205 = vmatpush2.msra.mxu0 0.0
    %1206 = vmatprep.subr.mxu0 0.0
    %1207 = vmatpush2.msra.mxu0 0.0
    %1208 = vmatprep.subr.mxu0 0.0
    %1209 = vmatpush2.msra.mxu0 0.0
    %1210 = vmatprep.subr.mxu0 0.0
    %1211 = vmatpush2.msra.mxu0 0.0
    %1212 = vmatprep.subr.mxu0 0.0
    %1213 = vmatpush2.msra.mxu0 0.0
    %1214 = vmatprep.subr.mxu0 0.0
    %1215 = vmatpush2.msra.mxu0 0.0
    %1216 = vmatprep.subr.mxu0 0.0
    %1217 = vmatpush2.msra.mxu0 0.0
    %1218 = vmatprep.subr.mxu0 0.0
    %1219 = vmatpush2.msra.mxu0 0.0
    %1220 = vmatprep.subr.mxu0 0.0
    %1221 = vmatpush2.msra.mxu0 0.0
    %1222 = vmatprep.subr.mxu0 0.0
    %1223 = vmatpush2.msra.mxu0 0.0
    %1224 = vmatprep.subr.mxu0 0.0
    %1225 = vmatpush2.msra.mxu0 0.0
    %1226 = vmatprep.subr.mxu0 0.0
    %1227 = vmatpush2.msra.mxu0 0.0
    %1228 = vmatprep.subr.mxu0 0.0
    %1229 = vmatpush2.msra.mxu0 0.0
    %1230 = vmatprep.subr.mxu0 0.0
    %1231 = vmatpush2.msra.mxu0 0.0
    %1232 = vmatprep.mubr.f32.mxu0 0.0
    %1233 = vmatmul.mubr.f32.gmra.mxu0 %v1096
    %v1234 = vpop.f32.mrf.mxu0
    %v1235 = vadd.f32 %v755, %v1234
    %v1236 = vpop.f32.mrf.mxu0
    %1237 = vdwg.mxu0
    %v1238 = vadd.f32 %v554, %v1164
    %v1239 = vxor.u32 %v1238, 2147483648
    %v1240 = vmul.f32 %v1239, 1.442695
    %v1241 = vpow.pop %v1240
    %v1242 = vadd.f32 %v1241, 1.0
    %v1243 = vrcp.pop %v1242
    %v1244 = vmul.f32 1.0, %v1243
    %v1245 = vadd.f32 %v556, %v1166
    %v1246 = vxor.u32 %v1245, 2147483648
    %v1247 = vmul.f32 %v1246, 1.442695
    %v1248 = vpow.pop %v1247
    %v1249 = vadd.f32 %v1248, 1.0
    %v1250 = vrcp.pop %v1249
    %v1251 = vmul.f32 1.0, %v1250
    %v1252 = vmul.f32 %v1244, %v1235
    %v1253 = vadd.f32 %v665, %v1252
    %v1254 = vtanh.pop %v1253
    %v1255 = vsub.f32 1.0, %v1251
    %v1256 = vmul.f32 %v1255, %v1254
    %v1257 = vmul.f32 %v1251, %v1096
    %v1258 = vadd.f32 %v1256, %v1257
    %vm1259 = vcmp.gt.s32.totalorder %v742, 2
    %v1260 = vsel %vm1259, 1, 0
    %1261 = vset.pattern.permute.xlu0 0
    %1262 = vperm.xlu0 %1261, %v1260
    %v1263 = vpop.permute.xlu0 %1262
    %vm1264 = vcmp.eq.s32.totalorder %v1263, 1
    %v1265 = vsel %vm1264, %v1258, %v1096
    %1266 = vmatprep.subr.mxu0 %v739
    %1267 = vmatpush1.msra.mxu0 %v738
    %1268 = vmatprep.subr.mxu0 %v736
    %1269 = vmatpush1.msra.mxu0 %v735
    %1270 = vmatprep.subr.mxu0 %v733
    %1271 = vmatpush1.msra.mxu0 %v732
    %1272 = vmatprep.subr.mxu0 %v730
    %1273 = vmatpush1.msra.mxu0 %v729
    %1274 = vmatprep.subr.mxu0 %v727
    %1275 = vmatpush1.msra.mxu0 %v726
    %1276 = vmatprep.subr.mxu0 %v724
    %1277 = vmatpush1.msra.mxu0 %v723
    %1278 = vmatprep.subr.mxu0 %v721
    %1279 = vmatpush1.msra.mxu0 %v720
    %1280 = vmatprep.subr.mxu0 %v718
    %1281 = vmatpush1.msra.mxu0 %v717
    %1282 = vmatprep.subr.mxu0 %v715
    %1283 = vmatpush1.msra.mxu0 %v714
    %1284 = vmatprep.subr.mxu0 %v712
    %1285 = vmatpush1.msra.mxu0 %v711
    %1286 = vmatprep.subr.mxu0 %v709
    %1287 = vmatpush1.msra.mxu0 %v708
    %1288 = vmatprep.subr.mxu0 %v706
    %1289 = vmatpush1.msra.mxu0 %v705
    %1290 = vmatprep.subr.mxu0 %v703
    %1291 = vmatpush1.msra.mxu0 %v702
    %1292 = vmatprep.subr.mxu0 %v700
    %1293 = vmatpush1.msra.mxu0 %v699
    %1294 = vmatprep.subr.mxu0 %v697
    %1295 = vmatpush1.msra.mxu0 %v696
    %1296 = vmatprep.subr.mxu0 %v694
    %1297 = vmatpush1.msra.mxu0 %v693
    %1298 = vmatprep.subr.mxu0 0.0
    %1299 = vmatpush2.msra.mxu0 0.0
    %1300 = vmatprep.subr.mxu0 0.0
    %1301 = vmatpush2.msra.mxu0 0.0
    %1302 = vmatprep.subr.mxu0 0.0
    %1303 = vmatpush2.msra.mxu0 0.0
    %1304 = vmatprep.subr.mxu0 0.0
    %1305 = vmatpush2.msra.mxu0 0.0
    %1306 = vmatprep.subr.mxu0 0.0
    %1307 = vmatpush2.msra.mxu0 0.0
    %1308 = vmatprep.subr.mxu0 0.0
    %1309 = vmatpush2.msra.mxu0 0.0
    %1310 = vmatprep.subr.mxu0 0.0
    %1311 = vmatpush2.msra.mxu0 0.0
    %1312 = vmatprep.subr.mxu0 0.0
    %1313 = vmatpush2.msra.mxu0 0.0
    %1314 = vmatprep.subr.mxu0 0.0
    %1315 = vmatpush2.msra.mxu0 0.0
    %1316 = vmatprep.subr.mxu0 0.0
    %1317 = vmatpush2.msra.mxu0 0.0
    %1318 = vmatprep.subr.mxu0 0.0
    %1319 = vmatpush2.msra.mxu0 0.0
    %1320 = vmatprep.subr.mxu0 0.0
    %1321 = vmatpush2.msra.mxu0 0.0
    %1322 = vmatprep.subr.mxu0 0.0
    %1323 = vmatpush2.msra.mxu0 0.0
    %1324 = vmatprep.subr.mxu0 0.0
    %1325 = vmatpush2.msra.mxu0 0.0
    %1326 = vmatprep.subr.mxu0 0.0
    %1327 = vmatpush2.msra.mxu0 0.0
    %1328 = vmatprep.subr.mxu0 0.0
    %1329 = vmatpush2.msra.mxu0 0.0
    %1330 = vmatprep.mubr.f32.mxu0 0.0
    %1331 = vmatmul.mubr.f32.gmra.mxu0 %v1265
    %v1332 = vpop.f32.mrf.mxu0
    %v1333 = vadd.f32 %v747, %v1332
    %v1334 = vpop.f32.mrf.mxu0
    %v1335 = vadd.f32 %v751, %v1334
    %1336 = vdwg.mxu0
    %1337 = vmatprep.subr.mxu0 0.0
    %1338 = vmatpush1.msra.mxu0 %v740
    %1339 = vmatprep.subr.mxu0 0.0
    %1340 = vmatpush1.msra.mxu0 %v737
    %1341 = vmatprep.subr.mxu0 0.0
    %1342 = vmatpush1.msra.mxu0 %v734
    %1343 = vmatprep.subr.mxu0 0.0
    %1344 = vmatpush1.msra.mxu0 %v731
    %1345 = vmatprep.subr.mxu0 0.0
    %1346 = vmatpush1.msra.mxu0 %v728
    %1347 = vmatprep.subr.mxu0 0.0
    %1348 = vmatpush1.msra.mxu0 %v725
    %1349 = vmatprep.subr.mxu0 0.0
    %1350 = vmatpush1.msra.mxu0 %v722
    %1351 = vmatprep.subr.mxu0 0.0
    %1352 = vmatpush1.msra.mxu0 %v719
    %1353 = vmatprep.subr.mxu0 0.0
    %1354 = vmatpush1.msra.mxu0 %v716
    %1355 = vmatprep.subr.mxu0 0.0
    %1356 = vmatpush1.msra.mxu0 %v713
    %1357 = vmatprep.subr.mxu0 0.0
    %1358 = vmatpush1.msra.mxu0 %v710
    %1359 = vmatprep.subr.mxu0 0.0
    %1360 = vmatpush1.msra.mxu0 %v707
    %1361 = vmatprep.subr.mxu0 0.0
    %1362 = vmatpush1.msra.mxu0 %v704
    %1363 = vmatprep.subr.mxu0 0.0
    %1364 = vmatpush1.msra.mxu0 %v701
    %1365 = vmatprep.subr.mxu0 0.0
    %1366 = vmatpush1.msra.mxu0 %v698
    %1367 = vmatprep.subr.mxu0 0.0
    %1368 = vmatpush1.msra.mxu0 %v695
    %1369 = vmatprep.subr.mxu0 0.0
    %1370 = vmatpush2.msra.mxu0 0.0
    %1371 = vmatprep.subr.mxu0 0.0
    %1372 = vmatpush2.msra.mxu0 0.0
    %1373 = vmatprep.subr.mxu0 0.0
    %1374 = vmatpush2.msra.mxu0 0.0
    %1375 = vmatprep.subr.mxu0 0.0
    %1376 = vmatpush2.msra.mxu0 0.0
    %1377 = vmatprep.subr.mxu0 0.0
    %1378 = vmatpush2.msra.mxu0 0.0
    %1379 = vmatprep.subr.mxu0 0.0
    %1380 = vmatpush2.msra.mxu0 0.0
    %1381 = vmatprep.subr.mxu0 0.0
    %1382 = vmatpush2.msra.mxu0 0.0
    %1383 = vmatprep.subr.mxu0 0.0
    %1384 = vmatpush2.msra.mxu0 0.0
    %1385 = vmatprep.subr.mxu0 0.0
    %1386 = vmatpush2.msra.mxu0 0.0
    %1387 = vmatprep.subr.mxu0 0.0
    %1388 = vmatpush2.msra.mxu0 0.0
    %1389 = vmatprep.subr.mxu0 0.0
    %1390 = vmatpush2.msra.mxu0 0.0
    %1391 = vmatprep.subr.mxu0 0.0
    %1392 = vmatpush2.msra.mxu0 0.0
    %1393 = vmatprep.subr.mxu0 0.0
    %1394 = vmatpush2.msra.mxu0 0.0
    %1395 = vmatprep.subr.mxu0 0.0
    %1396 = vmatpush2.msra.mxu0 0.0
    %1397 = vmatprep.subr.mxu0 0.0
    %1398 = vmatpush2.msra.mxu0 0.0
    %1399 = vmatprep.subr.mxu0 0.0
    %1400 = vmatpush2.msra.mxu0 0.0
    %1401 = vmatprep.mubr.f32.mxu0 0.0
    %1402 = vmatmul.mubr.f32.gmra.mxu0 %v1265
    %v1403 = vpop.f32.mrf.mxu0
    %v1404 = vadd.f32 %v755, %v1403
    %v1405 = vpop.f32.mrf.mxu0
    %1406 = vdwg.mxu0
    %v1407 = vadd.f32 %v560, %v1333
    %v1408 = vxor.u32 %v1407, 2147483648
    %v1409 = vmul.f32 %v1408, 1.442695
    %v1410 = vpow.pop %v1409
    %v1411 = vadd.f32 %v1410, 1.0
    %v1412 = vrcp.pop %v1411
    %v1413 = vmul.f32 1.0, %v1412
    %v1414 = vadd.f32 %v562, %v1335
    %v1415 = vxor.u32 %v1414, 2147483648
    %v1416 = vmul.f32 %v1415, 1.442695
    %v1417 = vpow.pop %v1416
    %v1418 = vadd.f32 %v1417, 1.0
    %v1419 = vrcp.pop %v1418
    %v1420 = vmul.f32 1.0, %v1419
    %v1421 = vmul.f32 %v1413, %v1404
    %v1422 = vadd.f32 %v670, %v1421
    %v1423 = vtanh.pop %v1422
    %v1424 = vsub.f32 1.0, %v1420
    %v1425 = vmul.f32 %v1424, %v1423
    %v1426 = vmul.f32 %v1420, %v1265
    %v1427 = vadd.f32 %v1425, %v1426
    %vm1428 = vcmp.gt.s32.totalorder %v742, 3
    %v1429 = vsel %vm1428, 1, 0
    %1430 = vset.pattern.permute.xlu0 0
    %1431 = vperm.xlu0 %1430, %v1429
    %v1432 = vpop.permute.xlu0 %1431
    %vm1433 = vcmp.eq.s32.totalorder %v1432, 1
    %v1434 = vsel %vm1433, %v1427, %v1265
    %1435 = vmatprep.subr.mxu0 %v739
    %1436 = vmatpush1.msra.mxu0 %v738
    %1437 = vmatprep.subr.mxu0 %v736
    %1438 = vmatpush1.msra.mxu0 %v735
    %1439 = vmatprep.subr.mxu0 %v733
    %1440 = vmatpush1.msra.mxu0 %v732
    %1441 = vmatprep.subr.mxu0 %v730
    %1442 = vmatpush1.msra.mxu0 %v729
    %1443 = vmatprep.subr.mxu0 %v727
    %1444 = vmatpush1.msra.mxu0 %v726
    %1445 = vmatprep.subr.mxu0 %v724
    %1446 = vmatpush1.msra.mxu0 %v723
    %1447 = vmatprep.subr.mxu0 %v721
    %1448 = vmatpush1.msra.mxu0 %v720
    %1449 = vmatprep.subr.mxu0 %v718
    %1450 = vmatpush1.msra.mxu0 %v717
    %1451 = vmatprep.subr.mxu0 %v715
    %1452 = vmatpush1.msra.mxu0 %v714
    %1453 = vmatprep.subr.mxu0 %v712
    %1454 = vmatpush1.msra.mxu0 %v711
    %1455 = vmatprep.subr.mxu0 %v709
    %1456 = vmatpush1.msra.mxu0 %v708
    %1457 = vmatprep.subr.mxu0 %v706
    %1458 = vmatpush1.msra.mxu0 %v705
    %1459 = vmatprep.subr.mxu0 %v703
    %1460 = vmatpush1.msra.mxu0 %v702
    %1461 = vmatprep.subr.mxu0 %v700
    %1462 = vmatpush1.msra.mxu0 %v699
    %1463 = vmatprep.subr.mxu0 %v697
    %1464 = vmatpush1.msra.mxu0 %v696
    %1465 = vmatprep.subr.mxu0 %v694
    %1466 = vmatpush1.msra.mxu0 %v693
    %1467 = vmatprep.subr.mxu0 0.0
    %1468 = vmatpush2.msra.mxu0 0.0
    %1469 = vmatprep.subr.mxu0 0.0
    %1470 = vmatpush2.msra.mxu0 0.0
    %1471 = vmatprep.subr.mxu0 0.0
    %1472 = vmatpush2.msra.mxu0 0.0
    %1473 = vmatprep.subr.mxu0 0.0
    %1474 = vmatpush2.msra.mxu0 0.0
    %1475 = vmatprep.subr.mxu0 0.0
    %1476 = vmatpush2.msra.mxu0 0.0
    %1477 = vmatprep.subr.mxu0 0.0
    %1478 = vmatpush2.msra.mxu0 0.0
    %1479 = vmatprep.subr.mxu0 0.0
    %1480 = vmatpush2.msra.mxu0 0.0
    %1481 = vmatprep.subr.mxu0 0.0
    %1482 = vmatpush2.msra.mxu0 0.0
    %1483 = vmatprep.subr.mxu0 0.0
    %1484 = vmatpush2.msra.mxu0 0.0
    %1485 = vmatprep.subr.mxu0 0.0
    %1486 = vmatpush2.msra.mxu0 0.0
    %1487 = vmatprep.subr.mxu0 0.0
    %1488 = vmatpush2.msra.mxu0 0.0
    %1489 = vmatprep.subr.mxu0 0.0
    %1490 = vmatpush2.msra.mxu0 0.0
    %1491 = vmatprep.subr.mxu0 0.0
    %1492 = vmatpush2.msra.mxu0 0.0
    %1493 = vmatprep.subr.mxu0 0.0
    %1494 = vmatpush2.msra.mxu0 0.0
    %1495 = vmatprep.subr.mxu0 0.0
    %1496 = vmatpush2.msra.mxu0 0.0
    %1497 = vmatprep.subr.mxu0 0.0
    %1498 = vmatpush2.msra.mxu0 0.0
    %1499 = vmatprep.mubr.f32.mxu0 0.0
    %1500 = vmatmul.mubr.f32.gmra.mxu0 %v1434
    %v1501 = vpop.f32.mrf.mxu0
    %v1502 = vadd.f32 %v747, %v1501
    %v1503 = vpop.f32.mrf.mxu0
    %v1504 = vadd.f32 %v751, %v1503
    %1505 = vdwg.mxu0
    %1506 = vmatprep.subr.mxu0 0.0
    %1507 = vmatpush1.msra.mxu0 %v740
    %1508 = vmatprep.subr.mxu0 0.0
    %1509 = vmatpush1.msra.mxu0 %v737
    %1510 = vmatprep.subr.mxu0 0.0
    %1511 = vmatpush1.msra.mxu0 %v734
    %1512 = vmatprep.subr.mxu0 0.0
    %1513 = vmatpush1.msra.mxu0 %v731
    %1514 = vmatprep.subr.mxu0 0.0
    %1515 = vmatpush1.msra.mxu0 %v728
    %1516 = vmatprep.subr.mxu0 0.0
    %1517 = vmatpush1.msra.mxu0 %v725
    %1518 = vmatprep.subr.mxu0 0.0
    %1519 = vmatpush1.msra.mxu0 %v722
    %1520 = vmatprep.subr.mxu0 0.0
    %1521 = vmatpush1.msra.mxu0 %v719
    %1522 = vmatprep.subr.mxu0 0.0
    %1523 = vmatpush1.msra.mxu0 %v716
    %1524 = vmatprep.subr.mxu0 0.0
    %1525 = vmatpush1.msra.mxu0 %v713
    %1526 = vmatprep.subr.mxu0 0.0
    %1527 = vmatpush1.msra.mxu0 %v710
    %1528 = vmatprep.subr.mxu0 0.0
    %1529 = vmatpush1.msra.mxu0 %v707
    %1530 = vmatprep.subr.mxu0 0.0
    %1531 = vmatpush1.msra.mxu0 %v704
    %1532 = vmatprep.subr.mxu0 0.0
    %1533 = vmatpush1.msra.mxu0 %v701
    %1534 = vmatprep.subr.mxu0 0.0
    %1535 = vmatpush1.msra.mxu0 %v698
    %1536 = vmatprep.subr.mxu0 0.0
    %1537 = vmatpush1.msra.mxu0 %v695
    %1538 = vmatprep.subr.mxu0 0.0
    %1539 = vmatpush2.msra.mxu0 0.0
    %1540 = vmatprep.subr.mxu0 0.0
    %1541 = vmatpush2.msra.mxu0 0.0
    %1542 = vmatprep.subr.mxu0 0.0
    %1543 = vmatpush2.msra.mxu0 0.0
    %1544 = vmatprep.subr.mxu0 0.0
    %1545 = vmatpush2.msra.mxu0 0.0
    %1546 = vmatprep.subr.mxu0 0.0
    %1547 = vmatpush2.msra.mxu0 0.0
    %1548 = vmatprep.subr.mxu0 0.0
    %1549 = vmatpush2.msra.mxu0 0.0
    %1550 = vmatprep.subr.mxu0 0.0
    %1551 = vmatpush2.msra.mxu0 0.0
    %1552 = vmatprep.subr.mxu0 0.0
    %1553 = vmatpush2.msra.mxu0 0.0
    %1554 = vmatprep.subr.mxu0 0.0
    %1555 = vmatpush2.msra.mxu0 0.0
    %1556 = vmatprep.subr.mxu0 0.0
    %1557 = vmatpush2.msra.mxu0 0.0
    %1558 = vmatprep.subr.mxu0 0.0
    %1559 = vmatpush2.msra.mxu0 0.0
    %1560 = vmatprep.subr.mxu0 0.0
    %1561 = vmatpush2.msra.mxu0 0.0
    %1562 = vmatprep.subr.mxu0 0.0
    %1563 = vmatpush2.msra.mxu0 0.0
    %1564 = vmatprep.subr.mxu0 0.0
    %1565 = vmatpush2.msra.mxu0 0.0
    %1566 = vmatprep.subr.mxu0 0.0
    %1567 = vmatpush2.msra.mxu0 0.0
    %1568 = vmatprep.subr.mxu0 0.0
    %1569 = vmatpush2.msra.mxu0 0.0
    %1570 = vmatprep.mubr.f32.mxu0 0.0
    %1571 = vmatmul.mubr.f32.gmra.mxu0 %v1434
    %v1572 = vpop.f32.mrf.mxu0
    %v1573 = vadd.f32 %v755, %v1572
    %v1574 = vpop.f32.mrf.mxu0
    %1575 = vdwg.mxu0
    %v1576 = vadd.f32 %v566, %v1502
    %v1577 = vxor.u32 %v1576, 2147483648
    %v1578 = vmul.f32 %v1577, 1.442695
    %v1579 = vpow.pop %v1578
    %v1580 = vadd.f32 %v1579, 1.0
    %v1581 = vrcp.pop %v1580
    %v1582 = vmul.f32 1.0, %v1581
    %v1583 = vadd.f32 %v568, %v1504
    %v1584 = vxor.u32 %v1583, 2147483648
    %v1585 = vmul.f32 %v1584, 1.442695
    %v1586 = vpow.pop %v1585
    %v1587 = vadd.f32 %v1586, 1.0
    %v1588 = vrcp.pop %v1587
    %v1589 = vmul.f32 1.0, %v1588
    %v1590 = vmul.f32 %v1582, %v1573
    %v1591 = vadd.f32 %v675, %v1590
    %v1592 = vtanh.pop %v1591
    %v1593 = vsub.f32 1.0, %v1589
    %v1594 = vmul.f32 %v1593, %v1592
    %v1595 = vmul.f32 %v1589, %v1434
    %v1596 = vadd.f32 %v1594, %v1595
    %vm1597 = vcmp.gt.s32.totalorder %v742, 4
    %v1598 = vsel %vm1597, 1, 0
    %1599 = vset.pattern.permute.xlu0 0
    %1600 = vperm.xlu0 %1599, %v1598
    %v1601 = vpop.permute.xlu0 %1600
    %vm1602 = vcmp.eq.s32.totalorder %v1601, 1
    %v1603 = vsel %vm1602, %v1596, %v1434
    %1604 = vmatprep.subr.mxu0 %v739
    %1605 = vmatpush1.msra.mxu0 %v738
    %1606 = vmatprep.subr.mxu0 %v736
    %1607 = vmatpush1.msra.mxu0 %v735
    %1608 = vmatprep.subr.mxu0 %v733
    %1609 = vmatpush1.msra.mxu0 %v732
    %1610 = vmatprep.subr.mxu0 %v730
    %1611 = vmatpush1.msra.mxu0 %v729
    %1612 = vmatprep.subr.mxu0 %v727
    %1613 = vmatpush1.msra.mxu0 %v726
    %1614 = vmatprep.subr.mxu0 %v724
    %1615 = vmatpush1.msra.mxu0 %v723
    %1616 = vmatprep.subr.mxu0 %v721
    %1617 = vmatpush1.msra.mxu0 %v720
    %1618 = vmatprep.subr.mxu0 %v718
    %1619 = vmatpush1.msra.mxu0 %v717
    %1620 = vmatprep.subr.mxu0 %v715
    %1621 = vmatpush1.msra.mxu0 %v714
    %1622 = vmatprep.subr.mxu0 %v712
    %1623 = vmatpush1.msra.mxu0 %v711
    %1624 = vmatprep.subr.mxu0 %v709
    %1625 = vmatpush1.msra.mxu0 %v708
    %1626 = vmatprep.subr.mxu0 %v706
    %1627 = vmatpush1.msra.mxu0 %v705
    %1628 = vmatprep.subr.mxu0 %v703
    %1629 = vmatpush1.msra.mxu0 %v702
    %1630 = vmatprep.subr.mxu0 %v700
    %1631 = vmatpush1.msra.mxu0 %v699
    %1632 = vmatprep.subr.mxu0 %v697
    %1633 = vmatpush1.msra.mxu0 %v696
    %1634 = vmatprep.subr.mxu0 %v694
    %1635 = vmatpush1.msra.mxu0 %v693
    %1636 = vmatprep.subr.mxu0 0.0
    %1637 = vmatpush2.msra.mxu0 0.0
    %1638 = vmatprep.subr.mxu0 0.0
    %1639 = vmatpush2.msra.mxu0 0.0
    %1640 = vmatprep.subr.mxu0 0.0
    %1641 = vmatpush2.msra.mxu0 0.0
    %1642 = vmatprep.subr.mxu0 0.0
    %1643 = vmatpush2.msra.mxu0 0.0
    %1644 = vmatprep.subr.mxu0 0.0
    %1645 = vmatpush2.msra.mxu0 0.0
    %1646 = vmatprep.subr.mxu0 0.0
    %1647 = vmatpush2.msra.mxu0 0.0
    %1648 = vmatprep.subr.mxu0 0.0
    %1649 = vmatpush2.msra.mxu0 0.0
    %1650 = vmatprep.subr.mxu0 0.0
    %1651 = vmatpush2.msra.mxu0 0.0
    %1652 = vmatprep.subr.mxu0 0.0
    %1653 = vmatpush2.msra.mxu0 0.0
    %1654 = vmatprep.subr.mxu0 0.0
    %1655 = vmatpush2.msra.mxu0 0.0
    %1656 = vmatprep.subr.mxu0 0.0
    %1657 = vmatpush2.msra.mxu0 0.0
    %1658 = vmatprep.subr.mxu0 0.0
    %1659 = vmatpush2.msra.mxu0 0.0
    %1660 = vmatprep.subr.mxu0 0.0
    %1661 = vmatpush2.msra.mxu0 0.0
    %1662 = vmatprep.subr.mxu0 0.0
    %1663 = vmatpush2.msra.mxu0 0.0
    %1664 = vmatprep.subr.mxu0 0.0
    %1665 = vmatpush2.msra.mxu0 0.0
    %1666 = vmatprep.subr.mxu0 0.0
    %1667 = vmatpush2.msra.mxu0 0.0
    %1668 = vmatprep.mubr.f32.mxu0 0.0
    %1669 = vmatmul.mubr.f32.gmra.mxu0 %v1603
    %v1670 = vpop.f32.mrf.mxu0
    %v1671 = vadd.f32 %v747, %v1670
    %v1672 = vpop.f32.mrf.mxu0
    %v1673 = vadd.f32 %v751, %v1672
    %1674 = vdwg.mxu0
    %1675 = vmatprep.subr.mxu0 0.0
    %1676 = vmatpush1.msra.mxu0 %v740
    %1677 = vmatprep.subr.mxu0 0.0
    %1678 = vmatpush1.msra.mxu0 %v737
    %1679 = vmatprep.subr.mxu0 0.0
    %1680 = vmatpush1.msra.mxu0 %v734
    %1681 = vmatprep.subr.mxu0 0.0
    %1682 = vmatpush1.msra.mxu0 %v731
    %1683 = vmatprep.subr.mxu0 0.0
    %1684 = vmatpush1.msra.mxu0 %v728
    %1685 = vmatprep.subr.mxu0 0.0
    %1686 = vmatpush1.msra.mxu0 %v725
    %1687 = vmatprep.subr.mxu0 0.0
    %1688 = vmatpush1.msra.mxu0 %v722
    %1689 = vmatprep.subr.mxu0 0.0
    %1690 = vmatpush1.msra.mxu0 %v719
    %1691 = vmatprep.subr.mxu0 0.0
    %1692 = vmatpush1.msra.mxu0 %v716
    %1693 = vmatprep.subr.mxu0 0.0
    %1694 = vmatpush1.msra.mxu0 %v713
    %1695 = vmatprep.subr.mxu0 0.0
    %1696 = vmatpush1.msra.mxu0 %v710
    %1697 = vmatprep.subr.mxu0 0.0
    %1698 = vmatpush1.msra.mxu0 %v707
    %1699 = vmatprep.subr.mxu0 0.0
    %1700 = vmatpush1.msra.mxu0 %v704
    %1701 = vmatprep.subr.mxu0 0.0
    %1702 = vmatpush1.msra.mxu0 %v701
    %1703 = vmatprep.subr.mxu0 0.0
    %1704 = vmatpush1.msra.mxu0 %v698
    %1705 = vmatprep.subr.mxu0 0.0
    %1706 = vmatpush1.msra.mxu0 %v695
    %1707 = vmatprep.subr.mxu0 0.0
    %1708 = vmatpush2.msra.mxu0 0.0
    %1709 = vmatprep.subr.mxu0 0.0
    %1710 = vmatpush2.msra.mxu0 0.0
    %1711 = vmatprep.subr.mxu0 0.0
    %1712 = vmatpush2.msra.mxu0 0.0
    %1713 = vmatprep.subr.mxu0 0.0
    %1714 = vmatpush2.msra.mxu0 0.0
    %1715 = vmatprep.subr.mxu0 0.0
    %1716 = vmatpush2.msra.mxu0 0.0
    %1717 = vmatprep.subr.mxu0 0.0
    %1718 = vmatpush2.msra.mxu0 0.0
    %1719 = vmatprep.subr.mxu0 0.0
    %1720 = vmatpush2.msra.mxu0 0.0
    %1721 = vmatprep.subr.mxu0 0.0
    %1722 = vmatpush2.msra.mxu0 0.0
    %1723 = vmatprep.subr.mxu0 0.0
    %1724 = vmatpush2.msra.mxu0 0.0
    %1725 = vmatprep.subr.mxu0 0.0
    %1726 = vmatpush2.msra.mxu0 0.0
    %1727 = vmatprep.subr.mxu0 0.0
    %1728 = vmatpush2.msra.mxu0 0.0
    %1729 = vmatprep.subr.mxu0 0.0
    %1730 = vmatpush2.msra.mxu0 0.0
    %1731 = vmatprep.subr.mxu0 0.0
    %1732 = vmatpush2.msra.mxu0 0.0
    %1733 = vmatprep.subr.mxu0 0.0
    %1734 = vmatpush2.msra.mxu0 0.0
    %1735 = vmatprep.subr.mxu0 0.0
    %1736 = vmatpush2.msra.mxu0 0.0
    %1737 = vmatprep.subr.mxu0 0.0
    %1738 = vmatpush2.msra.mxu0 0.0
    %1739 = vmatprep.mubr.f32.mxu0 0.0
    %1740 = vmatmul.mubr.f32.gmra.mxu0 %v1603
    %v1741 = vpop.f32.mrf.mxu0
    %v1742 = vadd.f32 %v755, %v1741
    %v1743 = vpop.f32.mrf.mxu0
    %1744 = vdwg.mxu0
    %v1745 = vadd.f32 %v572, %v1671
    %v1746 = vxor.u32 %v1745, 2147483648
    %v1747 = vmul.f32 %v1746, 1.442695
    %v1748 = vpow.pop %v1747
    %v1749 = vadd.f32 %v1748, 1.0
    %v1750 = vrcp.pop %v1749
    %v1751 = vmul.f32 1.0, %v1750
    %v1752 = vadd.f32 %v574, %v1673
    %v1753 = vxor.u32 %v1752, 2147483648
    %v1754 = vmul.f32 %v1753, 1.442695
    %v1755 = vpow.pop %v1754
    %v1756 = vadd.f32 %v1755, 1.0
    %v1757 = vrcp.pop %v1756
    %v1758 = vmul.f32 1.0, %v1757
    %v1759 = vmul.f32 %v1751, %v1742
    %v1760 = vadd.f32 %v680, %v1759
    %v1761 = vtanh.pop %v1760
    %v1762 = vsub.f32 1.0, %v1758
    %v1763 = vmul.f32 %v1762, %v1761
    %v1764 = vmul.f32 %v1758, %v1603
    %v1765 = vadd.f32 %v1763, %v1764
    %vm1766 = vcmp.gt.s32.totalorder %v742, 5
    %v1767 = vsel %vm1766, 1, 0
    %1768 = vset.pattern.permute.xlu0 0
    %1769 = vperm.xlu0 %1768, %v1767
    %v1770 = vpop.permute.xlu0 %1769
    %vm1771 = vcmp.eq.s32.totalorder %v1770, 1
    %v1772 = vsel %vm1771, %v1765, %v1603
    %1773 = vmatprep.subr.mxu0 %v739
    %1774 = vmatpush1.msra.mxu0 %v738
    %1775 = vmatprep.subr.mxu0 %v736
    %1776 = vmatpush1.msra.mxu0 %v735
    %1777 = vmatprep.subr.mxu0 %v733
    %1778 = vmatpush1.msra.mxu0 %v732
    %1779 = vmatprep.subr.mxu0 %v730
    %1780 = vmatpush1.msra.mxu0 %v729
    %1781 = vmatprep.subr.mxu0 %v727
    %1782 = vmatpush1.msra.mxu0 %v726
    %1783 = vmatprep.subr.mxu0 %v724
    %1784 = vmatpush1.msra.mxu0 %v723
    %1785 = vmatprep.subr.mxu0 %v721
    %1786 = vmatpush1.msra.mxu0 %v720
    %1787 = vmatprep.subr.mxu0 %v718
    %1788 = vmatpush1.msra.mxu0 %v717
    %1789 = vmatprep.subr.mxu0 %v715
    %1790 = vmatpush1.msra.mxu0 %v714
    %1791 = vmatprep.subr.mxu0 %v712
    %1792 = vmatpush1.msra.mxu0 %v711
    %1793 = vmatprep.subr.mxu0 %v709
    %1794 = vmatpush1.msra.mxu0 %v708
    %1795 = vmatprep.subr.mxu0 %v706
    %1796 = vmatpush1.msra.mxu0 %v705
    %1797 = vmatprep.subr.mxu0 %v703
    %1798 = vmatpush1.msra.mxu0 %v702
    %1799 = vmatprep.subr.mxu0 %v700
    %1800 = vmatpush1.msra.mxu0 %v699
    %1801 = vmatprep.subr.mxu0 %v697
    %1802 = vmatpush1.msra.mxu0 %v696
    %1803 = vmatprep.subr.mxu0 %v694
    %1804 = vmatpush1.msra.mxu0 %v693
    %1805 = vmatprep.subr.mxu0 0.0
    %1806 = vmatpush2.msra.mxu0 0.0
    %1807 = vmatprep.subr.mxu0 0.0
    %1808 = vmatpush2.msra.mxu0 0.0
    %1809 = vmatprep.subr.mxu0 0.0
    %1810 = vmatpush2.msra.mxu0 0.0
    %1811 = vmatprep.subr.mxu0 0.0
    %1812 = vmatpush2.msra.mxu0 0.0
    %1813 = vmatprep.subr.mxu0 0.0
    %1814 = vmatpush2.msra.mxu0 0.0
    %1815 = vmatprep.subr.mxu0 0.0
    %1816 = vmatpush2.msra.mxu0 0.0
    %1817 = vmatprep.subr.mxu0 0.0
    %1818 = vmatpush2.msra.mxu0 0.0
    %1819 = vmatprep.subr.mxu0 0.0
    %1820 = vmatpush2.msra.mxu0 0.0
    %1821 = vmatprep.subr.mxu0 0.0
    %1822 = vmatpush2.msra.mxu0 0.0
    %1823 = vmatprep.subr.mxu0 0.0
    %1824 = vmatpush2.msra.mxu0 0.0
    %1825 = vmatprep.subr.mxu0 0.0
    %1826 = vmatpush2.msra.mxu0 0.0
    %1827 = vmatprep.subr.mxu0 0.0
    %1828 = vmatpush2.msra.mxu0 0.0
    %1829 = vmatprep.subr.mxu0 0.0
    %1830 = vmatpush2.msra.mxu0 0.0
    %1831 = vmatprep.subr.mxu0 0.0
    %1832 = vmatpush2.msra.mxu0 0.0
    %1833 = vmatprep.subr.mxu0 0.0
    %1834 = vmatpush2.msra.mxu0 0.0
    %1835 = vmatprep.subr.mxu0 0.0
    %1836 = vmatpush2.msra.mxu0 0.0
    %1837 = vmatprep.mubr.f32.mxu0 0.0
    %1838 = vmatmul.mubr.f32.gmra.mxu0 %v1772
    %v1839 = vpop.f32.mrf.mxu0
    %v1840 = vadd.f32 %v747, %v1839
    %v1841 = vpop.f32.mrf.mxu0
    %v1842 = vadd.f32 %v751, %v1841
    %1843 = vdwg.mxu0
    %1844 = vmatprep.subr.mxu0 0.0
    %1845 = vmatpush1.msra.mxu0 %v740
    %1846 = vmatprep.subr.mxu0 0.0
    %1847 = vmatpush1.msra.mxu0 %v737
    %1848 = vmatprep.subr.mxu0 0.0
    %1849 = vmatpush1.msra.mxu0 %v734
    %1850 = vmatprep.subr.mxu0 0.0
    %1851 = vmatpush1.msra.mxu0 %v731
    %1852 = vmatprep.subr.mxu0 0.0
    %1853 = vmatpush1.msra.mxu0 %v728
    %1854 = vmatprep.subr.mxu0 0.0
    %1855 = vmatpush1.msra.mxu0 %v725
    %1856 = vmatprep.subr.mxu0 0.0
    %1857 = vmatpush1.msra.mxu0 %v722
    %1858 = vmatprep.subr.mxu0 0.0
    %1859 = vmatpush1.msra.mxu0 %v719
    %1860 = vmatprep.subr.mxu0 0.0
    %1861 = vmatpush1.msra.mxu0 %v716
    %1862 = vmatprep.subr.mxu0 0.0
    %1863 = vmatpush1.msra.mxu0 %v713
    %1864 = vmatprep.subr.mxu0 0.0
    %1865 = vmatpush1.msra.mxu0 %v710
    %1866 = vmatprep.subr.mxu0 0.0
    %1867 = vmatpush1.msra.mxu0 %v707
    %1868 = vmatprep.subr.mxu0 0.0
    %1869 = vmatpush1.msra.mxu0 %v704
    %1870 = vmatprep.subr.mxu0 0.0
    %1871 = vmatpush1.msra.mxu0 %v701
    %1872 = vmatprep.subr.mxu0 0.0
    %1873 = vmatpush1.msra.mxu0 %v698
    %1874 = vmatprep.subr.mxu0 0.0
    %1875 = vmatpush1.msra.mxu0 %v695
    %1876 = vmatprep.subr.mxu0 0.0
    %1877 = vmatpush2.msra.mxu0 0.0
    %1878 = vmatprep.subr.mxu0 0.0
    %1879 = vmatpush2.msra.mxu0 0.0
    %1880 = vmatprep.subr.mxu0 0.0
    %1881 = vmatpush2.msra.mxu0 0.0
    %1882 = vmatprep.subr.mxu0 0.0
    %1883 = vmatpush2.msra.mxu0 0.0
    %1884 = vmatprep.subr.mxu0 0.0
    %1885 = vmatpush2.msra.mxu0 0.0
    %1886 = vmatprep.subr.mxu0 0.0
    %1887 = vmatpush2.msra.mxu0 0.0
    %1888 = vmatprep.subr.mxu0 0.0
    %1889 = vmatpush2.msra.mxu0 0.0
    %1890 = vmatprep.subr.mxu0 0.0
    %1891 = vmatpush2.msra.mxu0 0.0
    %1892 = vmatprep.subr.mxu0 0.0
    %1893 = vmatpush2.msra.mxu0 0.0
    %1894 = vmatprep.subr.mxu0 0.0
    %1895 = vmatpush2.msra.mxu0 0.0
    %1896 = vmatprep.subr.mxu0 0.0
    %1897 = vmatpush2.msra.mxu0 0.0
    %1898 = vmatprep.subr.mxu0 0.0
    %1899 = vmatpush2.msra.mxu0 0.0
    %1900 = vmatprep.subr.mxu0 0.0
    %1901 = vmatpush2.msra.mxu0 0.0
    %1902 = vmatprep.subr.mxu0 0.0
    %1903 = vmatpush2.msra.mxu0 0.0
    %1904 = vmatprep.subr.mxu0 0.0
    %1905 = vmatpush2.msra.mxu0 0.0
    %1906 = vmatprep.subr.mxu0 0.0
    %1907 = vmatpush2.msra.mxu0 0.0
    %1908 = vmatprep.mubr.f32.mxu0 0.0
    %1909 = vmatmul.mubr.f32.gmra.mxu0 %v1772
    %v1910 = vpop.f32.mrf.mxu0
    %v1911 = vadd.f32 %v755, %v1910
    %v1912 = vpop.f32.mrf.mxu0
    %1913 = vdwg.mxu0
    %v1914 = vadd.f32 %v578, %v1840
    %v1915 = vxor.u32 %v1914, 2147483648
    %v1916 = vmul.f32 %v1915, 1.442695
    %v1917 = vpow.pop %v1916
    %v1918 = vadd.f32 %v1917, 1.0
    %v1919 = vrcp.pop %v1918
    %v1920 = vmul.f32 1.0, %v1919
    %v1921 = vadd.f32 %v580, %v1842
    %v1922 = vxor.u32 %v1921, 2147483648
    %v1923 = vmul.f32 %v1922, 1.442695
    %v1924 = vpow.pop %v1923
    %v1925 = vadd.f32 %v1924, 1.0
    %v1926 = vrcp.pop %v1925
    %v1927 = vmul.f32 1.0, %v1926
    %v1928 = vmul.f32 %v1920, %v1911
    %v1929 = vadd.f32 %v685, %v1928
    %v1930 = vtanh.pop %v1929
    %v1931 = vsub.f32 1.0, %v1927
    %v1932 = vmul.f32 %v1931, %v1930
    %v1933 = vmul.f32 %v1927, %v1772
    %v1934 = vadd.f32 %v1932, %v1933
    %vm1935 = vcmp.gt.s32.totalorder %v742, 6
    %v1936 = vsel %vm1935, 1, 0
    %1937 = vset.pattern.permute.xlu0 0
    %1938 = vperm.xlu0 %1937, %v1936
    %v1939 = vpop.permute.xlu0 %1938
    %vm1940 = vcmp.eq.s32.totalorder %v1939, 1
    %v1941 = vsel %vm1940, %v1934, %v1772
    %1942 = vmatprep.subr.mxu0 %v739
    %1943 = vmatpush1.msra.mxu0 %v738
    %1944 = vmatprep.subr.mxu0 %v736
    %1945 = vmatpush1.msra.mxu0 %v735
    %1946 = vmatprep.subr.mxu0 %v733
    %1947 = vmatpush1.msra.mxu0 %v732
    %1948 = vmatprep.subr.mxu0 %v730
    %1949 = vmatpush1.msra.mxu0 %v729
    %1950 = vmatprep.subr.mxu0 %v727
    %1951 = vmatpush1.msra.mxu0 %v726
    %1952 = vmatprep.subr.mxu0 %v724
    %1953 = vmatpush1.msra.mxu0 %v723
    %1954 = vmatprep.subr.mxu0 %v721
    %1955 = vmatpush1.msra.mxu0 %v720
    %1956 = vmatprep.subr.mxu0 %v718
    %1957 = vmatpush1.msra.mxu0 %v717
    %1958 = vmatprep.subr.mxu0 %v715
    %1959 = vmatpush1.msra.mxu0 %v714
    %1960 = vmatprep.subr.mxu0 %v712
    %1961 = vmatpush1.msra.mxu0 %v711
    %1962 = vmatprep.subr.mxu0 %v709
    %1963 = vmatpush1.msra.mxu0 %v708
    %1964 = vmatprep.subr.mxu0 %v706
    %1965 = vmatpush1.msra.mxu0 %v705
    %1966 = vmatprep.subr.mxu0 %v703
    %1967 = vmatpush1.msra.mxu0 %v702
    %1968 = vmatprep.subr.mxu0 %v700
    %1969 = vmatpush1.msra.mxu0 %v699
    %1970 = vmatprep.subr.mxu0 %v697
    %1971 = vmatpush1.msra.mxu0 %v696
    %1972 = vmatprep.subr.mxu0 %v694
    %1973 = vmatpush1.msra.mxu0 %v693
    %1974 = vmatprep.subr.mxu0 0.0
    %1975 = vmatpush2.msra.mxu0 0.0
    %1976 = vmatprep.subr.mxu0 0.0
    %1977 = vmatpush2.msra.mxu0 0.0
    %1978 = vmatprep.subr.mxu0 0.0
    %1979 = vmatpush2.msra.mxu0 0.0
    %1980 = vmatprep.subr.mxu0 0.0
    %1981 = vmatpush2.msra.mxu0 0.0
    %1982 = vmatprep.subr.mxu0 0.0
    %1983 = vmatpush2.msra.mxu0 0.0
    %1984 = vmatprep.subr.mxu0 0.0
    %1985 = vmatpush2.msra.mxu0 0.0
    %1986 = vmatprep.subr.mxu0 0.0
    %1987 = vmatpush2.msra.mxu0 0.0
    %1988 = vmatprep.subr.mxu0 0.0
    %1989 = vmatpush2.msra.mxu0 0.0
    %1990 = vmatprep.subr.mxu0 0.0
    %1991 = vmatpush2.msra.mxu0 0.0
    %1992 = vmatprep.subr.mxu0 0.0
    %1993 = vmatpush2.msra.mxu0 0.0
    %1994 = vmatprep.subr.mxu0 0.0
    %1995 = vmatpush2.msra.mxu0 0.0
    %1996 = vmatprep.subr.mxu0 0.0
    %1997 = vmatpush2.msra.mxu0 0.0
    %1998 = vmatprep.subr.mxu0 0.0
    %1999 = vmatpush2.msra.mxu0 0.0
    %2000 = vmatprep.subr.mxu0 0.0
    %2001 = vmatpush2.msra.mxu0 0.0
    %2002 = vmatprep.subr.mxu0 0.0
    %2003 = vmatpush2.msra.mxu0 0.0
    %2004 = vmatprep.subr.mxu0 0.0
    %2005 = vmatpush2.msra.mxu0 0.0
    %2006 = vmatprep.mubr.f32.mxu0 0.0
    %2007 = vmatmul.mubr.f32.gmra.mxu0 %v1941
    %v2008 = vpop.f32.mrf.mxu0
    %v2009 = vadd.f32 %v747, %v2008
    %v2010 = vpop.f32.mrf.mxu0
    %v2011 = vadd.f32 %v751, %v2010
    %2012 = vdwg.mxu0
    %2013 = vmatprep.subr.mxu0 0.0
    %2014 = vmatpush1.msra.mxu0 %v740
    %2015 = vmatprep.subr.mxu0 0.0
    %2016 = vmatpush1.msra.mxu0 %v737
    %2017 = vmatprep.subr.mxu0 0.0
    %2018 = vmatpush1.msra.mxu0 %v734
    %2019 = vmatprep.subr.mxu0 0.0
    %2020 = vmatpush1.msra.mxu0 %v731
    %2021 = vmatprep.subr.mxu0 0.0
    %2022 = vmatpush1.msra.mxu0 %v728
    %2023 = vmatprep.subr.mxu0 0.0
    %2024 = vmatpush1.msra.mxu0 %v725
    %2025 = vmatprep.subr.mxu0 0.0
    %2026 = vmatpush1.msra.mxu0 %v722
    %2027 = vmatprep.subr.mxu0 0.0
    %2028 = vmatpush1.msra.mxu0 %v719
    %2029 = vmatprep.subr.mxu0 0.0
    %2030 = vmatpush1.msra.mxu0 %v716
    %2031 = vmatprep.subr.mxu0 0.0
    %2032 = vmatpush1.msra.mxu0 %v713
    %2033 = vmatprep.subr.mxu0 0.0
    %2034 = vmatpush1.msra.mxu0 %v710
    %2035 = vmatprep.subr.mxu0 0.0
    %2036 = vmatpush1.msra.mxu0 %v707
    %2037 = vmatprep.subr.mxu0 0.0
    %2038 = vmatpush1.msra.mxu0 %v704
    %2039 = vmatprep.subr.mxu0 0.0
    %2040 = vmatpush1.msra.mxu0 %v701
    %2041 = vmatprep.subr.mxu0 0.0
    %2042 = vmatpush1.msra.mxu0 %v698
    %2043 = vmatprep.subr.mxu0 0.0
    %2044 = vmatpush1.msra.mxu0 %v695
    %2045 = vmatprep.subr.mxu0 0.0
    %2046 = vmatpush2.msra.mxu0 0.0
    %2047 = vmatprep.subr.mxu0 0.0
    %2048 = vmatpush2.msra.mxu0 0.0
    %2049 = vmatprep.subr.mxu0 0.0
    %2050 = vmatpush2.msra.mxu0 0.0
    %2051 = vmatprep.subr.mxu0 0.0
    %2052 = vmatpush2.msra.mxu0 0.0
    %2053 = vmatprep.subr.mxu0 0.0
    %2054 = vmatpush2.msra.mxu0 0.0
    %2055 = vmatprep.subr.mxu0 0.0
    %2056 = vmatpush2.msra.mxu0 0.0
    %2057 = vmatprep.subr.mxu0 0.0
    %2058 = vmatpush2.msra.mxu0 0.0
    %2059 = vmatprep.subr.mxu0 0.0
    %2060 = vmatpush2.msra.mxu0 0.0
    %2061 = vmatprep.subr.mxu0 0.0
    %2062 = vmatpush2.msra.mxu0 0.0
    %2063 = vmatprep.subr.mxu0 0.0
    %2064 = vmatpush2.msra.mxu0 0.0
    %2065 = vmatprep.subr.mxu0 0.0
    %2066 = vmatpush2.msra.mxu0 0.0
    %2067 = vmatprep.subr.mxu0 0.0
    %2068 = vmatpush2.msra.mxu0 0.0
    %2069 = vmatprep.subr.mxu0 0.0
    %2070 = vmatpush2.msra.mxu0 0.0
    %2071 = vmatprep.subr.mxu0 0.0
    %2072 = vmatpush2.msra.mxu0 0.0
    %2073 = vmatprep.subr.mxu0 0.0
    %2074 = vmatpush2.msra.mxu0 0.0
    %2075 = vmatprep.subr.mxu0 0.0
    %2076 = vmatpush2.msra.mxu0 0.0
    %2077 = vmatprep.mubr.f32.mxu0 0.0
    %2078 = vmatmul.mubr.f32.gmra.mxu0 %v1941
    %v2079 = vpop.f32.mrf.mxu0
    %v2080 = vadd.f32 %v755, %v2079
    %v2081 = vpop.f32.mrf.mxu0
    %2082 = vdwg.mxu0
    %v2083 = vadd.f32 %v584, %v2009
    %v2084 = vxor.u32 %v2083, 2147483648
    %v2085 = vmul.f32 %v2084, 1.442695
    %v2086 = vpow.pop %v2085
    %v2087 = vadd.f32 %v2086, 1.0
    %v2088 = vrcp.pop %v2087
    %v2089 = vmul.f32 1.0, %v2088
    %v2090 = vadd.f32 %v586, %v2011
    %v2091 = vxor.u32 %v2090, 2147483648
    %v2092 = vmul.f32 %v2091, 1.442695
    %v2093 = vpow.pop %v2092
    %v2094 = vadd.f32 %v2093, 1.0
    %v2095 = vrcp.pop %v2094
    %v2096 = vmul.f32 1.0, %v2095
    %v2097 = vmul.f32 %v2089, %v2080
    %v2098 = vadd.f32 %v690, %v2097
    %v2099 = vtanh.pop %v2098
    %v2100 = vsub.f32 1.0, %v2096
    %v2101 = vmul.f32 %v2100, %v2099
    %v2102 = vmul.f32 %v2096, %v1941
    %v2103 = vadd.f32 %v2101, %v2102
    %vm2104 = vcmp.gt.s32.totalorder %v742, 7
    %v2105 = vsel %vm2104, 1, 0
    %2106 = vset.pattern.permute.xlu0 0
    %2107 = vperm.xlu0 %2106, %v2105
    %v2108 = vpop.permute.xlu0 %2107
    %vm2109 = vcmp.eq.s32.totalorder %v2108, 1
    %v2110 = vsel %vm2109, %v2103, %v1941
    %v2111 = vld [vmem:[%s5] sm:$0xff]
    %v2112 = vld [vmem:[%s5 + $0x8] sm:$0xff]
    %v2113 = vld [vmem:[%s5 + $0x10] sm:$0xff]
    %v2114 = vld [vmem:[%s5 + $0x18] sm:$0xff]
    %v2115 = vld [vmem:[%s5 + $0x20] sm:$0xff]
    %v2116 = vld [vmem:[%s5 + $0x28] sm:$0xff]
    %v2117 = vld [vmem:[%s25] sm:$0x1]
    %2119 = vset.pattern.permute.xlu0 0
    %2120 = vperm.xlu0 %2119, %v2111
    %v2121 = vpop.permute.xlu0 %2120
    %2124 = vset.pattern.permute.xlu0 0
    %2125 = vperm.xlu0 %2124, %v2112
    %v2126 = vpop.permute.xlu0 %2125
    %2129 = vset.pattern.permute.xlu0 0
    %2130 = vperm.xlu0 %2129, %v2113
    %v2131 = vpop.permute.xlu0 %2130
    %2134 = vset.pattern.permute.xlu0 0
    %2135 = vperm.xlu0 %2134, %v2114
    %v2136 = vpop.permute.xlu0 %2135
    %2139 = vset.pattern.permute.xlu0 0
    %2140 = vperm.xlu0 %2139, %v2115
    %v2141 = vpop.permute.xlu0 %2140
    %2144 = vset.pattern.permute.xlu0 0
    %2145 = vperm.xlu0 %2144, %v2116
    %v2146 = vpop.permute.xlu0 %2145
    %v2148 = vlaneseq
    %v2149 = vshrl.u32 %v2148, 7
    %v2150 = vsub.s32 0, %v2149
    %v2151 = vrot.slane %v2117, %v2150
    %v2152 = vmul.f32 %v2121, %v2151
    %v2153 = vmul.f32 %v2126, %v2151
    %v2154 = vmul.f32 %v2131, %v2151
    %v2155 = vmul.f32 %v2136, %v2151
    %v2156 = vmul.f32 %v2141, %v2151
    %v2157 = vmul.f32 %v2146, %v2151
    %v2158 = vld [vmem:[%s25 + $0x1] sm:$0x1]
    %2159 = vset.pattern.permute.xlu0 1
    %2160 = vperm.xlu0 %2159, %v2111
    %v2161 = vpop.permute.xlu0 %2160
    %2163 = vset.pattern.permute.xlu0 1
    %2164 = vperm.xlu0 %2163, %v2112
    %v2165 = vpop.permute.xlu0 %2164
    %2167 = vset.pattern.permute.xlu0 1
    %2168 = vperm.xlu0 %2167, %v2113
    %v2169 = vpop.permute.xlu0 %2168
    %2171 = vset.pattern.permute.xlu0 1
    %2172 = vperm.xlu0 %2171, %v2114
    %v2173 = vpop.permute.xlu0 %2172
    %2175 = vset.pattern.permute.xlu0 1
    %2176 = vperm.xlu0 %2175, %v2115
    %v2177 = vpop.permute.xlu0 %2176
    %2179 = vset.pattern.permute.xlu0 1
    %2180 = vperm.xlu0 %2179, %v2116
    %v2181 = vpop.permute.xlu0 %2180
    %v2183 = vlaneseq
    %v2184 = vshrl.u32 %v2183, 7
    %v2185 = vsub.s32 0, %v2184
    %v2186 = vrot.slane %v2158, %v2185
    %v2187 = vmul.f32 %v2161, %v2186
    %v2188 = vmul.f32 %v2165, %v2186
    %v2189 = vmul.f32 %v2169, %v2186
    %v2190 = vmul.f32 %v2173, %v2186
    %v2191 = vmul.f32 %v2177, %v2186
    %v2192 = vmul.f32 %v2181, %v2186
    %v2193 = vadd.f32 %v2152, %v2187
    %v2194 = vadd.f32 %v2153, %v2188
    %v2195 = vadd.f32 %v2154, %v2189
    %v2196 = vadd.f32 %v2155, %v2190
    %v2197 = vadd.f32 %v2156, %v2191
    %v2198 = vadd.f32 %v2157, %v2192
    %v2199 = vld [vmem:[%s27] sm:$0x1]
    %v2201 = vlaneseq
    %v2202 = vshrl.u32 %v2201, 7
    %v2203 = vsub.s32 0, %v2202
    %v2204 = vrot.slane %v2199, %v2203
    %v2206 = vadd.f32 %v2193, %v2204
    %v2207 = vadd.f32 %v2194, %v2204
    %v2208 = vadd.f32 %v2195, %v2204
    %v2209 = vadd.f32 %v2196, %v2204
    %v2210 = vadd.f32 %v2197, %v2204
    %v2211 = vadd.f32 %v2198, %v2204
    %v2212 = vmax.f32 %v2206, 0.0
    %v2213 = vmax.f32 %v2207, 0.0
    %v2214 = vmax.f32 %v2208, 0.0
    %v2215 = vmax.f32 %v2209, 0.0
    %v2216 = vmax.f32 %v2210, 0.0
    %v2217 = vmax.f32 %v2211, 0.0
    %v2218 = vld [vmem:[#allocation9] sm:$0xff]
    %v2219 = vld [vmem:[#allocation9 + $0x8] sm:$0xff]
    %v2220 = vld [vmem:[#allocation9 + $0x10] sm:$0xff]
    %v2221 = vld [vmem:[#allocation9 + $0x18] sm:$0xff]
    %v2222 = vld [vmem:[#allocation9 + $0x20] sm:$0xff]
    %v2223 = vld [vmem:[#allocation9 + $0x28] sm:$0xff]
    %v2224 = vld [vmem:[%s31] sm:$0x7]
    %v2226 = vlaneseq
    %v2227 = vshrl.u32 %v2226, 7
    %v2228 = vsub.s32 0, %v2227
    %v2229 = vrot.slane %v2224, %v2228
    %v2230 = vlaneseq
    %v2231 = vshrl.u32 %v2230, 7
    %v2232 = vsub.s32 1, %v2231
    %v2233 = vrot.slane %v2224, %v2232
    %v2234 = vlaneseq
    %v2235 = vshrl.u32 %v2234, 7
    %v2236 = vsub.s32 2, %v2235
    %v2237 = vrot.slane %v2224, %v2236
    %v2242 = vsel %vm450, %v2212, 0
    %v2245 = vsel %vm450, %v2213, 0
    %v2248 = vsel %vm450, %v2214, 0
    %v2251 = vsel %vm450, %v2215, 0
    %v2254 = vsel %vm450, %v2216, 0
    %v2257 = vsel %vm450, %v2217, 0
    %2259 = vmatprep.subr.mxu0 0.0
    %2260 = vmatpush1.msra.mxu0 0.0
    %2261 = vmatprep.subr.mxu0 0.0
    %2262 = vmatpush1.msra.mxu0 0.0
    %2263 = vmatprep.subr.mxu0 0.0
    %2264 = vmatpush1.msra.mxu0 0.0
    %2265 = vmatprep.subr.mxu0 0.0
    %2266 = vmatpush1.msra.mxu0 0.0
    %2267 = vmatprep.subr.mxu0 0.0
    %2268 = vmatpush1.msra.mxu0 0.0
    %2269 = vmatprep.subr.mxu0 0.0
    %2270 = vmatpush1.msra.mxu0 0.0
    %2271 = vmatprep.subr.mxu0 0.0
    %2272 = vmatpush1.msra.mxu0 0.0
    %2273 = vmatprep.subr.mxu0 0.0
    %2274 = vmatpush1.msra.mxu0 0.0
    %2275 = vmatprep.subr.mxu0 0.0
    %2276 = vmatpush1.msra.mxu0 0.0
    %2277 = vmatprep.subr.mxu0 0.0
    %2278 = vmatpush1.msra.mxu0 0.0
    %2279 = vmatprep.subr.mxu0 0.0
    %2280 = vmatpush1.msra.mxu0 0.0
    %2281 = vmatprep.subr.mxu0 0.0
    %2282 = vmatpush1.msra.mxu0 0.0
    %2283 = vmatprep.subr.mxu0 0.0
    %2284 = vmatpush1.msra.mxu0 0.0
    %2285 = vmatprep.subr.mxu0 0.0
    %2286 = vmatpush1.msra.mxu0 0.0
    %2287 = vmatprep.subr.mxu0 %v2222
    %2288 = vmatpush1.msra.mxu0 %v2221
    %2289 = vmatprep.subr.mxu0 %v2219
    %2290 = vmatpush1.msra.mxu0 %v2218
    %2291 = vmatprep.subr.mxu0 0.0
    %2292 = vmatpush2.msra.mxu0 0.0
    %2293 = vmatprep.subr.mxu0 0.0
    %2294 = vmatpush2.msra.mxu0 0.0
    %2295 = vmatprep.subr.mxu0 0.0
    %2296 = vmatpush2.msra.mxu0 0.0
    %2297 = vmatprep.subr.mxu0 0.0
    %2298 = vmatpush2.msra.mxu0 0.0
    %2299 = vmatprep.subr.mxu0 0.0
    %2300 = vmatpush2.msra.mxu0 0.0
    %2301 = vmatprep.subr.mxu0 0.0
    %2302 = vmatpush2.msra.mxu0 0.0
    %2303 = vmatprep.subr.mxu0 0.0
    %2304 = vmatpush2.msra.mxu0 0.0
    %2305 = vmatprep.subr.mxu0 0.0
    %2306 = vmatpush2.msra.mxu0 0.0
    %2307 = vmatprep.subr.mxu0 0.0
    %2308 = vmatpush2.msra.mxu0 0.0
    %2309 = vmatprep.subr.mxu0 0.0
    %2310 = vmatpush2.msra.mxu0 0.0
    %2311 = vmatprep.subr.mxu0 0.0
    %2312 = vmatpush2.msra.mxu0 0.0
    %2313 = vmatprep.subr.mxu0 0.0
    %2314 = vmatpush2.msra.mxu0 0.0
    %2315 = vmatprep.subr.mxu0 0.0
    %2316 = vmatpush2.msra.mxu0 0.0
    %2317 = vmatprep.subr.mxu0 0.0
    %2318 = vmatpush2.msra.mxu0 0.0
    %2319 = vmatprep.subr.mxu0 0.0
    %2320 = vmatpush2.msra.mxu0 0.0
    %2321 = vmatprep.subr.mxu0 0.0
    %2322 = vmatpush2.msra.mxu0 0.0
    %2323 = vmatprep.mubr.f32.mxu0 0.0
    %2324 = vmatmul.mubr.f32.gmra.mxu0 %v2242
    %v2325 = vpop.f32.mrf.mxu0
    %v2326 = vadd.f32 %v2229, %v2325
    %v2327 = vpop.f32.mrf.mxu0
    %v2328 = vadd.f32 %v2233, %v2327
    %2329 = vmatprep.mubr.f32.mxu0 0.0
    %2330 = vmatmul.mubr.f32.gmra.mxu0 %v2245
    %v2331 = vpop.f32.mrf.mxu0
    %v2332 = vadd.f32 %v2229, %v2331
    %v2333 = vpop.f32.mrf.mxu0
    %v2334 = vadd.f32 %v2233, %v2333
    %2335 = vmatprep.mubr.f32.mxu0 0.0
    %2336 = vmatmul.mubr.f32.gmra.mxu0 %v2248
    %v2337 = vpop.f32.mrf.mxu0
    %v2338 = vadd.f32 %v2229, %v2337
    %v2339 = vpop.f32.mrf.mxu0
    %v2340 = vadd.f32 %v2233, %v2339
    %2341 = vmatprep.mubr.f32.mxu0 0.0
    %2342 = vmatmul.mubr.f32.gmra.mxu0 %v2251
    %v2343 = vpop.f32.mrf.mxu0
    %v2344 = vadd.f32 %v2229, %v2343
    %v2345 = vpop.f32.mrf.mxu0
    %v2346 = vadd.f32 %v2233, %v2345
    %2347 = vmatprep.mubr.f32.mxu0 0.0
    %2348 = vmatmul.mubr.f32.gmra.mxu0 %v2254
    %v2349 = vpop.f32.mrf.mxu0
    %v2350 = vadd.f32 %v2229, %v2349
    %v2351 = vpop.f32.mrf.mxu0
    %v2352 = vadd.f32 %v2233, %v2351
    %2353 = vmatprep.mubr.f32.mxu0 0.0
    %2354 = vmatmul.mubr.f32.gmra.mxu0 %v2257
    %v2355 = vpop.f32.mrf.mxu0
    %v2356 = vadd.f32 %v2229, %v2355
    %v2357 = vpop.f32.mrf.mxu0
    %v2358 = vadd.f32 %v2233, %v2357
    %2359 = vdwg.mxu0
    %2360 = vmatprep.subr.mxu0 0.0
    %2361 = vmatpush1.msra.mxu0 0.0
    %2362 = vmatprep.subr.mxu0 0.0
    %2363 = vmatpush1.msra.mxu0 0.0
    %2364 = vmatprep.subr.mxu0 0.0
    %2365 = vmatpush1.msra.mxu0 0.0
    %2366 = vmatprep.subr.mxu0 0.0
    %2367 = vmatpush1.msra.mxu0 0.0
    %2368 = vmatprep.subr.mxu0 0.0
    %2369 = vmatpush1.msra.mxu0 0.0
    %2370 = vmatprep.subr.mxu0 0.0
    %2371 = vmatpush1.msra.mxu0 0.0
    %2372 = vmatprep.subr.mxu0 0.0
    %2373 = vmatpush1.msra.mxu0 0.0
    %2374 = vmatprep.subr.mxu0 0.0
    %2375 = vmatpush1.msra.mxu0 0.0
    %2376 = vmatprep.subr.mxu0 0.0
    %2377 = vmatpush1.msra.mxu0 0.0
    %2378 = vmatprep.subr.mxu0 0.0
    %2379 = vmatpush1.msra.mxu0 0.0
    %2380 = vmatprep.subr.mxu0 0.0
    %2381 = vmatpush1.msra.mxu0 0.0
    %2382 = vmatprep.subr.mxu0 0.0
    %2383 = vmatpush1.msra.mxu0 0.0
    %2384 = vmatprep.subr.mxu0 0.0
    %2385 = vmatpush1.msra.mxu0 0.0
    %2386 = vmatprep.subr.mxu0 0.0
    %2387 = vmatpush1.msra.mxu0 0.0
    %2388 = vmatprep.subr.mxu0 0.0
    %2389 = vmatpush1.msra.mxu0 %v2223
    %2390 = vmatprep.subr.mxu0 0.0
    %2391 = vmatpush1.msra.mxu0 %v2220
    %2392 = vmatprep.subr.mxu0 0.0
    %2393 = vmatpush2.msra.mxu0 0.0
    %2394 = vmatprep.subr.mxu0 0.0
    %2395 = vmatpush2.msra.mxu0 0.0
    %2396 = vmatprep.subr.mxu0 0.0
    %2397 = vmatpush2.msra.mxu0 0.0
    %2398 = vmatprep.subr.mxu0 0.0
    %2399 = vmatpush2.msra.mxu0 0.0
    %2400 = vmatprep.subr.mxu0 0.0
    %2401 = vmatpush2.msra.mxu0 0.0
    %2402 = vmatprep.subr.mxu0 0.0
    %2403 = vmatpush2.msra.mxu0 0.0
    %2404 = vmatprep.subr.mxu0 0.0
    %2405 = vmatpush2.msra.mxu0 0.0
    %2406 = vmatprep.subr.mxu0 0.0
    %2407 = vmatpush2.msra.mxu0 0.0
    %2408 = vmatprep.subr.mxu0 0.0
    %2409 = vmatpush2.msra.mxu0 0.0
    %2410 = vmatprep.subr.mxu0 0.0
    %2411 = vmatpush2.msra.mxu0 0.0
    %2412 = vmatprep.subr.mxu0 0.0
    %2413 = vmatpush2.msra.mxu0 0.0
    %2414 = vmatprep.subr.mxu0 0.0
    %2415 = vmatpush2.msra.mxu0 0.0
    %2416 = vmatprep.subr.mxu0 0.0
    %2417 = vmatpush2.msra.mxu0 0.0
    %2418 = vmatprep.subr.mxu0 0.0
    %2419 = vmatpush2.msra.mxu0 0.0
    %2420 = vmatprep.subr.mxu0 0.0
    %2421 = vmatpush2.msra.mxu0 0.0
    %2422 = vmatprep.subr.mxu0 0.0
    %2423 = vmatpush2.msra.mxu0 0.0
    %2424 = vmatprep.mubr.f32.mxu0 0.0
    %2425 = vmatmul.mubr.f32.gmra.mxu0 %v2242
    %v2426 = vpop.f32.mrf.mxu0
    %v2427 = vadd.f32 %v2237, %v2426
    %v2428 = vpop.f32.mrf.mxu0
    %2429 = vmatprep.mubr.f32.mxu0 0.0
    %2430 = vmatmul.mubr.f32.gmra.mxu0 %v2245
    %v2431 = vpop.f32.mrf.mxu0
    %v2432 = vadd.f32 %v2237, %v2431
    %v2433 = vpop.f32.mrf.mxu0
    %2434 = vmatprep.mubr.f32.mxu0 0.0
    %2435 = vmatmul.mubr.f32.gmra.mxu0 %v2248
    %v2436 = vpop.f32.mrf.mxu0
    %v2437 = vadd.f32 %v2237, %v2436
    %v2438 = vpop.f32.mrf.mxu0
    %2439 = vmatprep.mubr.f32.mxu0 0.0
    %2440 = vmatmul.mubr.f32.gmra.mxu0 %v2251
    %v2441 = vpop.f32.mrf.mxu0
    %v2442 = vadd.f32 %v2237, %v2441
    %v2443 = vpop.f32.mrf.mxu0
    %2444 = vmatprep.mubr.f32.mxu0 0.0
    %2445 = vmatmul.mubr.f32.gmra.mxu0 %v2254
    %v2446 = vpop.f32.mrf.mxu0
    %v2447 = vadd.f32 %v2237, %v2446
    %v2448 = vpop.f32.mrf.mxu0
    %2449 = vmatprep.mubr.f32.mxu0 0.0
    %2450 = vmatmul.mubr.f32.gmra.mxu0 %v2257
    %v2451 = vpop.f32.mrf.mxu0
    %v2452 = vadd.f32 %v2237, %v2451
    %v2453 = vpop.f32.mrf.mxu0
    %2454 = vdwg.mxu0
    %v2455 = vld [vmem:[#allocation11] sm:$0xff]
    %v2456 = vld [vmem:[#allocation11 + $0x8] sm:$0xff]
    %v2457 = vld [vmem:[#allocation11 + $0x10] sm:$0xff]
    %v2458 = vld [vmem:[#allocation11 + $0x18] sm:$0xff]
    %v2459 = vld [vmem:[#allocation11 + $0x20] sm:$0xff]
    %v2460 = vld [vmem:[#allocation11 + $0x28] sm:$0xff]
    %v2461 = vld [vmem:[#allocation11 + $0x30] sm:$0xff]
    %v2462 = vld [vmem:[#allocation11 + $0x38] sm:$0xff]
    %v2463 = vld [vmem:[#allocation11 + $0x40] sm:$0xff]
    %v2464 = vld [vmem:[#allocation11 + $0x48] sm:$0xff]
    %v2465 = vld [vmem:[#allocation11 + $0x50] sm:$0xff]
    %v2466 = vld [vmem:[#allocation11 + $0x58] sm:$0xff]
    %v2467 = vld [vmem:[#allocation11 + $0x60] sm:$0xff]
    %v2468 = vld [vmem:[#allocation11 + $0x68] sm:$0xff]
    %v2469 = vld [vmem:[#allocation11 + $0x70] sm:$0xff]
    %v2470 = vld [vmem:[#allocation11 + $0x78] sm:$0xff]
    %v2471 = vld [vmem:[#allocation11 + $0x80] sm:$0xff]
    %v2472 = vld [vmem:[#allocation11 + $0x88] sm:$0xff]
    %v2473 = vld [vmem:[#allocation11 + $0x90] sm:$0xff]
    %v2474 = vld [vmem:[#allocation11 + $0x98] sm:$0xff]
    %v2475 = vld [vmem:[#allocation11 + $0xa0] sm:$0xff]
    %v2476 = vld [vmem:[#allocation11 + $0xa8] sm:$0xff]
    %v2477 = vld [vmem:[#allocation11 + $0xb0] sm:$0xff]
    %v2478 = vld [vmem:[#allocation11 + $0xb8] sm:$0xff]
    %v2479 = vld [vmem:[#allocation11 + $0xc0] sm:$0xff]
    %v2480 = vld [vmem:[#allocation11 + $0xc8] sm:$0xff]
    %v2481 = vld [vmem:[#allocation11 + $0xd0] sm:$0xff]
    %v2482 = vld [vmem:[#allocation11 + $0xd8] sm:$0xff]
    %v2483 = vld [vmem:[#allocation11 + $0xe0] sm:$0xff]
    %v2484 = vld [vmem:[#allocation11 + $0xe8] sm:$0xff]
    %v2485 = vld [vmem:[#allocation11 + $0xf0] sm:$0xff]
    %v2486 = vld [vmem:[#allocation11 + $0xf8] sm:$0xff]
    %v2487 = vld [vmem:[#allocation11 + $0x100] sm:$0xff]
    %v2488 = vld [vmem:[#allocation11 + $0x108] sm:$0xff]
    %v2489 = vld [vmem:[#allocation11 + $0x110] sm:$0xff]
    %v2490 = vld [vmem:[#allocation11 + $0x118] sm:$0xff]
    %v2491 = vld [vmem:[#allocation11 + $0x120] sm:$0xff]
    %v2492 = vld [vmem:[#allocation11 + $0x128] sm:$0xff]
    %v2493 = vld [vmem:[#allocation11 + $0x130] sm:$0xff]
    %v2494 = vld [vmem:[#allocation11 + $0x138] sm:$0xff]
    %v2495 = vld [vmem:[#allocation11 + $0x140] sm:$0xff]
    %v2496 = vld [vmem:[#allocation11 + $0x148] sm:$0xff]
    %v2497 = vld [vmem:[#allocation11 + $0x150] sm:$0xff]
    %v2498 = vld [vmem:[#allocation11 + $0x158] sm:$0xff]
    %v2499 = vld [vmem:[#allocation11 + $0x160] sm:$0xff]
    %v2500 = vld [vmem:[#allocation11 + $0x168] sm:$0xff]
    %v2501 = vld [vmem:[#allocation11 + $0x170] sm:$0xff]
    %v2502 = vld [vmem:[#allocation11 + $0x178] sm:$0xff]
    %v2503 = vld [vmem:[%s35] sm:$0x7]
    %v2504 = vld [vmem:[%s7] sm:$0xff]
    %v2506 = vlaneseq
    %v2507 = vshrl.u32 %v2506, 7
    %v2508 = vsub.s32 0, %v2507
    %v2509 = vrot.slane %v2503, %v2508
    %v2510 = vlaneseq
    %v2511 = vshrl.u32 %v2510, 7
    %v2512 = vsub.s32 1, %v2511
    %v2513 = vrot.slane %v2503, %v2512
    %v2514 = vlaneseq
    %v2515 = vshrl.u32 %v2514, 7
    %v2516 = vsub.s32 2, %v2515
    %v2517 = vrot.slane %v2503, %v2516
    %2521 = vmatprep.subr.mxu0 %v2501
    %2522 = vmatpush1.msra.mxu0 %v2500
    %2523 = vmatprep.subr.mxu0 %v2498
    %2524 = vmatpush1.msra.mxu0 %v2497
    %2525 = vmatprep.subr.mxu0 %v2495
    %2526 = vmatpush1.msra.mxu0 %v2494
    %2527 = vmatprep.subr.mxu0 %v2492
    %2528 = vmatpush1.msra.mxu0 %v2491
    %2529 = vmatprep.subr.mxu0 %v2489
    %2530 = vmatpush1.msra.mxu0 %v2488
    %2531 = vmatprep.subr.mxu0 %v2486
    %2532 = vmatpush1.msra.mxu0 %v2485
    %2533 = vmatprep.subr.mxu0 %v2483
    %2534 = vmatpush1.msra.mxu0 %v2482
    %2535 = vmatprep.subr.mxu0 %v2480
    %2536 = vmatpush1.msra.mxu0 %v2479
    %2537 = vmatprep.subr.mxu0 %v2477
    %2538 = vmatpush1.msra.mxu0 %v2476
    %2539 = vmatprep.subr.mxu0 %v2474
    %2540 = vmatpush1.msra.mxu0 %v2473
    %2541 = vmatprep.subr.mxu0 %v2471
    %2542 = vmatpush1.msra.mxu0 %v2470
    %2543 = vmatprep.subr.mxu0 %v2468
    %2544 = vmatpush1.msra.mxu0 %v2467
    %2545 = vmatprep.subr.mxu0 %v2465
    %2546 = vmatpush1.msra.mxu0 %v2464
    %2547 = vmatprep.subr.mxu0 %v2462
    %2548 = vmatpush1.msra.mxu0 %v2461
    %2549 = vmatprep.subr.mxu0 %v2459
    %2550 = vmatpush1.msra.mxu0 %v2458
    %2551 = vmatprep.subr.mxu0 %v2456
    %2552 = vmatpush1.msra.mxu0 %v2455
    %2553 = vmatprep.subr.mxu0 0.0
    %2554 = vmatpush2.msra.mxu0 0.0
    %2555 = vmatprep.subr.mxu0 0.0
    %2556 = vmatpush2.msra.mxu0 0.0
    %2557 = vmatprep.subr.mxu0 0.0
    %2558 = vmatpush2.msra.mxu0 0.0
    %2559 = vmatprep.subr.mxu0 0.0
    %2560 = vmatpush2.msra.mxu0 0.0
    %2561 = vmatprep.subr.mxu0 0.0
    %2562 = vmatpush2.msra.mxu0 0.0
    %2563 = vmatprep.subr.mxu0 0.0
    %2564 = vmatpush2.msra.mxu0 0.0
    %2565 = vmatprep.subr.mxu0 0.0
    %2566 = vmatpush2.msra.mxu0 0.0
    %2567 = vmatprep.subr.mxu0 0.0
    %2568 = vmatpush2.msra.mxu0 0.0
    %2569 = vmatprep.subr.mxu0 0.0
    %2570 = vmatpush2.msra.mxu0 0.0
    %2571 = vmatprep.subr.mxu0 0.0
    %2572 = vmatpush2.msra.mxu0 0.0
    %2573 = vmatprep.subr.mxu0 0.0
    %2574 = vmatpush2.msra.mxu0 0.0
    %2575 = vmatprep.subr.mxu0 0.0
    %2576 = vmatpush2.msra.mxu0 0.0
    %2577 = vmatprep.subr.mxu0 0.0
    %2578 = vmatpush2.msra.mxu0 0.0
    %2579 = vmatprep.subr.mxu0 0.0
    %2580 = vmatpush2.msra.mxu0 0.0
    %2581 = vmatprep.subr.mxu0 0.0
    %2582 = vmatpush2.msra.mxu0 0.0
    %2583 = vmatprep.subr.mxu0 0.0
    %2584 = vmatpush2.msra.mxu0 0.0
    %2585 = vmatprep.mubr.f32.mxu0 0.0
    %2586 = vmatmul.mubr.f32.gmra.mxu0 0.0
    %v2587 = vpop.f32.mrf.mxu0
    %v2588 = vadd.f32 %v2509, %v2587
    %v2589 = vpop.f32.mrf.mxu0
    %v2590 = vadd.f32 %v2513, %v2589
    %2591 = vdwg.mxu0
    %2592 = vmatprep.subr.mxu0 0.0
    %2593 = vmatpush1.msra.mxu0 %v2502
    %2594 = vmatprep.subr.mxu0 0.0
    %2595 = vmatpush1.msra.mxu0 %v2499
    %2596 = vmatprep.subr.mxu0 0.0
    %2597 = vmatpush1.msra.mxu0 %v2496
    %2598 = vmatprep.subr.mxu0 0.0
    %2599 = vmatpush1.msra.mxu0 %v2493
    %2600 = vmatprep.subr.mxu0 0.0
    %2601 = vmatpush1.msra.mxu0 %v2490
    %2602 = vmatprep.subr.mxu0 0.0
    %2603 = vmatpush1.msra.mxu0 %v2487
    %2604 = vmatprep.subr.mxu0 0.0
    %2605 = vmatpush1.msra.mxu0 %v2484
    %2606 = vmatprep.subr.mxu0 0.0
    %2607 = vmatpush1.msra.mxu0 %v2481
    %2608 = vmatprep.subr.mxu0 0.0
    %2609 = vmatpush1.msra.mxu0 %v2478
    %2610 = vmatprep.subr.mxu0 0.0
    %2611 = vmatpush1.msra.mxu0 %v2475
    %2612 = vmatprep.subr.mxu0 0.0
    %2613 = vmatpush1.msra.mxu0 %v2472
    %2614 = vmatprep.subr.mxu0 0.0
    %2615 = vmatpush1.msra.mxu0 %v2469
    %2616 = vmatprep.subr.mxu0 0.0
    %2617 = vmatpush1.msra.mxu0 %v2466
    %2618 = vmatprep.subr.mxu0 0.0
    %2619 = vmatpush1.msra.mxu0 %v2463
    %2620 = vmatprep.subr.mxu0 0.0
    %2621 = vmatpush1.msra.mxu0 %v2460
    %2622 = vmatprep.subr.mxu0 0.0
    %2623 = vmatpush1.msra.mxu0 %v2457
    %2624 = vmatprep.subr.mxu0 0.0
    %2625 = vmatpush2.msra.mxu0 0.0
    %2626 = vmatprep.subr.mxu0 0.0
    %2627 = vmatpush2.msra.mxu0 0.0
    %2628 = vmatprep.subr.mxu0 0.0
    %2629 = vmatpush2.msra.mxu0 0.0
    %2630 = vmatprep.subr.mxu0 0.0
    %2631 = vmatpush2.msra.mxu0 0.0
    %2632 = vmatprep.subr.mxu0 0.0
    %2633 = vmatpush2.msra.mxu0 0.0
    %2634 = vmatprep.subr.mxu0 0.0
    %2635 = vmatpush2.msra.mxu0 0.0
    %2636 = vmatprep.subr.mxu0 0.0
    %2637 = vmatpush2.msra.mxu0 0.0
    %2638 = vmatprep.subr.mxu0 0.0
    %2639 = vmatpush2.msra.mxu0 0.0
    %2640 = vmatprep.subr.mxu0 0.0
    %2641 = vmatpush2.msra.mxu0 0.0
    %2642 = vmatprep.subr.mxu0 0.0
    %2643 = vmatpush2.msra.mxu0 0.0
    %2644 = vmatprep.subr.mxu0 0.0
    %2645 = vmatpush2.msra.mxu0 0.0
    %2646 = vmatprep.subr.mxu0 0.0
    %2647 = vmatpush2.msra.mxu0 0.0
    %2648 = vmatprep.subr.mxu0 0.0
    %2649 = vmatpush2.msra.mxu0 0.0
    %2650 = vmatprep.subr.mxu0 0.0
    %2651 = vmatpush2.msra.mxu0 0.0
    %2652 = vmatprep.subr.mxu0 0.0
    %2653 = vmatpush2.msra.mxu0 0.0
    %2654 = vmatprep.subr.mxu0 0.0
    %2655 = vmatpush2.msra.mxu0 0.0
    %2656 = vmatprep.mubr.f32.mxu0 0.0
    %2657 = vmatmul.mubr.f32.gmra.mxu0 0.0
    %v2658 = vpop.f32.mrf.mxu0
    %v2659 = vadd.f32 %v2517, %v2658
    %v2660 = vpop.f32.mrf.mxu0
    %2661 = vdwg.mxu0
    %v2662 = vadd.f32 %v2326, %v2588
    %v2663 = vxor.u32 %v2662, 2147483648
    %v2664 = vmul.f32 %v2663, 1.442695
    %v2665 = vpow.pop %v2664
    %v2666 = vadd.f32 %v2665, 1.0
    %v2667 = vrcp.pop %v2666
    %v2668 = vmul.f32 1.0, %v2667
    %v2669 = vadd.f32 %v2328, %v2590
    %v2670 = vxor.u32 %v2669, 2147483648
    %v2671 = vmul.f32 %v2670, 1.442695
    %v2672 = vpow.pop %v2671
    %v2673 = vadd.f32 %v2672, 1.0
    %v2674 = vrcp.pop %v2673
    %v2675 = vmul.f32 1.0, %v2674
    %v2676 = vmul.f32 %v2668, %v2659
    %v2677 = vadd.f32 %v2427, %v2676
    %v2678 = vtanh.pop %v2677
    %v2679 = vsub.f32 1.0, %v2675
    %v2680 = vmul.f32 %v2679, %v2678
    %v2681 = vmul.f32 %v2675, 0.0
    %v2682 = vadd.f32 %v2680, %v2681
    %vm2683 = vcmp.gt.s32.totalorder %v2504, 0
    %v2684 = vsel %vm2683, 1, 0
    %2685 = vset.pattern.permute.xlu0 0
    %2686 = vperm.xlu0 %2685, %v2684
    %v2687 = vpop.permute.xlu0 %2686
    %vm2688 = vcmp.eq.s32.totalorder %v2687, 1
    %v2689 = vsel %vm2688, %v2682, 0.0
    %2690 = vmatprep.subr.mxu0 %v2501
    %2691 = vmatpush1.msra.mxu0 %v2500
    %2692 = vmatprep.subr.mxu0 %v2498
    %2693 = vmatpush1.msra.mxu0 %v2497
    %2694 = vmatprep.subr.mxu0 %v2495
    %2695 = vmatpush1.msra.mxu0 %v2494
    %2696 = vmatprep.subr.mxu0 %v2492
    %2697 = vmatpush1.msra.mxu0 %v2491
    %2698 = vmatprep.subr.mxu0 %v2489
    %2699 = vmatpush1.msra.mxu0 %v2488
    %2700 = vmatprep.subr.mxu0 %v2486
    %2701 = vmatpush1.msra.mxu0 %v2485
    %2702 = vmatprep.subr.mxu0 %v2483
    %2703 = vmatpush1.msra.mxu0 %v2482
    %2704 = vmatprep.subr.mxu0 %v2480
    %2705 = vmatpush1.msra.mxu0 %v2479
    %2706 = vmatprep.subr.mxu0 %v2477
    %2707 = vmatpush1.msra.mxu0 %v2476
    %2708 = vmatprep.subr.mxu0 %v2474
    %2709 = vmatpush1.msra.mxu0 %v2473
    %2710 = vmatprep.subr.mxu0 %v2471
    %2711 = vmatpush1.msra.mxu0 %v2470
    %2712 = vmatprep.subr.mxu0 %v2468
    %2713 = vmatpush1.msra.mxu0 %v2467
    %2714 = vmatprep.subr.mxu0 %v2465
    %2715 = vmatpush1.msra.mxu0 %v2464
    %2716 = vmatprep.subr.mxu0 %v2462
    %2717 = vmatpush1.msra.mxu0 %v2461
    %2718 = vmatprep.subr.mxu0 %v2459
    %2719 = vmatpush1.msra.mxu0 %v2458
    %2720 = vmatprep.subr.mxu0 %v2456
    %2721 = vmatpush1.msra.mxu0 %v2455
    %2722 = vmatprep.subr.mxu0 0.0
    %2723 = vmatpush2.msra.mxu0 0.0
    %2724 = vmatprep.subr.mxu0 0.0
    %2725 = vmatpush2.msra.mxu0 0.0
    %2726 = vmatprep.subr.mxu0 0.0
    %2727 = vmatpush2.msra.mxu0 0.0
    %2728 = vmatprep.subr.mxu0 0.0
    %2729 = vmatpush2.msra.mxu0 0.0
    %2730 = vmatprep.subr.mxu0 0.0
    %2731 = vmatpush2.msra.mxu0 0.0
    %2732 = vmatprep.subr.mxu0 0.0
    %2733 = vmatpush2.msra.mxu0 0.0
    %2734 = vmatprep.subr.mxu0 0.0
    %2735 = vmatpush2.msra.mxu0 0.0
    %2736 = vmatprep.subr.mxu0 0.0
    %2737 = vmatpush2.msra.mxu0 0.0
    %2738 = vmatprep.subr.mxu0 0.0
    %2739 = vmatpush2.msra.mxu0 0.0
    %2740 = vmatprep.subr.mxu0 0.0
    %2741 = vmatpush2.msra.mxu0 0.0
    %2742 = vmatprep.subr.mxu0 0.0
    %2743 = vmatpush2.msra.mxu0 0.0
    %2744 = vmatprep.subr.mxu0 0.0
    %2745 = vmatpush2.msra.mxu0 0.0
    %2746 = vmatprep.subr.mxu0 0.0
    %2747 = vmatpush2.msra.mxu0 0.0
    %2748 = vmatprep.subr.mxu0 0.0
    %2749 = vmatpush2.msra.mxu0 0.0
    %2750 = vmatprep.subr.mxu0 0.0
    %2751 = vmatpush2.msra.mxu0 0.0
    %2752 = vmatprep.subr.mxu0 0.0
    %2753 = vmatpush2.msra.mxu0 0.0
    %2754 = vmatprep.mubr.f32.mxu0 0.0
    %2755 = vmatmul.mubr.f32.gmra.mxu0 %v2689
    %v2756 = vpop.f32.mrf.mxu0
    %v2757 = vadd.f32 %v2509, %v2756
    %v2758 = vpop.f32.mrf.mxu0
    %v2759 = vadd.f32 %v2513, %v2758
    %2760 = vdwg.mxu0
    %2761 = vmatprep.subr.mxu0 0.0
    %2762 = vmatpush1.msra.mxu0 %v2502
    %2763 = vmatprep.subr.mxu0 0.0
    %2764 = vmatpush1.msra.mxu0 %v2499
    %2765 = vmatprep.subr.mxu0 0.0
    %2766 = vmatpush1.msra.mxu0 %v2496
    %2767 = vmatprep.subr.mxu0 0.0
    %2768 = vmatpush1.msra.mxu0 %v2493
    %2769 = vmatprep.subr.mxu0 0.0
    %2770 = vmatpush1.msra.mxu0 %v2490
    %2771 = vmatprep.subr.mxu0 0.0
    %2772 = vmatpush1.msra.mxu0 %v2487
    %2773 = vmatprep.subr.mxu0 0.0
    %2774 = vmatpush1.msra.mxu0 %v2484
    %2775 = vmatprep.subr.mxu0 0.0
    %2776 = vmatpush1.msra.mxu0 %v2481
    %2777 = vmatprep.subr.mxu0 0.0
    %2778 = vmatpush1.msra.mxu0 %v2478
    %2779 = vmatprep.subr.mxu0 0.0
    %2780 = vmatpush1.msra.mxu0 %v2475
    %2781 = vmatprep.subr.mxu0 0.0
    %2782 = vmatpush1.msra.mxu0 %v2472
    %2783 = vmatprep.subr.mxu0 0.0
    %2784 = vmatpush1.msra.mxu0 %v2469
    %2785 = vmatprep.subr.mxu0 0.0
    %2786 = vmatpush1.msra.mxu0 %v2466
    %2787 = vmatprep.subr.mxu0 0.0
    %2788 = vmatpush1.msra.mxu0 %v2463
    %2789 = vmatprep.subr.mxu0 0.0
    %2790 = vmatpush1.msra.mxu0 %v2460
    %2791 = vmatprep.subr.mxu0 0.0
    %2792 = vmatpush1.msra.mxu0 %v2457
    %2793 = vmatprep.subr.mxu0 0.0
    %2794 = vmatpush2.msra.mxu0 0.0
    %2795 = vmatprep.subr.mxu0 0.0
    %2796 = vmatpush2.msra.mxu0 0.0
    %2797 = vmatprep.subr.mxu0 0.0
    %2798 = vmatpush2.msra.mxu0 0.0
    %2799 = vmatprep.subr.mxu0 0.0
    %2800 = vmatpush2.msra.mxu0 0.0
    %2801 = vmatprep.subr.mxu0 0.0
    %2802 = vmatpush2.msra.mxu0 0.0
    %2803 = vmatprep.subr.mxu0 0.0
    %2804 = vmatpush2.msra.mxu0 0.0
    %2805 = vmatprep.subr.mxu0 0.0
    %2806 = vmatpush2.msra.mxu0 0.0
    %2807 = vmatprep.subr.mxu0 0.0
    %2808 = vmatpush2.msra.mxu0 0.0
    %2809 = vmatprep.subr.mxu0 0.0
    %2810 = vmatpush2.msra.mxu0 0.0
    %2811 = vmatprep.subr.mxu0 0.0
    %2812 = vmatpush2.msra.mxu0 0.0
    %2813 = vmatprep.subr.mxu0 0.0
    %2814 = vmatpush2.msra.mxu0 0.0
    %2815 = vmatprep.subr.mxu0 0.0
    %2816 = vmatpush2.msra.mxu0 0.0
    %2817 = vmatprep.subr.mxu0 0.0
    %2818 = vmatpush2.msra.mxu0 0.0
    %2819 = vmatprep.subr.mxu0 0.0
    %2820 = vmatpush2.msra.mxu0 0.0
    %2821 = vmatprep.subr.mxu0 0.0
    %2822 = vmatpush2.msra.mxu0 0.0
    %2823 = vmatprep.subr.mxu0 0.0
    %2824 = vmatpush2.msra.mxu0 0.0
    %2825 = vmatprep.mubr.f32.mxu0 0.0
    %2826 = vmatmul.mubr.f32.gmra.mxu0 %v2689
    %v2827 = vpop.f32.mrf.mxu0
    %v2828 = vadd.f32 %v2517, %v2827
    %v2829 = vpop.f32.mrf.mxu0
    %2830 = vdwg.mxu0
    %v2831 = vadd.f32 %v2332, %v2757
    %v2832 = vxor.u32 %v2831, 2147483648
    %v2833 = vmul.f32 %v2832, 1.442695
    %v2834 = vpow.pop %v2833
    %v2835 = vadd.f32 %v2834, 1.0
    %v2836 = vrcp.pop %v2835
    %v2837 = vmul.f32 1.0, %v2836
    %v2838 = vadd.f32 %v2334, %v2759
    %v2839 = vxor.u32 %v2838, 2147483648
    %v2840 = vmul.f32 %v2839, 1.442695
    %v2841 = vpow.pop %v2840
    %v2842 = vadd.f32 %v2841, 1.0
    %v2843 = vrcp.pop %v2842
    %v2844 = vmul.f32 1.0, %v2843
    %v2845 = vmul.f32 %v2837, %v2828
    %v2846 = vadd.f32 %v2432, %v2845
    %v2847 = vtanh.pop %v2846
    %v2848 = vsub.f32 1.0, %v2844
    %v2849 = vmul.f32 %v2848, %v2847
    %v2850 = vmul.f32 %v2844, %v2689
    %v2851 = vadd.f32 %v2849, %v2850
    %vm2852 = vcmp.gt.s32.totalorder %v2504, 1
    %v2853 = vsel %vm2852, 1, 0
    %2854 = vset.pattern.permute.xlu0 0
    %2855 = vperm.xlu0 %2854, %v2853
    %v2856 = vpop.permute.xlu0 %2855
    %vm2857 = vcmp.eq.s32.totalorder %v2856, 1
    %v2858 = vsel %vm2857, %v2851, %v2689
    %2859 = vmatprep.subr.mxu0 %v2501
    %2860 = vmatpush1.msra.mxu0 %v2500
    %2861 = vmatprep.subr.mxu0 %v2498
    %2862 = vmatpush1.msra.mxu0 %v2497
    %2863 = vmatprep.subr.mxu0 %v2495
    %2864 = vmatpush1.msra.mxu0 %v2494
    %2865 = vmatprep.subr.mxu0 %v2492
    %2866 = vmatpush1.msra.mxu0 %v2491
    %2867 = vmatprep.subr.mxu0 %v2489
    %2868 = vmatpush1.msra.mxu0 %v2488
    %2869 = vmatprep.subr.mxu0 %v2486
    %2870 = vmatpush1.msra.mxu0 %v2485
    %2871 = vmatprep.subr.mxu0 %v2483
    %2872 = vmatpush1.msra.mxu0 %v2482
    %2873 = vmatprep.subr.mxu0 %v2480
    %2874 = vmatpush1.msra.mxu0 %v2479
    %2875 = vmatprep.subr.mxu0 %v2477
    %2876 = vmatpush1.msra.mxu0 %v2476
    %2877 = vmatprep.subr.mxu0 %v2474
    %2878 = vmatpush1.msra.mxu0 %v2473
    %2879 = vmatprep.subr.mxu0 %v2471
    %2880 = vmatpush1.msra.mxu0 %v2470
    %2881 = vmatprep.subr.mxu0 %v2468
    %2882 = vmatpush1.msra.mxu0 %v2467
    %2883 = vmatprep.subr.mxu0 %v2465
    %2884 = vmatpush1.msra.mxu0 %v2464
    %2885 = vmatprep.subr.mxu0 %v2462
    %2886 = vmatpush1.msra.mxu0 %v2461
    %2887 = vmatprep.subr.mxu0 %v2459
    %2888 = vmatpush1.msra.mxu0 %v2458
    %2889 = vmatprep.subr.mxu0 %v2456
    %2890 = vmatpush1.msra.mxu0 %v2455
    %2891 = vmatprep.subr.mxu0 0.0
    %2892 = vmatpush2.msra.mxu0 0.0
    %2893 = vmatprep.subr.mxu0 0.0
    %2894 = vmatpush2.msra.mxu0 0.0
    %2895 = vmatprep.subr.mxu0 0.0
    %2896 = vmatpush2.msra.mxu0 0.0
    %2897 = vmatprep.subr.mxu0 0.0
    %2898 = vmatpush2.msra.mxu0 0.0
    %2899 = vmatprep.subr.mxu0 0.0
    %2900 = vmatpush2.msra.mxu0 0.0
    %2901 = vmatprep.subr.mxu0 0.0
    %2902 = vmatpush2.msra.mxu0 0.0
    %2903 = vmatprep.subr.mxu0 0.0
    %2904 = vmatpush2.msra.mxu0 0.0
    %2905 = vmatprep.subr.mxu0 0.0
    %2906 = vmatpush2.msra.mxu0 0.0
    %2907 = vmatprep.subr.mxu0 0.0
    %2908 = vmatpush2.msra.mxu0 0.0
    %2909 = vmatprep.subr.mxu0 0.0
    %2910 = vmatpush2.msra.mxu0 0.0
    %2911 = vmatprep.subr.mxu0 0.0
    %2912 = vmatpush2.msra.mxu0 0.0
    %2913 = vmatprep.subr.mxu0 0.0
    %2914 = vmatpush2.msra.mxu0 0.0
    %2915 = vmatprep.subr.mxu0 0.0
    %2916 = vmatpush2.msra.mxu0 0.0
    %2917 = vmatprep.subr.mxu0 0.0
    %2918 = vmatpush2.msra.mxu0 0.0
    %2919 = vmatprep.subr.mxu0 0.0
    %2920 = vmatpush2.msra.mxu0 0.0
    %2921 = vmatprep.subr.mxu0 0.0
    %2922 = vmatpush2.msra.mxu0 0.0
    %2923 = vmatprep.mubr.f32.mxu0 0.0
    %2924 = vmatmul.mubr.f32.gmra.mxu0 %v2858
    %v2925 = vpop.f32.mrf.mxu0
    %v2926 = vadd.f32 %v2509, %v2925
    %v2927 = vpop.f32.mrf.mxu0
    %v2928 = vadd.f32 %v2513, %v2927
    %2929 = vdwg.mxu0
    %2930 = vmatprep.subr.mxu0 0.0
    %2931 = vmatpush1.msra.mxu0 %v2502
    %2932 = vmatprep.subr.mxu0 0.0
    %2933 = vmatpush1.msra.mxu0 %v2499
    %2934 = vmatprep.subr.mxu0 0.0
    %2935 = vmatpush1.msra.mxu0 %v2496
    %2936 = vmatprep.subr.mxu0 0.0
    %2937 = vmatpush1.msra.mxu0 %v2493
    %2938 = vmatprep.subr.mxu0 0.0
    %2939 = vmatpush1.msra.mxu0 %v2490
    %2940 = vmatprep.subr.mxu0 0.0
    %2941 = vmatpush1.msra.mxu0 %v2487
    %2942 = vmatprep.subr.mxu0 0.0
    %2943 = vmatpush1.msra.mxu0 %v2484
    %2944 = vmatprep.subr.mxu0 0.0
    %2945 = vmatpush1.msra.mxu0 %v2481
    %2946 = vmatprep.subr.mxu0 0.0
    %2947 = vmatpush1.msra.mxu0 %v2478
    %2948 = vmatprep.subr.mxu0 0.0
    %2949 = vmatpush1.msra.mxu0 %v2475
    %2950 = vmatprep.subr.mxu0 0.0
    %2951 = vmatpush1.msra.mxu0 %v2472
    %2952 = vmatprep.subr.mxu0 0.0
    %2953 = vmatpush1.msra.mxu0 %v2469
    %2954 = vmatprep.subr.mxu0 0.0
    %2955 = vmatpush1.msra.mxu0 %v2466
    %2956 = vmatprep.subr.mxu0 0.0
    %2957 = vmatpush1.msra.mxu0 %v2463
    %2958 = vmatprep.subr.mxu0 0.0
    %2959 = vmatpush1.msra.mxu0 %v2460
    %2960 = vmatprep.subr.mxu0 0.0
    %2961 = vmatpush1.msra.mxu0 %v2457
    %2962 = vmatprep.subr.mxu0 0.0
    %2963 = vmatpush2.msra.mxu0 0.0
    %2964 = vmatprep.subr.mxu0 0.0
    %2965 = vmatpush2.msra.mxu0 0.0
    %2966 = vmatprep.subr.mxu0 0.0
    %2967 = vmatpush2.msra.mxu0 0.0
    %2968 = vmatprep.subr.mxu0 0.0
    %2969 = vmatpush2.msra.mxu0 0.0
    %2970 = vmatprep.subr.mxu0 0.0
    %2971 = vmatpush2.msra.mxu0 0.0
    %2972 = vmatprep.subr.mxu0 0.0
    %2973 = vmatpush2.msra.mxu0 0.0
    %2974 = vmatprep.subr.mxu0 0.0
    %2975 = vmatpush2.msra.mxu0 0.0
    %2976 = vmatprep.subr.mxu0 0.0
    %2977 = vmatpush2.msra.mxu0 0.0
    %2978 = vmatprep.subr.mxu0 0.0
    %2979 = vmatpush2.msra.mxu0 0.0
    %2980 = vmatprep.subr.mxu0 0.0
    %2981 = vmatpush2.msra.mxu0 0.0
    %2982 = vmatprep.subr.mxu0 0.0
    %2983 = vmatpush2.msra.mxu0 0.0
    %2984 = vmatprep.subr.mxu0 0.0
    %2985 = vmatpush2.msra.mxu0 0.0
    %2986 = vmatprep.subr.mxu0 0.0
    %2987 = vmatpush2.msra.mxu0 0.0
    %2988 = vmatprep.subr.mxu0 0.0
    %2989 = vmatpush2.msra.mxu0 0.0
    %2990 = vmatprep.subr.mxu0 0.0
    %2991 = vmatpush2.msra.mxu0 0.0
    %2992 = vmatprep.subr.mxu0 0.0
    %2993 = vmatpush2.msra.mxu0 0.0
    %2994 = vmatprep.mubr.f32.mxu0 0.0
    %2995 = vmatmul.mubr.f32.gmra.mxu0 %v2858
    %v2996 = vpop.f32.mrf.mxu0
    %v2997 = vadd.f32 %v2517, %v2996
    %v2998 = vpop.f32.mrf.mxu0
    %2999 = vdwg.mxu0
    %v3000 = vadd.f32 %v2338, %v2926
    %v3001 = vxor.u32 %v3000, 2147483648
    %v3002 = vmul.f32 %v3001, 1.442695
    %v3003 = vpow.pop %v3002
    %v3004 = vadd.f32 %v3003, 1.0
    %v3005 = vrcp.pop %v3004
    %v3006 = vmul.f32 1.0, %v3005
    %v3007 = vadd.f32 %v2340, %v2928
    %v3008 = vxor.u32 %v3007, 2147483648
    %v3009 = vmul.f32 %v3008, 1.442695
    %v3010 = vpow.pop %v3009
    %v3011 = vadd.f32 %v3010, 1.0
    %v3012 = vrcp.pop %v3011
    %v3013 = vmul.f32 1.0, %v3012
    %v3014 = vmul.f32 %v3006, %v2997
    %v3015 = vadd.f32 %v2437, %v3014
    %v3016 = vtanh.pop %v3015
    %v3017 = vsub.f32 1.0, %v3013
    %v3018 = vmul.f32 %v3017, %v3016
    %v3019 = vmul.f32 %v3013, %v2858
    %v3020 = vadd.f32 %v3018, %v3019
    %vm3021 = vcmp.gt.s32.totalorder %v2504, 2
    %v3022 = vsel %vm3021, 1, 0
    %3023 = vset.pattern.permute.xlu0 0
    %3024 = vperm.xlu0 %3023, %v3022
    %v3025 = vpop.permute.xlu0 %3024
    %vm3026 = vcmp.eq.s32.totalorder %v3025, 1
    %v3027 = vsel %vm3026, %v3020, %v2858
    %3028 = vmatprep.subr.mxu0 %v2501
    %3029 = vmatpush1.msra.mxu0 %v2500
    %3030 = vmatprep.subr.mxu0 %v2498
    %3031 = vmatpush1.msra.mxu0 %v2497
    %3032 = vmatprep.subr.mxu0 %v2495
    %3033 = vmatpush1.msra.mxu0 %v2494
    %3034 = vmatprep.subr.mxu0 %v2492
    %3035 = vmatpush1.msra.mxu0 %v2491
    %3036 = vmatprep.subr.mxu0 %v2489
    %3037 = vmatpush1.msra.mxu0 %v2488
    %3038 = vmatprep.subr.mxu0 %v2486
    %3039 = vmatpush1.msra.mxu0 %v2485
    %3040 = vmatprep.subr.mxu0 %v2483
    %3041 = vmatpush1.msra.mxu0 %v2482
    %3042 = vmatprep.subr.mxu0 %v2480
    %3043 = vmatpush1.msra.mxu0 %v2479
    %3044 = vmatprep.subr.mxu0 %v2477
    %3045 = vmatpush1.msra.mxu0 %v2476
    %3046 = vmatprep.subr.mxu0 %v2474
    %3047 = vmatpush1.msra.mxu0 %v2473
    %3048 = vmatprep.subr.mxu0 %v2471
    %3049 = vmatpush1.msra.mxu0 %v2470
    %3050 = vmatprep.subr.mxu0 %v2468
    %3051 = vmatpush1.msra.mxu0 %v2467
    %3052 = vmatprep.subr.mxu0 %v2465
    %3053 = vmatpush1.msra.mxu0 %v2464
    %3054 = vmatprep.subr.mxu0 %v2462
    %3055 = vmatpush1.msra.mxu0 %v2461
    %3056 = vmatprep.subr.mxu0 %v2459
    %3057 = vmatpush1.msra.mxu0 %v2458
    %3058 = vmatprep.subr.mxu0 %v2456
    %3059 = vmatpush1.msra.mxu0 %v2455
    %3060 = vmatprep.subr.mxu0 0.0
    %3061 = vmatpush2.msra.mxu0 0.0
    %3062 = vmatprep.subr.mxu0 0.0
    %3063 = vmatpush2.msra.mxu0 0.0
    %3064 = vmatprep.subr.mxu0 0.0
    %3065 = vmatpush2.msra.mxu0 0.0
    %3066 = vmatprep.subr.mxu0 0.0
    %3067 = vmatpush2.msra.mxu0 0.0
    %3068 = vmatprep.subr.mxu0 0.0
    %3069 = vmatpush2.msra.mxu0 0.0
    %3070 = vmatprep.subr.mxu0 0.0
    %3071 = vmatpush2.msra.mxu0 0.0
    %3072 = vmatprep.subr.mxu0 0.0
    %3073 = vmatpush2.msra.mxu0 0.0
    %3074 = vmatprep.subr.mxu0 0.0
    %3075 = vmatpush2.msra.mxu0 0.0
    %3076 = vmatprep.subr.mxu0 0.0
    %3077 = vmatpush2.msra.mxu0 0.0
    %3078 = vmatprep.subr.mxu0 0.0
    %3079 = vmatpush2.msra.mxu0 0.0
    %3080 = vmatprep.subr.mxu0 0.0
    %3081 = vmatpush2.msra.mxu0 0.0
    %3082 = vmatprep.subr.mxu0 0.0
    %3083 = vmatpush2.msra.mxu0 0.0
    %3084 = vmatprep.subr.mxu0 0.0
    %3085 = vmatpush2.msra.mxu0 0.0
    %3086 = vmatprep.subr.mxu0 0.0
    %3087 = vmatpush2.msra.mxu0 0.0
    %3088 = vmatprep.subr.mxu0 0.0
    %3089 = vmatpush2.msra.mxu0 0.0
    %3090 = vmatprep.subr.mxu0 0.0
    %3091 = vmatpush2.msra.mxu0 0.0
    %3092 = vmatprep.mubr.f32.mxu0 0.0
    %3093 = vmatmul.mubr.f32.gmra.mxu0 %v3027
    %v3094 = vpop.f32.mrf.mxu0
    %v3095 = vadd.f32 %v2509, %v3094
    %v3096 = vpop.f32.mrf.mxu0
    %v3097 = vadd.f32 %v2513, %v3096
    %3098 = vdwg.mxu0
    %3099 = vmatprep.subr.mxu0 0.0
    %3100 = vmatpush1.msra.mxu0 %v2502
    %3101 = vmatprep.subr.mxu0 0.0
    %3102 = vmatpush1.msra.mxu0 %v2499
    %3103 = vmatprep.subr.mxu0 0.0
    %3104 = vmatpush1.msra.mxu0 %v2496
    %3105 = vmatprep.subr.mxu0 0.0
    %3106 = vmatpush1.msra.mxu0 %v2493
    %3107 = vmatprep.subr.mxu0 0.0
    %3108 = vmatpush1.msra.mxu0 %v2490
    %3109 = vmatprep.subr.mxu0 0.0
    %3110 = vmatpush1.msra.mxu0 %v2487
    %3111 = vmatprep.subr.mxu0 0.0
    %3112 = vmatpush1.msra.mxu0 %v2484
    %3113 = vmatprep.subr.mxu0 0.0
    %3114 = vmatpush1.msra.mxu0 %v2481
    %3115 = vmatprep.subr.mxu0 0.0
    %3116 = vmatpush1.msra.mxu0 %v2478
    %3117 = vmatprep.subr.mxu0 0.0
    %3118 = vmatpush1.msra.mxu0 %v2475
    %3119 = vmatprep.subr.mxu0 0.0
    %3120 = vmatpush1.msra.mxu0 %v2472
    %3121 = vmatprep.subr.mxu0 0.0
    %3122 = vmatpush1.msra.mxu0 %v2469
    %3123 = vmatprep.subr.mxu0 0.0
    %3124 = vmatpush1.msra.mxu0 %v2466
    %3125 = vmatprep.subr.mxu0 0.0
    %3126 = vmatpush1.msra.mxu0 %v2463
    %3127 = vmatprep.subr.mxu0 0.0
    %3128 = vmatpush1.msra.mxu0 %v2460
    %3129 = vmatprep.subr.mxu0 0.0
    %3130 = vmatpush1.msra.mxu0 %v2457
    %3131 = vmatprep.subr.mxu0 0.0
    %3132 = vmatpush2.msra.mxu0 0.0
    %3133 = vmatprep.subr.mxu0 0.0
    %3134 = vmatpush2.msra.mxu0 0.0
    %3135 = vmatprep.subr.mxu0 0.0
    %3136 = vmatpush2.msra.mxu0 0.0
    %3137 = vmatprep.subr.mxu0 0.0
    %3138 = vmatpush2.msra.mxu0 0.0
    %3139 = vmatprep.subr.mxu0 0.0
    %3140 = vmatpush2.msra.mxu0 0.0
    %3141 = vmatprep.subr.mxu0 0.0
    %3142 = vmatpush2.msra.mxu0 0.0
    %3143 = vmatprep.subr.mxu0 0.0
    %3144 = vmatpush2.msra.mxu0 0.0
    %3145 = vmatprep.subr.mxu0 0.0
    %3146 = vmatpush2.msra.mxu0 0.0
    %3147 = vmatprep.subr.mxu0 0.0
    %3148 = vmatpush2.msra.mxu0 0.0
    %3149 = vmatprep.subr.mxu0 0.0
    %3150 = vmatpush2.msra.mxu0 0.0
    %3151 = vmatprep.subr.mxu0 0.0
    %3152 = vmatpush2.msra.mxu0 0.0
    %3153 = vmatprep.subr.mxu0 0.0
    %3154 = vmatpush2.msra.mxu0 0.0
    %3155 = vmatprep.subr.mxu0 0.0
    %3156 = vmatpush2.msra.mxu0 0.0
    %3157 = vmatprep.subr.mxu0 0.0
    %3158 = vmatpush2.msra.mxu0 0.0
    %3159 = vmatprep.subr.mxu0 0.0
    %3160 = vmatpush2.msra.mxu0 0.0
    %3161 = vmatprep.subr.mxu0 0.0
    %3162 = vmatpush2.msra.mxu0 0.0
    %3163 = vmatprep.mubr.f32.mxu0 0.0
    %3164 = vmatmul.mubr.f32.gmra.mxu0 %v3027
    %v3165 = vpop.f32.mrf.mxu0
    %v3166 = vadd.f32 %v2517, %v3165
    %v3167 = vpop.f32.mrf.mxu0
    %3168 = vdwg.mxu0
    %v3169 = vadd.f32 %v2344, %v3095
    %v3170 = vxor.u32 %v3169, 2147483648
    %v3171 = vmul.f32 %v3170, 1.442695
    %v3172 = vpow.pop %v3171
    %v3173 = vadd.f32 %v3172, 1.0
    %v3174 = vrcp.pop %v3173
    %v3175 = vmul.f32 1.0, %v3174
    %v3176 = vadd.f32 %v2346, %v3097
    %v3177 = vxor.u32 %v3176, 2147483648
    %v3178 = vmul.f32 %v3177, 1.442695
    %v3179 = vpow.pop %v3178
    %v3180 = vadd.f32 %v3179, 1.0
    %v3181 = vrcp.pop %v3180
    %v3182 = vmul.f32 1.0, %v3181
    %v3183 = vmul.f32 %v3175, %v3166
    %v3184 = vadd.f32 %v2442, %v3183
    %v3185 = vtanh.pop %v3184
    %v3186 = vsub.f32 1.0, %v3182
    %v3187 = vmul.f32 %v3186, %v3185
    %v3188 = vmul.f32 %v3182, %v3027
    %v3189 = vadd.f32 %v3187, %v3188
    %vm3190 = vcmp.gt.s32.totalorder %v2504, 3
    %v3191 = vsel %vm3190, 1, 0
    %3192 = vset.pattern.permute.xlu0 0
    %3193 = vperm.xlu0 %3192, %v3191
    %v3194 = vpop.permute.xlu0 %3193
    %vm3195 = vcmp.eq.s32.totalorder %v3194, 1
    %v3196 = vsel %vm3195, %v3189, %v3027
    %3197 = vmatprep.subr.mxu0 %v2501
    %3198 = vmatpush1.msra.mxu0 %v2500
    %3199 = vmatprep.subr.mxu0 %v2498
    %3200 = vmatpush1.msra.mxu0 %v2497
    %3201 = vmatprep.subr.mxu0 %v2495
    %3202 = vmatpush1.msra.mxu0 %v2494
    %3203 = vmatprep.subr.mxu0 %v2492
    %3204 = vmatpush1.msra.mxu0 %v2491
    %3205 = vmatprep.subr.mxu0 %v2489
    %3206 = vmatpush1.msra.mxu0 %v2488
    %3207 = vmatprep.subr.mxu0 %v2486
    %3208 = vmatpush1.msra.mxu0 %v2485
    %3209 = vmatprep.subr.mxu0 %v2483
    %3210 = vmatpush1.msra.mxu0 %v2482
    %3211 = vmatprep.subr.mxu0 %v2480
    %3212 = vmatpush1.msra.mxu0 %v2479
    %3213 = vmatprep.subr.mxu0 %v2477
    %3214 = vmatpush1.msra.mxu0 %v2476
    %3215 = vmatprep.subr.mxu0 %v2474
    %3216 = vmatpush1.msra.mxu0 %v2473
    %3217 = vmatprep.subr.mxu0 %v2471
    %3218 = vmatpush1.msra.mxu0 %v2470
    %3219 = vmatprep.subr.mxu0 %v2468
    %3220 = vmatpush1.msra.mxu0 %v2467
    %3221 = vmatprep.subr.mxu0 %v2465
    %3222 = vmatpush1.msra.mxu0 %v2464
    %3223 = vmatprep.subr.mxu0 %v2462
    %3224 = vmatpush1.msra.mxu0 %v2461
    %3225 = vmatprep.subr.mxu0 %v2459
    %3226 = vmatpush1.msra.mxu0 %v2458
    %3227 = vmatprep.subr.mxu0 %v2456
    %3228 = vmatpush1.msra.mxu0 %v2455
    %3229 = vmatprep.subr.mxu0 0.0
    %3230 = vmatpush2.msra.mxu0 0.0
    %3231 = vmatprep.subr.mxu0 0.0
    %3232 = vmatpush2.msra.mxu0 0.0
    %3233 = vmatprep.subr.mxu0 0.0
    %3234 = vmatpush2.msra.mxu0 0.0
    %3235 = vmatprep.subr.mxu0 0.0
    %3236 = vmatpush2.msra.mxu0 0.0
    %3237 = vmatprep.subr.mxu0 0.0
    %3238 = vmatpush2.msra.mxu0 0.0
    %3239 = vmatprep.subr.mxu0 0.0
    %3240 = vmatpush2.msra.mxu0 0.0
    %3241 = vmatprep.subr.mxu0 0.0
    %3242 = vmatpush2.msra.mxu0 0.0
    %3243 = vmatprep.subr.mxu0 0.0
    %3244 = vmatpush2.msra.mxu0 0.0
    %3245 = vmatprep.subr.mxu0 0.0
    %3246 = vmatpush2.msra.mxu0 0.0
    %3247 = vmatprep.subr.mxu0 0.0
    %3248 = vmatpush2.msra.mxu0 0.0
    %3249 = vmatprep.subr.mxu0 0.0
    %3250 = vmatpush2.msra.mxu0 0.0
    %3251 = vmatprep.subr.mxu0 0.0
    %3252 = vmatpush2.msra.mxu0 0.0
    %3253 = vmatprep.subr.mxu0 0.0
    %3254 = vmatpush2.msra.mxu0 0.0
    %3255 = vmatprep.subr.mxu0 0.0
    %3256 = vmatpush2.msra.mxu0 0.0
    %3257 = vmatprep.subr.mxu0 0.0
    %3258 = vmatpush2.msra.mxu0 0.0
    %3259 = vmatprep.subr.mxu0 0.0
    %3260 = vmatpush2.msra.mxu0 0.0
    %3261 = vmatprep.mubr.f32.mxu0 0.0
    %3262 = vmatmul.mubr.f32.gmra.mxu0 %v3196
    %v3263 = vpop.f32.mrf.mxu0
    %v3264 = vadd.f32 %v2509, %v3263
    %v3265 = vpop.f32.mrf.mxu0
    %v3266 = vadd.f32 %v2513, %v3265
    %3267 = vdwg.mxu0
    %3268 = vmatprep.subr.mxu0 0.0
    %3269 = vmatpush1.msra.mxu0 %v2502
    %3270 = vmatprep.subr.mxu0 0.0
    %3271 = vmatpush1.msra.mxu0 %v2499
    %3272 = vmatprep.subr.mxu0 0.0
    %3273 = vmatpush1.msra.mxu0 %v2496
    %3274 = vmatprep.subr.mxu0 0.0
    %3275 = vmatpush1.msra.mxu0 %v2493
    %3276 = vmatprep.subr.mxu0 0.0
    %3277 = vmatpush1.msra.mxu0 %v2490
    %3278 = vmatprep.subr.mxu0 0.0
    %3279 = vmatpush1.msra.mxu0 %v2487
    %3280 = vmatprep.subr.mxu0 0.0
    %3281 = vmatpush1.msra.mxu0 %v2484
    %3282 = vmatprep.subr.mxu0 0.0
    %3283 = vmatpush1.msra.mxu0 %v2481
    %3284 = vmatprep.subr.mxu0 0.0
    %3285 = vmatpush1.msra.mxu0 %v2478
    %3286 = vmatprep.subr.mxu0 0.0
    %3287 = vmatpush1.msra.mxu0 %v2475
    %3288 = vmatprep.subr.mxu0 0.0
    %3289 = vmatpush1.msra.mxu0 %v2472
    %3290 = vmatprep.subr.mxu0 0.0
    %3291 = vmatpush1.msra.mxu0 %v2469
    %3292 = vmatprep.subr.mxu0 0.0
    %3293 = vmatpush1.msra.mxu0 %v2466
    %3294 = vmatprep.subr.mxu0 0.0
    %3295 = vmatpush1.msra.mxu0 %v2463
    %3296 = vmatprep.subr.mxu0 0.0
    %3297 = vmatpush1.msra.mxu0 %v2460
    %3298 = vmatprep.subr.mxu0 0.0
    %3299 = vmatpush1.msra.mxu0 %v2457
    %3300 = vmatprep.subr.mxu0 0.0
    %3301 = vmatpush2.msra.mxu0 0.0
    %3302 = vmatprep.subr.mxu0 0.0
    %3303 = vmatpush2.msra.mxu0 0.0
    %3304 = vmatprep.subr.mxu0 0.0
    %3305 = vmatpush2.msra.mxu0 0.0
    %3306 = vmatprep.subr.mxu0 0.0
    %3307 = vmatpush2.msra.mxu0 0.0
    %3308 = vmatprep.subr.mxu0 0.0
    %3309 = vmatpush2.msra.mxu0 0.0
    %3310 = vmatprep.subr.mxu0 0.0
    %3311 = vmatpush2.msra.mxu0 0.0
    %3312 = vmatprep.subr.mxu0 0.0
    %3313 = vmatpush2.msra.mxu0 0.0
    %3314 = vmatprep.subr.mxu0 0.0
    %3315 = vmatpush2.msra.mxu0 0.0
    %3316 = vmatprep.subr.mxu0 0.0
    %3317 = vmatpush2.msra.mxu0 0.0
    %3318 = vmatprep.subr.mxu0 0.0
    %3319 = vmatpush2.msra.mxu0 0.0
    %3320 = vmatprep.subr.mxu0 0.0
    %3321 = vmatpush2.msra.mxu0 0.0
    %3322 = vmatprep.subr.mxu0 0.0
    %3323 = vmatpush2.msra.mxu0 0.0
    %3324 = vmatprep.subr.mxu0 0.0
    %3325 = vmatpush2.msra.mxu0 0.0
    %3326 = vmatprep.subr.mxu0 0.0
    %3327 = vmatpush2.msra.mxu0 0.0
    %3328 = vmatprep.subr.mxu0 0.0
    %3329 = vmatpush2.msra.mxu0 0.0
    %3330 = vmatprep.subr.mxu0 0.0
    %3331 = vmatpush2.msra.mxu0 0.0
    %3332 = vmatprep.mubr.f32.mxu0 0.0
    %3333 = vmatmul.mubr.f32.gmra.mxu0 %v3196
    %v3334 = vpop.f32.mrf.mxu0
    %v3335 = vadd.f32 %v2517, %v3334
    %v3336 = vpop.f32.mrf.mxu0
    %3337 = vdwg.mxu0
    %v3338 = vadd.f32 %v2350, %v3264
    %v3339 = vxor.u32 %v3338, 2147483648
    %v3340 = vmul.f32 %v3339, 1.442695
    %v3341 = vpow.pop %v3340
    %v3342 = vadd.f32 %v3341, 1.0
    %v3343 = vrcp.pop %v3342
    %v3344 = vmul.f32 1.0, %v3343
    %v3345 = vadd.f32 %v2352, %v3266
    %v3346 = vxor.u32 %v3345, 2147483648
    %v3347 = vmul.f32 %v3346, 1.442695
    %v3348 = vpow.pop %v3347
    %v3349 = vadd.f32 %v3348, 1.0
    %v3350 = vrcp.pop %v3349
    %v3351 = vmul.f32 1.0, %v3350
    %v3352 = vmul.f32 %v3344, %v3335
    %v3353 = vadd.f32 %v2447, %v3352
    %v3354 = vtanh.pop %v3353
    %v3355 = vsub.f32 1.0, %v3351
    %v3356 = vmul.f32 %v3355, %v3354
    %v3357 = vmul.f32 %v3351, %v3196
    %v3358 = vadd.f32 %v3356, %v3357
    %vm3359 = vcmp.gt.s32.totalorder %v2504, 4
    %v3360 = vsel %vm3359, 1, 0
    %3361 = vset.pattern.permute.xlu0 0
    %3362 = vperm.xlu0 %3361, %v3360
    %v3363 = vpop.permute.xlu0 %3362
    %vm3364 = vcmp.eq.s32.totalorder %v3363, 1
    %v3365 = vsel %vm3364, %v3358, %v3196
    %3366 = vmatprep.subr.mxu0 %v2501
    %3367 = vmatpush1.msra.mxu0 %v2500
    %3368 = vmatprep.subr.mxu0 %v2498
    %3369 = vmatpush1.msra.mxu0 %v2497
    %3370 = vmatprep.subr.mxu0 %v2495
    %3371 = vmatpush1.msra.mxu0 %v2494
    %3372 = vmatprep.subr.mxu0 %v2492
    %3373 = vmatpush1.msra.mxu0 %v2491
    %3374 = vmatprep.subr.mxu0 %v2489
    %3375 = vmatpush1.msra.mxu0 %v2488
    %3376 = vmatprep.subr.mxu0 %v2486
    %3377 = vmatpush1.msra.mxu0 %v2485
    %3378 = vmatprep.subr.mxu0 %v2483
    %3379 = vmatpush1.msra.mxu0 %v2482
    %3380 = vmatprep.subr.mxu0 %v2480
    %3381 = vmatpush1.msra.mxu0 %v2479
    %3382 = vmatprep.subr.mxu0 %v2477
    %3383 = vmatpush1.msra.mxu0 %v2476
    %3384 = vmatprep.subr.mxu0 %v2474
    %3385 = vmatpush1.msra.mxu0 %v2473
    %3386 = vmatprep.subr.mxu0 %v2471
    %3387 = vmatpush1.msra.mxu0 %v2470
    %3388 = vmatprep.subr.mxu0 %v2468
    %3389 = vmatpush1.msra.mxu0 %v2467
    %3390 = vmatprep.subr.mxu0 %v2465
    %3391 = vmatpush1.msra.mxu0 %v2464
    %3392 = vmatprep.subr.mxu0 %v2462
    %3393 = vmatpush1.msra.mxu0 %v2461
    %3394 = vmatprep.subr.mxu0 %v2459
    %3395 = vmatpush1.msra.mxu0 %v2458
    %3396 = vmatprep.subr.mxu0 %v2456
    %3397 = vmatpush1.msra.mxu0 %v2455
    %3398 = vmatprep.subr.mxu0 0.0
    %3399 = vmatpush2.msra.mxu0 0.0
    %3400 = vmatprep.subr.mxu0 0.0
    %3401 = vmatpush2.msra.mxu0 0.0
    %3402 = vmatprep.subr.mxu0 0.0
    %3403 = vmatpush2.msra.mxu0 0.0
    %3404 = vmatprep.subr.mxu0 0.0
    %3405 = vmatpush2.msra.mxu0 0.0
    %3406 = vmatprep.subr.mxu0 0.0
    %3407 = vmatpush2.msra.mxu0 0.0
    %3408 = vmatprep.subr.mxu0 0.0
    %3409 = vmatpush2.msra.mxu0 0.0
    %3410 = vmatprep.subr.mxu0 0.0
    %3411 = vmatpush2.msra.mxu0 0.0
    %3412 = vmatprep.subr.mxu0 0.0
    %3413 = vmatpush2.msra.mxu0 0.0
    %3414 = vmatprep.subr.mxu0 0.0
    %3415 = vmatpush2.msra.mxu0 0.0
    %3416 = vmatprep.subr.mxu0 0.0
    %3417 = vmatpush2.msra.mxu0 0.0
    %3418 = vmatprep.subr.mxu0 0.0
    %3419 = vmatpush2.msra.mxu0 0.0
    %3420 = vmatprep.subr.mxu0 0.0
    %3421 = vmatpush2.msra.mxu0 0.0
    %3422 = vmatprep.subr.mxu0 0.0
    %3423 = vmatpush2.msra.mxu0 0.0
    %3424 = vmatprep.subr.mxu0 0.0
    %3425 = vmatpush2.msra.mxu0 0.0
    %3426 = vmatprep.subr.mxu0 0.0
    %3427 = vmatpush2.msra.mxu0 0.0
    %3428 = vmatprep.subr.mxu0 0.0
    %3429 = vmatpush2.msra.mxu0 0.0
    %3430 = vmatprep.mubr.f32.mxu0 0.0
    %3431 = vmatmul.mubr.f32.gmra.mxu0 %v3365
    %v3432 = vpop.f32.mrf.mxu0
    %v3433 = vadd.f32 %v2509, %v3432
    %v3434 = vpop.f32.mrf.mxu0
    %v3435 = vadd.f32 %v2513, %v3434
    %3436 = vdwg.mxu0
    %3437 = vmatprep.subr.mxu0 0.0
    %3438 = vmatpush1.msra.mxu0 %v2502
    %3439 = vmatprep.subr.mxu0 0.0
    %3440 = vmatpush1.msra.mxu0 %v2499
    %3441 = vmatprep.subr.mxu0 0.0
    %3442 = vmatpush1.msra.mxu0 %v2496
    %3443 = vmatprep.subr.mxu0 0.0
    %3444 = vmatpush1.msra.mxu0 %v2493
    %3445 = vmatprep.subr.mxu0 0.0
    %3446 = vmatpush1.msra.mxu0 %v2490
    %3447 = vmatprep.subr.mxu0 0.0
    %3448 = vmatpush1.msra.mxu0 %v2487
    %3449 = vmatprep.subr.mxu0 0.0
    %3450 = vmatpush1.msra.mxu0 %v2484
    %3451 = vmatprep.subr.mxu0 0.0
    %3452 = vmatpush1.msra.mxu0 %v2481
    %3453 = vmatprep.subr.mxu0 0.0
    %3454 = vmatpush1.msra.mxu0 %v2478
    %3455 = vmatprep.subr.mxu0 0.0
    %3456 = vmatpush1.msra.mxu0 %v2475
    %3457 = vmatprep.subr.mxu0 0.0
    %3458 = vmatpush1.msra.mxu0 %v2472
    %3459 = vmatprep.subr.mxu0 0.0
    %3460 = vmatpush1.msra.mxu0 %v2469
    %3461 = vmatprep.subr.mxu0 0.0
    %3462 = vmatpush1.msra.mxu0 %v2466
    %3463 = vmatprep.subr.mxu0 0.0
    %3464 = vmatpush1.msra.mxu0 %v2463
    %3465 = vmatprep.subr.mxu0 0.0
    %3466 = vmatpush1.msra.mxu0 %v2460
    %3467 = vmatprep.subr.mxu0 0.0
    %3468 = vmatpush1.msra.mxu0 %v2457
    %3469 = vmatprep.subr.mxu0 0.0
    %3470 = vmatpush2.msra.mxu0 0.0
    %3471 = vmatprep.subr.mxu0 0.0
    %3472 = vmatpush2.msra.mxu0 0.0
    %3473 = vmatprep.subr.mxu0 0.0
    %3474 = vmatpush2.msra.mxu0 0.0
    %3475 = vmatprep.subr.mxu0 0.0
    %3476 = vmatpush2.msra.mxu0 0.0
    %3477 = vmatprep.subr.mxu0 0.0
    %3478 = vmatpush2.msra.mxu0 0.0
    %3479 = vmatprep.subr.mxu0 0.0
    %3480 = vmatpush2.msra.mxu0 0.0
    %3481 = vmatprep.subr.mxu0 0.0
    %3482 = vmatpush2.msra.mxu0 0.0
    %3483 = vmatprep.subr.mxu0 0.0
    %3484 = vmatpush2.msra.mxu0 0.0
    %3485 = vmatprep.subr.mxu0 0.0
    %3486 = vmatpush2.msra.mxu0 0.0
    %3487 = vmatprep.subr.mxu0 0.0
    %3488 = vmatpush2.msra.mxu0 0.0
    %3489 = vmatprep.subr.mxu0 0.0
    %3490 = vmatpush2.msra.mxu0 0.0
    %3491 = vmatprep.subr.mxu0 0.0
    %3492 = vmatpush2.msra.mxu0 0.0
    %3493 = vmatprep.subr.mxu0 0.0
    %3494 = vmatpush2.msra.mxu0 0.0
    %3495 = vmatprep.subr.mxu0 0.0
    %3496 = vmatpush2.msra.mxu0 0.0
    %3497 = vmatprep.subr.mxu0 0.0
    %3498 = vmatpush2.msra.mxu0 0.0
    %3499 = vmatprep.subr.mxu0 0.0
    %3500 = vmatpush2.msra.mxu0 0.0
    %3501 = vmatprep.mubr.f32.mxu0 0.0
    %3502 = vmatmul.mubr.f32.gmra.mxu0 %v3365
    %v3503 = vpop.f32.mrf.mxu0
    %v3504 = vadd.f32 %v2517, %v3503
    %v3505 = vpop.f32.mrf.mxu0
    %3506 = vdwg.mxu0
    %v3507 = vadd.f32 %v2356, %v3433
    %v3508 = vxor.u32 %v3507, 2147483648
    %v3509 = vmul.f32 %v3508, 1.442695
    %v3510 = vpow.pop %v3509
    %v3511 = vadd.f32 %v3510, 1.0
    %v3512 = vrcp.pop %v3511
    %v3513 = vmul.f32 1.0, %v3512
    %v3514 = vadd.f32 %v2358, %v3435
    %v3515 = vxor.u32 %v3514, 2147483648
    %v3516 = vmul.f32 %v3515, 1.442695
    %v3517 = vpow.pop %v3516
    %v3518 = vadd.f32 %v3517, 1.0
    %v3519 = vrcp.pop %v3518
    %v3520 = vmul.f32 1.0, %v3519
    %v3521 = vmul.f32 %v3513, %v3504
    %v3522 = vadd.f32 %v2452, %v3521
    %v3523 = vtanh.pop %v3522
    %v3524 = vsub.f32 1.0, %v3520
    %v3525 = vmul.f32 %v3524, %v3523
    %v3526 = vmul.f32 %v3520, %v3365
    %v3527 = vadd.f32 %v3525, %v3526
    %vm3528 = vcmp.gt.s32.totalorder %v2504, 5
    %v3529 = vsel %vm3528, 1, 0
    %3530 = vset.pattern.permute.xlu0 0
    %3531 = vperm.xlu0 %3530, %v3529
    %v3532 = vpop.permute.xlu0 %3531
    %vm3533 = vcmp.eq.s32.totalorder %v3532, 1
    %v3534 = vsel %vm3533, %v3527, %v3365
    %3535 = vst [vmem:[#allocation21] sm:$0xff] %v2110
    %v3536 = vld [vmem:[#allocation12] sm:$0xff]
    %v3537 = vld [vmem:[#allocation12 + $0x8] sm:$0xff]
    %v3538 = vld [vmem:[#allocation12 + $0x10] sm:$0xff]
    %v3539 = vld [vmem:[#allocation12 + $0x18] sm:$0xff]
    %v3540 = vld [vmem:[#allocation12 + $0x20] sm:$0xff]
    %v3541 = vld [vmem:[#allocation12 + $0x28] sm:$0xff]
    %v3542 = vld [vmem:[#allocation12 + $0x30] sm:$0xff]
    %v3543 = vld [vmem:[#allocation12 + $0x38] sm:$0xff]
    %v3544 = vld [vmem:[#allocation12 + $0x40] sm:$0xff]
    %v3545 = vld [vmem:[#allocation12 + $0x48] sm:$0xff]
    %v3546 = vld [vmem:[#allocation12 + $0x50] sm:$0xff]
    %v3547 = vld [vmem:[#allocation12 + $0x58] sm:$0xff]
    %v3548 = vld [vmem:[#allocation12 + $0x60] sm:$0xff]
    %v3549 = vld [vmem:[#allocation12 + $0x68] sm:$0xff]
    %v3550 = vld [vmem:[#allocation12 + $0x70] sm:$0xff]
    %v3551 = vld [vmem:[#allocation12 + $0x78] sm:$0xff]
    %v3552 = vld [vmem:[#allocation12 + $0x80] sm:$0xff]
    %v3553 = vld [vmem:[#allocation12 + $0x88] sm:$0xff]
    %v3554 = vld [vmem:[#allocation12 + $0x90] sm:$0xff]
    %v3555 = vld [vmem:[#allocation12 + $0x98] sm:$0xff]
    %v3556 = vld [vmem:[#allocation12 + $0xa0] sm:$0xff]
    %v3557 = vld [vmem:[#allocation12 + $0xa8] sm:$0xff]
    %v3558 = vld [vmem:[#allocation12 + $0xb0] sm:$0xff]
    %v3559 = vld [vmem:[#allocation12 + $0xb8] sm:$0xff]
    %v3560 = vld [vmem:[#allocation12 + $0xc0] sm:$0xff]
    %v3561 = vld [vmem:[#allocation12 + $0xc8] sm:$0xff]
    %v3562 = vld [vmem:[#allocation12 + $0xd0] sm:$0xff]
    %v3563 = vld [vmem:[#allocation12 + $0xd8] sm:$0xff]
    %v3564 = vld [vmem:[#allocation12 + $0xe0] sm:$0xff]
    %v3565 = vld [vmem:[#allocation12 + $0xe8] sm:$0xff]
    %v3566 = vld [vmem:[#allocation12 + $0xf0] sm:$0xff]
    %v3567 = vld [vmem:[#allocation12 + $0xf8] sm:$0xff]
    %v3568 = vld [vmem:[#allocation14] sm:$0xff]
    %v3569 = vld [vmem:[#allocation14 + $0x8] sm:$0xff]
    %v3570 = vld [vmem:[#allocation14 + $0x10] sm:$0xff]
    %v3571 = vld [vmem:[#allocation14 + $0x18] sm:$0xff]
    %v3572 = vld [vmem:[#allocation14 + $0x20] sm:$0xff]
    %v3573 = vld [vmem:[#allocation14 + $0x28] sm:$0xff]
    %v3574 = vld [vmem:[#allocation14 + $0x30] sm:$0xff]
    %v3575 = vld [vmem:[#allocation14 + $0x38] sm:$0xff]
    %v3576 = vld [vmem:[#allocation14 + $0x40] sm:$0xff]
    %v3577 = vld [vmem:[#allocation14 + $0x48] sm:$0xff]
    %v3578 = vld [vmem:[#allocation14 + $0x50] sm:$0xff]
    %v3579 = vld [vmem:[#allocation14 + $0x58] sm:$0xff]
    %v3580 = vld [vmem:[#allocation14 + $0x60] sm:$0xff]
    %v3581 = vld [vmem:[#allocation14 + $0x68] sm:$0xff]
    %v3582 = vld [vmem:[#allocation14 + $0x70] sm:$0xff]
    %v3583 = vld [vmem:[#allocation14 + $0x78] sm:$0xff]
    %v3584 = vld [vmem:[#allocation14 + $0x80] sm:$0xff]
    %v3585 = vld [vmem:[#allocation14 + $0x88] sm:$0xff]
    %v3586 = vld [vmem:[#allocation14 + $0x90] sm:$0xff]
    %v3587 = vld [vmem:[#allocation14 + $0x98] sm:$0xff]
    %v3588 = vld [vmem:[#allocation14 + $0xa0] sm:$0xff]
    %v3589 = vld [vmem:[#allocation14 + $0xa8] sm:$0xff]
    %v3590 = vld [vmem:[#allocation14 + $0xb0] sm:$0xff]
    %v3591 = vld [vmem:[#allocation14 + $0xb8] sm:$0xff]
    %v3592 = vld [vmem:[#allocation14 + $0xc0] sm:$0xff]
    %v3593 = vld [vmem:[#allocation14 + $0xc8] sm:$0xff]
    %v3594 = vld [vmem:[#allocation14 + $0xd0] sm:$0xff]
    %v3595 = vld [vmem:[#allocation14 + $0xd8] sm:$0xff]
    %v3596 = vld [vmem:[#allocation14 + $0xe0] sm:$0xff]
    %v3597 = vld [vmem:[#allocation14 + $0xe8] sm:$0xff]
    %v3598 = vld [vmem:[#allocation14 + $0xf0] sm:$0xff]
    %v3599 = vld [vmem:[#allocation14 + $0xf8] sm:$0xff]
    %3600 = vmatprep.subr.mxu0 %v3599
    %3601 = vmatpush1.msra.mxu0 %v3598
    %3602 = vmatprep.subr.mxu0 %v3597
    %3603 = vmatpush1.msra.mxu0 %v3596
    %3604 = vmatprep.subr.mxu0 %v3595
    %3605 = vmatpush1.msra.mxu0 %v3594
    %3606 = vmatprep.subr.mxu0 %v3593
    %3607 = vmatpush1.msra.mxu0 %v3592
    %3608 = vmatprep.subr.mxu0 %v3591
    %3609 = vmatpush1.msra.mxu0 %v3590
    %3610 = vmatprep.subr.mxu0 %v3589
    %3611 = vmatpush1.msra.mxu0 %v3588
    %3612 = vmatprep.subr.mxu0 %v3587
    %3613 = vmatpush1.msra.mxu0 %v3586
    %3614 = vmatprep.subr.mxu0 %v3585
    %3615 = vmatpush1.msra.mxu0 %v3584
    %3616 = vmatprep.subr.mxu0 %v3583
    %3617 = vmatpush1.msra.mxu0 %v3582
    %3618 = vmatprep.subr.mxu0 %v3581
    %3619 = vmatpush1.msra.mxu0 %v3580
    %3620 = vmatprep.subr.mxu0 %v3579
    %3621 = vmatpush1.msra.mxu0 %v3578
    %3622 = vmatprep.subr.mxu0 %v3577
    %3623 = vmatpush1.msra.mxu0 %v3576
    %3624 = vmatprep.subr.mxu0 %v3575
    %3625 = vmatpush1.msra.mxu0 %v3574
    %3626 = vmatprep.subr.mxu0 %v3573
    %3627 = vmatpush1.msra.mxu0 %v3572
    %3628 = vmatprep.subr.mxu0 %v3571
    %3629 = vmatpush1.msra.mxu0 %v3570
    %3630 = vmatprep.subr.mxu0 %v3569
    %3631 = vmatpush1.msra.mxu0 %v3568
    %3632 = vmatprep.subr.mxu0 0.0
    %3633 = vmatpush2.msra.mxu0 0.0
    %3634 = vmatprep.subr.mxu0 0.0
    %3635 = vmatpush2.msra.mxu0 0.0
    %3636 = vmatprep.subr.mxu0 0.0
    %3637 = vmatpush2.msra.mxu0 0.0
    %3638 = vmatprep.subr.mxu0 0.0
    %3639 = vmatpush2.msra.mxu0 0.0
    %3640 = vmatprep.subr.mxu0 0.0
    %3641 = vmatpush2.msra.mxu0 0.0
    %3642 = vmatprep.subr.mxu0 0.0
    %3643 = vmatpush2.msra.mxu0 0.0
    %3644 = vmatprep.subr.mxu0 0.0
    %3645 = vmatpush2.msra.mxu0 0.0
    %3646 = vmatprep.subr.mxu0 0.0
    %3647 = vmatpush2.msra.mxu0 0.0
    %3648 = vmatprep.subr.mxu0 0.0
    %3649 = vmatpush2.msra.mxu0 0.0
    %3650 = vmatprep.subr.mxu0 0.0
    %3651 = vmatpush2.msra.mxu0 0.0
    %3652 = vmatprep.subr.mxu0 0.0
    %3653 = vmatpush2.msra.mxu0 0.0
    %3654 = vmatprep.subr.mxu0 0.0
    %3655 = vmatpush2.msra.mxu0 0.0
    %3656 = vmatprep.subr.mxu0 0.0
    %3657 = vmatpush2.msra.mxu0 0.0
    %3658 = vmatprep.subr.mxu0 0.0
    %3659 = vmatpush2.msra.mxu0 0.0
    %3660 = vmatprep.subr.mxu0 0.0
    %3661 = vmatpush2.msra.mxu0 0.0
    %3662 = vmatprep.subr.mxu0 0.0
    %3663 = vmatpush2.msra.mxu0 0.0
    %3664 = vmatprep.mubr.f32.mxu0 0.0
    %3665 = vmatmul.mubr.f32.gmra.mxu0 %v3534
    %v3666 = vpop.f32.mrf.mxu0
    %v3667 = vadd.f32 0.0, %v3666
    %v3668 = vpop.f32.mrf.mxu0
    %v3669 = vadd.f32 0.0, %v3668
    %3670 = vdwg.mxu0
    %3671 = vmatprep.subr.mxu0 %v3567
    %3672 = vmatpush1.msra.mxu0 %v3566
    %3673 = vmatprep.subr.mxu0 %v3565
    %3674 = vmatpush1.msra.mxu0 %v3564
    %3675 = vmatprep.subr.mxu0 %v3563
    %3676 = vmatpush1.msra.mxu0 %v3562
    %3677 = vmatprep.subr.mxu0 %v3561
    %3678 = vmatpush1.msra.mxu0 %v3560
    %3679 = vmatprep.subr.mxu0 %v3559
    %3680 = vmatpush1.msra.mxu0 %v3558
    %3681 = vmatprep.subr.mxu0 %v3557
    %3682 = vmatpush1.msra.mxu0 %v3556
    %3683 = vmatprep.subr.mxu0 %v3555
    %3684 = vmatpush1.msra.mxu0 %v3554
    %3685 = vmatprep.subr.mxu0 %v3553
    %3686 = vmatpush1.msra.mxu0 %v3552
    %3687 = vmatprep.subr.mxu0 %v3551
    %3688 = vmatpush1.msra.mxu0 %v3550
    %3689 = vmatprep.subr.mxu0 %v3549
    %3690 = vmatpush1.msra.mxu0 %v3548
    %3691 = vmatprep.subr.mxu0 %v3547
    %3692 = vmatpush1.msra.mxu0 %v3546
    %3693 = vmatprep.subr.mxu0 %v3545
    %3694 = vmatpush1.msra.mxu0 %v3544
    %3695 = vmatprep.subr.mxu0 %v3543
    %3696 = vmatpush1.msra.mxu0 %v3542
    %3697 = vmatprep.subr.mxu0 %v3541
    %3698 = vmatpush1.msra.mxu0 %v3540
    %3699 = vmatprep.subr.mxu0 %v3539
    %3700 = vmatpush1.msra.mxu0 %v3538
    %3701 = vmatprep.subr.mxu0 %v3537
    %3702 = vmatpush1.msra.mxu0 %v3536
    %3703 = vmatprep.subr.mxu0 0.0
    %3704 = vmatpush2.msra.mxu0 0.0
    %3705 = vmatprep.subr.mxu0 0.0
    %3706 = vmatpush2.msra.mxu0 0.0
    %3707 = vmatprep.subr.mxu0 0.0
    %3708 = vmatpush2.msra.mxu0 0.0
    %3709 = vmatprep.subr.mxu0 0.0
    %3710 = vmatpush2.msra.mxu0 0.0
    %3711 = vmatprep.subr.mxu0 0.0
    %3712 = vmatpush2.msra.mxu0 0.0
    %3713 = vmatprep.subr.mxu0 0.0
    %3714 = vmatpush2.msra.mxu0 0.0
    %3715 = vmatprep.subr.mxu0 0.0
    %3716 = vmatpush2.msra.mxu0 0.0
    %3717 = vmatprep.subr.mxu0 0.0
    %3718 = vmatpush2.msra.mxu0 0.0
    %3719 = vmatprep.subr.mxu0 0.0
    %3720 = vmatpush2.msra.mxu0 0.0
    %3721 = vmatprep.subr.mxu0 0.0
    %3722 = vmatpush2.msra.mxu0 0.0
    %3723 = vmatprep.subr.mxu0 0.0
    %3724 = vmatpush2.msra.mxu0 0.0
    %3725 = vmatprep.subr.mxu0 0.0
    %3726 = vmatpush2.msra.mxu0 0.0
    %3727 = vmatprep.subr.mxu0 0.0
    %3728 = vmatpush2.msra.mxu0 0.0
    %3729 = vmatprep.subr.mxu0 0.0
    %3730 = vmatpush2.msra.mxu0 0.0
    %3731 = vmatprep.subr.mxu0 0.0
    %3732 = vmatpush2.msra.mxu0 0.0
    %3733 = vmatprep.subr.mxu0 0.0
    %3734 = vmatpush2.msra.mxu0 0.0
    %3735 = vmatprep.mubr.f32.mxu0 0.0
    %3736 = vmatmul.mubr.f32.gmra.mxu0 %v2110
    %v3737 = vpop.f32.mrf.mxu0
    %v3738 = vadd.f32 %v3667, %v3737
    %v3739 = vpop.f32.mrf.mxu0
    %v3740 = vadd.f32 %v3669, %v3739
    %3741 = vdwg.mxu0
    %v3742 = vld [vmem:[%s41] sm:$0x3]
    %v3744 = vlaneseq
    %v3745 = vshrl.u32 %v3744, 7
    %v3746 = vsub.s32 0, %v3745
    %v3747 = vrot.slane %v3742, %v3746
    %v3748 = vlaneseq
    %v3749 = vshrl.u32 %v3748, 7
    %v3750 = vsub.s32 1, %v3749
    %v3751 = vrot.slane %v3742, %v3750
    %v3754 = vadd.f32 %v3738, %v3747
    %v3755 = vadd.f32 %v3740, %v3751
    %v3756 = vmul.f32 %v3755, 0.5
    %v3757 = vmul.f32 %v3756, 1.442695
    %v3758 = vpow.pop %v3757
    %3759 = vst [vmem:[#allocation22] sm:$0xff] %v3754
    %3760 = vst [vmem:[#allocation24] sm:$0xff] %v3758
    %v3761 = vlaneseq
    %v3762 = vshrl.u32 %v3761, 7
    %v3763 = vadd.s32 %v3762, 8
    %v3764 = vadd.s32 %v3762, 16
    %v3765 = vadd.s32 %v3762, 24
    %v3766 = vadd.s32 %v3762, 32
    %v3767 = vadd.s32 %v3762, 40
    %v3768 = vadd.s32 %v3762, 48
    %v3769 = vadd.s32 %v3762, 56
    %v3770 = vadd.s32 %v3762, 64
    %v3771 = vadd.s32 %v3762, 72
    %v3772 = vadd.s32 %v3762, 80
    %v3773 = vadd.s32 %v3762, 88
    %v3774 = vlaneseq
    %v3775 = vand.u32 %v3774, 127
    %v3776 = vmul.u32 %v3775, 12
    %vm3777 = vcmp.ge.s32.totalorder %v3762, %v3776
    %vm3778 = vcmp.ge.s32.totalorder %v3763, %v3776
    %vm3779 = vcmp.ge.s32.totalorder %v3764, %v3776
    %vm3780 = vcmp.ge.s32.totalorder %v3765, %v3776
    %vm3781 = vcmp.ge.s32.totalorder %v3766, %v3776
    %vm3782 = vcmp.ge.s32.totalorder %v3767, %v3776
    %vm3783 = vcmp.ge.s32.totalorder %v3768, %v3776
    %vm3784 = vcmp.ge.s32.totalorder %v3769, %v3776
    %vm3785 = vcmp.ge.s32.totalorder %v3770, %v3776
    %vm3786 = vcmp.ge.s32.totalorder %v3771, %v3776
    %vm3787 = vcmp.ge.s32.totalorder %v3772, %v3776
    %vm3788 = vcmp.ge.s32.totalorder %v3773, %v3776
    %v3789 = vadd.s32 %v3775, 1
    %v3790 = vmul.u32 %v3789, 12
    %vm3791 = vcmp.lt.s32.totalorder %v3762, %v3790
    %vm3792 = vcmp.lt.s32.totalorder %v3763, %v3790
    %vm3793 = vcmp.lt.s32.totalorder %v3764, %v3790
    %vm3794 = vcmp.lt.s32.totalorder %v3765, %v3790
    %vm3795 = vcmp.lt.s32.totalorder %v3766, %v3790
    %vm3796 = vcmp.lt.s32.totalorder %v3767, %v3790
    %vm3797 = vcmp.lt.s32.totalorder %v3768, %v3790
    %vm3798 = vcmp.lt.s32.totalorder %v3769, %v3790
    %vm3799 = vcmp.lt.s32.totalorder %v3770, %v3790
    %vm3800 = vcmp.lt.s32.totalorder %v3771, %v3790
    %vm3801 = vcmp.lt.s32.totalorder %v3772, %v3790
    %vm3802 = vcmp.lt.s32.totalorder %v3773, %v3790
    %vm3803 = vmand %vm3777, %vm3791
    %vm3804 = vmand %vm3778, %vm3792
    %vm3805 = vmand %vm3779, %vm3793
    %vm3806 = vmand %vm3780, %vm3794
    %vm3807 = vmand %vm3781, %vm3795
    %vm3808 = vmand %vm3782, %vm3796
    %vm3809 = vmand %vm3783, %vm3797
    %vm3810 = vmand %vm3784, %vm3798
    %vm3811 = vmand %vm3785, %vm3799
    %vm3812 = vmand %vm3786, %vm3800
    %vm3813 = vmand %vm3787, %vm3801
    %vm3814 = vmand %vm3788, %vm3802
    %v3815 = vsel %vm3803, 1, 0
    %v3816 = vsel %vm3804, 1, 0
    %v3817 = vsel %vm3805, 1, 0
    %v3818 = vsel %vm3806, 1, 0
    %v3819 = vsel %vm3807, 1, 0
    %v3820 = vsel %vm3808, 1, 0
    %v3821 = vsel %vm3809, 1, 0
    %v3822 = vsel %vm3810, 1, 0
    %v3823 = vsel %vm3811, 1, 0
    %v3824 = vsel %vm3812, 1, 0
    %v3825 = vsel %vm3813, 1, 0
    %v3826 = vsel %vm3814, 1, 0
    %v3827 = vcvt.s32.f32 %v3815
    %v3828 = vcvt.s32.f32 %v3816
    %v3829 = vcvt.s32.f32 %v3817
    %v3830 = vcvt.s32.f32 %v3818
    %v3831 = vcvt.s32.f32 %v3819
    %v3832 = vcvt.s32.f32 %v3820
    %v3833 = vcvt.s32.f32 %v3821
    %v3834 = vcvt.s32.f32 %v3822
    %v3835 = vcvt.s32.f32 %v3823
    %v3836 = vcvt.s32.f32 %v3824
    %v3837 = vcvt.s32.f32 %v3825
    %v3838 = vcvt.s32.f32 %v3826
    %v3839 = vld [vmem:[%s43] sm:$0xff]
    %v3840 = vld [vmem:[%s43 + $0x8] sm:$0xff]
    %v3841 = vld [vmem:[%s43 + $0x10] sm:$0xff]
    %v3842 = vld [vmem:[%s43 + $0x18] sm:$0xff]
    %v3843 = vld [vmem:[%s43 + $0x20] sm:$0xff]
    %v3844 = vld [vmem:[%s43 + $0x28] sm:$0xff]
    %v3845 = vld [vmem:[%s43 + $0x30] sm:$0xff]
    %v3846 = vld [vmem:[%s43 + $0x38] sm:$0xff]
    %v3847 = vld [vmem:[%s43 + $0x40] sm:$0xff]
    %v3848 = vld [vmem:[%s43 + $0x48] sm:$0xff]
    %v3849 = vld [vmem:[%s43 + $0x50] sm:$0xff]
    %v3850 = vld [vmem:[%s43 + $0x58] sm:$0xff]
    %v3851 = vld [vmem:[%s43 + $0x60] sm:$0xff]
    %v3852 = vld [vmem:[%s43 + $0x68] sm:$0xff]
    %v3853 = vld [vmem:[%s43 + $0x70] sm:$0xff]
    %v3854 = vld [vmem:[%s43 + $0x78] sm:$0xff]
    %3855 = vmatprep.subr.mxu0 0.0
    %3856 = vmatpush1.msra.mxu0 %v3854
    %3857 = vmatprep.subr.mxu0 0.0
    %3858 = vmatpush1.msra.mxu0 %v3853
    %3859 = vmatprep.subr.mxu0 0.0
    %3860 = vmatpush1.msra.mxu0 %v3852
    %3861 = vmatprep.subr.mxu0 0.0
    %3862 = vmatpush1.msra.mxu0 %v3851
    %3863 = vmatprep.subr.mxu0 0.0
    %3864 = vmatpush1.msra.mxu0 %v3850
    %3865 = vmatprep.subr.mxu0 0.0
    %3866 = vmatpush1.msra.mxu0 %v3849
    %3867 = vmatprep.subr.mxu0 0.0
    %3868 = vmatpush1.msra.mxu0 %v3848
    %3869 = vmatprep.subr.mxu0 0.0
    %3870 = vmatpush1.msra.mxu0 %v3847
    %3871 = vmatprep.subr.mxu0 0.0
    %3872 = vmatpush1.msra.mxu0 %v3846
    %3873 = vmatprep.subr.mxu0 0.0
    %3874 = vmatpush1.msra.mxu0 %v3845
    %3875 = vmatprep.subr.mxu0 0.0
    %3876 = vmatpush1.msra.mxu0 %v3844
    %3877 = vmatprep.subr.mxu0 0.0
    %3878 = vmatpush1.msra.mxu0 %v3843
    %3879 = vmatprep.subr.mxu0 0.0
    %3880 = vmatpush1.msra.mxu0 %v3842
    %3881 = vmatprep.subr.mxu0 0.0
    %3882 = vmatpush1.msra.mxu0 %v3841
    %3883 = vmatprep.subr.mxu0 0.0
    %3884 = vmatpush1.msra.mxu0 %v3840
    %3885 = vmatprep.subr.mxu0 0.0
    %3886 = vmatpush1.msra.mxu0 %v3839
    %3887 = vmatprep.subr.mxu0 0.0
    %3888 = vmatpush2.msra.mxu0 0.0
    %3889 = vmatprep.subr.mxu0 0.0
    %3890 = vmatpush2.msra.mxu0 0.0
    %3891 = vmatprep.subr.mxu0 0.0
    %3892 = vmatpush2.msra.mxu0 0.0
    %3893 = vmatprep.subr.mxu0 0.0
    %3894 = vmatpush2.msra.mxu0 0.0
    %3895 = vmatprep.subr.mxu0 0.0
    %3896 = vmatpush2.msra.mxu0 0.0
    %3897 = vmatprep.subr.mxu0 0.0
    %3898 = vmatpush2.msra.mxu0 0.0
    %3899 = vmatprep.subr.mxu0 0.0
    %3900 = vmatpush2.msra.mxu0 0.0
    %3901 = vmatprep.subr.mxu0 0.0
    %3902 = vmatpush2.msra.mxu0 0.0
    %3903 = vmatprep.subr.mxu0 0.0
    %3904 = vmatpush2.msra.mxu0 0.0
    %3905 = vmatprep.subr.mxu0 0.0
    %3906 = vmatpush2.msra.mxu0 0.0
    %3907 = vmatprep.subr.mxu0 0.0
    %3908 = vmatpush2.msra.mxu0 0.0
    %3909 = vmatprep.subr.mxu0 0.0
    %3910 = vmatpush2.msra.mxu0 0.0
    %3911 = vmatprep.subr.mxu0 0.0
    %3912 = vmatpush2.msra.mxu0 0.0
    %3913 = vmatprep.subr.mxu0 0.0
    %3914 = vmatpush2.msra.mxu0 0.0
    %3915 = vmatprep.subr.mxu0 0.0
    %3916 = vmatpush2.msra.mxu0 0.0
    %3917 = vmatprep.subr.mxu0 0.0
    %3918 = vmatpush2.msra.mxu0 0.0
    %3919 = vmatprep.mubr.f32.mxu0 0.0
    %3920 = vmatmul.mubr.f32.gmra.mxu0 %v2110
    %v3921 = vpop.f32.mrf.mxu0
    %v3922 = vadd.f32 0.0, %v3921
    %v3923 = vpop.f32.mrf.mxu0
    %3924 = vdwg.mxu0
    %v3925 = vld [vmem:[%s11] sm:$0xff]
    %vm3926 = vcmask 64512
    %v3928 = vsel %vm3926, %v3827, 0
    %v3931 = vsel %vm3926, %v3828, 0
    %v3934 = vsel %vm3926, %v3829, 0
    %v3937 = vsel %vm3926, %v3830, 0
    %v3940 = vsel %vm3926, %v3831, 0
    %v3943 = vsel %vm3926, %v3832, 0
    %v3946 = vsel %vm3926, %v3833, 0
    %v3949 = vsel %vm3926, %v3834, 0
    %v3952 = vsel %vm3926, %v3835, 0
    %v3955 = vsel %vm3926, %v3836, 0
    %v3958 = vsel %vm3926, %v3837, 0
    %v3961 = vsel %vm3926, %v3838, 0
    %3963 = vmatprep.subr.mxu0 0.0
    %3964 = vmatpush1.msra.mxu0 0.0
    %3965 = vmatprep.subr.mxu0 0.0
    %3966 = vmatpush1.msra.mxu0 0.0
    %3967 = vmatprep.subr.mxu0 0.0
    %3968 = vmatpush1.msra.mxu0 0.0
    %3969 = vmatprep.subr.mxu0 0.0
    %3970 = vmatpush1.msra.mxu0 0.0
    %3971 = vmatprep.subr.mxu0 0.0
    %3972 = vmatpush1.msra.mxu0 0.0
    %3973 = vmatprep.subr.mxu0 0.0
    %3974 = vmatpush1.msra.mxu0 0.0
    %3975 = vmatprep.subr.mxu0 0.0
    %3976 = vmatpush1.msra.mxu0 0.0
    %3977 = vmatprep.subr.mxu0 0.0
    %3978 = vmatpush1.msra.mxu0 0.0
    %3979 = vmatprep.subr.mxu0 0.0
    %3980 = vmatpush1.msra.mxu0 0.0
    %3981 = vmatprep.subr.mxu0 0.0
    %3982 = vmatpush1.msra.mxu0 0.0
    %3983 = vmatprep.subr.mxu0 0.0
    %3984 = vmatpush1.msra.mxu0 0.0
    %3985 = vmatprep.subr.mxu0 0.0
    %3986 = vmatpush1.msra.mxu0 0.0
    %3987 = vmatprep.subr.mxu0 0.0
    %3988 = vmatpush1.msra.mxu0 0.0
    %3989 = vmatprep.subr.mxu0 0.0
    %3990 = vmatpush1.msra.mxu0 0.0
    %3991 = vmatprep.subr.mxu0 0.0
    %3992 = vmatpush1.msra.mxu0 0.0
    %3993 = vmatprep.subr.mxu0 %v3758
    %3994 = vmatpush1.msra.mxu0 %v3754
    %3995 = vmatprep.subr.mxu0 0.0
    %3996 = vmatpush2.msra.mxu0 0.0
    %3997 = vmatprep.subr.mxu0 0.0
    %3998 = vmatpush2.msra.mxu0 0.0
    %3999 = vmatprep.subr.mxu0 0.0
    %4000 = vmatpush2.msra.mxu0 0.0
    %4001 = vmatprep.subr.mxu0 0.0
    %4002 = vmatpush2.msra.mxu0 0.0
    %4003 = vmatprep.subr.mxu0 0.0
    %4004 = vmatpush2.msra.mxu0 0.0
    %4005 = vmatprep.subr.mxu0 0.0
    %4006 = vmatpush2.msra.mxu0 0.0
    %4007 = vmatprep.subr.mxu0 0.0
    %4008 = vmatpush2.msra.mxu0 0.0
    %4009 = vmatprep.subr.mxu0 0.0
    %4010 = vmatpush2.msra.mxu0 0.0
    %4011 = vmatprep.subr.mxu0 0.0
    %4012 = vmatpush2.msra.mxu0 0.0
    %4013 = vmatprep.subr.mxu0 0.0
    %4014 = vmatpush2.msra.mxu0 0.0
    %4015 = vmatprep.subr.mxu0 0.0
    %4016 = vmatpush2.msra.mxu0 0.0
    %4017 = vmatprep.subr.mxu0 0.0
    %4018 = vmatpush2.msra.mxu0 0.0
    %4019 = vmatprep.subr.mxu0 0.0
    %4020 = vmatpush2.msra.mxu0 0.0
    %4021 = vmatprep.subr.mxu0 0.0
    %4022 = vmatpush2.msra.mxu0 0.0
    %4023 = vmatprep.subr.mxu0 0.0
    %4024 = vmatpush2.msra.mxu0 0.0
    %4025 = vmatprep.subr.mxu0 0.0
    %4026 = vmatpush2.msra.mxu0 0.0
    %4027 = vmatprep.mubr.f32.mxu0 0.0
    %4028 = vmatmul.mubr.f32.gmra.mxu0 %v3928
    %v4029 = vpop.f32.mrf.mxu0
    %v4030 = vadd.f32 0.0, %v4029
    %v4031 = vpop.f32.mrf.mxu0
    %v4032 = vadd.f32 0.0, %v4031
    %4033 = vmatprep.mubr.f32.mxu0 0.0
    %4034 = vmatmul.mubr.f32.gmra.mxu0 %v3931
    %v4035 = vpop.f32.mrf.mxu0
    %v4036 = vadd.f32 0.0, %v4035
    %v4037 = vpop.f32.mrf.mxu0
    %v4038 = vadd.f32 0.0, %v4037
    %4039 = vmatprep.mubr.f32.mxu0 0.0
    %4040 = vmatmul.mubr.f32.gmra.mxu0 %v3934
    %v4041 = vpop.f32.mrf.mxu0
    %v4042 = vadd.f32 0.0, %v4041
    %v4043 = vpop.f32.mrf.mxu0
    %v4044 = vadd.f32 0.0, %v4043
    %4045 = vmatprep.mubr.f32.mxu0 0.0
    %4046 = vmatmul.mubr.f32.gmra.mxu0 %v3937
    %v4047 = vpop.f32.mrf.mxu0
    %v4048 = vadd.f32 0.0, %v4047
    %v4049 = vpop.f32.mrf.mxu0
    %v4050 = vadd.f32 0.0, %v4049
    %4051 = vmatprep.mubr.f32.mxu0 0.0
    %4052 = vmatmul.mubr.f32.gmra.mxu0 %v3940
    %v4053 = vpop.f32.mrf.mxu0
    %v4054 = vadd.f32 0.0, %v4053
    %v4055 = vpop.f32.mrf.mxu0
    %v4056 = vadd.f32 0.0, %v4055
    %4057 = vmatprep.mubr.f32.mxu0 0.0
    %4058 = vmatmul.mubr.f32.gmra.mxu0 %v3943
    %v4059 = vpop.f32.mrf.mxu0
    %v4060 = vadd.f32 0.0, %v4059
    %v4061 = vpop.f32.mrf.mxu0
    %v4062 = vadd.f32 0.0, %v4061
    %4063 = vmatprep.mubr.f32.mxu0 0.0
    %4064 = vmatmul.mubr.f32.gmra.mxu0 %v3946
    %v4065 = vpop.f32.mrf.mxu0
    %v4066 = vadd.f32 0.0, %v4065
    %v4067 = vpop.f32.mrf.mxu0
    %v4068 = vadd.f32 0.0, %v4067
    %4069 = vmatprep.mubr.f32.mxu0 0.0
    %4070 = vmatmul.mubr.f32.gmra.mxu0 %v3949
    %v4071 = vpop.f32.mrf.mxu0
    %v4072 = vadd.f32 0.0, %v4071
    %v4073 = vpop.f32.mrf.mxu0
    %v4074 = vadd.f32 0.0, %v4073
    %4075 = vmatprep.mubr.f32.mxu0 0.0
    %4076 = vmatmul.mubr.f32.gmra.mxu0 %v3952
    %v4077 = vpop.f32.mrf.mxu0
    %v4078 = vadd.f32 0.0, %v4077
    %v4079 = vpop.f32.mrf.mxu0
    %v4080 = vadd.f32 0.0, %v4079
    %4081 = vmatprep.mubr.f32.mxu0 0.0
    %4082 = vmatmul.mubr.f32.gmra.mxu0 %v3955
    %v4083 = vpop.f32.mrf.mxu0
    %v4084 = vadd.f32 0.0, %v4083
    %v4085 = vpop.f32.mrf.mxu0
    %v4086 = vadd.f32 0.0, %v4085
    %4087 = vmatprep.mubr.f32.mxu0 0.0
    %4088 = vmatmul.mubr.f32.gmra.mxu0 %v3958
    %v4089 = vpop.f32.mrf.mxu0
    %v4090 = vadd.f32 0.0, %v4089
    %v4091 = vpop.f32.mrf.mxu0
    %v4092 = vadd.f32 0.0, %v4091
    %4093 = vmatprep.mubr.f32.mxu0 0.0
    %4094 = vmatmul.mubr.f32.gmra.mxu0 %v3961
    %v4095 = vpop.f32.mrf.mxu0
    %v4096 = vadd.f32 0.0, %v4095
    %v4097 = vpop.f32.mrf.mxu0
    %v4098 = vadd.f32 0.0, %v4097
    %4099 = vdwg.mxu0
    %4100 = vmatprep.subr.mxu0 0.0
    %4101 = vmatpush1.msra.mxu0 0.0
    %4102 = vmatprep.subr.mxu0 0.0
    %4103 = vmatpush1.msra.mxu0 0.0
    %4104 = vmatprep.subr.mxu0 0.0
    %4105 = vmatpush1.msra.mxu0 0.0
    %4106 = vmatprep.subr.mxu0 0.0
    %4107 = vmatpush1.msra.mxu0 0.0
    %4108 = vmatprep.subr.mxu0 0.0
    %4109 = vmatpush1.msra.mxu0 0.0
    %4110 = vmatprep.subr.mxu0 0.0
    %4111 = vmatpush1.msra.mxu0 0.0
    %4112 = vmatprep.subr.mxu0 0.0
    %4113 = vmatpush1.msra.mxu0 0.0
    %4114 = vmatprep.subr.mxu0 0.0
    %4115 = vmatpush1.msra.mxu0 0.0
    %4116 = vmatprep.subr.mxu0 0.0
    %4117 = vmatpush1.msra.mxu0 0.0
    %4118 = vmatprep.subr.mxu0 0.0
    %4119 = vmatpush1.msra.mxu0 0.0
    %4120 = vmatprep.subr.mxu0 0.0
    %4121 = vmatpush1.msra.mxu0 0.0
    %4122 = vmatprep.subr.mxu0 0.0
    %4123 = vmatpush1.msra.mxu0 0.0
    %4124 = vmatprep.subr.mxu0 0.0
    %4125 = vmatpush1.msra.mxu0 0.0
    %4126 = vmatprep.subr.mxu0 0.0
    %4127 = vmatpush1.msra.mxu0 0.0
    %4128 = vmatprep.subr.mxu0 0.0
    %4129 = vmatpush1.msra.mxu0 0.0
    %4130 = vmatprep.subr.mxu0 %v3925
    %4131 = vmatpush1.msra.mxu0 %v3922
    %4132 = vmatprep.subr.mxu0 0.0
    %4133 = vmatpush2.msra.mxu0 0.0
    %4134 = vmatprep.subr.mxu0 0.0
    %4135 = vmatpush2.msra.mxu0 0.0
    %4136 = vmatprep.subr.mxu0 0.0
    %4137 = vmatpush2.msra.mxu0 0.0
    %4138 = vmatprep.subr.mxu0 0.0
    %4139 = vmatpush2.msra.mxu0 0.0
    %4140 = vmatprep.subr.mxu0 0.0
    %4141 = vmatpush2.msra.mxu0 0.0
    %4142 = vmatprep.subr.mxu0 0.0
    %4143 = vmatpush2.msra.mxu0 0.0
    %4144 = vmatprep.subr.mxu0 0.0
    %4145 = vmatpush2.msra.mxu0 0.0
    %4146 = vmatprep.subr.mxu0 0.0
    %4147 = vmatpush2.msra.mxu0 0.0
    %4148 = vmatprep.subr.mxu0 0.0
    %4149 = vmatpush2.msra.mxu0 0.0
    %4150 = vmatprep.subr.mxu0 0.0
    %4151 = vmatpush2.msra.mxu0 0.0
    %4152 = vmatprep.subr.mxu0 0.0
    %4153 = vmatpush2.msra.mxu0 0.0
    %4154 = vmatprep.subr.mxu0 0.0
    %4155 = vmatpush2.msra.mxu0 0.0
    %4156 = vmatprep.subr.mxu0 0.0
    %4157 = vmatpush2.msra.mxu0 0.0
    %4158 = vmatprep.subr.mxu0 0.0
    %4159 = vmatpush2.msra.mxu0 0.0
    %4160 = vmatprep.subr.mxu0 0.0
    %4161 = vmatpush2.msra.mxu0 0.0
    %4162 = vmatprep.subr.mxu0 0.0
    %4163 = vmatpush2.msra.mxu0 0.0
    %4164 = vmatprep.mubr.f32.mxu0 0.0
    %4165 = vmatmul.mubr.f32.gmra.mxu0 %v3928
    %v4166 = vpop.f32.mrf.mxu0
    %v4167 = vadd.f32 0.0, %v4166
    %v4168 = vpop.f32.mrf.mxu0
    %v4169 = vadd.f32 0.0, %v4168
    %4170 = vmatprep.mubr.f32.mxu0 0.0
    %4171 = vmatmul.mubr.f32.gmra.mxu0 %v3931
    %v4172 = vpop.f32.mrf.mxu0
    %v4173 = vadd.f32 0.0, %v4172
    %v4174 = vpop.f32.mrf.mxu0
    %v4175 = vadd.f32 0.0, %v4174
    %4176 = vmatprep.mubr.f32.mxu0 0.0
    %4177 = vmatmul.mubr.f32.gmra.mxu0 %v3934
    %v4178 = vpop.f32.mrf.mxu0
    %v4179 = vadd.f32 0.0, %v4178
    %v4180 = vpop.f32.mrf.mxu0
    %v4181 = vadd.f32 0.0, %v4180
    %4182 = vmatprep.mubr.f32.mxu0 0.0
    %4183 = vmatmul.mubr.f32.gmra.mxu0 %v3937
    %v4184 = vpop.f32.mrf.mxu0
    %v4185 = vadd.f32 0.0, %v4184
    %v4186 = vpop.f32.mrf.mxu0
    %v4187 = vadd.f32 0.0, %v4186
    %4188 = vmatprep.mubr.f32.mxu0 0.0
    %4189 = vmatmul.mubr.f32.gmra.mxu0 %v3940
    %v4190 = vpop.f32.mrf.mxu0
    %v4191 = vadd.f32 0.0, %v4190
    %v4192 = vpop.f32.mrf.mxu0
    %v4193 = vadd.f32 0.0, %v4192
    %4194 = vmatprep.mubr.f32.mxu0 0.0
    %4195 = vmatmul.mubr.f32.gmra.mxu0 %v3943
    %v4196 = vpop.f32.mrf.mxu0
    %v4197 = vadd.f32 0.0, %v4196
    %v4198 = vpop.f32.mrf.mxu0
    %v4199 = vadd.f32 0.0, %v4198
    %4200 = vmatprep.mubr.f32.mxu0 0.0
    %4201 = vmatmul.mubr.f32.gmra.mxu0 %v3946
    %v4202 = vpop.f32.mrf.mxu0
    %v4203 = vadd.f32 0.0, %v4202
    %v4204 = vpop.f32.mrf.mxu0
    %v4205 = vadd.f32 0.0, %v4204
    %4206 = vmatprep.mubr.f32.mxu0 0.0
    %4207 = vmatmul.mubr.f32.gmra.mxu0 %v3949
    %v4208 = vpop.f32.mrf.mxu0
    %v4209 = vadd.f32 0.0, %v4208
    %v4210 = vpop.f32.mrf.mxu0
    %v4211 = vadd.f32 0.0, %v4210
    %4212 = vmatprep.mubr.f32.mxu0 0.0
    %4213 = vmatmul.mubr.f32.gmra.mxu0 %v3952
    %v4214 = vpop.f32.mrf.mxu0
    %v4215 = vadd.f32 0.0, %v4214
    %v4216 = vpop.f32.mrf.mxu0
    %v4217 = vadd.f32 0.0, %v4216
    %4218 = vmatprep.mubr.f32.mxu0 0.0
    %4219 = vmatmul.mubr.f32.gmra.mxu0 %v3955
    %v4220 = vpop.f32.mrf.mxu0
    %v4221 = vadd.f32 0.0, %v4220
    %v4222 = vpop.f32.mrf.mxu0
    %v4223 = vadd.f32 0.0, %v4222
    %4224 = vmatprep.mubr.f32.mxu0 0.0
    %4225 = vmatmul.mubr.f32.gmra.mxu0 %v3958
    %v4226 = vpop.f32.mrf.mxu0
    %v4227 = vadd.f32 0.0, %v4226
    %v4228 = vpop.f32.mrf.mxu0
    %v4229 = vadd.f32 0.0, %v4228
    %4230 = vmatprep.mubr.f32.mxu0 0.0
    %4231 = vmatmul.mubr.f32.gmra.mxu0 %v3961
    %v4232 = vpop.f32.mrf.mxu0
    %v4233 = vadd.f32 0.0, %v4232
    %v4234 = vpop.f32.mrf.mxu0
    %v4235 = vadd.f32 0.0, %v4234
    %4236 = vdwg.mxu0
    %v4237 = vld [vmem:[#allocation3] sm:$0xff]
    %v4238 = vld [vmem:[#allocation3 + $0x8] sm:$0xff]
    %v4239 = vld [vmem:[#allocation3 + $0x10] sm:$0xff]
    %v4240 = vld [vmem:[#allocation3 + $0x18] sm:$0xff]
    %v4241 = vld [vmem:[#allocation3 + $0x20] sm:$0xff]
    %v4242 = vld [vmem:[#allocation3 + $0x28] sm:$0xff]
    %v4243 = vld [vmem:[#allocation3 + $0x30] sm:$0xff]
    %v4244 = vld [vmem:[#allocation3 + $0x38] sm:$0xff]
    %v4245 = vld [vmem:[#allocation3 + $0x40] sm:$0xff]
    %v4246 = vld [vmem:[#allocation3 + $0x48] sm:$0xff]
    %v4247 = vld [vmem:[#allocation3 + $0x50] sm:$0xff]
    %v4248 = vld [vmem:[#allocation3 + $0x58] sm:$0xff]
    %v4249 = vmul.f32 %v4032, %v4237
    %v4250 = vmul.f32 %v4038, %v4238
    %v4251 = vmul.f32 %v4044, %v4239
    %v4252 = vmul.f32 %v4050, %v4240
    %v4253 = vmul.f32 %v4056, %v4241
    %v4254 = vmul.f32 %v4062, %v4242
    %v4255 = vmul.f32 %v4068, %v4243
    %v4256 = vmul.f32 %v4074, %v4244
    %v4257 = vmul.f32 %v4080, %v4245
    %v4258 = vmul.f32 %v4086, %v4246
    %v4259 = vmul.f32 %v4092, %v4247
    %v4260 = vmul.f32 %v4098, %v4248
    %v4261 = vadd.f32 %v4030, %v4249
    %v4262 = vadd.f32 %v4036, %v4250
    %v4263 = vadd.f32 %v4042, %v4251
    %v4264 = vadd.f32 %v4048, %v4252
    %v4265 = vadd.f32 %v4054, %v4253
    %v4266 = vadd.f32 %v4060, %v4254
    %v4267 = vadd.f32 %v4066, %v4255
    %v4268 = vadd.f32 %v4072, %v4256
    %v4269 = vadd.f32 %v4078, %v4257
    %v4270 = vadd.f32 %v4084, %v4258
    %v4271 = vadd.f32 %v4090, %v4259
    %v4272 = vadd.f32 %v4096, %v4260
    %4273 = vst [vmem:[#allocation25] sm:$0xff] %v4261
    %4274 = vst [vmem:[#allocation25 + $0x8] sm:$0xff] %v4262
    %4275 = vst [vmem:[#allocation25 + $0x10] sm:$0xff] %v4263
    %4276 = vst [vmem:[#allocation25 + $0x18] sm:$0xff] %v4264
    %4277 = vst [vmem:[#allocation25 + $0x20] sm:$0xff] %v4265
    %4278 = vst [vmem:[#allocation25 + $0x28] sm:$0xff] %v4266
    %4279 = vst [vmem:[#allocation25 + $0x30] sm:$0xff] %v4267
    %4280 = vst [vmem:[#allocation25 + $0x38] sm:$0xff] %v4268
    %4281 = vst [vmem:[#allocation25 + $0x40] sm:$0xff] %v4269
    %4282 = vst [vmem:[#allocation25 + $0x48] sm:$0xff] %v4270
    %4283 = vst [vmem:[#allocation25 + $0x50] sm:$0xff] %v4271
    %4284 = vst [vmem:[#allocation25 + $0x58] sm:$0xff] %v4272
    %v4285 = vld [vmem:[#allocation15] sm:$0xff]
    %v4286 = vld [vmem:[#allocation15 + $0x8] sm:$0xff]
    %v4287 = vld [vmem:[#allocation15 + $0x10] sm:$0xff]
    %v4288 = vld [vmem:[#allocation15 + $0x18] sm:$0xff]
    %v4289 = vld [vmem:[#allocation15 + $0x20] sm:$0xff]
    %v4290 = vld [vmem:[#allocation15 + $0x28] sm:$0xff]
    %v4291 = vld [vmem:[#allocation15 + $0x30] sm:$0xff]
    %v4292 = vld [vmem:[#allocation15 + $0x38] sm:$0xff]
    %v4293 = vld [vmem:[#allocation15 + $0x40] sm:$0xff]
    %v4294 = vld [vmem:[#allocation15 + $0x48] sm:$0xff]
    %v4295 = vld [vmem:[#allocation15 + $0x50] sm:$0xff]
    %v4296 = vld [vmem:[#allocation15 + $0x58] sm:$0xff]
    %v4297 = vld [vmem:[#allocation15 + $0x60] sm:$0xff]
    %v4298 = vld [vmem:[#allocation15 + $0x68] sm:$0xff]
    %v4299 = vld [vmem:[#allocation15 + $0x70] sm:$0xff]
    %v4300 = vld [vmem:[#allocation15 + $0x78] sm:$0xff]
    %4301 = vmatprep.subr.mxu0 0.0
    %4302 = vmatpush1.msra.mxu0 %v4300
    %4303 = vmatprep.subr.mxu0 0.0
    %4304 = vmatpush1.msra.mxu0 %v4299
    %4305 = vmatprep.subr.mxu0 0.0
    %4306 = vmatpush1.msra.mxu0 %v4298
    %4307 = vmatprep.subr.mxu0 0.0
    %4308 = vmatpush1.msra.mxu0 %v4297
    %4309 = vmatprep.subr.mxu0 0.0
    %4310 = vmatpush1.msra.mxu0 %v4296
    %4311 = vmatprep.subr.mxu0 0.0
    %4312 = vmatpush1.msra.mxu0 %v4295
    %4313 = vmatprep.subr.mxu0 0.0
    %4314 = vmatpush1.msra.mxu0 %v4294
    %4315 = vmatprep.subr.mxu0 0.0
    %4316 = vmatpush1.msra.mxu0 %v4293
    %4317 = vmatprep.subr.mxu0 0.0
    %4318 = vmatpush1.msra.mxu0 %v4292
    %4319 = vmatprep.subr.mxu0 0.0
    %4320 = vmatpush1.msra.mxu0 %v4291
    %4321 = vmatprep.subr.mxu0 0.0
    %4322 = vmatpush1.msra.mxu0 %v4290
    %4323 = vmatprep.subr.mxu0 0.0
    %4324 = vmatpush1.msra.mxu0 %v4289
    %4325 = vmatprep.subr.mxu0 0.0
    %4326 = vmatpush1.msra.mxu0 %v4288
    %4327 = vmatprep.subr.mxu0 0.0
    %4328 = vmatpush1.msra.mxu0 %v4287
    %4329 = vmatprep.subr.mxu0 0.0
    %4330 = vmatpush1.msra.mxu0 %v4286
    %4331 = vmatprep.subr.mxu0 0.0
    %4332 = vmatpush1.msra.mxu0 %v4285
    %4333 = vmatprep.subr.mxu0 0.0
    %4334 = vmatpush2.msra.mxu0 0.0
    %4335 = vmatprep.subr.mxu0 0.0
    %4336 = vmatpush2.msra.mxu0 0.0
    %4337 = vmatprep.subr.mxu0 0.0
    %4338 = vmatpush2.msra.mxu0 0.0
    %4339 = vmatprep.subr.mxu0 0.0
    %4340 = vmatpush2.msra.mxu0 0.0
    %4341 = vmatprep.subr.mxu0 0.0
    %4342 = vmatpush2.msra.mxu0 0.0
    %4343 = vmatprep.subr.mxu0 0.0
    %4344 = vmatpush2.msra.mxu0 0.0
    %4345 = vmatprep.subr.mxu0 0.0
    %4346 = vmatpush2.msra.mxu0 0.0
    %4347 = vmatprep.subr.mxu0 0.0
    %4348 = vmatpush2.msra.mxu0 0.0
    %4349 = vmatprep.subr.mxu0 0.0
    %4350 = vmatpush2.msra.mxu0 0.0
    %4351 = vmatprep.subr.mxu0 0.0
    %4352 = vmatpush2.msra.mxu0 0.0
    %4353 = vmatprep.subr.mxu0 0.0
    %4354 = vmatpush2.msra.mxu0 0.0
    %4355 = vmatprep.subr.mxu0 0.0
    %4356 = vmatpush2.msra.mxu0 0.0
    %4357 = vmatprep.subr.mxu0 0.0
    %4358 = vmatpush2.msra.mxu0 0.0
    %4359 = vmatprep.subr.mxu0 0.0
    %4360 = vmatpush2.msra.mxu0 0.0
    %4361 = vmatprep.subr.mxu0 0.0
    %4362 = vmatpush2.msra.mxu0 0.0
    %4363 = vmatprep.subr.mxu0 0.0
    %4364 = vmatpush2.msra.mxu0 0.0
    %4365 = vmatprep.mubr.f32.mxu0 0.0
    %4366 = vmatmul.mubr.f32.gmra.mxu0 %v4261
    %v4367 = vpop.f32.mrf.mxu0
    %v4368 = vadd.f32 0.0, %v4367
    %v4369 = vpop.f32.mrf.mxu0
    %4370 = vmatprep.mubr.f32.mxu0 0.0
    %4371 = vmatmul.mubr.f32.gmra.mxu0 %v4262
    %v4372 = vpop.f32.mrf.mxu0
    %v4373 = vadd.f32 0.0, %v4372
    %v4374 = vpop.f32.mrf.mxu0
    %4375 = vmatprep.mubr.f32.mxu0 0.0
    %4376 = vmatmul.mubr.f32.gmra.mxu0 %v4263
    %v4377 = vpop.f32.mrf.mxu0
    %v4378 = vadd.f32 0.0, %v4377
    %v4379 = vpop.f32.mrf.mxu0
    %4380 = vmatprep.mubr.f32.mxu0 0.0
    %4381 = vmatmul.mubr.f32.gmra.mxu0 %v4264
    %v4382 = vpop.f32.mrf.mxu0
    %v4383 = vadd.f32 0.0, %v4382
    %v4384 = vpop.f32.mrf.mxu0
    %4385 = vmatprep.mubr.f32.mxu0 0.0
    %4386 = vmatmul.mubr.f32.gmra.mxu0 %v4265
    %v4387 = vpop.f32.mrf.mxu0
    %v4388 = vadd.f32 0.0, %v4387
    %v4389 = vpop.f32.mrf.mxu0
    %4390 = vmatprep.mubr.f32.mxu0 0.0
    %4391 = vmatmul.mubr.f32.gmra.mxu0 %v4266
    %v4392 = vpop.f32.mrf.mxu0
    %v4393 = vadd.f32 0.0, %v4392
    %v4394 = vpop.f32.mrf.mxu0
    %4395 = vmatprep.mubr.f32.mxu0 0.0
    %4396 = vmatmul.mubr.f32.gmra.mxu0 %v4267
    %v4397 = vpop.f32.mrf.mxu0
    %v4398 = vadd.f32 0.0, %v4397
    %v4399 = vpop.f32.mrf.mxu0
    %4400 = vmatprep.mubr.f32.mxu0 0.0
    %4401 = vmatmul.mubr.f32.gmra.mxu0 %v4268
    %v4402 = vpop.f32.mrf.mxu0
    %v4403 = vadd.f32 0.0, %v4402
    %v4404 = vpop.f32.mrf.mxu0
    %4405 = vmatprep.mubr.f32.mxu0 0.0
    %4406 = vmatmul.mubr.f32.gmra.mxu0 %v4269
    %v4407 = vpop.f32.mrf.mxu0
    %v4408 = vadd.f32 0.0, %v4407
    %v4409 = vpop.f32.mrf.mxu0
    %4410 = vmatprep.mubr.f32.mxu0 0.0
    %4411 = vmatmul.mubr.f32.gmra.mxu0 %v4270
    %v4412 = vpop.f32.mrf.mxu0
    %v4413 = vadd.f32 0.0, %v4412
    %v4414 = vpop.f32.mrf.mxu0
    %4415 = vmatprep.mubr.f32.mxu0 0.0
    %4416 = vmatmul.mubr.f32.gmra.mxu0 %v4271
    %v4417 = vpop.f32.mrf.mxu0
    %v4418 = vadd.f32 0.0, %v4417
    %v4419 = vpop.f32.mrf.mxu0
    %4420 = vmatprep.mubr.f32.mxu0 0.0
    %4421 = vmatmul.mubr.f32.gmra.mxu0 %v4272
    %v4422 = vpop.f32.mrf.mxu0
    %v4423 = vadd.f32 0.0, %v4422
    %v4424 = vpop.f32.mrf.mxu0
    %4425 = vdwg.mxu0
    %v4426 = vadd.f32 %v4167, %v4368
    %v4427 = vadd.f32 %v4173, %v4373
    %v4428 = vadd.f32 %v4179, %v4378
    %v4429 = vadd.f32 %v4185, %v4383
    %v4430 = vadd.f32 %v4191, %v4388
    %v4431 = vadd.f32 %v4197, %v4393
    %v4432 = vadd.f32 %v4203, %v4398
    %v4433 = vadd.f32 %v4209, %v4403
    %v4434 = vadd.f32 %v4215, %v4408
    %v4435 = vadd.f32 %v4221, %v4413
    %v4436 = vadd.f32 %v4227, %v4418
    %v4437 = vadd.f32 %v4233, %v4423
    %v4438 = vld [vmem:[%s47] sm:$0x1]
    %v4440 = vlaneseq
    %v4441 = vshrl.u32 %v4440, 7
    %v4442 = vsub.s32 0, %v4441
    %v4443 = vrot.slane %v4438, %v4442
    %v4445 = vadd.f32 %v4426, %v4443
    %v4446 = vadd.f32 %v4427, %v4443
    %v4447 = vadd.f32 %v4428, %v4443
    %v4448 = vadd.f32 %v4429, %v4443
    %v4449 = vadd.f32 %v4430, %v4443
    %v4450 = vadd.f32 %v4431, %v4443
    %v4451 = vadd.f32 %v4432, %v4443
    %v4452 = vadd.f32 %v4433, %v4443
    %v4453 = vadd.f32 %v4434, %v4443
    %v4454 = vadd.f32 %v4435, %v4443
    %v4455 = vadd.f32 %v4436, %v4443
    %v4456 = vadd.f32 %v4437, %v4443
    %v4457 = vtanh.pop %v4445
    %v4458 = vtanh.pop %v4446
    %v4459 = vtanh.pop %v4447
    %v4460 = vtanh.pop %v4448
    %v4461 = vtanh.pop %v4449
    %v4462 = vtanh.pop %v4450
    %v4463 = vtanh.pop %v4451
    %v4464 = vtanh.pop %v4452
    %v4465 = vtanh.pop %v4453
    %v4466 = vtanh.pop %v4454
    %v4467 = vtanh.pop %v4455
    %v4468 = vtanh.pop %v4456
    %v4469 = vld [vmem:[#allocation17] sm:$0xff]
    %v4470 = vld [vmem:[#allocation17 + $0x8] sm:$0xff]
    %v4471 = vld [vmem:[#allocation17 + $0x10] sm:$0xff]
    %v4472 = vld [vmem:[#allocation17 + $0x18] sm:$0xff]
    %v4473 = vld [vmem:[#allocation17 + $0x20] sm:$0xff]
    %v4474 = vld [vmem:[#allocation17 + $0x28] sm:$0xff]
    %v4475 = vld [vmem:[#allocation17 + $0x30] sm:$0xff]
    %v4476 = vld [vmem:[#allocation17 + $0x38] sm:$0xff]
    %v4477 = vld [vmem:[#allocation17 + $0x40] sm:$0xff]
    %v4478 = vld [vmem:[#allocation17 + $0x48] sm:$0xff]
    %v4479 = vld [vmem:[#allocation17 + $0x50] sm:$0xff]
    %v4480 = vld [vmem:[#allocation17 + $0x58] sm:$0xff]
    %v4481 = vld [vmem:[#allocation17 + $0x60] sm:$0xff]
    %v4482 = vld [vmem:[#allocation17 + $0x68] sm:$0xff]
    %v4483 = vld [vmem:[#allocation17 + $0x70] sm:$0xff]
    %v4484 = vld [vmem:[#allocation17 + $0x78] sm:$0xff]
    %v4485 = vld [vmem:[#allocation17 + $0x80] sm:$0xff]
    %v4486 = vld [vmem:[#allocation17 + $0x88] sm:$0xff]
    %v4487 = vld [vmem:[#allocation17 + $0x90] sm:$0xff]
    %v4488 = vld [vmem:[#allocation17 + $0x98] sm:$0xff]
    %v4489 = vld [vmem:[#allocation17 + $0xa0] sm:$0xff]
    %v4490 = vld [vmem:[#allocation17 + $0xa8] sm:$0xff]
    %v4491 = vld [vmem:[#allocation17 + $0xb0] sm:$0xff]
    %v4492 = vld [vmem:[#allocation17 + $0xb8] sm:$0xff]
    %v4493 = vld [vmem:[#allocation17 + $0xc0] sm:$0xff]
    %v4494 = vld [vmem:[#allocation17 + $0xc8] sm:$0xff]
    %v4495 = vld [vmem:[#allocation17 + $0xd0] sm:$0xff]
    %v4496 = vld [vmem:[#allocation17 + $0xd8] sm:$0xff]
    %v4497 = vld [vmem:[#allocation17 + $0xe0] sm:$0xff]
    %v4498 = vld [vmem:[#allocation17 + $0xe8] sm:$0xff]
    %v4499 = vld [vmem:[#allocation17 + $0xf0] sm:$0xff]
    %v4500 = vld [vmem:[#allocation17 + $0xf8] sm:$0xff]
    %v4501 = vld [vmem:[#allocation17 + $0x100] sm:$0xff]
    %v4502 = vld [vmem:[#allocation17 + $0x108] sm:$0xff]
    %v4503 = vld [vmem:[#allocation17 + $0x110] sm:$0xff]
    %v4504 = vld [vmem:[#allocation17 + $0x118] sm:$0xff]
    %v4505 = vld [vmem:[#allocation17 + $0x120] sm:$0xff]
    %v4506 = vld [vmem:[#allocation17 + $0x128] sm:$0xff]
    %v4507 = vld [vmem:[#allocation17 + $0x130] sm:$0xff]
    %v4508 = vld [vmem:[#allocation17 + $0x138] sm:$0xff]
    %v4509 = vld [vmem:[#allocation17 + $0x140] sm:$0xff]
    %v4510 = vld [vmem:[#allocation17 + $0x148] sm:$0xff]
    %v4511 = vld [vmem:[#allocation17 + $0x150] sm:$0xff]
    %v4512 = vld [vmem:[#allocation17 + $0x158] sm:$0xff]
    %v4513 = vld [vmem:[#allocation17 + $0x160] sm:$0xff]
    %v4514 = vld [vmem:[#allocation17 + $0x168] sm:$0xff]
    %v4515 = vld [vmem:[#allocation17 + $0x170] sm:$0xff]
    %v4516 = vld [vmem:[#allocation17 + $0x178] sm:$0xff]
    %v4517 = vld [vmem:[%s51] sm:$0x7]
    %v4519 = vlaneseq
    %v4520 = vshrl.u32 %v4519, 7
    %v4521 = vsub.s32 0, %v4520
    %v4522 = vrot.slane %v4517, %v4521
    %v4523 = vlaneseq
    %v4524 = vshrl.u32 %v4523, 7
    %v4525 = vsub.s32 1, %v4524
    %v4526 = vrot.slane %v4517, %v4525
    %v4527 = vlaneseq
    %v4528 = vshrl.u32 %v4527, 7
    %v4529 = vsub.s32 2, %v4528
    %v4530 = vrot.slane %v4517, %v4529
    %4534 = vmatprep.subr.mxu0 %v4515
    %4535 = vmatpush1.msra.mxu0 %v4514
    %4536 = vmatprep.subr.mxu0 %v4512
    %4537 = vmatpush1.msra.mxu0 %v4511
    %4538 = vmatprep.subr.mxu0 %v4509
    %4539 = vmatpush1.msra.mxu0 %v4508
    %4540 = vmatprep.subr.mxu0 %v4506
    %4541 = vmatpush1.msra.mxu0 %v4505
    %4542 = vmatprep.subr.mxu0 %v4503
    %4543 = vmatpush1.msra.mxu0 %v4502
    %4544 = vmatprep.subr.mxu0 %v4500
    %4545 = vmatpush1.msra.mxu0 %v4499
    %4546 = vmatprep.subr.mxu0 %v4497
    %4547 = vmatpush1.msra.mxu0 %v4496
    %4548 = vmatprep.subr.mxu0 %v4494
    %4549 = vmatpush1.msra.mxu0 %v4493
    %4550 = vmatprep.subr.mxu0 %v4491
    %4551 = vmatpush1.msra.mxu0 %v4490
    %4552 = vmatprep.subr.mxu0 %v4488
    %4553 = vmatpush1.msra.mxu0 %v4487
    %4554 = vmatprep.subr.mxu0 %v4485
    %4555 = vmatpush1.msra.mxu0 %v4484
    %4556 = vmatprep.subr.mxu0 %v4482
    %4557 = vmatpush1.msra.mxu0 %v4481
    %4558 = vmatprep.subr.mxu0 %v4479
    %4559 = vmatpush1.msra.mxu0 %v4478
    %4560 = vmatprep.subr.mxu0 %v4476
    %4561 = vmatpush1.msra.mxu0 %v4475
    %4562 = vmatprep.subr.mxu0 %v4473
    %4563 = vmatpush1.msra.mxu0 %v4472
    %4564 = vmatprep.subr.mxu0 %v4470
    %4565 = vmatpush1.msra.mxu0 %v4469
    %4566 = vmatprep.subr.mxu0 0.0
    %4567 = vmatpush2.msra.mxu0 0.0
    %4568 = vmatprep.subr.mxu0 0.0
    %4569 = vmatpush2.msra.mxu0 0.0
    %4570 = vmatprep.subr.mxu0 0.0
    %4571 = vmatpush2.msra.mxu0 0.0
    %4572 = vmatprep.subr.mxu0 0.0
    %4573 = vmatpush2.msra.mxu0 0.0
    %4574 = vmatprep.subr.mxu0 0.0
    %4575 = vmatpush2.msra.mxu0 0.0
    %4576 = vmatprep.subr.mxu0 0.0
    %4577 = vmatpush2.msra.mxu0 0.0
    %4578 = vmatprep.subr.mxu0 0.0
    %4579 = vmatpush2.msra.mxu0 0.0
    %4580 = vmatprep.subr.mxu0 0.0
    %4581 = vmatpush2.msra.mxu0 0.0
    %4582 = vmatprep.subr.mxu0 0.0
    %4583 = vmatpush2.msra.mxu0 0.0
    %4584 = vmatprep.subr.mxu0 0.0
    %4585 = vmatpush2.msra.mxu0 0.0
    %4586 = vmatprep.subr.mxu0 0.0
    %4587 = vmatpush2.msra.mxu0 0.0
    %4588 = vmatprep.subr.mxu0 0.0
    %4589 = vmatpush2.msra.mxu0 0.0
    %4590 = vmatprep.subr.mxu0 0.0
    %4591 = vmatpush2.msra.mxu0 0.0
    %4592 = vmatprep.subr.mxu0 0.0
    %4593 = vmatpush2.msra.mxu0 0.0
    %4594 = vmatprep.subr.mxu0 0.0
    %4595 = vmatpush2.msra.mxu0 0.0
    %4596 = vmatprep.subr.mxu0 0.0
    %4597 = vmatpush2.msra.mxu0 0.0
    %4598 = vmatprep.mubr.f32.mxu0 0.0
    %4599 = vmatmul.mubr.f32.gmra.mxu0 %v4457
    %v4600 = vpop.f32.mrf.mxu0
    %v4601 = vadd.f32 %v4522, %v4600
    %v4602 = vpop.f32.mrf.mxu0
    %v4603 = vadd.f32 %v4526, %v4602
    %4604 = vmatprep.mubr.f32.mxu0 0.0
    %4605 = vmatmul.mubr.f32.gmra.mxu0 %v4458
    %v4606 = vpop.f32.mrf.mxu0
    %v4607 = vadd.f32 %v4522, %v4606
    %v4608 = vpop.f32.mrf.mxu0
    %v4609 = vadd.f32 %v4526, %v4608
    %4610 = vmatprep.mubr.f32.mxu0 0.0
    %4611 = vmatmul.mubr.f32.gmra.mxu0 %v4459
    %v4612 = vpop.f32.mrf.mxu0
    %v4613 = vadd.f32 %v4522, %v4612
    %v4614 = vpop.f32.mrf.mxu0
    %v4615 = vadd.f32 %v4526, %v4614
    %4616 = vmatprep.mubr.f32.mxu0 0.0
    %4617 = vmatmul.mubr.f32.gmra.mxu0 %v4460
    %v4618 = vpop.f32.mrf.mxu0
    %v4619 = vadd.f32 %v4522, %v4618
    %v4620 = vpop.f32.mrf.mxu0
    %v4621 = vadd.f32 %v4526, %v4620
    %4622 = vmatprep.mubr.f32.mxu0 0.0
    %4623 = vmatmul.mubr.f32.gmra.mxu0 %v4461
    %v4624 = vpop.f32.mrf.mxu0
    %v4625 = vadd.f32 %v4522, %v4624
    %v4626 = vpop.f32.mrf.mxu0
    %v4627 = vadd.f32 %v4526, %v4626
    %4628 = vmatprep.mubr.f32.mxu0 0.0
    %4629 = vmatmul.mubr.f32.gmra.mxu0 %v4462
    %v4630 = vpop.f32.mrf.mxu0
    %v4631 = vadd.f32 %v4522, %v4630
    %v4632 = vpop.f32.mrf.mxu0
    %v4633 = vadd.f32 %v4526, %v4632
    %4634 = vmatprep.mubr.f32.mxu0 0.0
    %4635 = vmatmul.mubr.f32.gmra.mxu0 %v4463
    %v4636 = vpop.f32.mrf.mxu0
    %v4637 = vadd.f32 %v4522, %v4636
    %v4638 = vpop.f32.mrf.mxu0
    %v4639 = vadd.f32 %v4526, %v4638
    %4640 = vmatprep.mubr.f32.mxu0 0.0
    %4641 = vmatmul.mubr.f32.gmra.mxu0 %v4464
    %v4642 = vpop.f32.mrf.mxu0
    %v4643 = vadd.f32 %v4522, %v4642
    %v4644 = vpop.f32.mrf.mxu0
    %v4645 = vadd.f32 %v4526, %v4644
    %4646 = vmatprep.mubr.f32.mxu0 0.0
    %4647 = vmatmul.mubr.f32.gmra.mxu0 %v4465
    %v4648 = vpop.f32.mrf.mxu0
    %v4649 = vadd.f32 %v4522, %v4648
    %v4650 = vpop.f32.mrf.mxu0
    %v4651 = vadd.f32 %v4526, %v4650
    %4652 = vmatprep.mubr.f32.mxu0 0.0
    %4653 = vmatmul.mubr.f32.gmra.mxu0 %v4466
    %v4654 = vpop.f32.mrf.mxu0
    %v4655 = vadd.f32 %v4522, %v4654
    %v4656 = vpop.f32.mrf.mxu0
    %v4657 = vadd.f32 %v4526, %v4656
    %4658 = vmatprep.mubr.f32.mxu0 0.0
    %4659 = vmatmul.mubr.f32.gmra.mxu0 %v4467
    %v4660 = vpop.f32.mrf.mxu0
    %v4661 = vadd.f32 %v4522, %v4660
    %v4662 = vpop.f32.mrf.mxu0
    %v4663 = vadd.f32 %v4526, %v4662
    %4664 = vmatprep.mubr.f32.mxu0 0.0
    %4665 = vmatmul.mubr.f32.gmra.mxu0 %v4468
    %v4666 = vpop.f32.mrf.mxu0
    %v4667 = vadd.f32 %v4522, %v4666
    %v4668 = vpop.f32.mrf.mxu0
    %v4669 = vadd.f32 %v4526, %v4668
    %4670 = vdwg.mxu0
    %4671 = vmatprep.subr.mxu0 0.0
    %4672 = vmatpush1.msra.mxu0 %v4516
    %4673 = vmatprep.subr.mxu0 0.0
    %4674 = vmatpush1.msra.mxu0 %v4513
    %4675 = vmatprep.subr.mxu0 0.0
    %4676 = vmatpush1.msra.mxu0 %v4510
    %4677 = vmatprep.subr.mxu0 0.0
    %4678 = vmatpush1.msra.mxu0 %v4507
    %4679 = vmatprep.subr.mxu0 0.0
    %4680 = vmatpush1.msra.mxu0 %v4504
    %4681 = vmatprep.subr.mxu0 0.0
    %4682 = vmatpush1.msra.mxu0 %v4501
    %4683 = vmatprep.subr.mxu0 0.0
    %4684 = vmatpush1.msra.mxu0 %v4498
    %4685 = vmatprep.subr.mxu0 0.0
    %4686 = vmatpush1.msra.mxu0 %v4495
    %4687 = vmatprep.subr.mxu0 0.0
    %4688 = vmatpush1.msra.mxu0 %v4492
    %4689 = vmatprep.subr.mxu0 0.0
    %4690 = vmatpush1.msra.mxu0 %v4489
    %4691 = vmatprep.subr.mxu0 0.0
    %4692 = vmatpush1.msra.mxu0 %v4486
    %4693 = vmatprep.subr.mxu0 0.0
    %4694 = vmatpush1.msra.mxu0 %v4483
    %4695 = vmatprep.subr.mxu0 0.0
    %4696 = vmatpush1.msra.mxu0 %v4480
    %4697 = vmatprep.subr.mxu0 0.0
    %4698 = vmatpush1.msra.mxu0 %v4477
    %4699 = vmatprep.subr.mxu0 0.0
    %4700 = vmatpush1.msra.mxu0 %v4474
    %4701 = vmatprep.subr.mxu0 0.0
    %4702 = vmatpush1.msra.mxu0 %v4471
    %4703 = vmatprep.subr.mxu0 0.0
    %4704 = vmatpush2.msra.mxu0 0.0
    %4705 = vmatprep.subr.mxu0 0.0
    %4706 = vmatpush2.msra.mxu0 0.0
    %4707 = vmatprep.subr.mxu0 0.0
    %4708 = vmatpush2.msra.mxu0 0.0
    %4709 = vmatprep.subr.mxu0 0.0
    %4710 = vmatpush2.msra.mxu0 0.0
    %4711 = vmatprep.subr.mxu0 0.0
    %4712 = vmatpush2.msra.mxu0 0.0
    %4713 = vmatprep.subr.mxu0 0.0
    %4714 = vmatpush2.msra.mxu0 0.0
    %4715 = vmatprep.subr.mxu0 0.0
    %4716 = vmatpush2.msra.mxu0 0.0
    %4717 = vmatprep.subr.mxu0 0.0
    %4718 = vmatpush2.msra.mxu0 0.0
    %4719 = vmatprep.subr.mxu0 0.0
    %4720 = vmatpush2.msra.mxu0 0.0
    %4721 = vmatprep.subr.mxu0 0.0
    %4722 = vmatpush2.msra.mxu0 0.0
    %4723 = vmatprep.subr.mxu0 0.0
    %4724 = vmatpush2.msra.mxu0 0.0
    %4725 = vmatprep.subr.mxu0 0.0
    %4726 = vmatpush2.msra.mxu0 0.0
    %4727 = vmatprep.subr.mxu0 0.0
    %4728 = vmatpush2.msra.mxu0 0.0
    %4729 = vmatprep.subr.mxu0 0.0
    %4730 = vmatpush2.msra.mxu0 0.0
    %4731 = vmatprep.subr.mxu0 0.0
    %4732 = vmatpush2.msra.mxu0 0.0
    %4733 = vmatprep.subr.mxu0 0.0
    %4734 = vmatpush2.msra.mxu0 0.0
    %4735 = vmatprep.mubr.f32.mxu0 0.0
    %4736 = vmatmul.mubr.f32.gmra.mxu0 %v4457
    %v4737 = vpop.f32.mrf.mxu0
    %v4738 = vadd.f32 %v4530, %v4737
    %v4739 = vpop.f32.mrf.mxu0
    %4740 = vmatprep.mubr.f32.mxu0 0.0
    %4741 = vmatmul.mubr.f32.gmra.mxu0 %v4458
    %v4742 = vpop.f32.mrf.mxu0
    %v4743 = vadd.f32 %v4530, %v4742
    %v4744 = vpop.f32.mrf.mxu0
    %4745 = vmatprep.mubr.f32.mxu0 0.0
    %4746 = vmatmul.mubr.f32.gmra.mxu0 %v4459
    %v4747 = vpop.f32.mrf.mxu0
    %v4748 = vadd.f32 %v4530, %v4747
    %v4749 = vpop.f32.mrf.mxu0
    %4750 = vmatprep.mubr.f32.mxu0 0.0
    %4751 = vmatmul.mubr.f32.gmra.mxu0 %v4460
    %v4752 = vpop.f32.mrf.mxu0
    %v4753 = vadd.f32 %v4530, %v4752
    %v4754 = vpop.f32.mrf.mxu0
    %4755 = vmatprep.mubr.f32.mxu0 0.0
    %4756 = vmatmul.mubr.f32.gmra.mxu0 %v4461
    %v4757 = vpop.f32.mrf.mxu0
    %v4758 = vadd.f32 %v4530, %v4757
    %v4759 = vpop.f32.mrf.mxu0
    %4760 = vmatprep.mubr.f32.mxu0 0.0
    %4761 = vmatmul.mubr.f32.gmra.mxu0 %v4462
    %v4762 = vpop.f32.mrf.mxu0
    %v4763 = vadd.f32 %v4530, %v4762
    %v4764 = vpop.f32.mrf.mxu0
    %4765 = vmatprep.mubr.f32.mxu0 0.0
    %4766 = vmatmul.mubr.f32.gmra.mxu0 %v4463
    %v4767 = vpop.f32.mrf.mxu0
    %v4768 = vadd.f32 %v4530, %v4767
    %v4769 = vpop.f32.mrf.mxu0
    %4770 = vmatprep.mubr.f32.mxu0 0.0
    %4771 = vmatmul.mubr.f32.gmra.mxu0 %v4464
    %v4772 = vpop.f32.mrf.mxu0
    %v4773 = vadd.f32 %v4530, %v4772
    %v4774 = vpop.f32.mrf.mxu0
    %4775 = vmatprep.mubr.f32.mxu0 0.0
    %4776 = vmatmul.mubr.f32.gmra.mxu0 %v4465
    %v4777 = vpop.f32.mrf.mxu0
    %v4778 = vadd.f32 %v4530, %v4777
    %v4779 = vpop.f32.mrf.mxu0
    %4780 = vmatprep.mubr.f32.mxu0 0.0
    %4781 = vmatmul.mubr.f32.gmra.mxu0 %v4466
    %v4782 = vpop.f32.mrf.mxu0
    %v4783 = vadd.f32 %v4530, %v4782
    %v4784 = vpop.f32.mrf.mxu0
    %4785 = vmatprep.mubr.f32.mxu0 0.0
    %4786 = vmatmul.mubr.f32.gmra.mxu0 %v4467
    %v4787 = vpop.f32.mrf.mxu0
    %v4788 = vadd.f32 %v4530, %v4787
    %v4789 = vpop.f32.mrf.mxu0
    %4790 = vmatprep.mubr.f32.mxu0 0.0
    %4791 = vmatmul.mubr.f32.gmra.mxu0 %v4468
    %v4792 = vpop.f32.mrf.mxu0
    %v4793 = vadd.f32 %v4530, %v4792
    %v4794 = vpop.f32.mrf.mxu0
    %4795 = vdwg.mxu0
    %v4796 = vld [vmem:[#allocation18] sm:$0xff]
    %v4797 = vld [vmem:[#allocation18 + $0x8] sm:$0xff]
    %v4798 = vld [vmem:[#allocation18 + $0x10] sm:$0xff]
    %v4799 = vld [vmem:[#allocation18 + $0x18] sm:$0xff]
    %v4800 = vld [vmem:[#allocation18 + $0x20] sm:$0xff]
    %v4801 = vld [vmem:[#allocation18 + $0x28] sm:$0xff]
    %v4802 = vld [vmem:[#allocation18 + $0x30] sm:$0xff]
    %v4803 = vld [vmem:[#allocation18 + $0x38] sm:$0xff]
    %v4804 = vld [vmem:[#allocation18 + $0x40] sm:$0xff]
    %v4805 = vld [vmem:[#allocation18 + $0x48] sm:$0xff]
    %v4806 = vld [vmem:[#allocation18 + $0x50] sm:$0xff]
    %v4807 = vld [vmem:[#allocation18 + $0x58] sm:$0xff]
    %v4808 = vld [vmem:[#allocation18 + $0x60] sm:$0xff]
    %v4809 = vld [vmem:[#allocation18 + $0x68] sm:$0xff]
    %v4810 = vld [vmem:[#allocation18 + $0x70] sm:$0xff]
    %v4811 = vld [vmem:[#allocation18 + $0x78] sm:$0xff]
    %v4812 = vld [vmem:[#allocation18 + $0x80] sm:$0xff]
    %v4813 = vld [vmem:[#allocation18 + $0x88] sm:$0xff]
    %v4814 = vld [vmem:[#allocation18 + $0x90] sm:$0xff]
    %v4815 = vld [vmem:[#allocation18 + $0x98] sm:$0xff]
    %v4816 = vld [vmem:[#allocation18 + $0xa0] sm:$0xff]
    %v4817 = vld [vmem:[#allocation18 + $0xa8] sm:$0xff]
    %v4818 = vld [vmem:[#allocation18 + $0xb0] sm:$0xff]
    %v4819 = vld [vmem:[#allocation18 + $0xb8] sm:$0xff]
    %v4820 = vld [vmem:[#allocation18 + $0xc0] sm:$0xff]
    %v4821 = vld [vmem:[#allocation18 + $0xc8] sm:$0xff]
    %v4822 = vld [vmem:[#allocation18 + $0xd0] sm:$0xff]
    %v4823 = vld [vmem:[#allocation18 + $0xd8] sm:$0xff]
    %v4824 = vld [vmem:[#allocation18 + $0xe0] sm:$0xff]
    %v4825 = vld [vmem:[#allocation18 + $0xe8] sm:$0xff]
    %v4826 = vld [vmem:[#allocation18 + $0xf0] sm:$0xff]
    %v4827 = vld [vmem:[#allocation18 + $0xf8] sm:$0xff]
    %v4828 = vld [vmem:[#allocation18 + $0x100] sm:$0xff]
    %v4829 = vld [vmem:[#allocation18 + $0x108] sm:$0xff]
    %v4830 = vld [vmem:[#allocation18 + $0x110] sm:$0xff]
    %v4831 = vld [vmem:[#allocation18 + $0x118] sm:$0xff]
    %v4832 = vld [vmem:[#allocation18 + $0x120] sm:$0xff]
    %v4833 = vld [vmem:[#allocation18 + $0x128] sm:$0xff]
    %v4834 = vld [vmem:[#allocation18 + $0x130] sm:$0xff]
    %v4835 = vld [vmem:[#allocation18 + $0x138] sm:$0xff]
    %v4836 = vld [vmem:[#allocation18 + $0x140] sm:$0xff]
    %v4837 = vld [vmem:[#allocation18 + $0x148] sm:$0xff]
    %v4838 = vld [vmem:[#allocation18 + $0x150] sm:$0xff]
    %v4839 = vld [vmem:[#allocation18 + $0x158] sm:$0xff]
    %v4840 = vld [vmem:[#allocation18 + $0x160] sm:$0xff]
    %v4841 = vld [vmem:[#allocation18 + $0x168] sm:$0xff]
    %v4842 = vld [vmem:[#allocation18 + $0x170] sm:$0xff]
    %v4843 = vld [vmem:[#allocation18 + $0x178] sm:$0xff]
    %v4844 = vld [vmem:[%s55] sm:$0x7]
    %v4846 = vlaneseq
    %v4847 = vshrl.u32 %v4846, 7
    %v4848 = vsub.s32 0, %v4847
    %v4849 = vrot.slane %v4844, %v4848
    %v4850 = vlaneseq
    %v4851 = vshrl.u32 %v4850, 7
    %v4852 = vsub.s32 1, %v4851
    %v4853 = vrot.slane %v4844, %v4852
    %v4854 = vlaneseq
    %v4855 = vshrl.u32 %v4854, 7
    %v4856 = vsub.s32 2, %v4855
    %v4857 = vrot.slane %v4844, %v4856
    %4861 = vmatprep.subr.mxu0 %v4842
    %4862 = vmatpush1.msra.mxu0 %v4841
    %4863 = vmatprep.subr.mxu0 %v4839
    %4864 = vmatpush1.msra.mxu0 %v4838
    %4865 = vmatprep.subr.mxu0 %v4836
    %4866 = vmatpush1.msra.mxu0 %v4835
    %4867 = vmatprep.subr.mxu0 %v4833
    %4868 = vmatpush1.msra.mxu0 %v4832
    %4869 = vmatprep.subr.mxu0 %v4830
    %4870 = vmatpush1.msra.mxu0 %v4829
    %4871 = vmatprep.subr.mxu0 %v4827
    %4872 = vmatpush1.msra.mxu0 %v4826
    %4873 = vmatprep.subr.mxu0 %v4824
    %4874 = vmatpush1.msra.mxu0 %v4823
    %4875 = vmatprep.subr.mxu0 %v4821
    %4876 = vmatpush1.msra.mxu0 %v4820
    %4877 = vmatprep.subr.mxu0 %v4818
    %4878 = vmatpush1.msra.mxu0 %v4817
    %4879 = vmatprep.subr.mxu0 %v4815
    %4880 = vmatpush1.msra.mxu0 %v4814
    %4881 = vmatprep.subr.mxu0 %v4812
    %4882 = vmatpush1.msra.mxu0 %v4811
    %4883 = vmatprep.subr.mxu0 %v4809
    %4884 = vmatpush1.msra.mxu0 %v4808
    %4885 = vmatprep.subr.mxu0 %v4806
    %4886 = vmatpush1.msra.mxu0 %v4805
    %4887 = vmatprep.subr.mxu0 %v4803
    %4888 = vmatpush1.msra.mxu0 %v4802
    %4889 = vmatprep.subr.mxu0 %v4800
    %4890 = vmatpush1.msra.mxu0 %v4799
    %4891 = vmatprep.subr.mxu0 %v4797
    %4892 = vmatpush1.msra.mxu0 %v4796
    %4893 = vmatprep.subr.mxu0 0.0
    %4894 = vmatpush2.msra.mxu0 0.0
    %4895 = vmatprep.subr.mxu0 0.0
    %4896 = vmatpush2.msra.mxu0 0.0
    %4897 = vmatprep.subr.mxu0 0.0
    %4898 = vmatpush2.msra.mxu0 0.0
    %4899 = vmatprep.subr.mxu0 0.0
    %4900 = vmatpush2.msra.mxu0 0.0
    %4901 = vmatprep.subr.mxu0 0.0
    %4902 = vmatpush2.msra.mxu0 0.0
    %4903 = vmatprep.subr.mxu0 0.0
    %4904 = vmatpush2.msra.mxu0 0.0
    %4905 = vmatprep.subr.mxu0 0.0
    %4906 = vmatpush2.msra.mxu0 0.0
    %4907 = vmatprep.subr.mxu0 0.0
    %4908 = vmatpush2.msra.mxu0 0.0
    %4909 = vmatprep.subr.mxu0 0.0
    %4910 = vmatpush2.msra.mxu0 0.0
    %4911 = vmatprep.subr.mxu0 0.0
    %4912 = vmatpush2.msra.mxu0 0.0
    %4913 = vmatprep.subr.mxu0 0.0
    %4914 = vmatpush2.msra.mxu0 0.0
    %4915 = vmatprep.subr.mxu0 0.0
    %4916 = vmatpush2.msra.mxu0 0.0
    %4917 = vmatprep.subr.mxu0 0.0
    %4918 = vmatpush2.msra.mxu0 0.0
    %4919 = vmatprep.subr.mxu0 0.0
    %4920 = vmatpush2.msra.mxu0 0.0
    %4921 = vmatprep.subr.mxu0 0.0
    %4922 = vmatpush2.msra.mxu0 0.0
    %4923 = vmatprep.subr.mxu0 0.0
    %4924 = vmatpush2.msra.mxu0 0.0
    %4925 = vmatprep.mubr.f32.mxu0 0.0
    %4926 = vmatmul.mubr.f32.gmra.mxu0 0.0
    %v4927 = vpop.f32.mrf.mxu0
    %v4928 = vadd.f32 %v4849, %v4927
    %v4929 = vpop.f32.mrf.mxu0
    %v4930 = vadd.f32 %v4853, %v4929
    %4931 = vmatprep.mubr.f32.mxu0 0.0
    %4932 = vmatmul.mubr.f32.gmra.mxu0 0.0
    %v4933 = vpop.f32.mrf.mxu0
    %v4934 = vadd.f32 %v4849, %v4933
    %v4935 = vpop.f32.mrf.mxu0
    %v4936 = vadd.f32 %v4853, %v4935
    %4937 = vmatprep.mubr.f32.mxu0 0.0
    %4938 = vmatmul.mubr.f32.gmra.mxu0 0.0
    %v4939 = vpop.f32.mrf.mxu0
    %v4940 = vadd.f32 %v4849, %v4939
    %v4941 = vpop.f32.mrf.mxu0
    %v4942 = vadd.f32 %v4853, %v4941
    %4943 = vmatprep.mubr.f32.mxu0 0.0
    %4944 = vmatmul.mubr.f32.gmra.mxu0 0.0
    %v4945 = vpop.f32.mrf.mxu0
    %v4946 = vadd.f32 %v4849, %v4945
    %v4947 = vpop.f32.mrf.mxu0
    %v4948 = vadd.f32 %v4853, %v4947
    %4949 = vmatprep.mubr.f32.mxu0 0.0
    %4950 = vmatmul.mubr.f32.gmra.mxu0 0.0
    %v4951 = vpop.f32.mrf.mxu0
    %v4952 = vadd.f32 %v4849, %v4951
    %v4953 = vpop.f32.mrf.mxu0
    %v4954 = vadd.f32 %v4853, %v4953
    %4955 = vmatprep.mubr.f32.mxu0 0.0
    %4956 = vmatmul.mubr.f32.gmra.mxu0 0.0
    %v4957 = vpop.f32.mrf.mxu0
    %v4958 = vadd.f32 %v4849, %v4957
    %v4959 = vpop.f32.mrf.mxu0
    %v4960 = vadd.f32 %v4853, %v4959
    %4961 = vmatprep.mubr.f32.mxu0 0.0
    %4962 = vmatmul.mubr.f32.gmra.mxu0 0.0
    %v4963 = vpop.f32.mrf.mxu0
    %v4964 = vadd.f32 %v4849, %v4963
    %v4965 = vpop.f32.mrf.mxu0
    %v4966 = vadd.f32 %v4853, %v4965
    %4967 = vmatprep.mubr.f32.mxu0 0.0
    %4968 = vmatmul.mubr.f32.gmra.mxu0 0.0
    %v4969 = vpop.f32.mrf.mxu0
    %v4970 = vadd.f32 %v4849, %v4969
    %v4971 = vpop.f32.mrf.mxu0
    %v4972 = vadd.f32 %v4853, %v4971
    %4973 = vmatprep.mubr.f32.mxu0 0.0
    %4974 = vmatmul.mubr.f32.gmra.mxu0 0.0
    %v4975 = vpop.f32.mrf.mxu0
    %v4976 = vadd.f32 %v4849, %v4975
    %v4977 = vpop.f32.mrf.mxu0
    %v4978 = vadd.f32 %v4853, %v4977
    %4979 = vmatprep.mubr.f32.mxu0 0.0
    %4980 = vmatmul.mubr.f32.gmra.mxu0 0.0
    %v4981 = vpop.f32.mrf.mxu0
    %v4982 = vadd.f32 %v4849, %v4981
    %v4983 = vpop.f32.mrf.mxu0
    %v4984 = vadd.f32 %v4853, %v4983
    %4985 = vmatprep.mubr.f32.mxu0 0.0
    %4986 = vmatmul.mubr.f32.gmra.mxu0 0.0
    %v4987 = vpop.f32.mrf.mxu0
    %v4988 = vadd.f32 %v4849, %v4987
    %v4989 = vpop.f32.mrf.mxu0
    %v4990 = vadd.f32 %v4853, %v4989
    %4991 = vmatprep.mubr.f32.mxu0 0.0
    %4992 = vmatmul.mubr.f32.gmra.mxu0 0.0
    %v4993 = vpop.f32.mrf.mxu0
    %v4994 = vadd.f32 %v4849, %v4993
    %v4995 = vpop.f32.mrf.mxu0
    %v4996 = vadd.f32 %v4853, %v4995
    %4997 = vdwg.mxu0
    %4998 = vmatprep.subr.mxu0 0.0
    %4999 = vmatpush1.msra.mxu0 %v4843
    %5000 = vmatprep.subr.mxu0 0.0
    %5001 = vmatpush1.msra.mxu0 %v4840
    %5002 = vmatprep.subr.mxu0 0.0
    %5003 = vmatpush1.msra.mxu0 %v4837
    %5004 = vmatprep.subr.mxu0 0.0
    %5005 = vmatpush1.msra.mxu0 %v4834
    %5006 = vmatprep.subr.mxu0 0.0
    %5007 = vmatpush1.msra.mxu0 %v4831
    %5008 = vmatprep.subr.mxu0 0.0
    %5009 = vmatpush1.msra.mxu0 %v4828
    %5010 = vmatprep.subr.mxu0 0.0
    %5011 = vmatpush1.msra.mxu0 %v4825
    %5012 = vmatprep.subr.mxu0 0.0
    %5013 = vmatpush1.msra.mxu0 %v4822
    %5014 = vmatprep.subr.mxu0 0.0
    %5015 = vmatpush1.msra.mxu0 %v4819
    %5016 = vmatprep.subr.mxu0 0.0
    %5017 = vmatpush1.msra.mxu0 %v4816
    %5018 = vmatprep.subr.mxu0 0.0
    %5019 = vmatpush1.msra.mxu0 %v4813
    %5020 = vmatprep.subr.mxu0 0.0
    %5021 = vmatpush1.msra.mxu0 %v4810
    %5022 = vmatprep.subr.mxu0 0.0
    %5023 = vmatpush1.msra.mxu0 %v4807
    %5024 = vmatprep.subr.mxu0 0.0
    %5025 = vmatpush1.msra.mxu0 %v4804
    %5026 = vmatprep.subr.mxu0 0.0
    %5027 = vmatpush1.msra.mxu0 %v4801
    %5028 = vmatprep.subr.mxu0 0.0
    %5029 = vmatpush1.msra.mxu0 %v4798
    %5030 = vmatprep.subr.mxu0 0.0
    %5031 = vmatpush2.msra.mxu0 0.0
    %5032 = vmatprep.subr.mxu0 0.0
    %5033 = vmatpush2.msra.mxu0 0.0
    %5034 = vmatprep.subr.mxu0 0.0
    %5035 = vmatpush2.msra.mxu0 0.0
    %5036 = vmatprep.subr.mxu0 0.0
    %5037 = vmatpush2.msra.mxu0 0.0
    %5038 = vmatprep.subr.mxu0 0.0
    %5039 = vmatpush2.msra.mxu0 0.0
    %5040 = vmatprep.subr.mxu0 0.0
    %5041 = vmatpush2.msra.mxu0 0.0
    %5042 = vmatprep.subr.mxu0 0.0
    %5043 = vmatpush2.msra.mxu0 0.0
    %5044 = vmatprep.subr.mxu0 0.0
    %5045 = vmatpush2.msra.mxu0 0.0
    %5046 = vmatprep.subr.mxu0 0.0
    %5047 = vmatpush2.msra.mxu0 0.0
    %5048 = vmatprep.subr.mxu0 0.0
    %5049 = vmatpush2.msra.mxu0 0.0
    %5050 = vmatprep.subr.mxu0 0.0
    %5051 = vmatpush2.msra.mxu0 0.0
    %5052 = vmatprep.subr.mxu0 0.0
    %5053 = vmatpush2.msra.mxu0 0.0
    %5054 = vmatprep.subr.mxu0 0.0
    %5055 = vmatpush2.msra.mxu0 0.0
    %5056 = vmatprep.subr.mxu0 0.0
    %5057 = vmatpush2.msra.mxu0 0.0
    %5058 = vmatprep.subr.mxu0 0.0
    %5059 = vmatpush2.msra.mxu0 0.0
    %5060 = vmatprep.subr.mxu0 0.0
    %5061 = vmatpush2.msra.mxu0 0.0
    %5062 = vmatprep.mubr.f32.mxu0 0.0
    %5063 = vmatmul.mubr.f32.gmra.mxu0 0.0
    %v5064 = vpop.f32.mrf.mxu0
    %v5065 = vadd.f32 %v4857, %v5064
    %v5066 = vpop.f32.mrf.mxu0
    %5067 = vmatprep.mubr.f32.mxu0 0.0
    %5068 = vmatmul.mubr.f32.gmra.mxu0 0.0
    %v5069 = vpop.f32.mrf.mxu0
    %v5070 = vadd.f32 %v4857, %v5069
    %v5071 = vpop.f32.mrf.mxu0
    %5072 = vmatprep.mubr.f32.mxu0 0.0
    %5073 = vmatmul.mubr.f32.gmra.mxu0 0.0
    %v5074 = vpop.f32.mrf.mxu0
    %v5075 = vadd.f32 %v4857, %v5074
    %v5076 = vpop.f32.mrf.mxu0
    %5077 = vmatprep.mubr.f32.mxu0 0.0
    %5078 = vmatmul.mubr.f32.gmra.mxu0 0.0
    %v5079 = vpop.f32.mrf.mxu0
    %v5080 = vadd.f32 %v4857, %v5079
    %v5081 = vpop.f32.mrf.mxu0
    %5082 = vmatprep.mubr.f32.mxu0 0.0
    %5083 = vmatmul.mubr.f32.gmra.mxu0 0.0
    %v5084 = vpop.f32.mrf.mxu0
    %v5085 = vadd.f32 %v4857, %v5084
    %v5086 = vpop.f32.mrf.mxu0
    %5087 = vmatprep.mubr.f32.mxu0 0.0
    %5088 = vmatmul.mubr.f32.gmra.mxu0 0.0
    %v5089 = vpop.f32.mrf.mxu0
    %v5090 = vadd.f32 %v4857, %v5089
    %v5091 = vpop.f32.mrf.mxu0
    %5092 = vmatprep.mubr.f32.mxu0 0.0
    %5093 = vmatmul.mubr.f32.gmra.mxu0 0.0
    %v5094 = vpop.f32.mrf.mxu0
    %v5095 = vadd.f32 %v4857, %v5094
    %v5096 = vpop.f32.mrf.mxu0
    %5097 = vmatprep.mubr.f32.mxu0 0.0
    %5098 = vmatmul.mubr.f32.gmra.mxu0 0.0
    %v5099 = vpop.f32.mrf.mxu0
    %v5100 = vadd.f32 %v4857, %v5099
    %v5101 = vpop.f32.mrf.mxu0
    %5102 = vmatprep.mubr.f32.mxu0 0.0
    %5103 = vmatmul.mubr.f32.gmra.mxu0 0.0
    %v5104 = vpop.f32.mrf.mxu0
    %v5105 = vadd.f32 %v4857, %v5104
    %v5106 = vpop.f32.mrf.mxu0
    %5107 = vmatprep.mubr.f32.mxu0 0.0
    %5108 = vmatmul.mubr.f32.gmra.mxu0 0.0
    %v5109 = vpop.f32.mrf.mxu0
    %v5110 = vadd.f32 %v4857, %v5109
    %v5111 = vpop.f32.mrf.mxu0
    %5112 = vmatprep.mubr.f32.mxu0 0.0
    %5113 = vmatmul.mubr.f32.gmra.mxu0 0.0
    %v5114 = vpop.f32.mrf.mxu0
    %v5115 = vadd.f32 %v4857, %v5114
    %v5116 = vpop.f32.mrf.mxu0
    %5117 = vmatprep.mubr.f32.mxu0 0.0
    %5118 = vmatmul.mubr.f32.gmra.mxu0 0.0
    %v5119 = vpop.f32.mrf.mxu0
    %v5120 = vadd.f32 %v4857, %v5119
    %v5121 = vpop.f32.mrf.mxu0
    %5122 = vdwg.mxu0
    %v5123 = vadd.f32 %v4601, %v4928
    %v5124 = vadd.f32 %v4607, %v4934
    %v5125 = vadd.f32 %v4613, %v4940
    %v5126 = vadd.f32 %v4619, %v4946
    %v5127 = vadd.f32 %v4625, %v4952
    %v5128 = vadd.f32 %v4631, %v4958
    %v5129 = vadd.f32 %v4637, %v4964
    %v5130 = vadd.f32 %v4643, %v4970
    %v5131 = vadd.f32 %v4649, %v4976
    %v5132 = vadd.f32 %v4655, %v4982
    %v5133 = vadd.f32 %v4661, %v4988
    %v5134 = vadd.f32 %v4667, %v4994
    %v5135 = vxor.u32 %v5123, 2147483648
    %v5136 = vxor.u32 %v5124, 2147483648
    %v5137 = vxor.u32 %v5125, 2147483648
    %v5138 = vxor.u32 %v5126, 2147483648
    %v5139 = vxor.u32 %v5127, 2147483648
    %v5140 = vxor.u32 %v5128, 2147483648
    %v5141 = vxor.u32 %v5129, 2147483648
    %v5142 = vxor.u32 %v5130, 2147483648
    %v5143 = vxor.u32 %v5131, 2147483648
    %v5144 = vxor.u32 %v5132, 2147483648
    %v5145 = vxor.u32 %v5133, 2147483648
    %v5146 = vxor.u32 %v5134, 2147483648
    %v5147 = vmul.f32 %v5135, 1.442695
    %v5148 = vpow.pop %v5147
    %v5149 = vmul.f32 %v5136, 1.442695
    %v5150 = vpow.pop %v5149
    %v5151 = vmul.f32 %v5137, 1.442695
    %v5152 = vpow.pop %v5151
    %v5153 = vmul.f32 %v5138, 1.442695
    %v5154 = vpow.pop %v5153
    %v5155 = vmul.f32 %v5139, 1.442695
    %v5156 = vpow.pop %v5155
    %v5157 = vmul.f32 %v5140, 1.442695
    %v5158 = vpow.pop %v5157
    %v5159 = vmul.f32 %v5141, 1.442695
    %v5160 = vpow.pop %v5159
    %v5161 = vmul.f32 %v5142, 1.442695
    %v5162 = vpow.pop %v5161
    %v5163 = vmul.f32 %v5143, 1.442695
    %v5164 = vpow.pop %v5163
    %v5165 = vmul.f32 %v5144, 1.442695
    %v5166 = vpow.pop %v5165
    %v5167 = vmul.f32 %v5145, 1.442695
    %v5168 = vpow.pop %v5167
    %v5169 = vmul.f32 %v5146, 1.442695
    %v5170 = vpow.pop %v5169
    %v5171 = vadd.f32 %v5148, 1.0
    %v5172 = vadd.f32 %v5150, 1.0
    %v5173 = vadd.f32 %v5152, 1.0
    %v5174 = vadd.f32 %v5154, 1.0
    %v5175 = vadd.f32 %v5156, 1.0
    %v5176 = vadd.f32 %v5158, 1.0
    %v5177 = vadd.f32 %v5160, 1.0
    %v5178 = vadd.f32 %v5162, 1.0
    %v5179 = vadd.f32 %v5164, 1.0
    %v5180 = vadd.f32 %v5166, 1.0
    %v5181 = vadd.f32 %v5168, 1.0
    %v5182 = vadd.f32 %v5170, 1.0
    %v5183 = vrcp.pop %v5171
    %v5184 = vmul.f32 1.0, %v5183
    %v5185 = vrcp.pop %v5172
    %v5186 = vmul.f32 1.0, %v5185
    %v5187 = vrcp.pop %v5173
    %v5188 = vmul.f32 1.0, %v5187
    %v5189 = vrcp.pop %v5174
    %v5190 = vmul.f32 1.0, %v5189
    %v5191 = vrcp.pop %v5175
    %v5192 = vmul.f32 1.0, %v5191
    %v5193 = vrcp.pop %v5176
    %v5194 = vmul.f32 1.0, %v5193
    %v5195 = vrcp.pop %v5177
    %v5196 = vmul.f32 1.0, %v5195
    %v5197 = vrcp.pop %v5178
    %v5198 = vmul.f32 1.0, %v5197
    %v5199 = vrcp.pop %v5179
    %v5200 = vmul.f32 1.0, %v5199
    %v5201 = vrcp.pop %v5180
    %v5202 = vmul.f32 1.0, %v5201
    %v5203 = vrcp.pop %v5181
    %v5204 = vmul.f32 1.0, %v5203
    %v5205 = vrcp.pop %v5182
    %v5206 = vmul.f32 1.0, %v5205
    %v5207 = vadd.f32 %v4603, %v4930
    %v5208 = vadd.f32 %v4609, %v4936
    %v5209 = vadd.f32 %v4615, %v4942
    %v5210 = vadd.f32 %v4621, %v4948
    %v5211 = vadd.f32 %v4627, %v4954
    %v5212 = vadd.f32 %v4633, %v4960
    %v5213 = vadd.f32 %v4639, %v4966
    %v5214 = vadd.f32 %v4645, %v4972
    %v5215 = vadd.f32 %v4651, %v4978
    %v5216 = vadd.f32 %v4657, %v4984
    %v5217 = vadd.f32 %v4663, %v4990
    %v5218 = vadd.f32 %v4669, %v4996
    %v5219 = vxor.u32 %v5207, 2147483648
    %v5220 = vxor.u32 %v5208, 2147483648
    %v5221 = vxor.u32 %v5209, 2147483648
    %v5222 = vxor.u32 %v5210, 2147483648
    %v5223 = vxor.u32 %v5211, 2147483648
    %v5224 = vxor.u32 %v5212, 2147483648
    %v5225 = vxor.u32 %v5213, 2147483648
    %v5226 = vxor.u32 %v5214, 2147483648
    %v5227 = vxor.u32 %v5215, 2147483648
    %v5228 = vxor.u32 %v5216, 2147483648
    %v5229 = vxor.u32 %v5217, 2147483648
    %v5230 = vxor.u32 %v5218, 2147483648
    %v5231 = vmul.f32 %v5219, 1.442695
    %v5232 = vpow.pop %v5231
    %v5233 = vmul.f32 %v5220, 1.442695
    %v5234 = vpow.pop %v5233
    %v5235 = vmul.f32 %v5221, 1.442695
    %v5236 = vpow.pop %v5235
    %v5237 = vmul.f32 %v5222, 1.442695
    %v5238 = vpow.pop %v5237
    %v5239 = vmul.f32 %v5223, 1.442695
    %v5240 = vpow.pop %v5239
    %v5241 = vmul.f32 %v5224, 1.442695
    %v5242 = vpow.pop %v5241
    %v5243 = vmul.f32 %v5225, 1.442695
    %v5244 = vpow.pop %v5243
    %v5245 = vmul.f32 %v5226, 1.442695
    %v5246 = vpow.pop %v5245
    %v5247 = vmul.f32 %v5227, 1.442695
    %v5248 = vpow.pop %v5247
    %v5249 = vmul.f32 %v5228, 1.442695
    %v5250 = vpow.pop %v5249
    %v5251 = vmul.f32 %v5229, 1.442695
    %v5252 = vpow.pop %v5251
    %v5253 = vmul.f32 %v5230, 1.442695
    %v5254 = vpow.pop %v5253
    %v5255 = vadd.f32 %v5232, 1.0
    %v5256 = vadd.f32 %v5234, 1.0
    %v5257 = vadd.f32 %v5236, 1.0
    %v5258 = vadd.f32 %v5238, 1.0
    %v5259 = vadd.f32 %v5240, 1.0
    %v5260 = vadd.f32 %v5242, 1.0
    %v5261 = vadd.f32 %v5244, 1.0
    %v5262 = vadd.f32 %v5246, 1.0
    %v5263 = vadd.f32 %v5248, 1.0
    %v5264 = vadd.f32 %v5250, 1.0
    %v5265 = vadd.f32 %v5252, 1.0
    %v5266 = vadd.f32 %v5254, 1.0
    %v5267 = vrcp.pop %v5255
    %v5268 = vmul.f32 1.0, %v5267
    %v5269 = vrcp.pop %v5256
    %v5270 = vmul.f32 1.0, %v5269
    %v5271 = vrcp.pop %v5257
    %v5272 = vmul.f32 1.0, %v5271
    %v5273 = vrcp.pop %v5258
    %v5274 = vmul.f32 1.0, %v5273
    %v5275 = vrcp.pop %v5259
    %v5276 = vmul.f32 1.0, %v5275
    %v5277 = vrcp.pop %v5260
    %v5278 = vmul.f32 1.0, %v5277
    %v5279 = vrcp.pop %v5261
    %v5280 = vmul.f32 1.0, %v5279
    %v5281 = vrcp.pop %v5262
    %v5282 = vmul.f32 1.0, %v5281
    %v5283 = vrcp.pop %v5263
    %v5284 = vmul.f32 1.0, %v5283
    %v5285 = vrcp.pop %v5264
    %v5286 = vmul.f32 1.0, %v5285
    %v5287 = vrcp.pop %v5265
    %v5288 = vmul.f32 1.0, %v5287
    %v5289 = vrcp.pop %v5266
    %v5290 = vmul.f32 1.0, %v5289
    %v5291 = vmul.f32 %v5184, %v5065
    %v5292 = vmul.f32 %v5186, %v5070
    %v5293 = vmul.f32 %v5188, %v5075
    %v5294 = vmul.f32 %v5190, %v5080
    %v5295 = vmul.f32 %v5192, %v5085
    %v5296 = vmul.f32 %v5194, %v5090
    %v5297 = vmul.f32 %v5196, %v5095
    %v5298 = vmul.f32 %v5198, %v5100
    %v5299 = vmul.f32 %v5200, %v5105
    %v5300 = vmul.f32 %v5202, %v5110
    %v5301 = vmul.f32 %v5204, %v5115
    %v5302 = vmul.f32 %v5206, %v5120
    %v5303 = vadd.f32 %v4738, %v5291
    %v5304 = vadd.f32 %v4743, %v5292
    %v5305 = vadd.f32 %v4748, %v5293
    %v5306 = vadd.f32 %v4753, %v5294
    %v5307 = vadd.f32 %v4758, %v5295
    %v5308 = vadd.f32 %v4763, %v5296
    %v5309 = vadd.f32 %v4768, %v5297
    %v5310 = vadd.f32 %v4773, %v5298
    %v5311 = vadd.f32 %v4778, %v5299
    %v5312 = vadd.f32 %v4783, %v5300
    %v5313 = vadd.f32 %v4788, %v5301
    %v5314 = vadd.f32 %v4793, %v5302
    %v5315 = vtanh.pop %v5303
    %v5316 = vtanh.pop %v5304
    %v5317 = vtanh.pop %v5305
    %v5318 = vtanh.pop %v5306
    %v5319 = vtanh.pop %v5307
    %v5320 = vtanh.pop %v5308
    %v5321 = vtanh.pop %v5309
    %v5322 = vtanh.pop %v5310
    %v5323 = vtanh.pop %v5311
    %v5324 = vtanh.pop %v5312
    %v5325 = vtanh.pop %v5313
    %v5326 = vtanh.pop %v5314
    %v5327 = vsub.f32 1.0, %v5268
    %v5328 = vsub.f32 1.0, %v5270
    %v5329 = vsub.f32 1.0, %v5272
    %v5330 = vsub.f32 1.0, %v5274
    %v5331 = vsub.f32 1.0, %v5276
    %v5332 = vsub.f32 1.0, %v5278
    %v5333 = vsub.f32 1.0, %v5280
    %v5334 = vsub.f32 1.0, %v5282
    %v5335 = vsub.f32 1.0, %v5284
    %v5336 = vsub.f32 1.0, %v5286
    %v5337 = vsub.f32 1.0, %v5288
    %v5338 = vsub.f32 1.0, %v5290
    %v5339 = vmul.f32 %v5327, %v5315
    %v5340 = vmul.f32 %v5328, %v5316
    %v5341 = vmul.f32 %v5329, %v5317
    %v5342 = vmul.f32 %v5330, %v5318
    %v5343 = vmul.f32 %v5331, %v5319
    %v5344 = vmul.f32 %v5332, %v5320
    %v5345 = vmul.f32 %v5333, %v5321
    %v5346 = vmul.f32 %v5334, %v5322
    %v5347 = vmul.f32 %v5335, %v5323
    %v5348 = vmul.f32 %v5336, %v5324
    %v5349 = vmul.f32 %v5337, %v5325
    %v5350 = vmul.f32 %v5338, %v5326
    %v5351 = vmul.f32 %v5268, 0.0
    %v5352 = vmul.f32 %v5270, 0.0
    %v5353 = vmul.f32 %v5272, 0.0
    %v5354 = vmul.f32 %v5274, 0.0
    %v5355 = vmul.f32 %v5276, 0.0
    %v5356 = vmul.f32 %v5278, 0.0
    %v5357 = vmul.f32 %v5280, 0.0
    %v5358 = vmul.f32 %v5282, 0.0
    %v5359 = vmul.f32 %v5284, 0.0
    %v5360 = vmul.f32 %v5286, 0.0
    %v5361 = vmul.f32 %v5288, 0.0
    %v5362 = vmul.f32 %v5290, 0.0
    %v5363 = vadd.f32 %v5339, %v5351
    %v5364 = vadd.f32 %v5340, %v5352
    %v5365 = vadd.f32 %v5341, %v5353
    %v5366 = vadd.f32 %v5342, %v5354
    %v5367 = vadd.f32 %v5343, %v5355
    %v5368 = vadd.f32 %v5344, %v5356
    %v5369 = vadd.f32 %v5345, %v5357
    %v5370 = vadd.f32 %v5346, %v5358
    %v5371 = vadd.f32 %v5347, %v5359
    %v5372 = vadd.f32 %v5348, %v5360
    %v5373 = vadd.f32 %v5349, %v5361
    %v5374 = vadd.f32 %v5350, %v5362
    %5375 = vst [vmem:[#allocation2] sm:$0xff] %v5363
    %5376 = vst [vmem:[#allocation2 + $0x8] sm:$0xff] %v5364
    %5377 = vst [vmem:[#allocation2 + $0x10] sm:$0xff] %v5365
    %5378 = vst [vmem:[#allocation2 + $0x18] sm:$0xff] %v5366
    %5379 = vst [vmem:[#allocation2 + $0x20] sm:$0xff] %v5367
    %5380 = vst [vmem:[#allocation2 + $0x28] sm:$0xff] %v5368
    %5381 = vst [vmem:[#allocation2 + $0x30] sm:$0xff] %v5369
    %5382 = vst [vmem:[#allocation2 + $0x38] sm:$0xff] %v5370
    %5383 = vst [vmem:[#allocation2 + $0x40] sm:$0xff] %v5371
    %5384 = vst [vmem:[#allocation2 + $0x48] sm:$0xff] %v5372
    %5385 = vst [vmem:[#allocation2 + $0x50] sm:$0xff] %v5373
    %5386 = vst [vmem:[#allocation2 + $0x58] sm:$0xff] %v5374
    %5387 = vmatprep.subr.mxu0 %v4842
    %5388 = vmatpush1.msra.mxu0 %v4841
    %5389 = vmatprep.subr.mxu0 %v4839
    %5390 = vmatpush1.msra.mxu0 %v4838
    %5391 = vmatprep.subr.mxu0 %v4836
    %5392 = vmatpush1.msra.mxu0 %v4835
    %5393 = vmatprep.subr.mxu0 %v4833
    %5394 = vmatpush1.msra.mxu0 %v4832
    %5395 = vmatprep.subr.mxu0 %v4830
    %5396 = vmatpush1.msra.mxu0 %v4829
    %5397 = vmatprep.subr.mxu0 %v4827
    %5398 = vmatpush1.msra.mxu0 %v4826
    %5399 = vmatprep.subr.mxu0 %v4824
    %5400 = vmatpush1.msra.mxu0 %v4823
    %5401 = vmatprep.subr.mxu0 %v4821
    %5402 = vmatpush1.msra.mxu0 %v4820
    %5403 = vmatprep.subr.mxu0 %v4818
    %5404 = vmatpush1.msra.mxu0 %v4817
    %5405 = vmatprep.subr.mxu0 %v4815
    %5406 = vmatpush1.msra.mxu0 %v4814
    %5407 = vmatprep.subr.mxu0 %v4812
    %5408 = vmatpush1.msra.mxu0 %v4811
    %5409 = vmatprep.subr.mxu0 %v4809
    %5410 = vmatpush1.msra.mxu0 %v4808
    %5411 = vmatprep.subr.mxu0 %v4806
    %5412 = vmatpush1.msra.mxu0 %v4805
    %5413 = vmatprep.subr.mxu0 %v4803
    %5414 = vmatpush1.msra.mxu0 %v4802
    %5415 = vmatprep.subr.mxu0 %v4800
    %5416 = vmatpush1.msra.mxu0 %v4799
    %5417 = vmatprep.subr.mxu0 %v4797
    %5418 = vmatpush1.msra.mxu0 %v4796
    %5419 = vmatprep.subr.mxu0 0.0
    %5420 = vmatpush2.msra.mxu0 0.0
    %5421 = vmatprep.subr.mxu0 0.0
    %5422 = vmatpush2.msra.mxu0 0.0
    %5423 = vmatprep.subr.mxu0 0.0
    %5424 = vmatpush2.msra.mxu0 0.0
    %5425 = vmatprep.subr.mxu0 0.0
    %5426 = vmatpush2.msra.mxu0 0.0
    %5427 = vmatprep.subr.mxu0 0.0
    %5428 = vmatpush2.msra.mxu0 0.0
    %5429 = vmatprep.subr.mxu0 0.0
    %5430 = vmatpush2.msra.mxu0 0.0
    %5431 = vmatprep.subr.mxu0 0.0
    %5432 = vmatpush2.msra.mxu0 0.0
    %5433 = vmatprep.subr.mxu0 0.0
    %5434 = vmatpush2.msra.mxu0 0.0
    %5435 = vmatprep.subr.mxu0 0.0
    %5436 = vmatpush2.msra.mxu0 0.0
    %5437 = vmatprep.subr.mxu0 0.0
    %5438 = vmatpush2.msra.mxu0 0.0
    %5439 = vmatprep.subr.mxu0 0.0
    %5440 = vmatpush2.msra.mxu0 0.0
    %5441 = vmatprep.subr.mxu0 0.0
    %5442 = vmatpush2.msra.mxu0 0.0
    %5443 = vmatprep.subr.mxu0 0.0
    %5444 = vmatpush2.msra.mxu0 0.0
    %5445 = vmatprep.subr.mxu0 0.0
    %5446 = vmatpush2.msra.mxu0 0.0
    %5447 = vmatprep.subr.mxu0 0.0
    %5448 = vmatpush2.msra.mxu0 0.0
    %5449 = vmatprep.subr.mxu0 0.0
    %5450 = vmatpush2.msra.mxu0 0.0
    %5451 = vmatprep.mubr.f32.mxu0 0.0
    %5452 = vmatmul.mubr.f32.gmra.mxu0 %v5363
    %v5453 = vpop.f32.mrf.mxu0
    %v5454 = vadd.f32 %v4849, %v5453
    %v5455 = vpop.f32.mrf.mxu0
    %v5456 = vadd.f32 %v4853, %v5455
    %5457 = vmatprep.mubr.f32.mxu0 0.0
    %5458 = vmatmul.mubr.f32.gmra.mxu0 %v5364
    %v5459 = vpop.f32.mrf.mxu0
    %v5460 = vadd.f32 %v4849, %v5459
    %v5461 = vpop.f32.mrf.mxu0
    %v5462 = vadd.f32 %v4853, %v5461
    %5463 = vmatprep.mubr.f32.mxu0 0.0
    %5464 = vmatmul.mubr.f32.gmra.mxu0 %v5365
    %v5465 = vpop.f32.mrf.mxu0
    %v5466 = vadd.f32 %v4849, %v5465
    %v5467 = vpop.f32.mrf.mxu0
    %v5468 = vadd.f32 %v4853, %v5467
    %5469 = vmatprep.mubr.f32.mxu0 0.0
    %5470 = vmatmul.mubr.f32.gmra.mxu0 %v5366
    %v5471 = vpop.f32.mrf.mxu0
    %v5472 = vadd.f32 %v4849, %v5471
    %v5473 = vpop.f32.mrf.mxu0
    %v5474 = vadd.f32 %v4853, %v5473
    %5475 = vmatprep.mubr.f32.mxu0 0.0
    %5476 = vmatmul.mubr.f32.gmra.mxu0 %v5367
    %v5477 = vpop.f32.mrf.mxu0
    %v5478 = vadd.f32 %v4849, %v5477
    %v5479 = vpop.f32.mrf.mxu0
    %v5480 = vadd.f32 %v4853, %v5479
    %5481 = vmatprep.mubr.f32.mxu0 0.0
    %5482 = vmatmul.mubr.f32.gmra.mxu0 %v5368
    %v5483 = vpop.f32.mrf.mxu0
    %v5484 = vadd.f32 %v4849, %v5483
    %v5485 = vpop.f32.mrf.mxu0
    %v5486 = vadd.f32 %v4853, %v5485
    %5487 = vmatprep.mubr.f32.mxu0 0.0
    %5488 = vmatmul.mubr.f32.gmra.mxu0 %v5369
    %v5489 = vpop.f32.mrf.mxu0
    %v5490 = vadd.f32 %v4849, %v5489
    %v5491 = vpop.f32.mrf.mxu0
    %v5492 = vadd.f32 %v4853, %v5491
    %5493 = vmatprep.mubr.f32.mxu0 0.0
    %5494 = vmatmul.mubr.f32.gmra.mxu0 %v5370
    %v5495 = vpop.f32.mrf.mxu0
    %v5496 = vadd.f32 %v4849, %v5495
    %v5497 = vpop.f32.mrf.mxu0
    %v5498 = vadd.f32 %v4853, %v5497
    %5499 = vmatprep.mubr.f32.mxu0 0.0
    %5500 = vmatmul.mubr.f32.gmra.mxu0 %v5371
    %v5501 = vpop.f32.mrf.mxu0
    %v5502 = vadd.f32 %v4849, %v5501
    %v5503 = vpop.f32.mrf.mxu0
    %v5504 = vadd.f32 %v4853, %v5503
    %5505 = vmatprep.mubr.f32.mxu0 0.0
    %5506 = vmatmul.mubr.f32.gmra.mxu0 %v5372
    %v5507 = vpop.f32.mrf.mxu0
    %v5508 = vadd.f32 %v4849, %v5507
    %v5509 = vpop.f32.mrf.mxu0
    %v5510 = vadd.f32 %v4853, %v5509
    %5511 = vmatprep.mubr.f32.mxu0 0.0
    %5512 = vmatmul.mubr.f32.gmra.mxu0 %v5373
    %v5513 = vpop.f32.mrf.mxu0
    %v5514 = vadd.f32 %v4849, %v5513
    %v5515 = vpop.f32.mrf.mxu0
    %v5516 = vadd.f32 %v4853, %v5515
    %5517 = vmatprep.mubr.f32.mxu0 0.0
    %5518 = vmatmul.mubr.f32.gmra.mxu0 %v5374
    %v5519 = vpop.f32.mrf.mxu0
    %v5520 = vadd.f32 %v4849, %v5519
    %v5521 = vpop.f32.mrf.mxu0
    %v5522 = vadd.f32 %v4853, %v5521
    %5523 = vdwg.mxu0
    %5524 = vmatprep.subr.mxu0 0.0
    %5525 = vmatpush1.msra.mxu0 %v4843
    %5526 = vmatprep.subr.mxu0 0.0
    %5527 = vmatpush1.msra.mxu0 %v4840
    %5528 = vmatprep.subr.mxu0 0.0
    %5529 = vmatpush1.msra.mxu0 %v4837
    %5530 = vmatprep.subr.mxu0 0.0
    %5531 = vmatpush1.msra.mxu0 %v4834
    %5532 = vmatprep.subr.mxu0 0.0
    %5533 = vmatpush1.msra.mxu0 %v4831
    %5534 = vmatprep.subr.mxu0 0.0
    %5535 = vmatpush1.msra.mxu0 %v4828
    %5536 = vmatprep.subr.mxu0 0.0
    %5537 = vmatpush1.msra.mxu0 %v4825
    %5538 = vmatprep.subr.mxu0 0.0
    %5539 = vmatpush1.msra.mxu0 %v4822
    %5540 = vmatprep.subr.mxu0 0.0
    %5541 = vmatpush1.msra.mxu0 %v4819
    %5542 = vmatprep.subr.mxu0 0.0
    %5543 = vmatpush1.msra.mxu0 %v4816
    %5544 = vmatprep.subr.mxu0 0.0
    %5545 = vmatpush1.msra.mxu0 %v4813
    %5546 = vmatprep.subr.mxu0 0.0
    %5547 = vmatpush1.msra.mxu0 %v4810
    %5548 = vmatprep.subr.mxu0 0.0
    %5549 = vmatpush1.msra.mxu0 %v4807
    %5550 = vmatprep.subr.mxu0 0.0
    %5551 = vmatpush1.msra.mxu0 %v4804
    %5552 = vmatprep.subr.mxu0 0.0
    %5553 = vmatpush1.msra.mxu0 %v4801
    %5554 = vmatprep.subr.mxu0 0.0
    %5555 = vmatpush1.msra.mxu0 %v4798
    %5556 = vmatprep.subr.mxu0 0.0
    %5557 = vmatpush2.msra.mxu0 0.0
    %5558 = vmatprep.subr.mxu0 0.0
    %5559 = vmatpush2.msra.mxu0 0.0
    %5560 = vmatprep.subr.mxu0 0.0
    %5561 = vmatpush2.msra.mxu0 0.0
    %5562 = vmatprep.subr.mxu0 0.0
    %5563 = vmatpush2.msra.mxu0 0.0
    %5564 = vmatprep.subr.mxu0 0.0
    %5565 = vmatpush2.msra.mxu0 0.0
    %5566 = vmatprep.subr.mxu0 0.0
    %5567 = vmatpush2.msra.mxu0 0.0
    %5568 = vmatprep.subr.mxu0 0.0
    %5569 = vmatpush2.msra.mxu0 0.0
    %5570 = vmatprep.subr.mxu0 0.0
    %5571 = vmatpush2.msra.mxu0 0.0
    %5572 = vmatprep.subr.mxu0 0.0
    %5573 = vmatpush2.msra.mxu0 0.0
    %5574 = vmatprep.subr.mxu0 0.0
    %5575 = vmatpush2.msra.mxu0 0.0
    %5576 = vmatprep.subr.mxu0 0.0
    %5577 = vmatpush2.msra.mxu0 0.0
    %5578 = vmatprep.subr.mxu0 0.0
    %5579 = vmatpush2.msra.mxu0 0.0
    %5580 = vmatprep.subr.mxu0 0.0
    %5581 = vmatpush2.msra.mxu0 0.0
    %5582 = vmatprep.subr.mxu0 0.0
    %5583 = vmatpush2.msra.mxu0 0.0
    %5584 = vmatprep.subr.mxu0 0.0
    %5585 = vmatpush2.msra.mxu0 0.0
    %5586 = vmatprep.subr.mxu0 0.0
    %5587 = vmatpush2.msra.mxu0 0.0
    %5588 = vmatprep.mubr.f32.mxu0 0.0
    %5589 = vmatmul.mubr.f32.gmra.mxu0 %v5363
    %v5590 = vpop.f32.mrf.mxu0
    %v5591 = vadd.f32 %v4857, %v5590
    %v5592 = vpop.f32.mrf.mxu0
    %5593 = vmatprep.mubr.f32.mxu0 0.0
    %5594 = vmatmul.mubr.f32.gmra.mxu0 %v5364
    %v5595 = vpop.f32.mrf.mxu0
    %v5596 = vadd.f32 %v4857, %v5595
    %v5597 = vpop.f32.mrf.mxu0
    %5598 = vmatprep.mubr.f32.mxu0 0.0
    %5599 = vmatmul.mubr.f32.gmra.mxu0 %v5365
    %v5600 = vpop.f32.mrf.mxu0
    %v5601 = vadd.f32 %v4857, %v5600
    %v5602 = vpop.f32.mrf.mxu0
    %5603 = vmatprep.mubr.f32.mxu0 0.0
    %5604 = vmatmul.mubr.f32.gmra.mxu0 %v5366
    %v5605 = vpop.f32.mrf.mxu0
    %v5606 = vadd.f32 %v4857, %v5605
    %v5607 = vpop.f32.mrf.mxu0
    %5608 = vmatprep.mubr.f32.mxu0 0.0
    %5609 = vmatmul.mubr.f32.gmra.mxu0 %v5367
    %v5610 = vpop.f32.mrf.mxu0
    %v5611 = vadd.f32 %v4857, %v5610
    %v5612 = vpop.f32.mrf.mxu0
    %5613 = vmatprep.mubr.f32.mxu0 0.0
    %5614 = vmatmul.mubr.f32.gmra.mxu0 %v5368
    %v5615 = vpop.f32.mrf.mxu0
    %v5616 = vadd.f32 %v4857, %v5615
    %v5617 = vpop.f32.mrf.mxu0
    %5618 = vmatprep.mubr.f32.mxu0 0.0
    %5619 = vmatmul.mubr.f32.gmra.mxu0 %v5369
    %v5620 = vpop.f32.mrf.mxu0
    %v5621 = vadd.f32 %v4857, %v5620
    %v5622 = vpop.f32.mrf.mxu0
    %5623 = vmatprep.mubr.f32.mxu0 0.0
    %5624 = vmatmul.mubr.f32.gmra.mxu0 %v5370
    %v5625 = vpop.f32.mrf.mxu0
    %v5626 = vadd.f32 %v4857, %v5625
    %v5627 = vpop.f32.mrf.mxu0
    %5628 = vmatprep.mubr.f32.mxu0 0.0
    %5629 = vmatmul.mubr.f32.gmra.mxu0 %v5371
    %v5630 = vpop.f32.mrf.mxu0
    %v5631 = vadd.f32 %v4857, %v5630
    %v5632 = vpop.f32.mrf.mxu0
    %5633 = vmatprep.mubr.f32.mxu0 0.0
    %5634 = vmatmul.mubr.f32.gmra.mxu0 %v5372
    %v5635 = vpop.f32.mrf.mxu0
    %v5636 = vadd.f32 %v4857, %v5635
    %v5637 = vpop.f32.mrf.mxu0
    %5638 = vmatprep.mubr.f32.mxu0 0.0
    %5639 = vmatmul.mubr.f32.gmra.mxu0 %v5373
    %v5640 = vpop.f32.mrf.mxu0
    %v5641 = vadd.f32 %v4857, %v5640
    %v5642 = vpop.f32.mrf.mxu0
    %5643 = vmatprep.mubr.f32.mxu0 0.0
    %5644 = vmatmul.mubr.f32.gmra.mxu0 %v5374
    %v5645 = vpop.f32.mrf.mxu0
    %v5646 = vadd.f32 %v4857, %v5645
    %v5647 = vpop.f32.mrf.mxu0
    %5648 = vdwg.mxu0
    %v5649 = vadd.f32 %v4601, %v5454
    %v5650 = vadd.f32 %v4607, %v5460
    %v5651 = vadd.f32 %v4613, %v5466
    %v5652 = vadd.f32 %v4619, %v5472
    %v5653 = vadd.f32 %v4625, %v5478
    %v5654 = vadd.f32 %v4631, %v5484
    %v5655 = vadd.f32 %v4637, %v5490
    %v5656 = vadd.f32 %v4643, %v5496
    %v5657 = vadd.f32 %v4649, %v5502
    %v5658 = vadd.f32 %v4655, %v5508
    %v5659 = vadd.f32 %v4661, %v5514
    %v5660 = vadd.f32 %v4667, %v5520
    %v5661 = vxor.u32 %v5649, 2147483648
    %v5662 = vxor.u32 %v5650, 2147483648
    %v5663 = vxor.u32 %v5651, 2147483648
    %v5664 = vxor.u32 %v5652, 2147483648
    %v5665 = vxor.u32 %v5653, 2147483648
    %v5666 = vxor.u32 %v5654, 2147483648
    %v5667 = vxor.u32 %v5655, 2147483648
    %v5668 = vxor.u32 %v5656, 2147483648
    %v5669 = vxor.u32 %v5657, 2147483648
    %v5670 = vxor.u32 %v5658, 2147483648
    %v5671 = vxor.u32 %v5659, 2147483648
    %v5672 = vxor.u32 %v5660, 2147483648
    %v5673 = vmul.f32 %v5661, 1.442695
    %v5674 = vpow.pop %v5673
    %v5675 = vmul.f32 %v5662, 1.442695
    %v5676 = vpow.pop %v5675
    %v5677 = vmul.f32 %v5663, 1.442695
    %v5678 = vpow.pop %v5677
    %v5679 = vmul.f32 %v5664, 1.442695
    %v5680 = vpow.pop %v5679
    %v5681 = vmul.f32 %v5665, 1.442695
    %v5682 = vpow.pop %v5681
    %v5683 = vmul.f32 %v5666, 1.442695
    %v5684 = vpow.pop %v5683
    %v5685 = vmul.f32 %v5667, 1.442695
    %v5686 = vpow.pop %v5685
    %v5687 = vmul.f32 %v5668, 1.442695
    %v5688 = vpow.pop %v5687
    %v5689 = vmul.f32 %v5669, 1.442695
    %v5690 = vpow.pop %v5689
    %v5691 = vmul.f32 %v5670, 1.442695
    %v5692 = vpow.pop %v5691
    %v5693 = vmul.f32 %v5671, 1.442695
    %v5694 = vpow.pop %v5693
    %v5695 = vmul.f32 %v5672, 1.442695
    %v5696 = vpow.pop %v5695
    %v5697 = vadd.f32 %v5674, 1.0
    %v5698 = vadd.f32 %v5676, 1.0
    %v5699 = vadd.f32 %v5678, 1.0
    %v5700 = vadd.f32 %v5680, 1.0
    %v5701 = vadd.f32 %v5682, 1.0
    %v5702 = vadd.f32 %v5684, 1.0
    %v5703 = vadd.f32 %v5686, 1.0
    %v5704 = vadd.f32 %v5688, 1.0
    %v5705 = vadd.f32 %v5690, 1.0
    %v5706 = vadd.f32 %v5692, 1.0
    %v5707 = vadd.f32 %v5694, 1.0
    %v5708 = vadd.f32 %v5696, 1.0
    %v5709 = vrcp.pop %v5697
    %v5710 = vmul.f32 1.0, %v5709
    %v5711 = vrcp.pop %v5698
    %v5712 = vmul.f32 1.0, %v5711
    %v5713 = vrcp.pop %v5699
    %v5714 = vmul.f32 1.0, %v5713
    %v5715 = vrcp.pop %v5700
    %v5716 = vmul.f32 1.0, %v5715
    %v5717 = vrcp.pop %v5701
    %v5718 = vmul.f32 1.0, %v5717
    %v5719 = vrcp.pop %v5702
    %v5720 = vmul.f32 1.0, %v5719
    %v5721 = vrcp.pop %v5703
    %v5722 = vmul.f32 1.0, %v5721
    %v5723 = vrcp.pop %v5704
    %v5724 = vmul.f32 1.0, %v5723
    %v5725 = vrcp.pop %v5705
    %v5726 = vmul.f32 1.0, %v5725
    %v5727 = vrcp.pop %v5706
    %v5728 = vmul.f32 1.0, %v5727
    %v5729 = vrcp.pop %v5707
    %v5730 = vmul.f32 1.0, %v5729
    %v5731 = vrcp.pop %v5708
    %v5732 = vmul.f32 1.0, %v5731
    %v5733 = vadd.f32 %v4603, %v5456
    %v5734 = vadd.f32 %v4609, %v5462
    %v5735 = vadd.f32 %v4615, %v5468
    %v5736 = vadd.f32 %v4621, %v5474
    %v5737 = vadd.f32 %v4627, %v5480
    %v5738 = vadd.f32 %v4633, %v5486
    %v5739 = vadd.f32 %v4639, %v5492
    %v5740 = vadd.f32 %v4645, %v5498
    %v5741 = vadd.f32 %v4651, %v5504
    %v5742 = vadd.f32 %v4657, %v5510
    %v5743 = vadd.f32 %v4663, %v5516
    %v5744 = vadd.f32 %v4669, %v5522
    %v5745 = vxor.u32 %v5733, 2147483648
    %v5746 = vxor.u32 %v5734, 2147483648
    %v5747 = vxor.u32 %v5735, 2147483648
    %v5748 = vxor.u32 %v5736, 2147483648
    %v5749 = vxor.u32 %v5737, 2147483648
    %v5750 = vxor.u32 %v5738, 2147483648
    %v5751 = vxor.u32 %v5739, 2147483648
    %v5752 = vxor.u32 %v5740, 2147483648
    %v5753 = vxor.u32 %v5741, 2147483648
    %v5754 = vxor.u32 %v5742, 2147483648
    %v5755 = vxor.u32 %v5743, 2147483648
    %v5756 = vxor.u32 %v5744, 2147483648
    %v5757 = vmul.f32 %v5745, 1.442695
    %v5758 = vpow.pop %v5757
    %v5759 = vmul.f32 %v5746, 1.442695
    %v5760 = vpow.pop %v5759
    %v5761 = vmul.f32 %v5747, 1.442695
    %v5762 = vpow.pop %v5761
    %v5763 = vmul.f32 %v5748, 1.442695
    %v5764 = vpow.pop %v5763
    %v5765 = vmul.f32 %v5749, 1.442695
    %v5766 = vpow.pop %v5765
    %v5767 = vmul.f32 %v5750, 1.442695
    %v5768 = vpow.pop %v5767
    %v5769 = vmul.f32 %v5751, 1.442695
    %v5770 = vpow.pop %v5769
    %v5771 = vmul.f32 %v5752, 1.442695
    %v5772 = vpow.pop %v5771
    %v5773 = vmul.f32 %v5753, 1.442695
    %v5774 = vpow.pop %v5773
    %v5775 = vmul.f32 %v5754, 1.442695
    %v5776 = vpow.pop %v5775
    %v5777 = vmul.f32 %v5755, 1.442695
    %v5778 = vpow.pop %v5777
    %v5779 = vmul.f32 %v5756, 1.442695
    %v5780 = vpow.pop %v5779
    %v5781 = vadd.f32 %v5758, 1.0
    %v5782 = vadd.f32 %v5760, 1.0
    %v5783 = vadd.f32 %v5762, 1.0
    %v5784 = vadd.f32 %v5764, 1.0
    %v5785 = vadd.f32 %v5766, 1.0
    %v5786 = vadd.f32 %v5768, 1.0
    %v5787 = vadd.f32 %v5770, 1.0
    %v5788 = vadd.f32 %v5772, 1.0
    %v5789 = vadd.f32 %v5774, 1.0
    %v5790 = vadd.f32 %v5776, 1.0
    %v5791 = vadd.f32 %v5778, 1.0
    %v5792 = vadd.f32 %v5780, 1.0
    %v5793 = vrcp.pop %v5781
    %v5794 = vmul.f32 1.0, %v5793
    %v5795 = vrcp.pop %v5782
    %v5796 = vmul.f32 1.0, %v5795
    %v5797 = vrcp.pop %v5783
    %v5798 = vmul.f32 1.0, %v5797
    %v5799 = vrcp.pop %v5784
    %v5800 = vmul.f32 1.0, %v5799
    %v5801 = vrcp.pop %v5785
    %v5802 = vmul.f32 1.0, %v5801
    %v5803 = vrcp.pop %v5786
    %v5804 = vmul.f32 1.0, %v5803
    %v5805 = vrcp.pop %v5787
    %v5806 = vmul.f32 1.0, %v5805
    %v5807 = vrcp.pop %v5788
    %v5808 = vmul.f32 1.0, %v5807
    %v5809 = vrcp.pop %v5789
    %v5810 = vmul.f32 1.0, %v5809
    %v5811 = vrcp.pop %v5790
    %v5812 = vmul.f32 1.0, %v5811
    %v5813 = vrcp.pop %v5791
    %v5814 = vmul.f32 1.0, %v5813
    %v5815 = vrcp.pop %v5792
    %v5816 = vmul.f32 1.0, %v5815
    %v5817 = vmul.f32 %v5710, %v5591
    %v5818 = vmul.f32 %v5712, %v5596
    %v5819 = vmul.f32 %v5714, %v5601
    %v5820 = vmul.f32 %v5716, %v5606
    %v5821 = vmul.f32 %v5718, %v5611
    %v5822 = vmul.f32 %v5720, %v5616
    %v5823 = vmul.f32 %v5722, %v5621
    %v5824 = vmul.f32 %v5724, %v5626
    %v5825 = vmul.f32 %v5726, %v5631
    %v5826 = vmul.f32 %v5728, %v5636
    %v5827 = vmul.f32 %v5730, %v5641
    %v5828 = vmul.f32 %v5732, %v5646
    %v5829 = vadd.f32 %v4738, %v5817
    %v5830 = vadd.f32 %v4743, %v5818
    %v5831 = vadd.f32 %v4748, %v5819
    %v5832 = vadd.f32 %v4753, %v5820
    %v5833 = vadd.f32 %v4758, %v5821
    %v5834 = vadd.f32 %v4763, %v5822
    %v5835 = vadd.f32 %v4768, %v5823
    %v5836 = vadd.f32 %v4773, %v5824
    %v5837 = vadd.f32 %v4778, %v5825
    %v5838 = vadd.f32 %v4783, %v5826
    %v5839 = vadd.f32 %v4788, %v5827
    %v5840 = vadd.f32 %v4793, %v5828
    %v5841 = vtanh.pop %v5829
    %v5842 = vtanh.pop %v5830
    %v5843 = vtanh.pop %v5831
    %v5844 = vtanh.pop %v5832
    %v5845 = vtanh.pop %v5833
    %v5846 = vtanh.pop %v5834
    %v5847 = vtanh.pop %v5835
    %v5848 = vtanh.pop %v5836
    %v5849 = vtanh.pop %v5837
    %v5850 = vtanh.pop %v5838
    %v5851 = vtanh.pop %v5839
    %v5852 = vtanh.pop %v5840
    %v5853 = vsub.f32 1.0, %v5794
    %v5854 = vsub.f32 1.0, %v5796
    %v5855 = vsub.f32 1.0, %v5798
    %v5856 = vsub.f32 1.0, %v5800
    %v5857 = vsub.f32 1.0, %v5802
    %v5858 = vsub.f32 1.0, %v5804
    %v5859 = vsub.f32 1.0, %v5806
    %v5860 = vsub.f32 1.0, %v5808
    %v5861 = vsub.f32 1.0, %v5810
    %v5862 = vsub.f32 1.0, %v5812
    %v5863 = vsub.f32 1.0, %v5814
    %v5864 = vsub.f32 1.0, %v5816
    %v5865 = vmul.f32 %v5853, %v5841
    %v5866 = vmul.f32 %v5854, %v5842
    %v5867 = vmul.f32 %v5855, %v5843
    %v5868 = vmul.f32 %v5856, %v5844
    %v5869 = vmul.f32 %v5857, %v5845
    %v5870 = vmul.f32 %v5858, %v5846
    %v5871 = vmul.f32 %v5859, %v5847
    %v5872 = vmul.f32 %v5860, %v5848
    %v5873 = vmul.f32 %v5861, %v5849
    %v5874 = vmul.f32 %v5862, %v5850
    %v5875 = vmul.f32 %v5863, %v5851
    %v5876 = vmul.f32 %v5864, %v5852
    %v5877 = vmul.f32 %v5794, %v5363
    %v5878 = vmul.f32 %v5796, %v5364
    %v5879 = vmul.f32 %v5798, %v5365
    %v5880 = vmul.f32 %v5800, %v5366
    %v5881 = vmul.f32 %v5802, %v5367
    %v5882 = vmul.f32 %v5804, %v5368
    %v5883 = vmul.f32 %v5806, %v5369
    %v5884 = vmul.f32 %v5808, %v5370
    %v5885 = vmul.f32 %v5810, %v5371
    %v5886 = vmul.f32 %v5812, %v5372
    %v5887 = vmul.f32 %v5814, %v5373
    %v5888 = vmul.f32 %v5816, %v5374
    %v5889 = vadd.f32 %v5865, %v5877
    %v5890 = vadd.f32 %v5866, %v5878
    %v5891 = vadd.f32 %v5867, %v5879
    %v5892 = vadd.f32 %v5868, %v5880
    %v5893 = vadd.f32 %v5869, %v5881
    %v5894 = vadd.f32 %v5870, %v5882
    %v5895 = vadd.f32 %v5871, %v5883
    %v5896 = vadd.f32 %v5872, %v5884
    %v5897 = vadd.f32 %v5873, %v5885
    %v5898 = vadd.f32 %v5874, %v5886
    %v5899 = vadd.f32 %v5875, %v5887
    %v5900 = vadd.f32 %v5876, %v5888
    %5901 = vst [vmem:[#allocation2 + $0x60] sm:$0xff] %v5889
    %5902 = vst [vmem:[#allocation2 + $0x68] sm:$0xff] %v5890
    %5903 = vst [vmem:[#allocation2 + $0x70] sm:$0xff] %v5891
    %5904 = vst [vmem:[#allocation2 + $0x78] sm:$0xff] %v5892
    %5905 = vst [vmem:[#allocation2 + $0x80] sm:$0xff] %v5893
    %5906 = vst [vmem:[#allocation2 + $0x88] sm:$0xff] %v5894
    %5907 = vst [vmem:[#allocation2 + $0x90] sm:$0xff] %v5895
    %5908 = vst [vmem:[#allocation2 + $0x98] sm:$0xff] %v5896
    %5909 = vst [vmem:[#allocation2 + $0xa0] sm:$0xff] %v5897
    %5910 = vst [vmem:[#allocation2 + $0xa8] sm:$0xff] %v5898
    %5911 = vst [vmem:[#allocation2 + $0xb0] sm:$0xff] %v5899
    %5912 = vst [vmem:[#allocation2 + $0xb8] sm:$0xff] %v5900
    %5913 = vmatprep.subr.mxu0 %v4842
    %5914 = vmatpush1.msra.mxu0 %v4841
    %5915 = vmatprep.subr.mxu0 %v4839
    %5916 = vmatpush1.msra.mxu0 %v4838
    %5917 = vmatprep.subr.mxu0 %v4836
    %5918 = vmatpush1.msra.mxu0 %v4835
    %5919 = vmatprep.subr.mxu0 %v4833
    %5920 = vmatpush1.msra.mxu0 %v4832
    %5921 = vmatprep.subr.mxu0 %v4830
    %5922 = vmatpush1.msra.mxu0 %v4829
    %5923 = vmatprep.subr.mxu0 %v4827
    %5924 = vmatpush1.msra.mxu0 %v4826
    %5925 = vmatprep.subr.mxu0 %v4824
    %5926 = vmatpush1.msra.mxu0 %v4823
    %5927 = vmatprep.subr.mxu0 %v4821
    %5928 = vmatpush1.msra.mxu0 %v4820
    %5929 = vmatprep.subr.mxu0 %v4818
    %5930 = vmatpush1.msra.mxu0 %v4817
    %5931 = vmatprep.subr.mxu0 %v4815
    %5932 = vmatpush1.msra.mxu0 %v4814
    %5933 = vmatprep.subr.mxu0 %v4812
    %5934 = vmatpush1.msra.mxu0 %v4811
    %5935 = vmatprep.subr.mxu0 %v4809
    %5936 = vmatpush1.msra.mxu0 %v4808
    %5937 = vmatprep.subr.mxu0 %v4806
    %5938 = vmatpush1.msra.mxu0 %v4805
    %5939 = vmatprep.subr.mxu0 %v4803
    %5940 = vmatpush1.msra.mxu0 %v4802
    %5941 = vmatprep.subr.mxu0 %v4800
    %5942 = vmatpush1.msra.mxu0 %v4799
    %5943 = vmatprep.subr.mxu0 %v4797
    %5944 = vmatpush1.msra.mxu0 %v4796
    %5945 = vmatprep.subr.mxu0 0.0
    %5946 = vmatpush2.msra.mxu0 0.0
    %5947 = vmatprep.subr.mxu0 0.0
    %5948 = vmatpush2.msra.mxu0 0.0
    %5949 = vmatprep.subr.mxu0 0.0
    %5950 = vmatpush2.msra.mxu0 0.0
    %5951 = vmatprep.subr.mxu0 0.0
    %5952 = vmatpush2.msra.mxu0 0.0
    %5953 = vmatprep.subr.mxu0 0.0
    %5954 = vmatpush2.msra.mxu0 0.0
    %5955 = vmatprep.subr.mxu0 0.0
    %5956 = vmatpush2.msra.mxu0 0.0
    %5957 = vmatprep.subr.mxu0 0.0
    %5958 = vmatpush2.msra.mxu0 0.0
    %5959 = vmatprep.subr.mxu0 0.0
    %5960 = vmatpush2.msra.mxu0 0.0
    %5961 = vmatprep.subr.mxu0 0.0
    %5962 = vmatpush2.msra.mxu0 0.0
    %5963 = vmatprep.subr.mxu0 0.0
    %5964 = vmatpush2.msra.mxu0 0.0
    %5965 = vmatprep.subr.mxu0 0.0
    %5966 = vmatpush2.msra.mxu0 0.0
    %5967 = vmatprep.subr.mxu0 0.0
    %5968 = vmatpush2.msra.mxu0 0.0
    %5969 = vmatprep.subr.mxu0 0.0
    %5970 = vmatpush2.msra.mxu0 0.0
    %5971 = vmatprep.subr.mxu0 0.0
    %5972 = vmatpush2.msra.mxu0 0.0
    %5973 = vmatprep.subr.mxu0 0.0
    %5974 = vmatpush2.msra.mxu0 0.0
    %5975 = vmatprep.subr.mxu0 0.0
    %5976 = vmatpush2.msra.mxu0 0.0
    %5977 = vmatprep.mubr.f32.mxu0 0.0
    %5978 = vmatmul.mubr.f32.gmra.mxu0 %v5889
    %v5979 = vpop.f32.mrf.mxu0
    %v5980 = vadd.f32 %v4849, %v5979
    %v5981 = vpop.f32.mrf.mxu0
    %v5982 = vadd.f32 %v4853, %v5981
    %5983 = vmatprep.mubr.f32.mxu0 0.0
    %5984 = vmatmul.mubr.f32.gmra.mxu0 %v5890
    %v5985 = vpop.f32.mrf.mxu0
    %v5986 = vadd.f32 %v4849, %v5985
    %v5987 = vpop.f32.mrf.mxu0
    %v5988 = vadd.f32 %v4853, %v5987
    %5989 = vmatprep.mubr.f32.mxu0 0.0
    %5990 = vmatmul.mubr.f32.gmra.mxu0 %v5891
    %v5991 = vpop.f32.mrf.mxu0
    %v5992 = vadd.f32 %v4849, %v5991
    %v5993 = vpop.f32.mrf.mxu0
    %v5994 = vadd.f32 %v4853, %v5993
    %5995 = vmatprep.mubr.f32.mxu0 0.0
    %5996 = vmatmul.mubr.f32.gmra.mxu0 %v5892
    %v5997 = vpop.f32.mrf.mxu0
    %v5998 = vadd.f32 %v4849, %v5997
    %v5999 = vpop.f32.mrf.mxu0
    %v6000 = vadd.f32 %v4853, %v5999
    %6001 = vmatprep.mubr.f32.mxu0 0.0
    %6002 = vmatmul.mubr.f32.gmra.mxu0 %v5893
    %v6003 = vpop.f32.mrf.mxu0
    %v6004 = vadd.f32 %v4849, %v6003
    %v6005 = vpop.f32.mrf.mxu0
    %v6006 = vadd.f32 %v4853, %v6005
    %6007 = vmatprep.mubr.f32.mxu0 0.0
    %6008 = vmatmul.mubr.f32.gmra.mxu0 %v5894
    %v6009 = vpop.f32.mrf.mxu0
    %v6010 = vadd.f32 %v4849, %v6009
    %v6011 = vpop.f32.mrf.mxu0
    %v6012 = vadd.f32 %v4853, %v6011
    %6013 = vmatprep.mubr.f32.mxu0 0.0
    %6014 = vmatmul.mubr.f32.gmra.mxu0 %v5895
    %v6015 = vpop.f32.mrf.mxu0
    %v6016 = vadd.f32 %v4849, %v6015
    %v6017 = vpop.f32.mrf.mxu0
    %v6018 = vadd.f32 %v4853, %v6017
    %6019 = vmatprep.mubr.f32.mxu0 0.0
    %6020 = vmatmul.mubr.f32.gmra.mxu0 %v5896
    %v6021 = vpop.f32.mrf.mxu0
    %v6022 = vadd.f32 %v4849, %v6021
    %v6023 = vpop.f32.mrf.mxu0
    %v6024 = vadd.f32 %v4853, %v6023
    %6025 = vmatprep.mubr.f32.mxu0 0.0
    %6026 = vmatmul.mubr.f32.gmra.mxu0 %v5897
    %v6027 = vpop.f32.mrf.mxu0
    %v6028 = vadd.f32 %v4849, %v6027
    %v6029 = vpop.f32.mrf.mxu0
    %v6030 = vadd.f32 %v4853, %v6029
    %6031 = vmatprep.mubr.f32.mxu0 0.0
    %6032 = vmatmul.mubr.f32.gmra.mxu0 %v5898
    %v6033 = vpop.f32.mrf.mxu0
    %v6034 = vadd.f32 %v4849, %v6033
    %v6035 = vpop.f32.mrf.mxu0
    %v6036 = vadd.f32 %v4853, %v6035
    %6037 = vmatprep.mubr.f32.mxu0 0.0
    %6038 = vmatmul.mubr.f32.gmra.mxu0 %v5899
    %v6039 = vpop.f32.mrf.mxu0
    %v6040 = vadd.f32 %v4849, %v6039
    %v6041 = vpop.f32.mrf.mxu0
    %v6042 = vadd.f32 %v4853, %v6041
    %6043 = vmatprep.mubr.f32.mxu0 0.0
    %6044 = vmatmul.mubr.f32.gmra.mxu0 %v5900
    %v6045 = vpop.f32.mrf.mxu0
    %v6046 = vadd.f32 %v4849, %v6045
    %v6047 = vpop.f32.mrf.mxu0
    %v6048 = vadd.f32 %v4853, %v6047
    %6049 = vdwg.mxu0
    %6050 = vmatprep.subr.mxu0 0.0
    %6051 = vmatpush1.msra.mxu0 %v4843
    %6052 = vmatprep.subr.mxu0 0.0
    %6053 = vmatpush1.msra.mxu0 %v4840
    %6054 = vmatprep.subr.mxu0 0.0
    %6055 = vmatpush1.msra.mxu0 %v4837
    %6056 = vmatprep.subr.mxu0 0.0
    %6057 = vmatpush1.msra.mxu0 %v4834
    %6058 = vmatprep.subr.mxu0 0.0
    %6059 = vmatpush1.msra.mxu0 %v4831
    %6060 = vmatprep.subr.mxu0 0.0
    %6061 = vmatpush1.msra.mxu0 %v4828
    %6062 = vmatprep.subr.mxu0 0.0
    %6063 = vmatpush1.msra.mxu0 %v4825
    %6064 = vmatprep.subr.mxu0 0.0
    %6065 = vmatpush1.msra.mxu0 %v4822
    %6066 = vmatprep.subr.mxu0 0.0
    %6067 = vmatpush1.msra.mxu0 %v4819
    %6068 = vmatprep.subr.mxu0 0.0
    %6069 = vmatpush1.msra.mxu0 %v4816
    %6070 = vmatprep.subr.mxu0 0.0
    %6071 = vmatpush1.msra.mxu0 %v4813
    %6072 = vmatprep.subr.mxu0 0.0
    %6073 = vmatpush1.msra.mxu0 %v4810
    %6074 = vmatprep.subr.mxu0 0.0
    %6075 = vmatpush1.msra.mxu0 %v4807
    %6076 = vmatprep.subr.mxu0 0.0
    %6077 = vmatpush1.msra.mxu0 %v4804
    %6078 = vmatprep.subr.mxu0 0.0
    %6079 = vmatpush1.msra.mxu0 %v4801
    %6080 = vmatprep.subr.mxu0 0.0
    %6081 = vmatpush1.msra.mxu0 %v4798
    %6082 = vmatprep.subr.mxu0 0.0
    %6083 = vmatpush2.msra.mxu0 0.0
    %6084 = vmatprep.subr.mxu0 0.0
    %6085 = vmatpush2.msra.mxu0 0.0
    %6086 = vmatprep.subr.mxu0 0.0
    %6087 = vmatpush2.msra.mxu0 0.0
    %6088 = vmatprep.subr.mxu0 0.0
    %6089 = vmatpush2.msra.mxu0 0.0
    %6090 = vmatprep.subr.mxu0 0.0
    %6091 = vmatpush2.msra.mxu0 0.0
    %6092 = vmatprep.subr.mxu0 0.0
    %6093 = vmatpush2.msra.mxu0 0.0
    %6094 = vmatprep.subr.mxu0 0.0
    %6095 = vmatpush2.msra.mxu0 0.0
    %6096 = vmatprep.subr.mxu0 0.0
    %6097 = vmatpush2.msra.mxu0 0.0
    %6098 = vmatprep.subr.mxu0 0.0
    %6099 = vmatpush2.msra.mxu0 0.0
    %6100 = vmatprep.subr.mxu0 0.0
    %6101 = vmatpush2.msra.mxu0 0.0
    %6102 = vmatprep.subr.mxu0 0.0
    %6103 = vmatpush2.msra.mxu0 0.0
    %6104 = vmatprep.subr.mxu0 0.0
    %6105 = vmatpush2.msra.mxu0 0.0
    %6106 = vmatprep.subr.mxu0 0.0
    %6107 = vmatpush2.msra.mxu0 0.0
    %6108 = vmatprep.subr.mxu0 0.0
    %6109 = vmatpush2.msra.mxu0 0.0
    %6110 = vmatprep.subr.mxu0 0.0
    %6111 = vmatpush2.msra.mxu0 0.0
    %6112 = vmatprep.subr.mxu0 0.0
    %6113 = vmatpush2.msra.mxu0 0.0
    %6114 = vmatprep.mubr.f32.mxu0 0.0
    %6115 = vmatmul.mubr.f32.gmra.mxu0 %v5889
    %v6116 = vpop.f32.mrf.mxu0
    %v6117 = vadd.f32 %v4857, %v6116
    %v6118 = vpop.f32.mrf.mxu0
    %6119 = vmatprep.mubr.f32.mxu0 0.0
    %6120 = vmatmul.mubr.f32.gmra.mxu0 %v5890
    %v6121 = vpop.f32.mrf.mxu0
    %v6122 = vadd.f32 %v4857, %v6121
    %v6123 = vpop.f32.mrf.mxu0
    %6124 = vmatprep.mubr.f32.mxu0 0.0
    %6125 = vmatmul.mubr.f32.gmra.mxu0 %v5891
    %v6126 = vpop.f32.mrf.mxu0
    %v6127 = vadd.f32 %v4857, %v6126
    %v6128 = vpop.f32.mrf.mxu0
    %6129 = vmatprep.mubr.f32.mxu0 0.0
    %6130 = vmatmul.mubr.f32.gmra.mxu0 %v5892
    %v6131 = vpop.f32.mrf.mxu0
    %v6132 = vadd.f32 %v4857, %v6131
    %v6133 = vpop.f32.mrf.mxu0
    %6134 = vmatprep.mubr.f32.mxu0 0.0
    %6135 = vmatmul.mubr.f32.gmra.mxu0 %v5893
    %v6136 = vpop.f32.mrf.mxu0
    %v6137 = vadd.f32 %v4857, %v6136
    %v6138 = vpop.f32.mrf.mxu0
    %6139 = vmatprep.mubr.f32.mxu0 0.0
    %6140 = vmatmul.mubr.f32.gmra.mxu0 %v5894
    %v6141 = vpop.f32.mrf.mxu0
    %v6142 = vadd.f32 %v4857, %v6141
    %v6143 = vpop.f32.mrf.mxu0
    %6144 = vmatprep.mubr.f32.mxu0 0.0
    %6145 = vmatmul.mubr.f32.gmra.mxu0 %v5895
    %v6146 = vpop.f32.mrf.mxu0
    %v6147 = vadd.f32 %v4857, %v6146
    %v6148 = vpop.f32.mrf.mxu0
    %6149 = vmatprep.mubr.f32.mxu0 0.0
    %6150 = vmatmul.mubr.f32.gmra.mxu0 %v5896
    %v6151 = vpop.f32.mrf.mxu0
    %v6152 = vadd.f32 %v4857, %v6151
    %v6153 = vpop.f32.mrf.mxu0
    %6154 = vmatprep.mubr.f32.mxu0 0.0
    %6155 = vmatmul.mubr.f32.gmra.mxu0 %v5897
    %v6156 = vpop.f32.mrf.mxu0
    %v6157 = vadd.f32 %v4857, %v6156
    %v6158 = vpop.f32.mrf.mxu0
    %6159 = vmatprep.mubr.f32.mxu0 0.0
    %6160 = vmatmul.mubr.f32.gmra.mxu0 %v5898
    %v6161 = vpop.f32.mrf.mxu0
    %v6162 = vadd.f32 %v4857, %v6161
    %v6163 = vpop.f32.mrf.mxu0
    %6164 = vmatprep.mubr.f32.mxu0 0.0
    %6165 = vmatmul.mubr.f32.gmra.mxu0 %v5899
    %v6166 = vpop.f32.mrf.mxu0
    %v6167 = vadd.f32 %v4857, %v6166
    %v6168 = vpop.f32.mrf.mxu0
    %6169 = vmatprep.mubr.f32.mxu0 0.0
    %6170 = vmatmul.mubr.f32.gmra.mxu0 %v5900
    %v6171 = vpop.f32.mrf.mxu0
    %v6172 = vadd.f32 %v4857, %v6171
    %v6173 = vpop.f32.mrf.mxu0
    %6174 = vdwg.mxu0
    %v6175 = vadd.f32 %v4601, %v5980
    %v6176 = vadd.f32 %v4607, %v5986
    %v6177 = vadd.f32 %v4613, %v5992
    %v6178 = vadd.f32 %v4619, %v5998
    %v6179 = vadd.f32 %v4625, %v6004
    %v6180 = vadd.f32 %v4631, %v6010
    %v6181 = vadd.f32 %v4637, %v6016
    %v6182 = vadd.f32 %v4643, %v6022
    %v6183 = vadd.f32 %v4649, %v6028
    %v6184 = vadd.f32 %v4655, %v6034
    %v6185 = vadd.f32 %v4661, %v6040
    %v6186 = vadd.f32 %v4667, %v6046
    %v6187 = vxor.u32 %v6175, 2147483648
    %v6188 = vxor.u32 %v6176, 2147483648
    %v6189 = vxor.u32 %v6177, 2147483648
    %v6190 = vxor.u32 %v6178, 2147483648
    %v6191 = vxor.u32 %v6179, 2147483648
    %v6192 = vxor.u32 %v6180, 2147483648
    %v6193 = vxor.u32 %v6181, 2147483648
    %v6194 = vxor.u32 %v6182, 2147483648
    %v6195 = vxor.u32 %v6183, 2147483648
    %v6196 = vxor.u32 %v6184, 2147483648
    %v6197 = vxor.u32 %v6185, 2147483648
    %v6198 = vxor.u32 %v6186, 2147483648
    %v6199 = vmul.f32 %v6187, 1.442695
    %v6200 = vpow.pop %v6199
    %v6201 = vmul.f32 %v6188, 1.442695
    %v6202 = vpow.pop %v6201
    %v6203 = vmul.f32 %v6189, 1.442695
    %v6204 = vpow.pop %v6203
    %v6205 = vmul.f32 %v6190, 1.442695
    %v6206 = vpow.pop %v6205
    %v6207 = vmul.f32 %v6191, 1.442695
    %v6208 = vpow.pop %v6207
    %v6209 = vmul.f32 %v6192, 1.442695
    %v6210 = vpow.pop %v6209
    %v6211 = vmul.f32 %v6193, 1.442695
    %v6212 = vpow.pop %v6211
    %v6213 = vmul.f32 %v6194, 1.442695
    %v6214 = vpow.pop %v6213
    %v6215 = vmul.f32 %v6195, 1.442695
    %v6216 = vpow.pop %v6215
    %v6217 = vmul.f32 %v6196, 1.442695
    %v6218 = vpow.pop %v6217
    %v6219 = vmul.f32 %v6197, 1.442695
    %v6220 = vpow.pop %v6219
    %v6221 = vmul.f32 %v6198, 1.442695
    %v6222 = vpow.pop %v6221
    %v6223 = vadd.f32 %v6200, 1.0
    %v6224 = vadd.f32 %v6202, 1.0
    %v6225 = vadd.f32 %v6204, 1.0
    %v6226 = vadd.f32 %v6206, 1.0
    %v6227 = vadd.f32 %v6208, 1.0
    %v6228 = vadd.f32 %v6210, 1.0
    %v6229 = vadd.f32 %v6212, 1.0
    %v6230 = vadd.f32 %v6214, 1.0
    %v6231 = vadd.f32 %v6216, 1.0
    %v6232 = vadd.f32 %v6218, 1.0
    %v6233 = vadd.f32 %v6220, 1.0
    %v6234 = vadd.f32 %v6222, 1.0
    %v6235 = vrcp.pop %v6223
    %v6236 = vmul.f32 1.0, %v6235
    %v6237 = vrcp.pop %v6224
    %v6238 = vmul.f32 1.0, %v6237
    %v6239 = vrcp.pop %v6225
    %v6240 = vmul.f32 1.0, %v6239
    %v6241 = vrcp.pop %v6226
    %v6242 = vmul.f32 1.0, %v6241
    %v6243 = vrcp.pop %v6227
    %v6244 = vmul.f32 1.0, %v6243
    %v6245 = vrcp.pop %v6228
    %v6246 = vmul.f32 1.0, %v6245
    %v6247 = vrcp.pop %v6229
    %v6248 = vmul.f32 1.0, %v6247
    %v6249 = vrcp.pop %v6230
    %v6250 = vmul.f32 1.0, %v6249
    %v6251 = vrcp.pop %v6231
    %v6252 = vmul.f32 1.0, %v6251
    %v6253 = vrcp.pop %v6232
    %v6254 = vmul.f32 1.0, %v6253
    %v6255 = vrcp.pop %v6233
    %v6256 = vmul.f32 1.0, %v6255
    %v6257 = vrcp.pop %v6234
    %v6258 = vmul.f32 1.0, %v6257
    %v6259 = vadd.f32 %v4603, %v5982
    %v6260 = vadd.f32 %v4609, %v5988
    %v6261 = vadd.f32 %v4615, %v5994
    %v6262 = vadd.f32 %v4621, %v6000
    %v6263 = vadd.f32 %v4627, %v6006
    %v6264 = vadd.f32 %v4633, %v6012
    %v6265 = vadd.f32 %v4639, %v6018
    %v6266 = vadd.f32 %v4645, %v6024
    %v6267 = vadd.f32 %v4651, %v6030
    %v6268 = vadd.f32 %v4657, %v6036
    %v6269 = vadd.f32 %v4663, %v6042
    %v6270 = vadd.f32 %v4669, %v6048
    %v6271 = vxor.u32 %v6259, 2147483648
    %v6272 = vxor.u32 %v6260, 2147483648
    %v6273 = vxor.u32 %v6261, 2147483648
    %v6274 = vxor.u32 %v6262, 2147483648
    %v6275 = vxor.u32 %v6263, 2147483648
    %v6276 = vxor.u32 %v6264, 2147483648
    %v6277 = vxor.u32 %v6265, 2147483648
    %v6278 = vxor.u32 %v6266, 2147483648
    %v6279 = vxor.u32 %v6267, 2147483648
    %v6280 = vxor.u32 %v6268, 2147483648
    %v6281 = vxor.u32 %v6269, 2147483648
    %v6282 = vxor.u32 %v6270, 2147483648
    %v6283 = vmul.f32 %v6271, 1.442695
    %v6284 = vpow.pop %v6283
    %v6285 = vmul.f32 %v6272, 1.442695
    %v6286 = vpow.pop %v6285
    %v6287 = vmul.f32 %v6273, 1.442695
    %v6288 = vpow.pop %v6287
    %v6289 = vmul.f32 %v6274, 1.442695
    %v6290 = vpow.pop %v6289
    %v6291 = vmul.f32 %v6275, 1.442695
    %v6292 = vpow.pop %v6291
    %v6293 = vmul.f32 %v6276, 1.442695
    %v6294 = vpow.pop %v6293
    %v6295 = vmul.f32 %v6277, 1.442695
    %v6296 = vpow.pop %v6295
    %v6297 = vmul.f32 %v6278, 1.442695
    %v6298 = vpow.pop %v6297
    %v6299 = vmul.f32 %v6279, 1.442695
    %v6300 = vpow.pop %v6299
    %v6301 = vmul.f32 %v6280, 1.442695
    %v6302 = vpow.pop %v6301
    %v6303 = vmul.f32 %v6281, 1.442695
    %v6304 = vpow.pop %v6303
    %v6305 = vmul.f32 %v6282, 1.442695
    %v6306 = vpow.pop %v6305
    %v6307 = vadd.f32 %v6284, 1.0
    %v6308 = vadd.f32 %v6286, 1.0
    %v6309 = vadd.f32 %v6288, 1.0
    %v6310 = vadd.f32 %v6290, 1.0
    %v6311 = vadd.f32 %v6292, 1.0
    %v6312 = vadd.f32 %v6294, 1.0
    %v6313 = vadd.f32 %v6296, 1.0
    %v6314 = vadd.f32 %v6298, 1.0
    %v6315 = vadd.f32 %v6300, 1.0
    %v6316 = vadd.f32 %v6302, 1.0
    %v6317 = vadd.f32 %v6304, 1.0
    %v6318 = vadd.f32 %v6306, 1.0
    %v6319 = vrcp.pop %v6307
    %v6320 = vmul.f32 1.0, %v6319
    %v6321 = vrcp.pop %v6308
    %v6322 = vmul.f32 1.0, %v6321
    %v6323 = vrcp.pop %v6309
    %v6324 = vmul.f32 1.0, %v6323
    %v6325 = vrcp.pop %v6310
    %v6326 = vmul.f32 1.0, %v6325
    %v6327 = vrcp.pop %v6311
    %v6328 = vmul.f32 1.0, %v6327
    %v6329 = vrcp.pop %v6312
    %v6330 = vmul.f32 1.0, %v6329
    %v6331 = vrcp.pop %v6313
    %v6332 = vmul.f32 1.0, %v6331
    %v6333 = vrcp.pop %v6314
    %v6334 = vmul.f32 1.0, %v6333
    %v6335 = vrcp.pop %v6315
    %v6336 = vmul.f32 1.0, %v6335
    %v6337 = vrcp.pop %v6316
    %v6338 = vmul.f32 1.0, %v6337
    %v6339 = vrcp.pop %v6317
    %v6340 = vmul.f32 1.0, %v6339
    %v6341 = vrcp.pop %v6318
    %v6342 = vmul.f32 1.0, %v6341
    %v6343 = vmul.f32 %v6236, %v6117
    %v6344 = vmul.f32 %v6238, %v6122
    %v6345 = vmul.f32 %v6240, %v6127
    %v6346 = vmul.f32 %v6242, %v6132
    %v6347 = vmul.f32 %v6244, %v6137
    %v6348 = vmul.f32 %v6246, %v6142
    %v6349 = vmul.f32 %v6248, %v6147
    %v6350 = vmul.f32 %v6250, %v6152
    %v6351 = vmul.f32 %v6252, %v6157
    %v6352 = vmul.f32 %v6254, %v6162
    %v6353 = vmul.f32 %v6256, %v6167
    %v6354 = vmul.f32 %v6258, %v6172
    %v6355 = vadd.f32 %v4738, %v6343
    %v6356 = vadd.f32 %v4743, %v6344
    %v6357 = vadd.f32 %v4748, %v6345
    %v6358 = vadd.f32 %v4753, %v6346
    %v6359 = vadd.f32 %v4758, %v6347
    %v6360 = vadd.f32 %v4763, %v6348
    %v6361 = vadd.f32 %v4768, %v6349
    %v6362 = vadd.f32 %v4773, %v6350
    %v6363 = vadd.f32 %v4778, %v6351
    %v6364 = vadd.f32 %v4783, %v6352
    %v6365 = vadd.f32 %v4788, %v6353
    %v6366 = vadd.f32 %v4793, %v6354
    %v6367 = vtanh.pop %v6355
    %v6368 = vtanh.pop %v6356
    %v6369 = vtanh.pop %v6357
    %v6370 = vtanh.pop %v6358
    %v6371 = vtanh.pop %v6359
    %v6372 = vtanh.pop %v6360
    %v6373 = vtanh.pop %v6361
    %v6374 = vtanh.pop %v6362
    %v6375 = vtanh.pop %v6363
    %v6376 = vtanh.pop %v6364
    %v6377 = vtanh.pop %v6365
    %v6378 = vtanh.pop %v6366
    %v6379 = vsub.f32 1.0, %v6320
    %v6380 = vsub.f32 1.0, %v6322
    %v6381 = vsub.f32 1.0, %v6324
    %v6382 = vsub.f32 1.0, %v6326
    %v6383 = vsub.f32 1.0, %v6328
    %v6384 = vsub.f32 1.0, %v6330
    %v6385 = vsub.f32 1.0, %v6332
    %v6386 = vsub.f32 1.0, %v6334
    %v6387 = vsub.f32 1.0, %v6336
    %v6388 = vsub.f32 1.0, %v6338
    %v6389 = vsub.f32 1.0, %v6340
    %v6390 = vsub.f32 1.0, %v6342
    %v6391 = vmul.f32 %v6379, %v6367
    %v6392 = vmul.f32 %v6380, %v6368
    %v6393 = vmul.f32 %v6381, %v6369
    %v6394 = vmul.f32 %v6382, %v6370
    %v6395 = vmul.f32 %v6383, %v6371
    %v6396 = vmul.f32 %v6384, %v6372
    %v6397 = vmul.f32 %v6385, %v6373
    %v6398 = vmul.f32 %v6386, %v6374
    %v6399 = vmul.f32 %v6387, %v6375
    %v6400 = vmul.f32 %v6388, %v6376
    %v6401 = vmul.f32 %v6389, %v6377
    %v6402 = vmul.f32 %v6390, %v6378
    %v6403 = vmul.f32 %v6320, %v5889
    %v6404 = vmul.f32 %v6322, %v5890
    %v6405 = vmul.f32 %v6324, %v5891
    %v6406 = vmul.f32 %v6326, %v5892
    %v6407 = vmul.f32 %v6328, %v5893
    %v6408 = vmul.f32 %v6330, %v5894
    %v6409 = vmul.f32 %v6332, %v5895
    %v6410 = vmul.f32 %v6334, %v5896
    %v6411 = vmul.f32 %v6336, %v5897
    %v6412 = vmul.f32 %v6338, %v5898
    %v6413 = vmul.f32 %v6340, %v5899
    %v6414 = vmul.f32 %v6342, %v5900
    %v6415 = vadd.f32 %v6391, %v6403
    %v6416 = vadd.f32 %v6392, %v6404
    %v6417 = vadd.f32 %v6393, %v6405
    %v6418 = vadd.f32 %v6394, %v6406
    %v6419 = vadd.f32 %v6395, %v6407
    %v6420 = vadd.f32 %v6396, %v6408
    %v6421 = vadd.f32 %v6397, %v6409
    %v6422 = vadd.f32 %v6398, %v6410
    %v6423 = vadd.f32 %v6399, %v6411
    %v6424 = vadd.f32 %v6400, %v6412
    %v6425 = vadd.f32 %v6401, %v6413
    %v6426 = vadd.f32 %v6402, %v6414
    %6427 = vst [vmem:[#allocation2 + $0xc0] sm:$0xff] %v6415
    %6428 = vst [vmem:[#allocation2 + $0xc8] sm:$0xff] %v6416
    %6429 = vst [vmem:[#allocation2 + $0xd0] sm:$0xff] %v6417
    %6430 = vst [vmem:[#allocation2 + $0xd8] sm:$0xff] %v6418
    %6431 = vst [vmem:[#allocation2 + $0xe0] sm:$0xff] %v6419
    %6432 = vst [vmem:[#allocation2 + $0xe8] sm:$0xff] %v6420
    %6433 = vst [vmem:[#allocation2 + $0xf0] sm:$0xff] %v6421
    %6434 = vst [vmem:[#allocation2 + $0xf8] sm:$0xff] %v6422
    %6435 = vst [vmem:[#allocation2 + $0x100] sm:$0xff] %v6423
    %6436 = vst [vmem:[#allocation2 + $0x108] sm:$0xff] %v6424
    %6437 = vst [vmem:[#allocation2 + $0x110] sm:$0xff] %v6425
    %6438 = vst [vmem:[#allocation2 + $0x118] sm:$0xff] %v6426
    %6439 = vmatprep.subr.mxu0 %v4842
    %6440 = vmatpush1.msra.mxu0 %v4841
    %6441 = vmatprep.subr.mxu0 %v4839
    %6442 = vmatpush1.msra.mxu0 %v4838
    %6443 = vmatprep.subr.mxu0 %v4836
    %6444 = vmatpush1.msra.mxu0 %v4835
    %6445 = vmatprep.subr.mxu0 %v4833
    %6446 = vmatpush1.msra.mxu0 %v4832
    %6447 = vmatprep.subr.mxu0 %v4830
    %6448 = vmatpush1.msra.mxu0 %v4829
    %6449 = vmatprep.subr.mxu0 %v4827
    %6450 = vmatpush1.msra.mxu0 %v4826
    %6451 = vmatprep.subr.mxu0 %v4824
    %6452 = vmatpush1.msra.mxu0 %v4823
    %6453 = vmatprep.subr.mxu0 %v4821
    %6454 = vmatpush1.msra.mxu0 %v4820
    %6455 = vmatprep.subr.mxu0 %v4818
    %6456 = vmatpush1.msra.mxu0 %v4817
    %6457 = vmatprep.subr.mxu0 %v4815
    %6458 = vmatpush1.msra.mxu0 %v4814
    %6459 = vmatprep.subr.mxu0 %v4812
    %6460 = vmatpush1.msra.mxu0 %v4811
    %6461 = vmatprep.subr.mxu0 %v4809
    %6462 = vmatpush1.msra.mxu0 %v4808
    %6463 = vmatprep.subr.mxu0 %v4806
    %6464 = vmatpush1.msra.mxu0 %v4805
    %6465 = vmatprep.subr.mxu0 %v4803
    %6466 = vmatpush1.msra.mxu0 %v4802
    %6467 = vmatprep.subr.mxu0 %v4800
    %6468 = vmatpush1.msra.mxu0 %v4799
    %6469 = vmatprep.subr.mxu0 %v4797
    %6470 = vmatpush1.msra.mxu0 %v4796
    %6471 = vmatprep.subr.mxu0 0.0
    %6472 = vmatpush2.msra.mxu0 0.0
    %6473 = vmatprep.subr.mxu0 0.0
    %6474 = vmatpush2.msra.mxu0 0.0
    %6475 = vmatprep.subr.mxu0 0.0
    %6476 = vmatpush2.msra.mxu0 0.0
    %6477 = vmatprep.subr.mxu0 0.0
    %6478 = vmatpush2.msra.mxu0 0.0
    %6479 = vmatprep.subr.mxu0 0.0
    %6480 = vmatpush2.msra.mxu0 0.0
    %6481 = vmatprep.subr.mxu0 0.0
    %6482 = vmatpush2.msra.mxu0 0.0
    %6483 = vmatprep.subr.mxu0 0.0
    %6484 = vmatpush2.msra.mxu0 0.0
    %6485 = vmatprep.subr.mxu0 0.0
    %6486 = vmatpush2.msra.mxu0 0.0
    %6487 = vmatprep.subr.mxu0 0.0
    %6488 = vmatpush2.msra.mxu0 0.0
    %6489 = vmatprep.subr.mxu0 0.0
    %6490 = vmatpush2.msra.mxu0 0.0
    %6491 = vmatprep.subr.mxu0 0.0
    %6492 = vmatpush2.msra.mxu0 0.0
    %6493 = vmatprep.subr.mxu0 0.0
    %6494 = vmatpush2.msra.mxu0 0.0
    %6495 = vmatprep.subr.mxu0 0.0
    %6496 = vmatpush2.msra.mxu0 0.0
    %6497 = vmatprep.subr.mxu0 0.0
    %6498 = vmatpush2.msra.mxu0 0.0
    %6499 = vmatprep.subr.mxu0 0.0
    %6500 = vmatpush2.msra.mxu0 0.0
    %6501 = vmatprep.subr.mxu0 0.0
    %6502 = vmatpush2.msra.mxu0 0.0
    %6503 = vmatprep.mubr.f32.mxu0 0.0
    %6504 = vmatmul.mubr.f32.gmra.mxu0 %v6415
    %v6505 = vpop.f32.mrf.mxu0
    %v6506 = vadd.f32 %v4849, %v6505
    %v6507 = vpop.f32.mrf.mxu0
    %v6508 = vadd.f32 %v4853, %v6507
    %6509 = vmatprep.mubr.f32.mxu0 0.0
    %6510 = vmatmul.mubr.f32.gmra.mxu0 %v6416
    %v6511 = vpop.f32.mrf.mxu0
    %v6512 = vadd.f32 %v4849, %v6511
    %v6513 = vpop.f32.mrf.mxu0
    %v6514 = vadd.f32 %v4853, %v6513
    %6515 = vmatprep.mubr.f32.mxu0 0.0
    %6516 = vmatmul.mubr.f32.gmra.mxu0 %v6417
    %v6517 = vpop.f32.mrf.mxu0
    %v6518 = vadd.f32 %v4849, %v6517
    %v6519 = vpop.f32.mrf.mxu0
    %v6520 = vadd.f32 %v4853, %v6519
    %6521 = vmatprep.mubr.f32.mxu0 0.0
    %6522 = vmatmul.mubr.f32.gmra.mxu0 %v6418
    %v6523 = vpop.f32.mrf.mxu0
    %v6524 = vadd.f32 %v4849, %v6523
    %v6525 = vpop.f32.mrf.mxu0
    %v6526 = vadd.f32 %v4853, %v6525
    %6527 = vmatprep.mubr.f32.mxu0 0.0
    %6528 = vmatmul.mubr.f32.gmra.mxu0 %v6419
    %v6529 = vpop.f32.mrf.mxu0
    %v6530 = vadd.f32 %v4849, %v6529
    %v6531 = vpop.f32.mrf.mxu0
    %v6532 = vadd.f32 %v4853, %v6531
    %6533 = vmatprep.mubr.f32.mxu0 0.0
    %6534 = vmatmul.mubr.f32.gmra.mxu0 %v6420
    %v6535 = vpop.f32.mrf.mxu0
    %v6536 = vadd.f32 %v4849, %v6535
    %v6537 = vpop.f32.mrf.mxu0
    %v6538 = vadd.f32 %v4853, %v6537
    %6539 = vmatprep.mubr.f32.mxu0 0.0
    %6540 = vmatmul.mubr.f32.gmra.mxu0 %v6421
    %v6541 = vpop.f32.mrf.mxu0
    %v6542 = vadd.f32 %v4849, %v6541
    %v6543 = vpop.f32.mrf.mxu0
    %v6544 = vadd.f32 %v4853, %v6543
    %6545 = vmatprep.mubr.f32.mxu0 0.0
    %6546 = vmatmul.mubr.f32.gmra.mxu0 %v6422
    %v6547 = vpop.f32.mrf.mxu0
    %v6548 = vadd.f32 %v4849, %v6547
    %v6549 = vpop.f32.mrf.mxu0
    %v6550 = vadd.f32 %v4853, %v6549
    %6551 = vmatprep.mubr.f32.mxu0 0.0
    %6552 = vmatmul.mubr.f32.gmra.mxu0 %v6423
    %v6553 = vpop.f32.mrf.mxu0
    %v6554 = vadd.f32 %v4849, %v6553
    %v6555 = vpop.f32.mrf.mxu0
    %v6556 = vadd.f32 %v4853, %v6555
    %6557 = vmatprep.mubr.f32.mxu0 0.0
    %6558 = vmatmul.mubr.f32.gmra.mxu0 %v6424
    %v6559 = vpop.f32.mrf.mxu0
    %v6560 = vadd.f32 %v4849, %v6559
    %v6561 = vpop.f32.mrf.mxu0
    %v6562 = vadd.f32 %v4853, %v6561
    %6563 = vmatprep.mubr.f32.mxu0 0.0
    %6564 = vmatmul.mubr.f32.gmra.mxu0 %v6425
    %v6565 = vpop.f32.mrf.mxu0
    %v6566 = vadd.f32 %v4849, %v6565
    %v6567 = vpop.f32.mrf.mxu0
    %v6568 = vadd.f32 %v4853, %v6567
    %6569 = vmatprep.mubr.f32.mxu0 0.0
    %6570 = vmatmul.mubr.f32.gmra.mxu0 %v6426
    %v6571 = vpop.f32.mrf.mxu0
    %v6572 = vadd.f32 %v4849, %v6571
    %v6573 = vpop.f32.mrf.mxu0
    %v6574 = vadd.f32 %v4853, %v6573
    %6575 = vdwg.mxu0
    %6576 = vmatprep.subr.mxu0 0.0
    %6577 = vmatpush1.msra.mxu0 %v4843
    %6578 = vmatprep.subr.mxu0 0.0
    %6579 = vmatpush1.msra.mxu0 %v4840
    %6580 = vmatprep.subr.mxu0 0.0
    %6581 = vmatpush1.msra.mxu0 %v4837
    %6582 = vmatprep.subr.mxu0 0.0
    %6583 = vmatpush1.msra.mxu0 %v4834
    %6584 = vmatprep.subr.mxu0 0.0
    %6585 = vmatpush1.msra.mxu0 %v4831
    %6586 = vmatprep.subr.mxu0 0.0
    %6587 = vmatpush1.msra.mxu0 %v4828
    %6588 = vmatprep.subr.mxu0 0.0
    %6589 = vmatpush1.msra.mxu0 %v4825
    %6590 = vmatprep.subr.mxu0 0.0
    %6591 = vmatpush1.msra.mxu0 %v4822
    %6592 = vmatprep.subr.mxu0 0.0
    %6593 = vmatpush1.msra.mxu0 %v4819
    %6594 = vmatprep.subr.mxu0 0.0
    %6595 = vmatpush1.msra.mxu0 %v4816
    %6596 = vmatprep.subr.mxu0 0.0
    %6597 = vmatpush1.msra.mxu0 %v4813
    %6598 = vmatprep.subr.mxu0 0.0
    %6599 = vmatpush1.msra.mxu0 %v4810
    %6600 = vmatprep.subr.mxu0 0.0
    %6601 = vmatpush1.msra.mxu0 %v4807
    %6602 = vmatprep.subr.mxu0 0.0
    %6603 = vmatpush1.msra.mxu0 %v4804
    %6604 = vmatprep.subr.mxu0 0.0
    %6605 = vmatpush1.msra.mxu0 %v4801
    %6606 = vmatprep.subr.mxu0 0.0
    %6607 = vmatpush1.msra.mxu0 %v4798
    %6608 = vmatprep.subr.mxu0 0.0
    %6609 = vmatpush2.msra.mxu0 0.0
    %6610 = vmatprep.subr.mxu0 0.0
    %6611 = vmatpush2.msra.mxu0 0.0
    %6612 = vmatprep.subr.mxu0 0.0
    %6613 = vmatpush2.msra.mxu0 0.0
    %6614 = vmatprep.subr.mxu0 0.0
    %6615 = vmatpush2.msra.mxu0 0.0
    %6616 = vmatprep.subr.mxu0 0.0
    %6617 = vmatpush2.msra.mxu0 0.0
    %6618 = vmatprep.subr.mxu0 0.0
    %6619 = vmatpush2.msra.mxu0 0.0
    %6620 = vmatprep.subr.mxu0 0.0
    %6621 = vmatpush2.msra.mxu0 0.0
    %6622 = vmatprep.subr.mxu0 0.0
    %6623 = vmatpush2.msra.mxu0 0.0
    %6624 = vmatprep.subr.mxu0 0.0
    %6625 = vmatpush2.msra.mxu0 0.0
    %6626 = vmatprep.subr.mxu0 0.0
    %6627 = vmatpush2.msra.mxu0 0.0
    %6628 = vmatprep.subr.mxu0 0.0
    %6629 = vmatpush2.msra.mxu0 0.0
    %6630 = vmatprep.subr.mxu0 0.0
    %6631 = vmatpush2.msra.mxu0 0.0
    %6632 = vmatprep.subr.mxu0 0.0
    %6633 = vmatpush2.msra.mxu0 0.0
    %6634 = vmatprep.subr.mxu0 0.0
    %6635 = vmatpush2.msra.mxu0 0.0
    %6636 = vmatprep.subr.mxu0 0.0
    %6637 = vmatpush2.msra.mxu0 0.0
    %6638 = vmatprep.subr.mxu0 0.0
    %6639 = vmatpush2.msra.mxu0 0.0
    %6640 = vmatprep.mubr.f32.mxu0 0.0
    %6641 = vmatmul.mubr.f32.gmra.mxu0 %v6415
    %v6642 = vpop.f32.mrf.mxu0
    %v6643 = vadd.f32 %v4857, %v6642
    %v6644 = vpop.f32.mrf.mxu0
    %6645 = vmatprep.mubr.f32.mxu0 0.0
    %6646 = vmatmul.mubr.f32.gmra.mxu0 %v6416
    %v6647 = vpop.f32.mrf.mxu0
    %v6648 = vadd.f32 %v4857, %v6647
    %v6649 = vpop.f32.mrf.mxu0
    %6650 = vmatprep.mubr.f32.mxu0 0.0
    %6651 = vmatmul.mubr.f32.gmra.mxu0 %v6417
    %v6652 = vpop.f32.mrf.mxu0
    %v6653 = vadd.f32 %v4857, %v6652
    %v6654 = vpop.f32.mrf.mxu0
    %6655 = vmatprep.mubr.f32.mxu0 0.0
    %6656 = vmatmul.mubr.f32.gmra.mxu0 %v6418
    %v6657 = vpop.f32.mrf.mxu0
    %v6658 = vadd.f32 %v4857, %v6657
    %v6659 = vpop.f32.mrf.mxu0
    %6660 = vmatprep.mubr.f32.mxu0 0.0
    %6661 = vmatmul.mubr.f32.gmra.mxu0 %v6419
    %v6662 = vpop.f32.mrf.mxu0
    %v6663 = vadd.f32 %v4857, %v6662
    %v6664 = vpop.f32.mrf.mxu0
    %6665 = vmatprep.mubr.f32.mxu0 0.0
    %6666 = vmatmul.mubr.f32.gmra.mxu0 %v6420
    %v6667 = vpop.f32.mrf.mxu0
    %v6668 = vadd.f32 %v4857, %v6667
    %v6669 = vpop.f32.mrf.mxu0
    %6670 = vmatprep.mubr.f32.mxu0 0.0
    %6671 = vmatmul.mubr.f32.gmra.mxu0 %v6421
    %v6672 = vpop.f32.mrf.mxu0
    %v6673 = vadd.f32 %v4857, %v6672
    %v6674 = vpop.f32.mrf.mxu0
    %6675 = vmatprep.mubr.f32.mxu0 0.0
    %6676 = vmatmul.mubr.f32.gmra.mxu0 %v6422
    %v6677 = vpop.f32.mrf.mxu0
    %v6678 = vadd.f32 %v4857, %v6677
    %v6679 = vpop.f32.mrf.mxu0
    %6680 = vmatprep.mubr.f32.mxu0 0.0
    %6681 = vmatmul.mubr.f32.gmra.mxu0 %v6423
    %v6682 = vpop.f32.mrf.mxu0
    %v6683 = vadd.f32 %v4857, %v6682
    %v6684 = vpop.f32.mrf.mxu0
    %6685 = vmatprep.mubr.f32.mxu0 0.0
    %6686 = vmatmul.mubr.f32.gmra.mxu0 %v6424
    %v6687 = vpop.f32.mrf.mxu0
    %v6688 = vadd.f32 %v4857, %v6687
    %v6689 = vpop.f32.mrf.mxu0
    %6690 = vmatprep.mubr.f32.mxu0 0.0
    %6691 = vmatmul.mubr.f32.gmra.mxu0 %v6425
    %v6692 = vpop.f32.mrf.mxu0
    %v6693 = vadd.f32 %v4857, %v6692
    %v6694 = vpop.f32.mrf.mxu0
    %6695 = vmatprep.mubr.f32.mxu0 0.0
    %6696 = vmatmul.mubr.f32.gmra.mxu0 %v6426
    %v6697 = vpop.f32.mrf.mxu0
    %v6698 = vadd.f32 %v4857, %v6697
    %v6699 = vpop.f32.mrf.mxu0
    %6700 = vdwg.mxu0
    %v6701 = vadd.f32 %v4601, %v6506
    %v6702 = vadd.f32 %v4607, %v6512
    %v6703 = vadd.f32 %v4613, %v6518
    %v6704 = vadd.f32 %v4619, %v6524
    %v6705 = vadd.f32 %v4625, %v6530
    %v6706 = vadd.f32 %v4631, %v6536
    %v6707 = vadd.f32 %v4637, %v6542
    %v6708 = vadd.f32 %v4643, %v6548
    %v6709 = vadd.f32 %v4649, %v6554
    %v6710 = vadd.f32 %v4655, %v6560
    %v6711 = vadd.f32 %v4661, %v6566
    %v6712 = vadd.f32 %v4667, %v6572
    %v6713 = vxor.u32 %v6701, 2147483648
    %v6714 = vxor.u32 %v6702, 2147483648
    %v6715 = vxor.u32 %v6703, 2147483648
    %v6716 = vxor.u32 %v6704, 2147483648
    %v6717 = vxor.u32 %v6705, 2147483648
    %v6718 = vxor.u32 %v6706, 2147483648
    %v6719 = vxor.u32 %v6707, 2147483648
    %v6720 = vxor.u32 %v6708, 2147483648
    %v6721 = vxor.u32 %v6709, 2147483648
    %v6722 = vxor.u32 %v6710, 2147483648
    %v6723 = vxor.u32 %v6711, 2147483648
    %v6724 = vxor.u32 %v6712, 2147483648
    %v6725 = vmul.f32 %v6713, 1.442695
    %v6726 = vpow.pop %v6725
    %v6727 = vmul.f32 %v6714, 1.442695
    %v6728 = vpow.pop %v6727
    %v6729 = vmul.f32 %v6715, 1.442695
    %v6730 = vpow.pop %v6729
    %v6731 = vmul.f32 %v6716, 1.442695
    %v6732 = vpow.pop %v6731
    %v6733 = vmul.f32 %v6717, 1.442695
    %v6734 = vpow.pop %v6733
    %v6735 = vmul.f32 %v6718, 1.442695
    %v6736 = vpow.pop %v6735
    %v6737 = vmul.f32 %v6719, 1.442695
    %v6738 = vpow.pop %v6737
    %v6739 = vmul.f32 %v6720, 1.442695
    %v6740 = vpow.pop %v6739
    %v6741 = vmul.f32 %v6721, 1.442695
    %v6742 = vpow.pop %v6741
    %v6743 = vmul.f32 %v6722, 1.442695
    %v6744 = vpow.pop %v6743
    %v6745 = vmul.f32 %v6723, 1.442695
    %v6746 = vpow.pop %v6745
    %v6747 = vmul.f32 %v6724, 1.442695
    %v6748 = vpow.pop %v6747
    %v6749 = vadd.f32 %v6726, 1.0
    %v6750 = vadd.f32 %v6728, 1.0
    %v6751 = vadd.f32 %v6730, 1.0
    %v6752 = vadd.f32 %v6732, 1.0
    %v6753 = vadd.f32 %v6734, 1.0
    %v6754 = vadd.f32 %v6736, 1.0
    %v6755 = vadd.f32 %v6738, 1.0
    %v6756 = vadd.f32 %v6740, 1.0
    %v6757 = vadd.f32 %v6742, 1.0
    %v6758 = vadd.f32 %v6744, 1.0
    %v6759 = vadd.f32 %v6746, 1.0
    %v6760 = vadd.f32 %v6748, 1.0
    %v6761 = vrcp.pop %v6749
    %v6762 = vmul.f32 1.0, %v6761
    %v6763 = vrcp.pop %v6750
    %v6764 = vmul.f32 1.0, %v6763
    %v6765 = vrcp.pop %v6751
    %v6766 = vmul.f32 1.0, %v6765
    %v6767 = vrcp.pop %v6752
    %v6768 = vmul.f32 1.0, %v6767
    %v6769 = vrcp.pop %v6753
    %v6770 = vmul.f32 1.0, %v6769
    %v6771 = vrcp.pop %v6754
    %v6772 = vmul.f32 1.0, %v6771
    %v6773 = vrcp.pop %v6755
    %v6774 = vmul.f32 1.0, %v6773
    %v6775 = vrcp.pop %v6756
    %v6776 = vmul.f32 1.0, %v6775
    %v6777 = vrcp.pop %v6757
    %v6778 = vmul.f32 1.0, %v6777
    %v6779 = vrcp.pop %v6758
    %v6780 = vmul.f32 1.0, %v6779
    %v6781 = vrcp.pop %v6759
    %v6782 = vmul.f32 1.0, %v6781
    %v6783 = vrcp.pop %v6760
    %v6784 = vmul.f32 1.0, %v6783
    %v6785 = vadd.f32 %v4603, %v6508
    %v6786 = vadd.f32 %v4609, %v6514
    %v6787 = vadd.f32 %v4615, %v6520
    %v6788 = vadd.f32 %v4621, %v6526
    %v6789 = vadd.f32 %v4627, %v6532
    %v6790 = vadd.f32 %v4633, %v6538
    %v6791 = vadd.f32 %v4639, %v6544
    %v6792 = vadd.f32 %v4645, %v6550
    %v6793 = vadd.f32 %v4651, %v6556
    %v6794 = vadd.f32 %v4657, %v6562
    %v6795 = vadd.f32 %v4663, %v6568
    %v6796 = vadd.f32 %v4669, %v6574
    %v6797 = vxor.u32 %v6785, 2147483648
    %v6798 = vxor.u32 %v6786, 2147483648
    %v6799 = vxor.u32 %v6787, 2147483648
    %v6800 = vxor.u32 %v6788, 2147483648
    %v6801 = vxor.u32 %v6789, 2147483648
    %v6802 = vxor.u32 %v6790, 2147483648
    %v6803 = vxor.u32 %v6791, 2147483648
    %v6804 = vxor.u32 %v6792, 2147483648
    %v6805 = vxor.u32 %v6793, 2147483648
    %v6806 = vxor.u32 %v6794, 2147483648
    %v6807 = vxor.u32 %v6795, 2147483648
    %v6808 = vxor.u32 %v6796, 2147483648
    %v6809 = vmul.f32 %v6797, 1.442695
    %v6810 = vpow.pop %v6809
    %v6811 = vmul.f32 %v6798, 1.442695
    %v6812 = vpow.pop %v6811
    %v6813 = vmul.f32 %v6799, 1.442695
    %v6814 = vpow.pop %v6813
    %v6815 = vmul.f32 %v6800, 1.442695
    %v6816 = vpow.pop %v6815
    %v6817 = vmul.f32 %v6801, 1.442695
    %v6818 = vpow.pop %v6817
    %v6819 = vmul.f32 %v6802, 1.442695
    %v6820 = vpow.pop %v6819
    %v6821 = vmul.f32 %v6803, 1.442695
    %v6822 = vpow.pop %v6821
    %v6823 = vmul.f32 %v6804, 1.442695
    %v6824 = vpow.pop %v6823
    %v6825 = vmul.f32 %v6805, 1.442695
    %v6826 = vpow.pop %v6825
    %v6827 = vmul.f32 %v6806, 1.442695
    %v6828 = vpow.pop %v6827
    %v6829 = vmul.f32 %v6807, 1.442695
    %v6830 = vpow.pop %v6829
    %v6831 = vmul.f32 %v6808, 1.442695
    %v6832 = vpow.pop %v6831
    %v6833 = vadd.f32 %v6810, 1.0
    %v6834 = vadd.f32 %v6812, 1.0
    %v6835 = vadd.f32 %v6814, 1.0
    %v6836 = vadd.f32 %v6816, 1.0
    %v6837 = vadd.f32 %v6818, 1.0
    %v6838 = vadd.f32 %v6820, 1.0
    %v6839 = vadd.f32 %v6822, 1.0
    %v6840 = vadd.f32 %v6824, 1.0
    %v6841 = vadd.f32 %v6826, 1.0
    %v6842 = vadd.f32 %v6828, 1.0
    %v6843 = vadd.f32 %v6830, 1.0
    %v6844 = vadd.f32 %v6832, 1.0
    %v6845 = vrcp.pop %v6833
    %v6846 = vmul.f32 1.0, %v6845
    %v6847 = vrcp.pop %v6834
    %v6848 = vmul.f32 1.0, %v6847
    %v6849 = vrcp.pop %v6835
    %v6850 = vmul.f32 1.0, %v6849
    %v6851 = vrcp.pop %v6836
    %v6852 = vmul.f32 1.0, %v6851
    %v6853 = vrcp.pop %v6837
    %v6854 = vmul.f32 1.0, %v6853
    %v6855 = vrcp.pop %v6838
    %v6856 = vmul.f32 1.0, %v6855
    %v6857 = vrcp.pop %v6839
    %v6858 = vmul.f32 1.0, %v6857
    %v6859 = vrcp.pop %v6840
    %v6860 = vmul.f32 1.0, %v6859
    %v6861 = vrcp.pop %v6841
    %v6862 = vmul.f32 1.0, %v6861
    %v6863 = vrcp.pop %v6842
    %v6864 = vmul.f32 1.0, %v6863
    %v6865 = vrcp.pop %v6843
    %v6866 = vmul.f32 1.0, %v6865
    %v6867 = vrcp.pop %v6844
    %v6868 = vmul.f32 1.0, %v6867
    %v6869 = vmul.f32 %v6762, %v6643
    %v6870 = vmul.f32 %v6764, %v6648
    %v6871 = vmul.f32 %v6766, %v6653
    %v6872 = vmul.f32 %v6768, %v6658
    %v6873 = vmul.f32 %v6770, %v6663
    %v6874 = vmul.f32 %v6772, %v6668
    %v6875 = vmul.f32 %v6774, %v6673
    %v6876 = vmul.f32 %v6776, %v6678
    %v6877 = vmul.f32 %v6778, %v6683
    %v6878 = vmul.f32 %v6780, %v6688
    %v6879 = vmul.f32 %v6782, %v6693
    %v6880 = vmul.f32 %v6784, %v6698
    %v6881 = vadd.f32 %v4738, %v6869
    %v6882 = vadd.f32 %v4743, %v6870
    %v6883 = vadd.f32 %v4748, %v6871
    %v6884 = vadd.f32 %v4753, %v6872
    %v6885 = vadd.f32 %v4758, %v6873
    %v6886 = vadd.f32 %v4763, %v6874
    %v6887 = vadd.f32 %v4768, %v6875
    %v6888 = vadd.f32 %v4773, %v6876
    %v6889 = vadd.f32 %v4778, %v6877
    %v6890 = vadd.f32 %v4783, %v6878
    %v6891 = vadd.f32 %v4788, %v6879
    %v6892 = vadd.f32 %v4793, %v6880
    %v6893 = vtanh.pop %v6881
    %v6894 = vtanh.pop %v6882
    %v6895 = vtanh.pop %v6883
    %v6896 = vtanh.pop %v6884
    %v6897 = vtanh.pop %v6885
    %v6898 = vtanh.pop %v6886
    %v6899 = vtanh.pop %v6887
    %v6900 = vtanh.pop %v6888
    %v6901 = vtanh.pop %v6889
    %v6902 = vtanh.pop %v6890
    %v6903 = vtanh.pop %v6891
    %v6904 = vtanh.pop %v6892
    %v6905 = vsub.f32 1.0, %v6846
    %v6906 = vsub.f32 1.0, %v6848
    %v6907 = vsub.f32 1.0, %v6850
    %v6908 = vsub.f32 1.0, %v6852
    %v6909 = vsub.f32 1.0, %v6854
    %v6910 = vsub.f32 1.0, %v6856
    %v6911 = vsub.f32 1.0, %v6858
    %v6912 = vsub.f32 1.0, %v6860
    %v6913 = vsub.f32 1.0, %v6862
    %v6914 = vsub.f32 1.0, %v6864
    %v6915 = vsub.f32 1.0, %v6866
    %v6916 = vsub.f32 1.0, %v6868
    %v6917 = vmul.f32 %v6905, %v6893
    %v6918 = vmul.f32 %v6906, %v6894
    %v6919 = vmul.f32 %v6907, %v6895
    %v6920 = vmul.f32 %v6908, %v6896
    %v6921 = vmul.f32 %v6909, %v6897
    %v6922 = vmul.f32 %v6910, %v6898
    %v6923 = vmul.f32 %v6911, %v6899
    %v6924 = vmul.f32 %v6912, %v6900
    %v6925 = vmul.f32 %v6913, %v6901
    %v6926 = vmul.f32 %v6914, %v6902
    %v6927 = vmul.f32 %v6915, %v6903
    %v6928 = vmul.f32 %v6916, %v6904
    %v6929 = vmul.f32 %v6846, %v6415
    %v6930 = vmul.f32 %v6848, %v6416
    %v6931 = vmul.f32 %v6850, %v6417
    %v6932 = vmul.f32 %v6852, %v6418
    %v6933 = vmul.f32 %v6854, %v6419
    %v6934 = vmul.f32 %v6856, %v6420
    %v6935 = vmul.f32 %v6858, %v6421
    %v6936 = vmul.f32 %v6860, %v6422
    %v6937 = vmul.f32 %v6862, %v6423
    %v6938 = vmul.f32 %v6864, %v6424
    %v6939 = vmul.f32 %v6866, %v6425
    %v6940 = vmul.f32 %v6868, %v6426
    %v6941 = vadd.f32 %v6917, %v6929
    %v6942 = vadd.f32 %v6918, %v6930
    %v6943 = vadd.f32 %v6919, %v6931
    %v6944 = vadd.f32 %v6920, %v6932
    %v6945 = vadd.f32 %v6921, %v6933
    %v6946 = vadd.f32 %v6922, %v6934
    %v6947 = vadd.f32 %v6923, %v6935
    %v6948 = vadd.f32 %v6924, %v6936
    %v6949 = vadd.f32 %v6925, %v6937
    %v6950 = vadd.f32 %v6926, %v6938
    %v6951 = vadd.f32 %v6927, %v6939
    %v6952 = vadd.f32 %v6928, %v6940
    %6953 = vst [vmem:[#allocation2 + $0x120] sm:$0xff] %v6941
    %6954 = vst [vmem:[#allocation2 + $0x128] sm:$0xff] %v6942
    %6955 = vst [vmem:[#allocation2 + $0x130] sm:$0xff] %v6943
    %6956 = vst [vmem:[#allocation2 + $0x138] sm:$0xff] %v6944
    %6957 = vst [vmem:[#allocation2 + $0x140] sm:$0xff] %v6945
    %6958 = vst [vmem:[#allocation2 + $0x148] sm:$0xff] %v6946
    %6959 = vst [vmem:[#allocation2 + $0x150] sm:$0xff] %v6947
    %6960 = vst [vmem:[#allocation2 + $0x158] sm:$0xff] %v6948
    %6961 = vst [vmem:[#allocation2 + $0x160] sm:$0xff] %v6949
    %6962 = vst [vmem:[#allocation2 + $0x168] sm:$0xff] %v6950
    %6963 = vst [vmem:[#allocation2 + $0x170] sm:$0xff] %v6951
    %6964 = vst [vmem:[#allocation2 + $0x178] sm:$0xff] %v6952
    %6965 = vmatprep.subr.mxu0 %v4842
    %6966 = vmatpush1.msra.mxu0 %v4841
    %6967 = vmatprep.subr.mxu0 %v4839
    %6968 = vmatpush1.msra.mxu0 %v4838
    %6969 = vmatprep.subr.mxu0 %v4836
    %6970 = vmatpush1.msra.mxu0 %v4835
    %6971 = vmatprep.subr.mxu0 %v4833
    %6972 = vmatpush1.msra.mxu0 %v4832
    %6973 = vmatprep.subr.mxu0 %v4830
    %6974 = vmatpush1.msra.mxu0 %v4829
    %6975 = vmatprep.subr.mxu0 %v4827
    %6976 = vmatpush1.msra.mxu0 %v4826
    %6977 = vmatprep.subr.mxu0 %v4824
    %6978 = vmatpush1.msra.mxu0 %v4823
    %6979 = vmatprep.subr.mxu0 %v4821
    %6980 = vmatpush1.msra.mxu0 %v4820
    %6981 = vmatprep.subr.mxu0 %v4818
    %6982 = vmatpush1.msra.mxu0 %v4817
    %6983 = vmatprep.subr.mxu0 %v4815
    %6984 = vmatpush1.msra.mxu0 %v4814
    %6985 = vmatprep.subr.mxu0 %v4812
    %6986 = vmatpush1.msra.mxu0 %v4811
    %6987 = vmatprep.subr.mxu0 %v4809
    %6988 = vmatpush1.msra.mxu0 %v4808
    %6989 = vmatprep.subr.mxu0 %v4806
    %6990 = vmatpush1.msra.mxu0 %v4805
    %6991 = vmatprep.subr.mxu0 %v4803
    %6992 = vmatpush1.msra.mxu0 %v4802
    %6993 = vmatprep.subr.mxu0 %v4800
    %6994 = vmatpush1.msra.mxu0 %v4799
    %6995 = vmatprep.subr.mxu0 %v4797
    %6996 = vmatpush1.msra.mxu0 %v4796
    %6997 = vmatprep.subr.mxu0 0.0
    %6998 = vmatpush2.msra.mxu0 0.0
    %6999 = vmatprep.subr.mxu0 0.0
    %7000 = vmatpush2.msra.mxu0 0.0
    %7001 = vmatprep.subr.mxu0 0.0
    %7002 = vmatpush2.msra.mxu0 0.0
    %7003 = vmatprep.subr.mxu0 0.0
    %7004 = vmatpush2.msra.mxu0 0.0
    %7005 = vmatprep.subr.mxu0 0.0
    %7006 = vmatpush2.msra.mxu0 0.0
    %7007 = vmatprep.subr.mxu0 0.0
    %7008 = vmatpush2.msra.mxu0 0.0
    %7009 = vmatprep.subr.mxu0 0.0
    %7010 = vmatpush2.msra.mxu0 0.0
    %7011 = vmatprep.subr.mxu0 0.0
    %7012 = vmatpush2.msra.mxu0 0.0
    %7013 = vmatprep.subr.mxu0 0.0
    %7014 = vmatpush2.msra.mxu0 0.0
    %7015 = vmatprep.subr.mxu0 0.0
    %7016 = vmatpush2.msra.mxu0 0.0
    %7017 = vmatprep.subr.mxu0 0.0
    %7018 = vmatpush2.msra.mxu0 0.0
    %7019 = vmatprep.subr.mxu0 0.0
    %7020 = vmatpush2.msra.mxu0 0.0
    %7021 = vmatprep.subr.mxu0 0.0
    %7022 = vmatpush2.msra.mxu0 0.0
    %7023 = vmatprep.subr.mxu0 0.0
    %7024 = vmatpush2.msra.mxu0 0.0
    %7025 = vmatprep.subr.mxu0 0.0
    %7026 = vmatpush2.msra.mxu0 0.0
    %7027 = vmatprep.subr.mxu0 0.0
    %7028 = vmatpush2.msra.mxu0 0.0
    %7029 = vmatprep.mubr.f32.mxu0 0.0
    %7030 = vmatmul.mubr.f32.gmra.mxu0 %v6941
    %v7031 = vpop.f32.mrf.mxu0
    %v7032 = vadd.f32 %v4849, %v7031
    %v7033 = vpop.f32.mrf.mxu0
    %v7034 = vadd.f32 %v4853, %v7033
    %7035 = vmatprep.mubr.f32.mxu0 0.0
    %7036 = vmatmul.mubr.f32.gmra.mxu0 %v6942
    %v7037 = vpop.f32.mrf.mxu0
    %v7038 = vadd.f32 %v4849, %v7037
    %v7039 = vpop.f32.mrf.mxu0
    %v7040 = vadd.f32 %v4853, %v7039
    %7041 = vmatprep.mubr.f32.mxu0 0.0
    %7042 = vmatmul.mubr.f32.gmra.mxu0 %v6943
    %v7043 = vpop.f32.mrf.mxu0
    %v7044 = vadd.f32 %v4849, %v7043
    %v7045 = vpop.f32.mrf.mxu0
    %v7046 = vadd.f32 %v4853, %v7045
    %7047 = vmatprep.mubr.f32.mxu0 0.0
    %7048 = vmatmul.mubr.f32.gmra.mxu0 %v6944
    %v7049 = vpop.f32.mrf.mxu0
    %v7050 = vadd.f32 %v4849, %v7049
    %v7051 = vpop.f32.mrf.mxu0
    %v7052 = vadd.f32 %v4853, %v7051
    %7053 = vmatprep.mubr.f32.mxu0 0.0
    %7054 = vmatmul.mubr.f32.gmra.mxu0 %v6945
    %v7055 = vpop.f32.mrf.mxu0
    %v7056 = vadd.f32 %v4849, %v7055
    %v7057 = vpop.f32.mrf.mxu0
    %v7058 = vadd.f32 %v4853, %v7057
    %7059 = vmatprep.mubr.f32.mxu0 0.0
    %7060 = vmatmul.mubr.f32.gmra.mxu0 %v6946
    %v7061 = vpop.f32.mrf.mxu0
    %v7062 = vadd.f32 %v4849, %v7061
    %v7063 = vpop.f32.mrf.mxu0
    %v7064 = vadd.f32 %v4853, %v7063
    %7065 = vmatprep.mubr.f32.mxu0 0.0
    %7066 = vmatmul.mubr.f32.gmra.mxu0 %v6947
    %v7067 = vpop.f32.mrf.mxu0
    %v7068 = vadd.f32 %v4849, %v7067
    %v7069 = vpop.f32.mrf.mxu0
    %v7070 = vadd.f32 %v4853, %v7069
    %7071 = vmatprep.mubr.f32.mxu0 0.0
    %7072 = vmatmul.mubr.f32.gmra.mxu0 %v6948
    %v7073 = vpop.f32.mrf.mxu0
    %v7074 = vadd.f32 %v4849, %v7073
    %v7075 = vpop.f32.mrf.mxu0
    %v7076 = vadd.f32 %v4853, %v7075
    %7077 = vmatprep.mubr.f32.mxu0 0.0
    %7078 = vmatmul.mubr.f32.gmra.mxu0 %v6949
    %v7079 = vpop.f32.mrf.mxu0
    %v7080 = vadd.f32 %v4849, %v7079
    %v7081 = vpop.f32.mrf.mxu0
    %v7082 = vadd.f32 %v4853, %v7081
    %7083 = vmatprep.mubr.f32.mxu0 0.0
    %7084 = vmatmul.mubr.f32.gmra.mxu0 %v6950
    %v7085 = vpop.f32.mrf.mxu0
    %v7086 = vadd.f32 %v4849, %v7085
    %v7087 = vpop.f32.mrf.mxu0
    %v7088 = vadd.f32 %v4853, %v7087
    %7089 = vmatprep.mubr.f32.mxu0 0.0
    %7090 = vmatmul.mubr.f32.gmra.mxu0 %v6951
    %v7091 = vpop.f32.mrf.mxu0
    %v7092 = vadd.f32 %v4849, %v7091
    %v7093 = vpop.f32.mrf.mxu0
    %v7094 = vadd.f32 %v4853, %v7093
    %7095 = vmatprep.mubr.f32.mxu0 0.0
    %7096 = vmatmul.mubr.f32.gmra.mxu0 %v6952
    %v7097 = vpop.f32.mrf.mxu0
    %v7098 = vadd.f32 %v4849, %v7097
    %v7099 = vpop.f32.mrf.mxu0
    %v7100 = vadd.f32 %v4853, %v7099
    %7101 = vdwg.mxu0
    %7102 = vmatprep.subr.mxu0 0.0
    %7103 = vmatpush1.msra.mxu0 %v4843
    %7104 = vmatprep.subr.mxu0 0.0
    %7105 = vmatpush1.msra.mxu0 %v4840
    %7106 = vmatprep.subr.mxu0 0.0
    %7107 = vmatpush1.msra.mxu0 %v4837
    %7108 = vmatprep.subr.mxu0 0.0
    %7109 = vmatpush1.msra.mxu0 %v4834
    %7110 = vmatprep.subr.mxu0 0.0
    %7111 = vmatpush1.msra.mxu0 %v4831
    %7112 = vmatprep.subr.mxu0 0.0
    %7113 = vmatpush1.msra.mxu0 %v4828
    %7114 = vmatprep.subr.mxu0 0.0
    %7115 = vmatpush1.msra.mxu0 %v4825
    %7116 = vmatprep.subr.mxu0 0.0
    %7117 = vmatpush1.msra.mxu0 %v4822
    %7118 = vmatprep.subr.mxu0 0.0
    %7119 = vmatpush1.msra.mxu0 %v4819
    %7120 = vmatprep.subr.mxu0 0.0
    %7121 = vmatpush1.msra.mxu0 %v4816
    %7122 = vmatprep.subr.mxu0 0.0
    %7123 = vmatpush1.msra.mxu0 %v4813
    %7124 = vmatprep.subr.mxu0 0.0
    %7125 = vmatpush1.msra.mxu0 %v4810
    %7126 = vmatprep.subr.mxu0 0.0
    %7127 = vmatpush1.msra.mxu0 %v4807
    %7128 = vmatprep.subr.mxu0 0.0
    %7129 = vmatpush1.msra.mxu0 %v4804
    %7130 = vmatprep.subr.mxu0 0.0
    %7131 = vmatpush1.msra.mxu0 %v4801
    %7132 = vmatprep.subr.mxu0 0.0
    %7133 = vmatpush1.msra.mxu0 %v4798
    %7134 = vmatprep.subr.mxu0 0.0
    %7135 = vmatpush2.msra.mxu0 0.0
    %7136 = vmatprep.subr.mxu0 0.0
    %7137 = vmatpush2.msra.mxu0 0.0
    %7138 = vmatprep.subr.mxu0 0.0
    %7139 = vmatpush2.msra.mxu0 0.0
    %7140 = vmatprep.subr.mxu0 0.0
    %7141 = vmatpush2.msra.mxu0 0.0
    %7142 = vmatprep.subr.mxu0 0.0
    %7143 = vmatpush2.msra.mxu0 0.0
    %7144 = vmatprep.subr.mxu0 0.0
    %7145 = vmatpush2.msra.mxu0 0.0
    %7146 = vmatprep.subr.mxu0 0.0
    %7147 = vmatpush2.msra.mxu0 0.0
    %7148 = vmatprep.subr.mxu0 0.0
    %7149 = vmatpush2.msra.mxu0 0.0
    %7150 = vmatprep.subr.mxu0 0.0
    %7151 = vmatpush2.msra.mxu0 0.0
    %7152 = vmatprep.subr.mxu0 0.0
    %7153 = vmatpush2.msra.mxu0 0.0
    %7154 = vmatprep.subr.mxu0 0.0
    %7155 = vmatpush2.msra.mxu0 0.0
    %7156 = vmatprep.subr.mxu0 0.0
    %7157 = vmatpush2.msra.mxu0 0.0
    %7158 = vmatprep.subr.mxu0 0.0
    %7159 = vmatpush2.msra.mxu0 0.0
    %7160 = vmatprep.subr.mxu0 0.0
    %7161 = vmatpush2.msra.mxu0 0.0
    %7162 = vmatprep.subr.mxu0 0.0
    %7163 = vmatpush2.msra.mxu0 0.0
    %7164 = vmatprep.subr.mxu0 0.0
    %7165 = vmatpush2.msra.mxu0 0.0
    %7166 = vmatprep.mubr.f32.mxu0 0.0
    %7167 = vmatmul.mubr.f32.gmra.mxu0 %v6941
    %v7168 = vpop.f32.mrf.mxu0
    %v7169 = vadd.f32 %v4857, %v7168
    %v7170 = vpop.f32.mrf.mxu0
    %7171 = vmatprep.mubr.f32.mxu0 0.0
    %7172 = vmatmul.mubr.f32.gmra.mxu0 %v6942
    %v7173 = vpop.f32.mrf.mxu0
    %v7174 = vadd.f32 %v4857, %v7173
    %v7175 = vpop.f32.mrf.mxu0
    %7176 = vmatprep.mubr.f32.mxu0 0.0
    %7177 = vmatmul.mubr.f32.gmra.mxu0 %v6943
    %v7178 = vpop.f32.mrf.mxu0
    %v7179 = vadd.f32 %v4857, %v7178
    %v7180 = vpop.f32.mrf.mxu0
    %7181 = vmatprep.mubr.f32.mxu0 0.0
    %7182 = vmatmul.mubr.f32.gmra.mxu0 %v6944
    %v7183 = vpop.f32.mrf.mxu0
    %v7184 = vadd.f32 %v4857, %v7183
    %v7185 = vpop.f32.mrf.mxu0
    %7186 = vmatprep.mubr.f32.mxu0 0.0
    %7187 = vmatmul.mubr.f32.gmra.mxu0 %v6945
    %v7188 = vpop.f32.mrf.mxu0
    %v7189 = vadd.f32 %v4857, %v7188
    %v7190 = vpop.f32.mrf.mxu0
    %7191 = vmatprep.mubr.f32.mxu0 0.0
    %7192 = vmatmul.mubr.f32.gmra.mxu0 %v6946
    %v7193 = vpop.f32.mrf.mxu0
    %v7194 = vadd.f32 %v4857, %v7193
    %v7195 = vpop.f32.mrf.mxu0
    %7196 = vmatprep.mubr.f32.mxu0 0.0
    %7197 = vmatmul.mubr.f32.gmra.mxu0 %v6947
    %v7198 = vpop.f32.mrf.mxu0
    %v7199 = vadd.f32 %v4857, %v7198
    %v7200 = vpop.f32.mrf.mxu0
    %7201 = vmatprep.mubr.f32.mxu0 0.0
    %7202 = vmatmul.mubr.f32.gmra.mxu0 %v6948
    %v7203 = vpop.f32.mrf.mxu0
    %v7204 = vadd.f32 %v4857, %v7203
    %v7205 = vpop.f32.mrf.mxu0
    %7206 = vmatprep.mubr.f32.mxu0 0.0
    %7207 = vmatmul.mubr.f32.gmra.mxu0 %v6949
    %v7208 = vpop.f32.mrf.mxu0
    %v7209 = vadd.f32 %v4857, %v7208
    %v7210 = vpop.f32.mrf.mxu0
    %7211 = vmatprep.mubr.f32.mxu0 0.0
    %7212 = vmatmul.mubr.f32.gmra.mxu0 %v6950
    %v7213 = vpop.f32.mrf.mxu0
    %v7214 = vadd.f32 %v4857, %v7213
    %v7215 = vpop.f32.mrf.mxu0
    %7216 = vmatprep.mubr.f32.mxu0 0.0
    %7217 = vmatmul.mubr.f32.gmra.mxu0 %v6951
    %v7218 = vpop.f32.mrf.mxu0
    %v7219 = vadd.f32 %v4857, %v7218
    %v7220 = vpop.f32.mrf.mxu0
    %7221 = vmatprep.mubr.f32.mxu0 0.0
    %7222 = vmatmul.mubr.f32.gmra.mxu0 %v6952
    %v7223 = vpop.f32.mrf.mxu0
    %v7224 = vadd.f32 %v4857, %v7223
    %v7225 = vpop.f32.mrf.mxu0
    %7226 = vdwg.mxu0
    %v7227 = vadd.f32 %v4601, %v7032
    %v7228 = vadd.f32 %v4607, %v7038
    %v7229 = vadd.f32 %v4613, %v7044
    %v7230 = vadd.f32 %v4619, %v7050
    %v7231 = vadd.f32 %v4625, %v7056
    %v7232 = vadd.f32 %v4631, %v7062
    %v7233 = vadd.f32 %v4637, %v7068
    %v7234 = vadd.f32 %v4643, %v7074
    %v7235 = vadd.f32 %v4649, %v7080
    %v7236 = vadd.f32 %v4655, %v7086
    %v7237 = vadd.f32 %v4661, %v7092
    %v7238 = vadd.f32 %v4667, %v7098
    %v7239 = vxor.u32 %v7227, 2147483648
    %v7240 = vxor.u32 %v7228, 2147483648
    %v7241 = vxor.u32 %v7229, 2147483648
    %v7242 = vxor.u32 %v7230, 2147483648
    %v7243 = vxor.u32 %v7231, 2147483648
    %v7244 = vxor.u32 %v7232, 2147483648
    %v7245 = vxor.u32 %v7233, 2147483648
    %v7246 = vxor.u32 %v7234, 2147483648
    %v7247 = vxor.u32 %v7235, 2147483648
    %v7248 = vxor.u32 %v7236, 2147483648
    %v7249 = vxor.u32 %v7237, 2147483648
    %v7250 = vxor.u32 %v7238, 2147483648
    %v7251 = vmul.f32 %v7239, 1.442695
    %v7252 = vpow.pop %v7251
    %v7253 = vmul.f32 %v7240, 1.442695
    %v7254 = vpow.pop %v7253
    %v7255 = vmul.f32 %v7241, 1.442695
    %v7256 = vpow.pop %v7255
    %v7257 = vmul.f32 %v7242, 1.442695
    %v7258 = vpow.pop %v7257
    %v7259 = vmul.f32 %v7243, 1.442695
    %v7260 = vpow.pop %v7259
    %v7261 = vmul.f32 %v7244, 1.442695
    %v7262 = vpow.pop %v7261
    %v7263 = vmul.f32 %v7245, 1.442695
    %v7264 = vpow.pop %v7263
    %v7265 = vmul.f32 %v7246, 1.442695
    %v7266 = vpow.pop %v7265
    %v7267 = vmul.f32 %v7247, 1.442695
    %v7268 = vpow.pop %v7267
    %v7269 = vmul.f32 %v7248, 1.442695
    %v7270 = vpow.pop %v7269
    %v7271 = vmul.f32 %v7249, 1.442695
    %v7272 = vpow.pop %v7271
    %v7273 = vmul.f32 %v7250, 1.442695
    %v7274 = vpow.pop %v7273
    %v7275 = vadd.f32 %v7252, 1.0
    %v7276 = vadd.f32 %v7254, 1.0
    %v7277 = vadd.f32 %v7256, 1.0
    %v7278 = vadd.f32 %v7258, 1.0
    %v7279 = vadd.f32 %v7260, 1.0
    %v7280 = vadd.f32 %v7262, 1.0
    %v7281 = vadd.f32 %v7264, 1.0
    %v7282 = vadd.f32 %v7266, 1.0
    %v7283 = vadd.f32 %v7268, 1.0
    %v7284 = vadd.f32 %v7270, 1.0
    %v7285 = vadd.f32 %v7272, 1.0
    %v7286 = vadd.f32 %v7274, 1.0
    %v7287 = vrcp.pop %v7275
    %v7288 = vmul.f32 1.0, %v7287
    %v7289 = vrcp.pop %v7276
    %v7290 = vmul.f32 1.0, %v7289
    %v7291 = vrcp.pop %v7277
    %v7292 = vmul.f32 1.0, %v7291
    %v7293 = vrcp.pop %v7278
    %v7294 = vmul.f32 1.0, %v7293
    %v7295 = vrcp.pop %v7279
    %v7296 = vmul.f32 1.0, %v7295
    %v7297 = vrcp.pop %v7280
    %v7298 = vmul.f32 1.0, %v7297
    %v7299 = vrcp.pop %v7281
    %v7300 = vmul.f32 1.0, %v7299
    %v7301 = vrcp.pop %v7282
    %v7302 = vmul.f32 1.0, %v7301
    %v7303 = vrcp.pop %v7283
    %v7304 = vmul.f32 1.0, %v7303
    %v7305 = vrcp.pop %v7284
    %v7306 = vmul.f32 1.0, %v7305
    %v7307 = vrcp.pop %v7285
    %v7308 = vmul.f32 1.0, %v7307
    %v7309 = vrcp.pop %v7286
    %v7310 = vmul.f32 1.0, %v7309
    %v7311 = vadd.f32 %v4603, %v7034
    %v7312 = vadd.f32 %v4609, %v7040
    %v7313 = vadd.f32 %v4615, %v7046
    %v7314 = vadd.f32 %v4621, %v7052
    %v7315 = vadd.f32 %v4627, %v7058
    %v7316 = vadd.f32 %v4633, %v7064
    %v7317 = vadd.f32 %v4639, %v7070
    %v7318 = vadd.f32 %v4645, %v7076
    %v7319 = vadd.f32 %v4651, %v7082
    %v7320 = vadd.f32 %v4657, %v7088
    %v7321 = vadd.f32 %v4663, %v7094
    %v7322 = vadd.f32 %v4669, %v7100
    %v7323 = vxor.u32 %v7311, 2147483648
    %v7324 = vxor.u32 %v7312, 2147483648
    %v7325 = vxor.u32 %v7313, 2147483648
    %v7326 = vxor.u32 %v7314, 2147483648
    %v7327 = vxor.u32 %v7315, 2147483648
    %v7328 = vxor.u32 %v7316, 2147483648
    %v7329 = vxor.u32 %v7317, 2147483648
    %v7330 = vxor.u32 %v7318, 2147483648
    %v7331 = vxor.u32 %v7319, 2147483648
    %v7332 = vxor.u32 %v7320, 2147483648
    %v7333 = vxor.u32 %v7321, 2147483648
    %v7334 = vxor.u32 %v7322, 2147483648
    %v7335 = vmul.f32 %v7323, 1.442695
    %v7336 = vpow.pop %v7335
    %v7337 = vmul.f32 %v7324, 1.442695
    %v7338 = vpow.pop %v7337
    %v7339 = vmul.f32 %v7325, 1.442695
    %v7340 = vpow.pop %v7339
    %v7341 = vmul.f32 %v7326, 1.442695
    %v7342 = vpow.pop %v7341
    %v7343 = vmul.f32 %v7327, 1.442695
    %v7344 = vpow.pop %v7343
    %v7345 = vmul.f32 %v7328, 1.442695
    %v7346 = vpow.pop %v7345
    %v7347 = vmul.f32 %v7329, 1.442695
    %v7348 = vpow.pop %v7347
    %v7349 = vmul.f32 %v7330, 1.442695
    %v7350 = vpow.pop %v7349
    %v7351 = vmul.f32 %v7331, 1.442695
    %v7352 = vpow.pop %v7351
    %v7353 = vmul.f32 %v7332, 1.442695
    %v7354 = vpow.pop %v7353
    %v7355 = vmul.f32 %v7333, 1.442695
    %v7356 = vpow.pop %v7355
    %v7357 = vmul.f32 %v7334, 1.442695
    %v7358 = vpow.pop %v7357
    %v7359 = vadd.f32 %v7336, 1.0
    %v7360 = vadd.f32 %v7338, 1.0
    %v7361 = vadd.f32 %v7340, 1.0
    %v7362 = vadd.f32 %v7342, 1.0
    %v7363 = vadd.f32 %v7344, 1.0
    %v7364 = vadd.f32 %v7346, 1.0
    %v7365 = vadd.f32 %v7348, 1.0
    %v7366 = vadd.f32 %v7350, 1.0
    %v7367 = vadd.f32 %v7352, 1.0
    %v7368 = vadd.f32 %v7354, 1.0
    %v7369 = vadd.f32 %v7356, 1.0
    %v7370 = vadd.f32 %v7358, 1.0
    %v7371 = vrcp.pop %v7359
    %v7372 = vmul.f32 1.0, %v7371
    %v7373 = vrcp.pop %v7360
    %v7374 = vmul.f32 1.0, %v7373
    %v7375 = vrcp.pop %v7361
    %v7376 = vmul.f32 1.0, %v7375
    %v7377 = vrcp.pop %v7362
    %v7378 = vmul.f32 1.0, %v7377
    %v7379 = vrcp.pop %v7363
    %v7380 = vmul.f32 1.0, %v7379
    %v7381 = vrcp.pop %v7364
    %v7382 = vmul.f32 1.0, %v7381
    %v7383 = vrcp.pop %v7365
    %v7384 = vmul.f32 1.0, %v7383
    %v7385 = vrcp.pop %v7366
    %v7386 = vmul.f32 1.0, %v7385
    %v7387 = vrcp.pop %v7367
    %v7388 = vmul.f32 1.0, %v7387
    %v7389 = vrcp.pop %v7368
    %v7390 = vmul.f32 1.0, %v7389
    %v7391 = vrcp.pop %v7369
    %v7392 = vmul.f32 1.0, %v7391
    %v7393 = vrcp.pop %v7370
    %v7394 = vmul.f32 1.0, %v7393
    %v7395 = vmul.f32 %v7288, %v7169
    %v7396 = vmul.f32 %v7290, %v7174
    %v7397 = vmul.f32 %v7292, %v7179
    %v7398 = vmul.f32 %v7294, %v7184
    %v7399 = vmul.f32 %v7296, %v7189
    %v7400 = vmul.f32 %v7298, %v7194
    %v7401 = vmul.f32 %v7300, %v7199
    %v7402 = vmul.f32 %v7302, %v7204
    %v7403 = vmul.f32 %v7304, %v7209
    %v7404 = vmul.f32 %v7306, %v7214
    %v7405 = vmul.f32 %v7308, %v7219
    %v7406 = vmul.f32 %v7310, %v7224
    %v7407 = vadd.f32 %v4738, %v7395
    %v7408 = vadd.f32 %v4743, %v7396
    %v7409 = vadd.f32 %v4748, %v7397
    %v7410 = vadd.f32 %v4753, %v7398
    %v7411 = vadd.f32 %v4758, %v7399
    %v7412 = vadd.f32 %v4763, %v7400
    %v7413 = vadd.f32 %v4768, %v7401
    %v7414 = vadd.f32 %v4773, %v7402
    %v7415 = vadd.f32 %v4778, %v7403
    %v7416 = vadd.f32 %v4783, %v7404
    %v7417 = vadd.f32 %v4788, %v7405
    %v7418 = vadd.f32 %v4793, %v7406
    %v7419 = vtanh.pop %v7407
    %v7420 = vtanh.pop %v7408
    %v7421 = vtanh.pop %v7409
    %v7422 = vtanh.pop %v7410
    %v7423 = vtanh.pop %v7411
    %v7424 = vtanh.pop %v7412
    %v7425 = vtanh.pop %v7413
    %v7426 = vtanh.pop %v7414
    %v7427 = vtanh.pop %v7415
    %v7428 = vtanh.pop %v7416
    %v7429 = vtanh.pop %v7417
    %v7430 = vtanh.pop %v7418
    %v7431 = vsub.f32 1.0, %v7372
    %v7432 = vsub.f32 1.0, %v7374
    %v7433 = vsub.f32 1.0, %v7376
    %v7434 = vsub.f32 1.0, %v7378
    %v7435 = vsub.f32 1.0, %v7380
    %v7436 = vsub.f32 1.0, %v7382
    %v7437 = vsub.f32 1.0, %v7384
    %v7438 = vsub.f32 1.0, %v7386
    %v7439 = vsub.f32 1.0, %v7388
    %v7440 = vsub.f32 1.0, %v7390
    %v7441 = vsub.f32 1.0, %v7392
    %v7442 = vsub.f32 1.0, %v7394
    %v7443 = vmul.f32 %v7431, %v7419
    %v7444 = vmul.f32 %v7432, %v7420
    %v7445 = vmul.f32 %v7433, %v7421
    %v7446 = vmul.f32 %v7434, %v7422
    %v7447 = vmul.f32 %v7435, %v7423
    %v7448 = vmul.f32 %v7436, %v7424
    %v7449 = vmul.f32 %v7437, %v7425
    %v7450 = vmul.f32 %v7438, %v7426
    %v7451 = vmul.f32 %v7439, %v7427
    %v7452 = vmul.f32 %v7440, %v7428
    %v7453 = vmul.f32 %v7441, %v7429
    %v7454 = vmul.f32 %v7442, %v7430
    %v7455 = vmul.f32 %v7372, %v6941
    %v7456 = vmul.f32 %v7374, %v6942
    %v7457 = vmul.f32 %v7376, %v6943
    %v7458 = vmul.f32 %v7378, %v6944
    %v7459 = vmul.f32 %v7380, %v6945
    %v7460 = vmul.f32 %v7382, %v6946
    %v7461 = vmul.f32 %v7384, %v6947
    %v7462 = vmul.f32 %v7386, %v6948
    %v7463 = vmul.f32 %v7388, %v6949
    %v7464 = vmul.f32 %v7390, %v6950
    %v7465 = vmul.f32 %v7392, %v6951
    %v7466 = vmul.f32 %v7394, %v6952
    %v7467 = vadd.f32 %v7443, %v7455
    %v7468 = vadd.f32 %v7444, %v7456
    %v7469 = vadd.f32 %v7445, %v7457
    %v7470 = vadd.f32 %v7446, %v7458
    %v7471 = vadd.f32 %v7447, %v7459
    %v7472 = vadd.f32 %v7448, %v7460
    %v7473 = vadd.f32 %v7449, %v7461
    %v7474 = vadd.f32 %v7450, %v7462
    %v7475 = vadd.f32 %v7451, %v7463
    %v7476 = vadd.f32 %v7452, %v7464
    %v7477 = vadd.f32 %v7453, %v7465
    %v7478 = vadd.f32 %v7454, %v7466
    %7479 = vst [vmem:[#allocation2 + $0x180] sm:$0xff] %v7467
    %7480 = vst [vmem:[#allocation2 + $0x188] sm:$0xff] %v7468
    %7481 = vst [vmem:[#allocation2 + $0x190] sm:$0xff] %v7469
    %7482 = vst [vmem:[#allocation2 + $0x198] sm:$0xff] %v7470
    %7483 = vst [vmem:[#allocation2 + $0x1a0] sm:$0xff] %v7471
    %7484 = vst [vmem:[#allocation2 + $0x1a8] sm:$0xff] %v7472
    %7485 = vst [vmem:[#allocation2 + $0x1b0] sm:$0xff] %v7473
    %7486 = vst [vmem:[#allocation2 + $0x1b8] sm:$0xff] %v7474
    %7487 = vst [vmem:[#allocation2 + $0x1c0] sm:$0xff] %v7475
    %7488 = vst [vmem:[#allocation2 + $0x1c8] sm:$0xff] %v7476
    %7489 = vst [vmem:[#allocation2 + $0x1d0] sm:$0xff] %v7477
    %7490 = vst [vmem:[#allocation2 + $0x1d8] sm:$0xff] %v7478
    %7491 = vmatprep.subr.mxu0 %v4842
    %7492 = vmatpush1.msra.mxu0 %v4841
    %7493 = vmatprep.subr.mxu0 %v4839
    %7494 = vmatpush1.msra.mxu0 %v4838
    %7495 = vmatprep.subr.mxu0 %v4836
    %7496 = vmatpush1.msra.mxu0 %v4835
    %7497 = vmatprep.subr.mxu0 %v4833
    %7498 = vmatpush1.msra.mxu0 %v4832
    %7499 = vmatprep.subr.mxu0 %v4830
    %7500 = vmatpush1.msra.mxu0 %v4829
    %7501 = vmatprep.subr.mxu0 %v4827
    %7502 = vmatpush1.msra.mxu0 %v4826
    %7503 = vmatprep.subr.mxu0 %v4824
    %7504 = vmatpush1.msra.mxu0 %v4823
    %7505 = vmatprep.subr.mxu0 %v4821
    %7506 = vmatpush1.msra.mxu0 %v4820
    %7507 = vmatprep.subr.mxu0 %v4818
    %7508 = vmatpush1.msra.mxu0 %v4817
    %7509 = vmatprep.subr.mxu0 %v4815
    %7510 = vmatpush1.msra.mxu0 %v4814
    %7511 = vmatprep.subr.mxu0 %v4812
    %7512 = vmatpush1.msra.mxu0 %v4811
    %7513 = vmatprep.subr.mxu0 %v4809
    %7514 = vmatpush1.msra.mxu0 %v4808
    %7515 = vmatprep.subr.mxu0 %v4806
    %7516 = vmatpush1.msra.mxu0 %v4805
    %7517 = vmatprep.subr.mxu0 %v4803
    %7518 = vmatpush1.msra.mxu0 %v4802
    %7519 = vmatprep.subr.mxu0 %v4800
    %7520 = vmatpush1.msra.mxu0 %v4799
    %7521 = vmatprep.subr.mxu0 %v4797
    %7522 = vmatpush1.msra.mxu0 %v4796
    %7523 = vmatprep.subr.mxu0 0.0
    %7524 = vmatpush2.msra.mxu0 0.0
    %7525 = vmatprep.subr.mxu0 0.0
    %7526 = vmatpush2.msra.mxu0 0.0
    %7527 = vmatprep.subr.mxu0 0.0
    %7528 = vmatpush2.msra.mxu0 0.0
    %7529 = vmatprep.subr.mxu0 0.0
    %7530 = vmatpush2.msra.mxu0 0.0
    %7531 = vmatprep.subr.mxu0 0.0
    %7532 = vmatpush2.msra.mxu0 0.0
    %7533 = vmatprep.subr.mxu0 0.0
    %7534 = vmatpush2.msra.mxu0 0.0
    %7535 = vmatprep.subr.mxu0 0.0
    %7536 = vmatpush2.msra.mxu0 0.0
    %7537 = vmatprep.subr.mxu0 0.0
    %7538 = vmatpush2.msra.mxu0 0.0
    %7539 = vmatprep.subr.mxu0 0.0
    %7540 = vmatpush2.msra.mxu0 0.0
    %7541 = vmatprep.subr.mxu0 0.0
    %7542 = vmatpush2.msra.mxu0 0.0
    %7543 = vmatprep.subr.mxu0 0.0
    %7544 = vmatpush2.msra.mxu0 0.0
    %7545 = vmatprep.subr.mxu0 0.0
    %7546 = vmatpush2.msra.mxu0 0.0
    %7547 = vmatprep.subr.mxu0 0.0
    %7548 = vmatpush2.msra.mxu0 0.0
    %7549 = vmatprep.subr.mxu0 0.0
    %7550 = vmatpush2.msra.mxu0 0.0
    %7551 = vmatprep.subr.mxu0 0.0
    %7552 = vmatpush2.msra.mxu0 0.0
    %7553 = vmatprep.subr.mxu0 0.0
    %7554 = vmatpush2.msra.mxu0 0.0
    %7555 = vmatprep.mubr.f32.mxu0 0.0
    %7556 = vmatmul.mubr.f32.gmra.mxu0 %v7467
    %v7557 = vpop.f32.mrf.mxu0
    %v7558 = vadd.f32 %v4849, %v7557
    %v7559 = vpop.f32.mrf.mxu0
    %v7560 = vadd.f32 %v4853, %v7559
    %7561 = vmatprep.mubr.f32.mxu0 0.0
    %7562 = vmatmul.mubr.f32.gmra.mxu0 %v7468
    %v7563 = vpop.f32.mrf.mxu0
    %v7564 = vadd.f32 %v4849, %v7563
    %v7565 = vpop.f32.mrf.mxu0
    %v7566 = vadd.f32 %v4853, %v7565
    %7567 = vmatprep.mubr.f32.mxu0 0.0
    %7568 = vmatmul.mubr.f32.gmra.mxu0 %v7469
    %v7569 = vpop.f32.mrf.mxu0
    %v7570 = vadd.f32 %v4849, %v7569
    %v7571 = vpop.f32.mrf.mxu0
    %v7572 = vadd.f32 %v4853, %v7571
    %7573 = vmatprep.mubr.f32.mxu0 0.0
    %7574 = vmatmul.mubr.f32.gmra.mxu0 %v7470
    %v7575 = vpop.f32.mrf.mxu0
    %v7576 = vadd.f32 %v4849, %v7575
    %v7577 = vpop.f32.mrf.mxu0
    %v7578 = vadd.f32 %v4853, %v7577
    %7579 = vmatprep.mubr.f32.mxu0 0.0
    %7580 = vmatmul.mubr.f32.gmra.mxu0 %v7471
    %v7581 = vpop.f32.mrf.mxu0
    %v7582 = vadd.f32 %v4849, %v7581
    %v7583 = vpop.f32.mrf.mxu0
    %v7584 = vadd.f32 %v4853, %v7583
    %7585 = vmatprep.mubr.f32.mxu0 0.0
    %7586 = vmatmul.mubr.f32.gmra.mxu0 %v7472
    %v7587 = vpop.f32.mrf.mxu0
    %v7588 = vadd.f32 %v4849, %v7587
    %v7589 = vpop.f32.mrf.mxu0
    %v7590 = vadd.f32 %v4853, %v7589
    %7591 = vmatprep.mubr.f32.mxu0 0.0
    %7592 = vmatmul.mubr.f32.gmra.mxu0 %v7473
    %v7593 = vpop.f32.mrf.mxu0
    %v7594 = vadd.f32 %v4849, %v7593
    %v7595 = vpop.f32.mrf.mxu0
    %v7596 = vadd.f32 %v4853, %v7595
    %7597 = vmatprep.mubr.f32.mxu0 0.0
    %7598 = vmatmul.mubr.f32.gmra.mxu0 %v7474
    %v7599 = vpop.f32.mrf.mxu0
    %v7600 = vadd.f32 %v4849, %v7599
    %v7601 = vpop.f32.mrf.mxu0
    %v7602 = vadd.f32 %v4853, %v7601
    %7603 = vmatprep.mubr.f32.mxu0 0.0
    %7604 = vmatmul.mubr.f32.gmra.mxu0 %v7475
    %v7605 = vpop.f32.mrf.mxu0
    %v7606 = vadd.f32 %v4849, %v7605
    %v7607 = vpop.f32.mrf.mxu0
    %v7608 = vadd.f32 %v4853, %v7607
    %7609 = vmatprep.mubr.f32.mxu0 0.0
    %7610 = vmatmul.mubr.f32.gmra.mxu0 %v7476
    %v7611 = vpop.f32.mrf.mxu0
    %v7612 = vadd.f32 %v4849, %v7611
    %v7613 = vpop.f32.mrf.mxu0
    %v7614 = vadd.f32 %v4853, %v7613
    %7615 = vmatprep.mubr.f32.mxu0 0.0
    %7616 = vmatmul.mubr.f32.gmra.mxu0 %v7477
    %v7617 = vpop.f32.mrf.mxu0
    %v7618 = vadd.f32 %v4849, %v7617
    %v7619 = vpop.f32.mrf.mxu0
    %v7620 = vadd.f32 %v4853, %v7619
    %7621 = vmatprep.mubr.f32.mxu0 0.0
    %7622 = vmatmul.mubr.f32.gmra.mxu0 %v7478
    %v7623 = vpop.f32.mrf.mxu0
    %v7624 = vadd.f32 %v4849, %v7623
    %v7625 = vpop.f32.mrf.mxu0
    %v7626 = vadd.f32 %v4853, %v7625
    %7627 = vdwg.mxu0
    %7628 = vmatprep.subr.mxu0 0.0
    %7629 = vmatpush1.msra.mxu0 %v4843
    %7630 = vmatprep.subr.mxu0 0.0
    %7631 = vmatpush1.msra.mxu0 %v4840
    %7632 = vmatprep.subr.mxu0 0.0
    %7633 = vmatpush1.msra.mxu0 %v4837
    %7634 = vmatprep.subr.mxu0 0.0
    %7635 = vmatpush1.msra.mxu0 %v4834
    %7636 = vmatprep.subr.mxu0 0.0
    %7637 = vmatpush1.msra.mxu0 %v4831
    %7638 = vmatprep.subr.mxu0 0.0
    %7639 = vmatpush1.msra.mxu0 %v4828
    %7640 = vmatprep.subr.mxu0 0.0
    %7641 = vmatpush1.msra.mxu0 %v4825
    %7642 = vmatprep.subr.mxu0 0.0
    %7643 = vmatpush1.msra.mxu0 %v4822
    %7644 = vmatprep.subr.mxu0 0.0
    %7645 = vmatpush1.msra.mxu0 %v4819
    %7646 = vmatprep.subr.mxu0 0.0
    %7647 = vmatpush1.msra.mxu0 %v4816
    %7648 = vmatprep.subr.mxu0 0.0
    %7649 = vmatpush1.msra.mxu0 %v4813
    %7650 = vmatprep.subr.mxu0 0.0
    %7651 = vmatpush1.msra.mxu0 %v4810
    %7652 = vmatprep.subr.mxu0 0.0
    %7653 = vmatpush1.msra.mxu0 %v4807
    %7654 = vmatprep.subr.mxu0 0.0
    %7655 = vmatpush1.msra.mxu0 %v4804
    %7656 = vmatprep.subr.mxu0 0.0
    %7657 = vmatpush1.msra.mxu0 %v4801
    %7658 = vmatprep.subr.mxu0 0.0
    %7659 = vmatpush1.msra.mxu0 %v4798
    %7660 = vmatprep.subr.mxu0 0.0
    %7661 = vmatpush2.msra.mxu0 0.0
    %7662 = vmatprep.subr.mxu0 0.0
    %7663 = vmatpush2.msra.mxu0 0.0
    %7664 = vmatprep.subr.mxu0 0.0
    %7665 = vmatpush2.msra.mxu0 0.0
    %7666 = vmatprep.subr.mxu0 0.0
    %7667 = vmatpush2.msra.mxu0 0.0
    %7668 = vmatprep.subr.mxu0 0.0
    %7669 = vmatpush2.msra.mxu0 0.0
    %7670 = vmatprep.subr.mxu0 0.0
    %7671 = vmatpush2.msra.mxu0 0.0
    %7672 = vmatprep.subr.mxu0 0.0
    %7673 = vmatpush2.msra.mxu0 0.0
    %7674 = vmatprep.subr.mxu0 0.0
    %7675 = vmatpush2.msra.mxu0 0.0
    %7676 = vmatprep.subr.mxu0 0.0
    %7677 = vmatpush2.msra.mxu0 0.0
    %7678 = vmatprep.subr.mxu0 0.0
    %7679 = vmatpush2.msra.mxu0 0.0
    %7680 = vmatprep.subr.mxu0 0.0
    %7681 = vmatpush2.msra.mxu0 0.0
    %7682 = vmatprep.subr.mxu0 0.0
    %7683 = vmatpush2.msra.mxu0 0.0
    %7684 = vmatprep.subr.mxu0 0.0
    %7685 = vmatpush2.msra.mxu0 0.0
    %7686 = vmatprep.subr.mxu0 0.0
    %7687 = vmatpush2.msra.mxu0 0.0
    %7688 = vmatprep.subr.mxu0 0.0
    %7689 = vmatpush2.msra.mxu0 0.0
    %7690 = vmatprep.subr.mxu0 0.0
    %7691 = vmatpush2.msra.mxu0 0.0
    %7692 = vmatprep.mubr.f32.mxu0 0.0
    %7693 = vmatmul.mubr.f32.gmra.mxu0 %v7467
    %v7694 = vpop.f32.mrf.mxu0
    %v7695 = vadd.f32 %v4857, %v7694
    %v7696 = vpop.f32.mrf.mxu0
    %7697 = vmatprep.mubr.f32.mxu0 0.0
    %7698 = vmatmul.mubr.f32.gmra.mxu0 %v7468
    %v7699 = vpop.f32.mrf.mxu0
    %v7700 = vadd.f32 %v4857, %v7699
    %v7701 = vpop.f32.mrf.mxu0
    %7702 = vmatprep.mubr.f32.mxu0 0.0
    %7703 = vmatmul.mubr.f32.gmra.mxu0 %v7469
    %v7704 = vpop.f32.mrf.mxu0
    %v7705 = vadd.f32 %v4857, %v7704
    %v7706 = vpop.f32.mrf.mxu0
    %7707 = vmatprep.mubr.f32.mxu0 0.0
    %7708 = vmatmul.mubr.f32.gmra.mxu0 %v7470
    %v7709 = vpop.f32.mrf.mxu0
    %v7710 = vadd.f32 %v4857, %v7709
    %v7711 = vpop.f32.mrf.mxu0
    %7712 = vmatprep.mubr.f32.mxu0 0.0
    %7713 = vmatmul.mubr.f32.gmra.mxu0 %v7471
    %v7714 = vpop.f32.mrf.mxu0
    %v7715 = vadd.f32 %v4857, %v7714
    %v7716 = vpop.f32.mrf.mxu0
    %7717 = vmatprep.mubr.f32.mxu0 0.0
    %7718 = vmatmul.mubr.f32.gmra.mxu0 %v7472
    %v7719 = vpop.f32.mrf.mxu0
    %v7720 = vadd.f32 %v4857, %v7719
    %v7721 = vpop.f32.mrf.mxu0
    %7722 = vmatprep.mubr.f32.mxu0 0.0
    %7723 = vmatmul.mubr.f32.gmra.mxu0 %v7473
    %v7724 = vpop.f32.mrf.mxu0
    %v7725 = vadd.f32 %v4857, %v7724
    %v7726 = vpop.f32.mrf.mxu0
    %7727 = vmatprep.mubr.f32.mxu0 0.0
    %7728 = vmatmul.mubr.f32.gmra.mxu0 %v7474
    %v7729 = vpop.f32.mrf.mxu0
    %v7730 = vadd.f32 %v4857, %v7729
    %v7731 = vpop.f32.mrf.mxu0
    %7732 = vmatprep.mubr.f32.mxu0 0.0
    %7733 = vmatmul.mubr.f32.gmra.mxu0 %v7475
    %v7734 = vpop.f32.mrf.mxu0
    %v7735 = vadd.f32 %v4857, %v7734
    %v7736 = vpop.f32.mrf.mxu0
    %7737 = vmatprep.mubr.f32.mxu0 0.0
    %7738 = vmatmul.mubr.f32.gmra.mxu0 %v7476
    %v7739 = vpop.f32.mrf.mxu0
    %v7740 = vadd.f32 %v4857, %v7739
    %v7741 = vpop.f32.mrf.mxu0
    %7742 = vmatprep.mubr.f32.mxu0 0.0
    %7743 = vmatmul.mubr.f32.gmra.mxu0 %v7477
    %v7744 = vpop.f32.mrf.mxu0
    %v7745 = vadd.f32 %v4857, %v7744
    %v7746 = vpop.f32.mrf.mxu0
    %7747 = vmatprep.mubr.f32.mxu0 0.0
    %7748 = vmatmul.mubr.f32.gmra.mxu0 %v7478
    %v7749 = vpop.f32.mrf.mxu0
    %v7750 = vadd.f32 %v4857, %v7749
    %v7751 = vpop.f32.mrf.mxu0
    %7752 = vdwg.mxu0
    %v7753 = vadd.f32 %v4601, %v7558
    %v7754 = vadd.f32 %v4607, %v7564
    %v7755 = vadd.f32 %v4613, %v7570
    %v7756 = vadd.f32 %v4619, %v7576
    %v7757 = vadd.f32 %v4625, %v7582
    %v7758 = vadd.f32 %v4631, %v7588
    %v7759 = vadd.f32 %v4637, %v7594
    %v7760 = vadd.f32 %v4643, %v7600
    %v7761 = vadd.f32 %v4649, %v7606
    %v7762 = vadd.f32 %v4655, %v7612
    %v7763 = vadd.f32 %v4661, %v7618
    %v7764 = vadd.f32 %v4667, %v7624
    %v7765 = vxor.u32 %v7753, 2147483648
    %v7766 = vxor.u32 %v7754, 2147483648
    %v7767 = vxor.u32 %v7755, 2147483648
    %v7768 = vxor.u32 %v7756, 2147483648
    %v7769 = vxor.u32 %v7757, 2147483648
    %v7770 = vxor.u32 %v7758, 2147483648
    %v7771 = vxor.u32 %v7759, 2147483648
    %v7772 = vxor.u32 %v7760, 2147483648
    %v7773 = vxor.u32 %v7761, 2147483648
    %v7774 = vxor.u32 %v7762, 2147483648
    %v7775 = vxor.u32 %v7763, 2147483648
    %v7776 = vxor.u32 %v7764, 2147483648
    %v7777 = vmul.f32 %v7765, 1.442695
    %v7778 = vpow.pop %v7777
    %v7779 = vmul.f32 %v7766, 1.442695
    %v7780 = vpow.pop %v7779
    %v7781 = vmul.f32 %v7767, 1.442695
    %v7782 = vpow.pop %v7781
    %v7783 = vmul.f32 %v7768, 1.442695
    %v7784 = vpow.pop %v7783
    %v7785 = vmul.f32 %v7769, 1.442695
    %v7786 = vpow.pop %v7785
    %v7787 = vmul.f32 %v7770, 1.442695
    %v7788 = vpow.pop %v7787
    %v7789 = vmul.f32 %v7771, 1.442695
    %v7790 = vpow.pop %v7789
    %v7791 = vmul.f32 %v7772, 1.442695
    %v7792 = vpow.pop %v7791
    %v7793 = vmul.f32 %v7773, 1.442695
    %v7794 = vpow.pop %v7793
    %v7795 = vmul.f32 %v7774, 1.442695
    %v7796 = vpow.pop %v7795
    %v7797 = vmul.f32 %v7775, 1.442695
    %v7798 = vpow.pop %v7797
    %v7799 = vmul.f32 %v7776, 1.442695
    %v7800 = vpow.pop %v7799
    %v7801 = vadd.f32 %v7778, 1.0
    %v7802 = vadd.f32 %v7780, 1.0
    %v7803 = vadd.f32 %v7782, 1.0
    %v7804 = vadd.f32 %v7784, 1.0
    %v7805 = vadd.f32 %v7786, 1.0
    %v7806 = vadd.f32 %v7788, 1.0
    %v7807 = vadd.f32 %v7790, 1.0
    %v7808 = vadd.f32 %v7792, 1.0
    %v7809 = vadd.f32 %v7794, 1.0
    %v7810 = vadd.f32 %v7796, 1.0
    %v7811 = vadd.f32 %v7798, 1.0
    %v7812 = vadd.f32 %v7800, 1.0
    %v7813 = vrcp.pop %v7801
    %v7814 = vmul.f32 1.0, %v7813
    %v7815 = vrcp.pop %v7802
    %v7816 = vmul.f32 1.0, %v7815
    %v7817 = vrcp.pop %v7803
    %v7818 = vmul.f32 1.0, %v7817
    %v7819 = vrcp.pop %v7804
    %v7820 = vmul.f32 1.0, %v7819
    %v7821 = vrcp.pop %v7805
    %v7822 = vmul.f32 1.0, %v7821
    %v7823 = vrcp.pop %v7806
    %v7824 = vmul.f32 1.0, %v7823
    %v7825 = vrcp.pop %v7807
    %v7826 = vmul.f32 1.0, %v7825
    %v7827 = vrcp.pop %v7808
    %v7828 = vmul.f32 1.0, %v7827
    %v7829 = vrcp.pop %v7809
    %v7830 = vmul.f32 1.0, %v7829
    %v7831 = vrcp.pop %v7810
    %v7832 = vmul.f32 1.0, %v7831
    %v7833 = vrcp.pop %v7811
    %v7834 = vmul.f32 1.0, %v7833
    %v7835 = vrcp.pop %v7812
    %v7836 = vmul.f32 1.0, %v7835
    %v7837 = vadd.f32 %v4603, %v7560
    %v7838 = vadd.f32 %v4609, %v7566
    %v7839 = vadd.f32 %v4615, %v7572
    %v7840 = vadd.f32 %v4621, %v7578
    %v7841 = vadd.f32 %v4627, %v7584
    %v7842 = vadd.f32 %v4633, %v7590
    %v7843 = vadd.f32 %v4639, %v7596
    %v7844 = vadd.f32 %v4645, %v7602
    %v7845 = vadd.f32 %v4651, %v7608
    %v7846 = vadd.f32 %v4657, %v7614
    %v7847 = vadd.f32 %v4663, %v7620
    %v7848 = vadd.f32 %v4669, %v7626
    %v7849 = vxor.u32 %v7837, 2147483648
    %v7850 = vxor.u32 %v7838, 2147483648
    %v7851 = vxor.u32 %v7839, 2147483648
    %v7852 = vxor.u32 %v7840, 2147483648
    %v7853 = vxor.u32 %v7841, 2147483648
    %v7854 = vxor.u32 %v7842, 2147483648
    %v7855 = vxor.u32 %v7843, 2147483648
    %v7856 = vxor.u32 %v7844, 2147483648
    %v7857 = vxor.u32 %v7845, 2147483648
    %v7858 = vxor.u32 %v7846, 2147483648
    %v7859 = vxor.u32 %v7847, 2147483648
    %v7860 = vxor.u32 %v7848, 2147483648
    %v7861 = vmul.f32 %v7849, 1.442695
    %v7862 = vpow.pop %v7861
    %v7863 = vmul.f32 %v7850, 1.442695
    %v7864 = vpow.pop %v7863
    %v7865 = vmul.f32 %v7851, 1.442695
    %v7866 = vpow.pop %v7865
    %v7867 = vmul.f32 %v7852, 1.442695
    %v7868 = vpow.pop %v7867
    %v7869 = vmul.f32 %v7853, 1.442695
    %v7870 = vpow.pop %v7869
    %v7871 = vmul.f32 %v7854, 1.442695
    %v7872 = vpow.pop %v7871
    %v7873 = vmul.f32 %v7855, 1.442695
    %v7874 = vpow.pop %v7873
    %v7875 = vmul.f32 %v7856, 1.442695
    %v7876 = vpow.pop %v7875
    %v7877 = vmul.f32 %v7857, 1.442695
    %v7878 = vpow.pop %v7877
    %v7879 = vmul.f32 %v7858, 1.442695
    %v7880 = vpow.pop %v7879
    %v7881 = vmul.f32 %v7859, 1.442695
    %v7882 = vpow.pop %v7881
    %v7883 = vmul.f32 %v7860, 1.442695
    %v7884 = vpow.pop %v7883
    %v7885 = vadd.f32 %v7862, 1.0
    %v7886 = vadd.f32 %v7864, 1.0
    %v7887 = vadd.f32 %v7866, 1.0
    %v7888 = vadd.f32 %v7868, 1.0
    %v7889 = vadd.f32 %v7870, 1.0
    %v7890 = vadd.f32 %v7872, 1.0
    %v7891 = vadd.f32 %v7874, 1.0
    %v7892 = vadd.f32 %v7876, 1.0
    %v7893 = vadd.f32 %v7878, 1.0
    %v7894 = vadd.f32 %v7880, 1.0
    %v7895 = vadd.f32 %v7882, 1.0
    %v7896 = vadd.f32 %v7884, 1.0
    %v7897 = vrcp.pop %v7885
    %v7898 = vmul.f32 1.0, %v7897
    %v7899 = vrcp.pop %v7886
    %v7900 = vmul.f32 1.0, %v7899
    %v7901 = vrcp.pop %v7887
    %v7902 = vmul.f32 1.0, %v7901
    %v7903 = vrcp.pop %v7888
    %v7904 = vmul.f32 1.0, %v7903
    %v7905 = vrcp.pop %v7889
    %v7906 = vmul.f32 1.0, %v7905
    %v7907 = vrcp.pop %v7890
    %v7908 = vmul.f32 1.0, %v7907
    %v7909 = vrcp.pop %v7891
    %v7910 = vmul.f32 1.0, %v7909
    %v7911 = vrcp.pop %v7892
    %v7912 = vmul.f32 1.0, %v7911
    %v7913 = vrcp.pop %v7893
    %v7914 = vmul.f32 1.0, %v7913
    %v7915 = vrcp.pop %v7894
    %v7916 = vmul.f32 1.0, %v7915
    %v7917 = vrcp.pop %v7895
    %v7918 = vmul.f32 1.0, %v7917
    %v7919 = vrcp.pop %v7896
    %v7920 = vmul.f32 1.0, %v7919
    %v7921 = vmul.f32 %v7814, %v7695
    %v7922 = vmul.f32 %v7816, %v7700
    %v7923 = vmul.f32 %v7818, %v7705
    %v7924 = vmul.f32 %v7820, %v7710
    %v7925 = vmul.f32 %v7822, %v7715
    %v7926 = vmul.f32 %v7824, %v7720
    %v7927 = vmul.f32 %v7826, %v7725
    %v7928 = vmul.f32 %v7828, %v7730
    %v7929 = vmul.f32 %v7830, %v7735
    %v7930 = vmul.f32 %v7832, %v7740
    %v7931 = vmul.f32 %v7834, %v7745
    %v7932 = vmul.f32 %v7836, %v7750
    %v7933 = vadd.f32 %v4738, %v7921
    %v7934 = vadd.f32 %v4743, %v7922
    %v7935 = vadd.f32 %v4748, %v7923
    %v7936 = vadd.f32 %v4753, %v7924
    %v7937 = vadd.f32 %v4758, %v7925
    %v7938 = vadd.f32 %v4763, %v7926
    %v7939 = vadd.f32 %v4768, %v7927
    %v7940 = vadd.f32 %v4773, %v7928
    %v7941 = vadd.f32 %v4778, %v7929
    %v7942 = vadd.f32 %v4783, %v7930
    %v7943 = vadd.f32 %v4788, %v7931
    %v7944 = vadd.f32 %v4793, %v7932
    %v7945 = vtanh.pop %v7933
    %v7946 = vtanh.pop %v7934
    %v7947 = vtanh.pop %v7935
    %v7948 = vtanh.pop %v7936
    %v7949 = vtanh.pop %v7937
    %v7950 = vtanh.pop %v7938
    %v7951 = vtanh.pop %v7939
    %v7952 = vtanh.pop %v7940
    %v7953 = vtanh.pop %v7941
    %v7954 = vtanh.pop %v7942
    %v7955 = vtanh.pop %v7943
    %v7956 = vtanh.pop %v7944
    %v7957 = vsub.f32 1.0, %v7898
    %v7958 = vsub.f32 1.0, %v7900
    %v7959 = vsub.f32 1.0, %v7902
    %v7960 = vsub.f32 1.0, %v7904
    %v7961 = vsub.f32 1.0, %v7906
    %v7962 = vsub.f32 1.0, %v7908
    %v7963 = vsub.f32 1.0, %v7910
    %v7964 = vsub.f32 1.0, %v7912
    %v7965 = vsub.f32 1.0, %v7914
    %v7966 = vsub.f32 1.0, %v7916
    %v7967 = vsub.f32 1.0, %v7918
    %v7968 = vsub.f32 1.0, %v7920
    %v7969 = vmul.f32 %v7957, %v7945
    %v7970 = vmul.f32 %v7958, %v7946
    %v7971 = vmul.f32 %v7959, %v7947
    %v7972 = vmul.f32 %v7960, %v7948
    %v7973 = vmul.f32 %v7961, %v7949
    %v7974 = vmul.f32 %v7962, %v7950
    %v7975 = vmul.f32 %v7963, %v7951
    %v7976 = vmul.f32 %v7964, %v7952
    %v7977 = vmul.f32 %v7965, %v7953
    %v7978 = vmul.f32 %v7966, %v7954
    %v7979 = vmul.f32 %v7967, %v7955
    %v7980 = vmul.f32 %v7968, %v7956
    %v7981 = vmul.f32 %v7898, %v7467
    %v7982 = vmul.f32 %v7900, %v7468
    %v7983 = vmul.f32 %v7902, %v7469
    %v7984 = vmul.f32 %v7904, %v7470
    %v7985 = vmul.f32 %v7906, %v7471
    %v7986 = vmul.f32 %v7908, %v7472
    %v7987 = vmul.f32 %v7910, %v7473
    %v7988 = vmul.f32 %v7912, %v7474
    %v7989 = vmul.f32 %v7914, %v7475
    %v7990 = vmul.f32 %v7916, %v7476
    %v7991 = vmul.f32 %v7918, %v7477
    %v7992 = vmul.f32 %v7920, %v7478
    %v7993 = vadd.f32 %v7969, %v7981
    %v7994 = vadd.f32 %v7970, %v7982
    %v7995 = vadd.f32 %v7971, %v7983
    %v7996 = vadd.f32 %v7972, %v7984
    %v7997 = vadd.f32 %v7973, %v7985
    %v7998 = vadd.f32 %v7974, %v7986
    %v7999 = vadd.f32 %v7975, %v7987
    %v8000 = vadd.f32 %v7976, %v7988
    %v8001 = vadd.f32 %v7977, %v7989
    %v8002 = vadd.f32 %v7978, %v7990
    %v8003 = vadd.f32 %v7979, %v7991
    %v8004 = vadd.f32 %v7980, %v7992
    %8005 = vst [vmem:[#allocation2 + $0x1e0] sm:$0xff] %v7993
    %8006 = vst [vmem:[#allocation2 + $0x1e8] sm:$0xff] %v7994
    %8007 = vst [vmem:[#allocation2 + $0x1f0] sm:$0xff] %v7995
    %8008 = vst [vmem:[#allocation2 + $0x1f8] sm:$0xff] %v7996
    %8009 = vst [vmem:[#allocation2 + $0x200] sm:$0xff] %v7997
    %8010 = vst [vmem:[#allocation2 + $0x208] sm:$0xff] %v7998
    %8011 = vst [vmem:[#allocation2 + $0x210] sm:$0xff] %v7999
    %8012 = vst [vmem:[#allocation2 + $0x218] sm:$0xff] %v8000
    %8013 = vst [vmem:[#allocation2 + $0x220] sm:$0xff] %v8001
    %8014 = vst [vmem:[#allocation2 + $0x228] sm:$0xff] %v8002
    %8015 = vst [vmem:[#allocation2 + $0x230] sm:$0xff] %v8003
    %8016 = vst [vmem:[#allocation2 + $0x238] sm:$0xff] %v8004
    %v8017 = vld [vmem:[#allocation2] sm:$0xff]
    %v8018 = vld [vmem:[#allocation2 + $0x8] sm:$0xff]
    %v8019 = vld [vmem:[#allocation2 + $0x10] sm:$0xff]
    %v8020 = vld [vmem:[#allocation2 + $0x18] sm:$0xff]
    %v8021 = vld [vmem:[#allocation2 + $0x20] sm:$0xff]
    %v8022 = vld [vmem:[#allocation2 + $0x28] sm:$0xff]
    %v8023 = vld [vmem:[#allocation2 + $0x30] sm:$0xff]
    %v8024 = vld [vmem:[#allocation2 + $0x38] sm:$0xff]
    %v8025 = vld [vmem:[#allocation2 + $0x40] sm:$0xff]
    %v8026 = vld [vmem:[#allocation2 + $0x48] sm:$0xff]
    %v8027 = vld [vmem:[#allocation2 + $0x50] sm:$0xff]
    %v8028 = vld [vmem:[#allocation2 + $0x58] sm:$0xff]
    %v8029 = vld [vmem:[#allocation2 + $0x60] sm:$0xff]
    %v8030 = vld [vmem:[#allocation2 + $0x68] sm:$0xff]
    %v8031 = vld [vmem:[#allocation2 + $0x70] sm:$0xff]
    %v8032 = vld [vmem:[#allocation2 + $0x78] sm:$0xff]
    %v8033 = vld [vmem:[#allocation2 + $0x80] sm:$0xff]
    %v8034 = vld [vmem:[#allocation2 + $0x88] sm:$0xff]
    %v8035 = vld [vmem:[#allocation2 + $0x90] sm:$0xff]
    %v8036 = vld [vmem:[#allocation2 + $0x98] sm:$0xff]
    %v8037 = vld [vmem:[#allocation2 + $0xa0] sm:$0xff]
    %v8038 = vld [vmem:[#allocation2 + $0xa8] sm:$0xff]
    %v8039 = vld [vmem:[#allocation2 + $0xb0] sm:$0xff]
    %v8040 = vld [vmem:[#allocation2 + $0xb8] sm:$0xff]
    %v8041 = vld [vmem:[#allocation2 + $0xc0] sm:$0xff]
    %v8042 = vld [vmem:[#allocation2 + $0xc8] sm:$0xff]
    %v8043 = vld [vmem:[#allocation2 + $0xd0] sm:$0xff]
    %v8044 = vld [vmem:[#allocation2 + $0xd8] sm:$0xff]
    %v8045 = vld [vmem:[#allocation2 + $0xe0] sm:$0xff]
    %v8046 = vld [vmem:[#allocation2 + $0xe8] sm:$0xff]
    %v8047 = vld [vmem:[#allocation2 + $0xf0] sm:$0xff]
    %v8048 = vld [vmem:[#allocation2 + $0xf8] sm:$0xff]
    %v8049 = vld [vmem:[#allocation2 + $0x100] sm:$0xff]
    %v8050 = vld [vmem:[#allocation2 + $0x108] sm:$0xff]
    %v8051 = vld [vmem:[#allocation2 + $0x110] sm:$0xff]
    %v8052 = vld [vmem:[#allocation2 + $0x118] sm:$0xff]
    %v8053 = vld [vmem:[#allocation2 + $0x120] sm:$0xff]
    %v8054 = vld [vmem:[#allocation2 + $0x128] sm:$0xff]
    %v8055 = vld [vmem:[#allocation2 + $0x130] sm:$0xff]
    %v8056 = vld [vmem:[#allocation2 + $0x138] sm:$0xff]
    %v8057 = vld [vmem:[#allocation2 + $0x140] sm:$0xff]
    %v8058 = vld [vmem:[#allocation2 + $0x148] sm:$0xff]
    %v8059 = vld [vmem:[#allocation2 + $0x150] sm:$0xff]
    %v8060 = vld [vmem:[#allocation2 + $0x158] sm:$0xff]
    %v8061 = vld [vmem:[#allocation2 + $0x160] sm:$0xff]
    %v8062 = vld [vmem:[#allocation2 + $0x168] sm:$0xff]
    %v8063 = vld [vmem:[#allocation2 + $0x170] sm:$0xff]
    %v8064 = vld [vmem:[#allocation2 + $0x178] sm:$0xff]
    %v8065 = vld [vmem:[#allocation2 + $0x180] sm:$0xff]
    %v8066 = vld [vmem:[#allocation2 + $0x188] sm:$0xff]
    %v8067 = vld [vmem:[#allocation2 + $0x190] sm:$0xff]
    %v8068 = vld [vmem:[#allocation2 + $0x198] sm:$0xff]
    %v8069 = vld [vmem:[#allocation2 + $0x1a0] sm:$0xff]
    %v8070 = vld [vmem:[#allocation2 + $0x1a8] sm:$0xff]
    %v8071 = vld [vmem:[#allocation2 + $0x1b0] sm:$0xff]
    %v8072 = vld [vmem:[#allocation2 + $0x1b8] sm:$0xff]
    %v8073 = vld [vmem:[#allocation2 + $0x1c0] sm:$0xff]
    %v8074 = vld [vmem:[#allocation2 + $0x1c8] sm:$0xff]
    %v8075 = vld [vmem:[#allocation2 + $0x1d0] sm:$0xff]
    %v8076 = vld [vmem:[#allocation2 + $0x1d8] sm:$0xff]
    %v8077 = vld [vmem:[#allocation2 + $0x1e0] sm:$0xff]
    %v8078 = vld [vmem:[#allocation2 + $0x1e8] sm:$0xff]
    %v8079 = vld [vmem:[#allocation2 + $0x1f0] sm:$0xff]
    %v8080 = vld [vmem:[#allocation2 + $0x1f8] sm:$0xff]
    %v8081 = vld [vmem:[#allocation2 + $0x200] sm:$0xff]
    %v8082 = vld [vmem:[#allocation2 + $0x208] sm:$0xff]
    %v8083 = vld [vmem:[#allocation2 + $0x210] sm:$0xff]
    %v8084 = vld [vmem:[#allocation2 + $0x218] sm:$0xff]
    %v8085 = vld [vmem:[#allocation2 + $0x220] sm:$0xff]
    %v8086 = vld [vmem:[#allocation2 + $0x228] sm:$0xff]
    %v8087 = vld [vmem:[#allocation2 + $0x230] sm:$0xff]
    %v8088 = vld [vmem:[#allocation2 + $0x238] sm:$0xff]
    %v8089 = vld [vmem:[#allocation20] sm:$0xff]
    %v8090 = vld [vmem:[#allocation20 + $0x8] sm:$0xff]
    %v8091 = vld [vmem:[#allocation20 + $0x10] sm:$0xff]
    %v8092 = vld [vmem:[#allocation20 + $0x18] sm:$0xff]
    %v8093 = vld [vmem:[#allocation20 + $0x20] sm:$0xff]
    %v8094 = vld [vmem:[#allocation20 + $0x28] sm:$0xff]
    %v8095 = vld [vmem:[#allocation20 + $0x30] sm:$0xff]
    %v8096 = vld [vmem:[#allocation20 + $0x38] sm:$0xff]
    %v8097 = vld [vmem:[#allocation20 + $0x40] sm:$0xff]
    %v8098 = vld [vmem:[#allocation20 + $0x48] sm:$0xff]
    %v8099 = vld [vmem:[#allocation20 + $0x50] sm:$0xff]
    %v8100 = vld [vmem:[#allocation20 + $0x58] sm:$0xff]
    %v8101 = vld [vmem:[#allocation20 + $0x60] sm:$0xff]
    %v8102 = vld [vmem:[#allocation20 + $0x68] sm:$0xff]
    %v8103 = vld [vmem:[#allocation20 + $0x70] sm:$0xff]
    %v8104 = vld [vmem:[#allocation20 + $0x78] sm:$0xff]
    %v8105 = vld [vmem:[%s59] sm:$0x1]
    %v8107 = vlaneseq
    %v8108 = vshrl.u32 %v8107, 7
    %v8109 = vsub.s32 0, %v8108
    %v8110 = vrot.slane %v8105, %v8109
    %8112 = vmatprep.subr.mxu0 0.0
    %8113 = vmatpush1.msra.mxu0 %v8104
    %8114 = vmatprep.subr.mxu0 0.0
    %8115 = vmatpush1.msra.mxu0 %v8103
    %8116 = vmatprep.subr.mxu0 0.0
    %8117 = vmatpush1.msra.mxu0 %v8102
    %8118 = vmatprep.subr.mxu0 0.0
    %8119 = vmatpush1.msra.mxu0 %v8101
    %8120 = vmatprep.subr.mxu0 0.0
    %8121 = vmatpush1.msra.mxu0 %v8100
    %8122 = vmatprep.subr.mxu0 0.0
    %8123 = vmatpush1.msra.mxu0 %v8099
    %8124 = vmatprep.subr.mxu0 0.0
    %8125 = vmatpush1.msra.mxu0 %v8098
    %8126 = vmatprep.subr.mxu0 0.0
    %8127 = vmatpush1.msra.mxu0 %v8097
    %8128 = vmatprep.subr.mxu0 0.0
    %8129 = vmatpush1.msra.mxu0 %v8096
    %8130 = vmatprep.subr.mxu0 0.0
    %8131 = vmatpush1.msra.mxu0 %v8095
    %8132 = vmatprep.subr.mxu0 0.0
    %8133 = vmatpush1.msra.mxu0 %v8094
    %8134 = vmatprep.subr.mxu0 0.0
    %8135 = vmatpush1.msra.mxu0 %v8093
    %8136 = vmatprep.subr.mxu0 0.0
    %8137 = vmatpush1.msra.mxu0 %v8092
    %8138 = vmatprep.subr.mxu0 0.0
    %8139 = vmatpush1.msra.mxu0 %v8091
    %8140 = vmatprep.subr.mxu0 0.0
    %8141 = vmatpush1.msra.mxu0 %v8090
    %8142 = vmatprep.subr.mxu0 0.0
    %8143 = vmatpush1.msra.mxu0 %v8089
    %8144 = vmatprep.subr.mxu0 0.0
    %8145 = vmatpush2.msra.mxu0 0.0
    %8146 = vmatprep.subr.mxu0 0.0
    %8147 = vmatpush2.msra.mxu0 0.0
    %8148 = vmatprep.subr.mxu0 0.0
    %8149 = vmatpush2.msra.mxu0 0.0
    %8150 = vmatprep.subr.mxu0 0.0
    %8151 = vmatpush2.msra.mxu0 0.0
    %8152 = vmatprep.subr.mxu0 0.0
    %8153 = vmatpush2.msra.mxu0 0.0
    %8154 = vmatprep.subr.mxu0 0.0
    %8155 = vmatpush2.msra.mxu0 0.0
    %8156 = vmatprep.subr.mxu0 0.0
    %8157 = vmatpush2.msra.mxu0 0.0
    %8158 = vmatprep.subr.mxu0 0.0
    %8159 = vmatpush2.msra.mxu0 0.0
    %8160 = vmatprep.subr.mxu0 0.0
    %8161 = vmatpush2.msra.mxu0 0.0
    %8162 = vmatprep.subr.mxu0 0.0
    %8163 = vmatpush2.msra.mxu0 0.0
    %8164 = vmatprep.subr.mxu0 0.0
    %8165 = vmatpush2.msra.mxu0 0.0
    %8166 = vmatprep.subr.mxu0 0.0
    %8167 = vmatpush2.msra.mxu0 0.0
    %8168 = vmatprep.subr.mxu0 0.0
    %8169 = vmatpush2.msra.mxu0 0.0
    %8170 = vmatprep.subr.mxu0 0.0
    %8171 = vmatpush2.msra.mxu0 0.0
    %8172 = vmatprep.subr.mxu0 0.0
    %8173 = vmatpush2.msra.mxu0 0.0
    %8174 = vmatprep.subr.mxu0 0.0
    %8175 = vmatpush2.msra.mxu0 0.0
    %8176 = vmatprep.mubr.f32.mxu0 0.0
    %8177 = vmatmul.mubr.f32.gmra.mxu0 %v8017
    %v8178 = vpop.f32.mrf.mxu0
    %v8179 = vadd.f32 %v8110, %v8178
    %v8180 = vpop.f32.mrf.mxu0
    %8181 = vmatprep.mubr.f32.mxu0 0.0
    %8182 = vmatmul.mubr.f32.gmra.mxu0 %v8018
    %v8183 = vpop.f32.mrf.mxu0
    %v8184 = vadd.f32 %v8110, %v8183
    %v8185 = vpop.f32.mrf.mxu0
    %8186 = vmatprep.mubr.f32.mxu0 0.0
    %8187 = vmatmul.mubr.f32.gmra.mxu0 %v8019
    %v8188 = vpop.f32.mrf.mxu0
    %v8189 = vadd.f32 %v8110, %v8188
    %v8190 = vpop.f32.mrf.mxu0
    %8191 = vmatprep.mubr.f32.mxu0 0.0
    %8192 = vmatmul.mubr.f32.gmra.mxu0 %v8020
    %v8193 = vpop.f32.mrf.mxu0
    %v8194 = vadd.f32 %v8110, %v8193
    %v8195 = vpop.f32.mrf.mxu0
    %8196 = vmatprep.mubr.f32.mxu0 0.0
    %8197 = vmatmul.mubr.f32.gmra.mxu0 %v8021
    %v8198 = vpop.f32.mrf.mxu0
    %v8199 = vadd.f32 %v8110, %v8198
    %v8200 = vpop.f32.mrf.mxu0
    %8201 = vmatprep.mubr.f32.mxu0 0.0
    %8202 = vmatmul.mubr.f32.gmra.mxu0 %v8022
    %v8203 = vpop.f32.mrf.mxu0
    %v8204 = vadd.f32 %v8110, %v8203
    %v8205 = vpop.f32.mrf.mxu0
    %8206 = vmatprep.mubr.f32.mxu0 0.0
    %8207 = vmatmul.mubr.f32.gmra.mxu0 %v8023
    %v8208 = vpop.f32.mrf.mxu0
    %v8209 = vadd.f32 %v8110, %v8208
    %v8210 = vpop.f32.mrf.mxu0
    %8211 = vmatprep.mubr.f32.mxu0 0.0
    %8212 = vmatmul.mubr.f32.gmra.mxu0 %v8024
    %v8213 = vpop.f32.mrf.mxu0
    %v8214 = vadd.f32 %v8110, %v8213
    %v8215 = vpop.f32.mrf.mxu0
    %8216 = vmatprep.mubr.f32.mxu0 0.0
    %8217 = vmatmul.mubr.f32.gmra.mxu0 %v8025
    %v8218 = vpop.f32.mrf.mxu0
    %v8219 = vadd.f32 %v8110, %v8218
    %v8220 = vpop.f32.mrf.mxu0
    %8221 = vmatprep.mubr.f32.mxu0 0.0
    %8222 = vmatmul.mubr.f32.gmra.mxu0 %v8026
    %v8223 = vpop.f32.mrf.mxu0
    %v8224 = vadd.f32 %v8110, %v8223
    %v8225 = vpop.f32.mrf.mxu0
    %8226 = vmatprep.mubr.f32.mxu0 0.0
    %8227 = vmatmul.mubr.f32.gmra.mxu0 %v8027
    %v8228 = vpop.f32.mrf.mxu0
    %v8229 = vadd.f32 %v8110, %v8228
    %v8230 = vpop.f32.mrf.mxu0
    %8231 = vmatprep.mubr.f32.mxu0 0.0
    %8232 = vmatmul.mubr.f32.gmra.mxu0 %v8028
    %v8233 = vpop.f32.mrf.mxu0
    %v8234 = vadd.f32 %v8110, %v8233
    %v8235 = vpop.f32.mrf.mxu0
    %8236 = vmatprep.mubr.f32.mxu0 0.0
    %8237 = vmatmul.mubr.f32.gmra.mxu0 %v8029
    %v8238 = vpop.f32.mrf.mxu0
    %v8239 = vadd.f32 %v8110, %v8238
    %v8240 = vpop.f32.mrf.mxu0
    %8241 = vmatprep.mubr.f32.mxu0 0.0
    %8242 = vmatmul.mubr.f32.gmra.mxu0 %v8030
    %v8243 = vpop.f32.mrf.mxu0
    %v8244 = vadd.f32 %v8110, %v8243
    %v8245 = vpop.f32.mrf.mxu0
    %8246 = vmatprep.mubr.f32.mxu0 0.0
    %8247 = vmatmul.mubr.f32.gmra.mxu0 %v8031
    %v8248 = vpop.f32.mrf.mxu0
    %v8249 = vadd.f32 %v8110, %v8248
    %v8250 = vpop.f32.mrf.mxu0
    %8251 = vmatprep.mubr.f32.mxu0 0.0
    %8252 = vmatmul.mubr.f32.gmra.mxu0 %v8032
    %v8253 = vpop.f32.mrf.mxu0
    %v8254 = vadd.f32 %v8110, %v8253
    %v8255 = vpop.f32.mrf.mxu0
    %8256 = vmatprep.mubr.f32.mxu0 0.0
    %8257 = vmatmul.mubr.f32.gmra.mxu0 %v8033
    %v8258 = vpop.f32.mrf.mxu0
    %v8259 = vadd.f32 %v8110, %v8258
    %v8260 = vpop.f32.mrf.mxu0
    %8261 = vmatprep.mubr.f32.mxu0 0.0
    %8262 = vmatmul.mubr.f32.gmra.mxu0 %v8034
    %v8263 = vpop.f32.mrf.mxu0
    %v8264 = vadd.f32 %v8110, %v8263
    %v8265 = vpop.f32.mrf.mxu0
    %8266 = vmatprep.mubr.f32.mxu0 0.0
    %8267 = vmatmul.mubr.f32.gmra.mxu0 %v8035
    %v8268 = vpop.f32.mrf.mxu0
    %v8269 = vadd.f32 %v8110, %v8268
    %v8270 = vpop.f32.mrf.mxu0
    %8271 = vmatprep.mubr.f32.mxu0 0.0
    %8272 = vmatmul.mubr.f32.gmra.mxu0 %v8036
    %v8273 = vpop.f32.mrf.mxu0
    %v8274 = vadd.f32 %v8110, %v8273
    %v8275 = vpop.f32.mrf.mxu0
    %8276 = vmatprep.mubr.f32.mxu0 0.0
    %8277 = vmatmul.mubr.f32.gmra.mxu0 %v8037
    %v8278 = vpop.f32.mrf.mxu0
    %v8279 = vadd.f32 %v8110, %v8278
    %v8280 = vpop.f32.mrf.mxu0
    %8281 = vmatprep.mubr.f32.mxu0 0.0
    %8282 = vmatmul.mubr.f32.gmra.mxu0 %v8038
    %v8283 = vpop.f32.mrf.mxu0
    %v8284 = vadd.f32 %v8110, %v8283
    %v8285 = vpop.f32.mrf.mxu0
    %8286 = vmatprep.mubr.f32.mxu0 0.0
    %8287 = vmatmul.mubr.f32.gmra.mxu0 %v8039
    %v8288 = vpop.f32.mrf.mxu0
    %v8289 = vadd.f32 %v8110, %v8288
    %v8290 = vpop.f32.mrf.mxu0
    %8291 = vmatprep.mubr.f32.mxu0 0.0
    %8292 = vmatmul.mubr.f32.gmra.mxu0 %v8040
    %v8293 = vpop.f32.mrf.mxu0
    %v8294 = vadd.f32 %v8110, %v8293
    %v8295 = vpop.f32.mrf.mxu0
    %8296 = vmatprep.mubr.f32.mxu0 0.0
    %8297 = vmatmul.mubr.f32.gmra.mxu0 %v8041
    %v8298 = vpop.f32.mrf.mxu0
    %v8299 = vadd.f32 %v8110, %v8298
    %v8300 = vpop.f32.mrf.mxu0
    %8301 = vmatprep.mubr.f32.mxu0 0.0
    %8302 = vmatmul.mubr.f32.gmra.mxu0 %v8042
    %v8303 = vpop.f32.mrf.mxu0
    %v8304 = vadd.f32 %v8110, %v8303
    %v8305 = vpop.f32.mrf.mxu0
    %8306 = vmatprep.mubr.f32.mxu0 0.0
    %8307 = vmatmul.mubr.f32.gmra.mxu0 %v8043
    %v8308 = vpop.f32.mrf.mxu0
    %v8309 = vadd.f32 %v8110, %v8308
    %v8310 = vpop.f32.mrf.mxu0
    %8311 = vmatprep.mubr.f32.mxu0 0.0
    %8312 = vmatmul.mubr.f32.gmra.mxu0 %v8044
    %v8313 = vpop.f32.mrf.mxu0
    %v8314 = vadd.f32 %v8110, %v8313
    %v8315 = vpop.f32.mrf.mxu0
    %8316 = vmatprep.mubr.f32.mxu0 0.0
    %8317 = vmatmul.mubr.f32.gmra.mxu0 %v8045
    %v8318 = vpop.f32.mrf.mxu0
    %v8319 = vadd.f32 %v8110, %v8318
    %v8320 = vpop.f32.mrf.mxu0
    %8321 = vmatprep.mubr.f32.mxu0 0.0
    %8322 = vmatmul.mubr.f32.gmra.mxu0 %v8046
    %v8323 = vpop.f32.mrf.mxu0
    %v8324 = vadd.f32 %v8110, %v8323
    %v8325 = vpop.f32.mrf.mxu0
    %8326 = vmatprep.mubr.f32.mxu0 0.0
    %8327 = vmatmul.mubr.f32.gmra.mxu0 %v8047
    %v8328 = vpop.f32.mrf.mxu0
    %v8329 = vadd.f32 %v8110, %v8328
    %v8330 = vpop.f32.mrf.mxu0
    %8331 = vmatprep.mubr.f32.mxu0 0.0
    %8332 = vmatmul.mubr.f32.gmra.mxu0 %v8048
    %v8333 = vpop.f32.mrf.mxu0
    %v8334 = vadd.f32 %v8110, %v8333
    %v8335 = vpop.f32.mrf.mxu0
    %8336 = vmatprep.mubr.f32.mxu0 0.0
    %8337 = vmatmul.mubr.f32.gmra.mxu0 %v8049
    %v8338 = vpop.f32.mrf.mxu0
    %v8339 = vadd.f32 %v8110, %v8338
    %v8340 = vpop.f32.mrf.mxu0
    %8341 = vmatprep.mubr.f32.mxu0 0.0
    %8342 = vmatmul.mubr.f32.gmra.mxu0 %v8050
    %v8343 = vpop.f32.mrf.mxu0
    %v8344 = vadd.f32 %v8110, %v8343
    %v8345 = vpop.f32.mrf.mxu0
    %8346 = vmatprep.mubr.f32.mxu0 0.0
    %8347 = vmatmul.mubr.f32.gmra.mxu0 %v8051
    %v8348 = vpop.f32.mrf.mxu0
    %v8349 = vadd.f32 %v8110, %v8348
    %v8350 = vpop.f32.mrf.mxu0
    %8351 = vmatprep.mubr.f32.mxu0 0.0
    %8352 = vmatmul.mubr.f32.gmra.mxu0 %v8052
    %v8353 = vpop.f32.mrf.mxu0
    %v8354 = vadd.f32 %v8110, %v8353
    %v8355 = vpop.f32.mrf.mxu0
    %8356 = vmatprep.mubr.f32.mxu0 0.0
    %8357 = vmatmul.mubr.f32.gmra.mxu0 %v8053
    %v8358 = vpop.f32.mrf.mxu0
    %v8359 = vadd.f32 %v8110, %v8358
    %v8360 = vpop.f32.mrf.mxu0
    %8361 = vmatprep.mubr.f32.mxu0 0.0
    %8362 = vmatmul.mubr.f32.gmra.mxu0 %v8054
    %v8363 = vpop.f32.mrf.mxu0
    %v8364 = vadd.f32 %v8110, %v8363
    %v8365 = vpop.f32.mrf.mxu0
    %8366 = vmatprep.mubr.f32.mxu0 0.0
    %8367 = vmatmul.mubr.f32.gmra.mxu0 %v8055
    %v8368 = vpop.f32.mrf.mxu0
    %v8369 = vadd.f32 %v8110, %v8368
    %v8370 = vpop.f32.mrf.mxu0
    %8371 = vmatprep.mubr.f32.mxu0 0.0
    %8372 = vmatmul.mubr.f32.gmra.mxu0 %v8056
    %v8373 = vpop.f32.mrf.mxu0
    %v8374 = vadd.f32 %v8110, %v8373
    %v8375 = vpop.f32.mrf.mxu0
    %8376 = vmatprep.mubr.f32.mxu0 0.0
    %8377 = vmatmul.mubr.f32.gmra.mxu0 %v8057
    %v8378 = vpop.f32.mrf.mxu0
    %v8379 = vadd.f32 %v8110, %v8378
    %v8380 = vpop.f32.mrf.mxu0
    %8381 = vmatprep.mubr.f32.mxu0 0.0
    %8382 = vmatmul.mubr.f32.gmra.mxu0 %v8058
    %v8383 = vpop.f32.mrf.mxu0
    %v8384 = vadd.f32 %v8110, %v8383
    %v8385 = vpop.f32.mrf.mxu0
    %8386 = vmatprep.mubr.f32.mxu0 0.0
    %8387 = vmatmul.mubr.f32.gmra.mxu0 %v8059
    %v8388 = vpop.f32.mrf.mxu0
    %v8389 = vadd.f32 %v8110, %v8388
    %v8390 = vpop.f32.mrf.mxu0
    %8391 = vmatprep.mubr.f32.mxu0 0.0
    %8392 = vmatmul.mubr.f32.gmra.mxu0 %v8060
    %v8393 = vpop.f32.mrf.mxu0
    %v8394 = vadd.f32 %v8110, %v8393
    %v8395 = vpop.f32.mrf.mxu0
    %8396 = vmatprep.mubr.f32.mxu0 0.0
    %8397 = vmatmul.mubr.f32.gmra.mxu0 %v8061
    %v8398 = vpop.f32.mrf.mxu0
    %v8399 = vadd.f32 %v8110, %v8398
    %v8400 = vpop.f32.mrf.mxu0
    %8401 = vmatprep.mubr.f32.mxu0 0.0
    %8402 = vmatmul.mubr.f32.gmra.mxu0 %v8062
    %v8403 = vpop.f32.mrf.mxu0
    %v8404 = vadd.f32 %v8110, %v8403
    %v8405 = vpop.f32.mrf.mxu0
    %8406 = vmatprep.mubr.f32.mxu0 0.0
    %8407 = vmatmul.mubr.f32.gmra.mxu0 %v8063
    %v8408 = vpop.f32.mrf.mxu0
    %v8409 = vadd.f32 %v8110, %v8408
    %v8410 = vpop.f32.mrf.mxu0
    %8411 = vmatprep.mubr.f32.mxu0 0.0
    %8412 = vmatmul.mubr.f32.gmra.mxu0 %v8064
    %v8413 = vpop.f32.mrf.mxu0
    %v8414 = vadd.f32 %v8110, %v8413
    %v8415 = vpop.f32.mrf.mxu0
    %8416 = vmatprep.mubr.f32.mxu0 0.0
    %8417 = vmatmul.mubr.f32.gmra.mxu0 %v8065
    %v8418 = vpop.f32.mrf.mxu0
    %v8419 = vadd.f32 %v8110, %v8418
    %v8420 = vpop.f32.mrf.mxu0
    %8421 = vmatprep.mubr.f32.mxu0 0.0
    %8422 = vmatmul.mubr.f32.gmra.mxu0 %v8066
    %v8423 = vpop.f32.mrf.mxu0
    %v8424 = vadd.f32 %v8110, %v8423
    %v8425 = vpop.f32.mrf.mxu0
    %8426 = vmatprep.mubr.f32.mxu0 0.0
    %8427 = vmatmul.mubr.f32.gmra.mxu0 %v8067
    %v8428 = vpop.f32.mrf.mxu0
    %v8429 = vadd.f32 %v8110, %v8428
    %v8430 = vpop.f32.mrf.mxu0
    %8431 = vmatprep.mubr.f32.mxu0 0.0
    %8432 = vmatmul.mubr.f32.gmra.mxu0 %v8068
    %v8433 = vpop.f32.mrf.mxu0
    %v8434 = vadd.f32 %v8110, %v8433
    %v8435 = vpop.f32.mrf.mxu0
    %8436 = vmatprep.mubr.f32.mxu0 0.0
    %8437 = vmatmul.mubr.f32.gmra.mxu0 %v8069
    %v8438 = vpop.f32.mrf.mxu0
    %v8439 = vadd.f32 %v8110, %v8438
    %v8440 = vpop.f32.mrf.mxu0
    %8441 = vmatprep.mubr.f32.mxu0 0.0
    %8442 = vmatmul.mubr.f32.gmra.mxu0 %v8070
    %v8443 = vpop.f32.mrf.mxu0
    %v8444 = vadd.f32 %v8110, %v8443
    %v8445 = vpop.f32.mrf.mxu0
    %8446 = vmatprep.mubr.f32.mxu0 0.0
    %8447 = vmatmul.mubr.f32.gmra.mxu0 %v8071
    %v8448 = vpop.f32.mrf.mxu0
    %v8449 = vadd.f32 %v8110, %v8448
    %v8450 = vpop.f32.mrf.mxu0
    %8451 = vmatprep.mubr.f32.mxu0 0.0
    %8452 = vmatmul.mubr.f32.gmra.mxu0 %v8072
    %v8453 = vpop.f32.mrf.mxu0
    %v8454 = vadd.f32 %v8110, %v8453
    %v8455 = vpop.f32.mrf.mxu0
    %8456 = vmatprep.mubr.f32.mxu0 0.0
    %8457 = vmatmul.mubr.f32.gmra.mxu0 %v8073
    %v8458 = vpop.f32.mrf.mxu0
    %v8459 = vadd.f32 %v8110, %v8458
    %v8460 = vpop.f32.mrf.mxu0
    %8461 = vmatprep.mubr.f32.mxu0 0.0
    %8462 = vmatmul.mubr.f32.gmra.mxu0 %v8074
    %v8463 = vpop.f32.mrf.mxu0
    %v8464 = vadd.f32 %v8110, %v8463
    %v8465 = vpop.f32.mrf.mxu0
    %8466 = vmatprep.mubr.f32.mxu0 0.0
    %8467 = vmatmul.mubr.f32.gmra.mxu0 %v8075
    %v8468 = vpop.f32.mrf.mxu0
    %v8469 = vadd.f32 %v8110, %v8468
    %v8470 = vpop.f32.mrf.mxu0
    %8471 = vmatprep.mubr.f32.mxu0 0.0
    %8472 = vmatmul.mubr.f32.gmra.mxu0 %v8076
    %v8473 = vpop.f32.mrf.mxu0
    %v8474 = vadd.f32 %v8110, %v8473
    %v8475 = vpop.f32.mrf.mxu0
    %8476 = vmatprep.mubr.f32.mxu0 0.0
    %8477 = vmatmul.mubr.f32.gmra.mxu0 %v8077
    %v8478 = vpop.f32.mrf.mxu0
    %v8479 = vadd.f32 %v8110, %v8478
    %v8480 = vpop.f32.mrf.mxu0
    %8481 = vmatprep.mubr.f32.mxu0 0.0
    %8482 = vmatmul.mubr.f32.gmra.mxu0 %v8078
    %v8483 = vpop.f32.mrf.mxu0
    %v8484 = vadd.f32 %v8110, %v8483
    %v8485 = vpop.f32.mrf.mxu0
    %8486 = vmatprep.mubr.f32.mxu0 0.0
    %8487 = vmatmul.mubr.f32.gmra.mxu0 %v8079
    %v8488 = vpop.f32.mrf.mxu0
    %v8489 = vadd.f32 %v8110, %v8488
    %v8490 = vpop.f32.mrf.mxu0
    %8491 = vmatprep.mubr.f32.mxu0 0.0
    %8492 = vmatmul.mubr.f32.gmra.mxu0 %v8080
    %v8493 = vpop.f32.mrf.mxu0
    %v8494 = vadd.f32 %v8110, %v8493
    %v8495 = vpop.f32.mrf.mxu0
    %8496 = vmatprep.mubr.f32.mxu0 0.0
    %8497 = vmatmul.mubr.f32.gmra.mxu0 %v8081
    %v8498 = vpop.f32.mrf.mxu0
    %v8499 = vadd.f32 %v8110, %v8498
    %v8500 = vpop.f32.mrf.mxu0
    %8501 = vmatprep.mubr.f32.mxu0 0.0
    %8502 = vmatmul.mubr.f32.gmra.mxu0 %v8082
    %v8503 = vpop.f32.mrf.mxu0
    %v8504 = vadd.f32 %v8110, %v8503
    %v8505 = vpop.f32.mrf.mxu0
    %8506 = vmatprep.mubr.f32.mxu0 0.0
    %8507 = vmatmul.mubr.f32.gmra.mxu0 %v8083
    %v8508 = vpop.f32.mrf.mxu0
    %v8509 = vadd.f32 %v8110, %v8508
    %v8510 = vpop.f32.mrf.mxu0
    %8511 = vmatprep.mubr.f32.mxu0 0.0
    %8512 = vmatmul.mubr.f32.gmra.mxu0 %v8084
    %v8513 = vpop.f32.mrf.mxu0
    %v8514 = vadd.f32 %v8110, %v8513
    %v8515 = vpop.f32.mrf.mxu0
    %8516 = vmatprep.mubr.f32.mxu0 0.0
    %8517 = vmatmul.mubr.f32.gmra.mxu0 %v8085
    %v8518 = vpop.f32.mrf.mxu0
    %v8519 = vadd.f32 %v8110, %v8518
    %v8520 = vpop.f32.mrf.mxu0
    %8521 = vmatprep.mubr.f32.mxu0 0.0
    %8522 = vmatmul.mubr.f32.gmra.mxu0 %v8086
    %v8523 = vpop.f32.mrf.mxu0
    %v8524 = vadd.f32 %v8110, %v8523
    %v8525 = vpop.f32.mrf.mxu0
    %8526 = vmatprep.mubr.f32.mxu0 0.0
    %8527 = vmatmul.mubr.f32.gmra.mxu0 %v8087
    %v8528 = vpop.f32.mrf.mxu0
    %v8529 = vadd.f32 %v8110, %v8528
    %v8530 = vpop.f32.mrf.mxu0
    %8531 = vmatprep.mubr.f32.mxu0 0.0
    %8532 = vmatmul.mubr.f32.gmra.mxu0 %v8088
    %v8533 = vpop.f32.mrf.mxu0
    %v8534 = vadd.f32 %v8110, %v8533
    %v8535 = vpop.f32.mrf.mxu0
    %8536 = vdwg.mxu0
    %8537 = vst [vmem:[#allocation27] sm:$0xff] %v8179
    %8538 = vst [vmem:[#allocation27 + $0x8] sm:$0xff] %v8184
    %8539 = vst [vmem:[#allocation27 + $0x10] sm:$0xff] %v8189
    %8540 = vst [vmem:[#allocation27 + $0x18] sm:$0xff] %v8194
    %8541 = vst [vmem:[#allocation27 + $0x20] sm:$0xff] %v8199
    %8542 = vst [vmem:[#allocation27 + $0x28] sm:$0xff] %v8204
    %8543 = vst [vmem:[#allocation27 + $0x30] sm:$0xff] %v8209
    %8544 = vst [vmem:[#allocation27 + $0x38] sm:$0xff] %v8214
    %8545 = vst [vmem:[#allocation27 + $0x40] sm:$0xff] %v8219
    %8546 = vst [vmem:[#allocation27 + $0x48] sm:$0xff] %v8224
    %8547 = vst [vmem:[#allocation27 + $0x50] sm:$0xff] %v8229
    %8548 = vst [vmem:[#allocation27 + $0x58] sm:$0xff] %v8234
    %8549 = vst [vmem:[#allocation27 + $0x60] sm:$0xff] %v8239
    %8550 = vst [vmem:[#allocation27 + $0x68] sm:$0xff] %v8244
    %8551 = vst [vmem:[#allocation27 + $0x70] sm:$0xff] %v8249
    %8552 = vst [vmem:[#allocation27 + $0x78] sm:$0xff] %v8254
    %8553 = vst [vmem:[#allocation27 + $0x80] sm:$0xff] %v8259
    %8554 = vst [vmem:[#allocation27 + $0x88] sm:$0xff] %v8264
    %8555 = vst [vmem:[#allocation27 + $0x90] sm:$0xff] %v8269
    %8556 = vst [vmem:[#allocation27 + $0x98] sm:$0xff] %v8274
    %8557 = vst [vmem:[#allocation27 + $0xa0] sm:$0xff] %v8279
    %8558 = vst [vmem:[#allocation27 + $0xa8] sm:$0xff] %v8284
    %8559 = vst [vmem:[#allocation27 + $0xb0] sm:$0xff] %v8289
    %8560 = vst [vmem:[#allocation27 + $0xb8] sm:$0xff] %v8294
    %8561 = vst [vmem:[#allocation27 + $0xc0] sm:$0xff] %v8299
    %8562 = vst [vmem:[#allocation27 + $0xc8] sm:$0xff] %v8304
    %8563 = vst [vmem:[#allocation27 + $0xd0] sm:$0xff] %v8309
    %8564 = vst [vmem:[#allocation27 + $0xd8] sm:$0xff] %v8314
    %8565 = vst [vmem:[#allocation27 + $0xe0] sm:$0xff] %v8319
    %8566 = vst [vmem:[#allocation27 + $0xe8] sm:$0xff] %v8324
    %8567 = vst [vmem:[#allocation27 + $0xf0] sm:$0xff] %v8329
    %8568 = vst [vmem:[#allocation27 + $0xf8] sm:$0xff] %v8334
    %8569 = vst [vmem:[#allocation27 + $0x100] sm:$0xff] %v8339
    %8570 = vst [vmem:[#allocation27 + $0x108] sm:$0xff] %v8344
    %8571 = vst [vmem:[#allocation27 + $0x110] sm:$0xff] %v8349
    %8572 = vst [vmem:[#allocation27 + $0x118] sm:$0xff] %v8354
    %8573 = vst [vmem:[#allocation27 + $0x120] sm:$0xff] %v8359
    %8574 = vst [vmem:[#allocation27 + $0x128] sm:$0xff] %v8364
    %8575 = vst [vmem:[#allocation27 + $0x130] sm:$0xff] %v8369
    %8576 = vst [vmem:[#allocation27 + $0x138] sm:$0xff] %v8374
    %8577 = vst [vmem:[#allocation27 + $0x140] sm:$0xff] %v8379
    %8578 = vst [vmem:[#allocation27 + $0x148] sm:$0xff] %v8384
    %8579 = vst [vmem:[#allocation27 + $0x150] sm:$0xff] %v8389
    %8580 = vst [vmem:[#allocation27 + $0x158] sm:$0xff] %v8394
    %8581 = vst [vmem:[#allocation27 + $0x160] sm:$0xff] %v8399
    %8582 = vst [vmem:[#allocation27 + $0x168] sm:$0xff] %v8404
    %8583 = vst [vmem:[#allocation27 + $0x170] sm:$0xff] %v8409
    %8584 = vst [vmem:[#allocation27 + $0x178] sm:$0xff] %v8414
    %8585 = vst [vmem:[#allocation27 + $0x180] sm:$0xff] %v8419
    %8586 = vst [vmem:[#allocation27 + $0x188] sm:$0xff] %v8424
    %8587 = vst [vmem:[#allocation27 + $0x190] sm:$0xff] %v8429
    %8588 = vst [vmem:[#allocation27 + $0x198] sm:$0xff] %v8434
    %8589 = vst [vmem:[#allocation27 + $0x1a0] sm:$0xff] %v8439
    %8590 = vst [vmem:[#allocation27 + $0x1a8] sm:$0xff] %v8444
    %8591 = vst [vmem:[#allocation27 + $0x1b0] sm:$0xff] %v8449
    %8592 = vst [vmem:[#allocation27 + $0x1b8] sm:$0xff] %v8454
    %8593 = vst [vmem:[#allocation27 + $0x1c0] sm:$0xff] %v8459
    %8594 = vst [vmem:[#allocation27 + $0x1c8] sm:$0xff] %v8464
    %8595 = vst [vmem:[#allocation27 + $0x1d0] sm:$0xff] %v8469
    %8596 = vst [vmem:[#allocation27 + $0x1d8] sm:$0xff] %v8474
    %8597 = vst [vmem:[#allocation27 + $0x1e0] sm:$0xff] %v8479
    %8598 = vst [vmem:[#allocation27 + $0x1e8] sm:$0xff] %v8484
    %8599 = vst [vmem:[#allocation27 + $0x1f0] sm:$0xff] %v8489
    %8600 = vst [vmem:[#allocation27 + $0x1f8] sm:$0xff] %v8494
    %8601 = vst [vmem:[#allocation27 + $0x200] sm:$0xff] %v8499
    %8602 = vst [vmem:[#allocation27 + $0x208] sm:$0xff] %v8504
    %8603 = vst [vmem:[#allocation27 + $0x210] sm:$0xff] %v8509
    %8604 = vst [vmem:[#allocation27 + $0x218] sm:$0xff] %v8514
    %8605 = vst [vmem:[#allocation27 + $0x220] sm:$0xff] %v8519
    %8606 = vst [vmem:[#allocation27 + $0x228] sm:$0xff] %v8524
    %8607 = vst [vmem:[#allocation27 + $0x230] sm:$0xff] %v8529
    %8608 = vst [vmem:[#allocation27 + $0x238] sm:$0xff] %v8534
    %v8609 = vld [vmem:[#allocation27] sm:$0xff]
    %v8610 = vld [vmem:[#allocation27 + $0x8] sm:$0xff]
    %v8611 = vld [vmem:[#allocation27 + $0x10] sm:$0xff]
    %v8612 = vld [vmem:[#allocation27 + $0x18] sm:$0xff]
    %v8613 = vld [vmem:[#allocation27 + $0x20] sm:$0xff]
    %v8614 = vld [vmem:[#allocation27 + $0x28] sm:$0xff]
    %v8615 = vld [vmem:[#allocation27 + $0x30] sm:$0xff]
    %v8616 = vld [vmem:[#allocation27 + $0x38] sm:$0xff]
    %v8617 = vld [vmem:[#allocation27 + $0x40] sm:$0xff]
    %v8618 = vld [vmem:[#allocation27 + $0x48] sm:$0xff]
    %v8619 = vld [vmem:[#allocation27 + $0x50] sm:$0xff]
    %v8620 = vld [vmem:[#allocation27 + $0x58] sm:$0xff]
    %v8621 = vadd.f32 %v4169, %v8609
    %v8622 = vadd.f32 %v4175, %v8610
    %v8623 = vadd.f32 %v4181, %v8611
    %v8624 = vadd.f32 %v4187, %v8612
    %v8625 = vadd.f32 %v4193, %v8613
    %v8626 = vadd.f32 %v4199, %v8614
    %v8627 = vadd.f32 %v4205, %v8615
    %v8628 = vadd.f32 %v4211, %v8616
    %v8629 = vadd.f32 %v4217, %v8617
    %v8630 = vadd.f32 %v4223, %v8618
    %v8631 = vadd.f32 %v4229, %v8619
    %v8632 = vadd.f32 %v4235, %v8620
    %8633 = vst [vmem:[#allocation28] sm:$0xff] %v8621
    %8634 = vst [vmem:[#allocation28 + $0x8] sm:$0xff] %v8622
    %8635 = vst [vmem:[#allocation28 + $0x10] sm:$0xff] %v8623
    %8636 = vst [vmem:[#allocation28 + $0x18] sm:$0xff] %v8624
    %8637 = vst [vmem:[#allocation28 + $0x20] sm:$0xff] %v8625
    %8638 = vst [vmem:[#allocation28 + $0x28] sm:$0xff] %v8626
    %8639 = vst [vmem:[#allocation28 + $0x30] sm:$0xff] %v8627
    %8640 = vst [vmem:[#allocation28 + $0x38] sm:$0xff] %v8628
    %8641 = vst [vmem:[#allocation28 + $0x40] sm:$0xff] %v8629
    %8642 = vst [vmem:[#allocation28 + $0x48] sm:$0xff] %v8630
    %8643 = vst [vmem:[#allocation28 + $0x50] sm:$0xff] %v8631
    %8644 = vst [vmem:[#allocation28 + $0x58] sm:$0xff] %v8632
    %v8645 = vld [vmem:[#allocation27 + $0x60] sm:$0xff]
    %v8646 = vld [vmem:[#allocation27 + $0x68] sm:$0xff]
    %v8647 = vld [vmem:[#allocation27 + $0x70] sm:$0xff]
    %v8648 = vld [vmem:[#allocation27 + $0x78] sm:$0xff]
    %v8649 = vld [vmem:[#allocation27 + $0x80] sm:$0xff]
    %v8650 = vld [vmem:[#allocation27 + $0x88] sm:$0xff]
    %v8651 = vld [vmem:[#allocation27 + $0x90] sm:$0xff]
    %v8652 = vld [vmem:[#allocation27 + $0x98] sm:$0xff]
    %v8653 = vld [vmem:[#allocation27 + $0xa0] sm:$0xff]
    %v8654 = vld [vmem:[#allocation27 + $0xa8] sm:$0xff]
    %v8655 = vld [vmem:[#allocation27 + $0xb0] sm:$0xff]
    %v8656 = vld [vmem:[#allocation27 + $0xb8] sm:$0xff]
    %v8657 = vadd.f32 %v8621, %v8645
    %v8658 = vadd.f32 %v8622, %v8646
    %v8659 = vadd.f32 %v8623, %v8647
    %v8660 = vadd.f32 %v8624, %v8648
    %v8661 = vadd.f32 %v8625, %v8649
    %v8662 = vadd.f32 %v8626, %v8650
    %v8663 = vadd.f32 %v8627, %v8651
    %v8664 = vadd.f32 %v8628, %v8652
    %v8665 = vadd.f32 %v8629, %v8653
    %v8666 = vadd.f32 %v8630, %v8654
    %v8667 = vadd.f32 %v8631, %v8655
    %v8668 = vadd.f32 %v8632, %v8656
    %8669 = vst [vmem:[#allocation28 + $0x60] sm:$0xff] %v8657
    %8670 = vst [vmem:[#allocation28 + $0x68] sm:$0xff] %v8658
    %8671 = vst [vmem:[#allocation28 + $0x70] sm:$0xff] %v8659
    %8672 = vst [vmem:[#allocation28 + $0x78] sm:$0xff] %v8660
    %8673 = vst [vmem:[#allocation28 + $0x80] sm:$0xff] %v8661
    %8674 = vst [vmem:[#allocation28 + $0x88] sm:$0xff] %v8662
    %8675 = vst [vmem:[#allocation28 + $0x90] sm:$0xff] %v8663
    %8676 = vst [vmem:[#allocation28 + $0x98] sm:$0xff] %v8664
    %8677 = vst [vmem:[#allocation28 + $0xa0] sm:$0xff] %v8665
    %8678 = vst [vmem:[#allocation28 + $0xa8] sm:$0xff] %v8666
    %8679 = vst [vmem:[#allocation28 + $0xb0] sm:$0xff] %v8667
    %8680 = vst [vmem:[#allocation28 + $0xb8] sm:$0xff] %v8668
    %v8681 = vld [vmem:[#allocation27 + $0xc0] sm:$0xff]
    %v8682 = vld [vmem:[#allocation27 + $0xc8] sm:$0xff]
    %v8683 = vld [vmem:[#allocation27 + $0xd0] sm:$0xff]
    %v8684 = vld [vmem:[#allocation27 + $0xd8] sm:$0xff]
    %v8685 = vld [vmem:[#allocation27 + $0xe0] sm:$0xff]
    %v8686 = vld [vmem:[#allocation27 + $0xe8] sm:$0xff]
    %v8687 = vld [vmem:[#allocation27 + $0xf0] sm:$0xff]
    %v8688 = vld [vmem:[#allocation27 + $0xf8] sm:$0xff]
    %v8689 = vld [vmem:[#allocation27 + $0x100] sm:$0xff]
    %v8690 = vld [vmem:[#allocation27 + $0x108] sm:$0xff]
    %v8691 = vld [vmem:[#allocation27 + $0x110] sm:$0xff]
    %v8692 = vld [vmem:[#allocation27 + $0x118] sm:$0xff]
    %v8693 = vadd.f32 %v8657, %v8681
    %v8694 = vadd.f32 %v8658, %v8682
    %v8695 = vadd.f32 %v8659, %v8683
    %v8696 = vadd.f32 %v8660, %v8684
    %v8697 = vadd.f32 %v8661, %v8685
    %v8698 = vadd.f32 %v8662, %v8686
    %v8699 = vadd.f32 %v8663, %v8687
    %v8700 = vadd.f32 %v8664, %v8688
    %v8701 = vadd.f32 %v8665, %v8689
    %v8702 = vadd.f32 %v8666, %v8690
    %v8703 = vadd.f32 %v8667, %v8691
    %v8704 = vadd.f32 %v8668, %v8692
    %8705 = vst [vmem:[#allocation28 + $0xc0] sm:$0xff] %v8693
    %8706 = vst [vmem:[#allocation28 + $0xc8] sm:$0xff] %v8694
    %8707 = vst [vmem:[#allocation28 + $0xd0] sm:$0xff] %v8695
    %8708 = vst [vmem:[#allocation28 + $0xd8] sm:$0xff] %v8696
    %8709 = vst [vmem:[#allocation28 + $0xe0] sm:$0xff] %v8697
    %8710 = vst [vmem:[#allocation28 + $0xe8] sm:$0xff] %v8698
    %8711 = vst [vmem:[#allocation28 + $0xf0] sm:$0xff] %v8699
    %8712 = vst [vmem:[#allocation28 + $0xf8] sm:$0xff] %v8700
    %8713 = vst [vmem:[#allocation28 + $0x100] sm:$0xff] %v8701
    %8714 = vst [vmem:[#allocation28 + $0x108] sm:$0xff] %v8702
    %8715 = vst [vmem:[#allocation28 + $0x110] sm:$0xff] %v8703
    %8716 = vst [vmem:[#allocation28 + $0x118] sm:$0xff] %v8704
    %v8717 = vld [vmem:[#allocation27 + $0x120] sm:$0xff]
    %v8718 = vld [vmem:[#allocation27 + $0x128] sm:$0xff]
    %v8719 = vld [vmem:[#allocation27 + $0x130] sm:$0xff]
    %v8720 = vld [vmem:[#allocation27 + $0x138] sm:$0xff]
    %v8721 = vld [vmem:[#allocation27 + $0x140] sm:$0xff]
    %v8722 = vld [vmem:[#allocation27 + $0x148] sm:$0xff]
    %v8723 = vld [vmem:[#allocation27 + $0x150] sm:$0xff]
    %v8724 = vld [vmem:[#allocation27 + $0x158] sm:$0xff]
    %v8725 = vld [vmem:[#allocation27 + $0x160] sm:$0xff]
    %v8726 = vld [vmem:[#allocation27 + $0x168] sm:$0xff]
    %v8727 = vld [vmem:[#allocation27 + $0x170] sm:$0xff]
    %v8728 = vld [vmem:[#allocation27 + $0x178] sm:$0xff]
    %v8729 = vadd.f32 %v8693, %v8717
    %v8730 = vadd.f32 %v8694, %v8718
    %v8731 = vadd.f32 %v8695, %v8719
    %v8732 = vadd.f32 %v8696, %v8720
    %v8733 = vadd.f32 %v8697, %v8721
    %v8734 = vadd.f32 %v8698, %v8722
    %v8735 = vadd.f32 %v8699, %v8723
    %v8736 = vadd.f32 %v8700, %v8724
    %v8737 = vadd.f32 %v8701, %v8725
    %v8738 = vadd.f32 %v8702, %v8726
    %v8739 = vadd.f32 %v8703, %v8727
    %v8740 = vadd.f32 %v8704, %v8728
    %8741 = vst [vmem:[#allocation28 + $0x120] sm:$0xff] %v8729
    %8742 = vst [vmem:[#allocation28 + $0x128] sm:$0xff] %v8730
    %8743 = vst [vmem:[#allocation28 + $0x130] sm:$0xff] %v8731
    %8744 = vst [vmem:[#allocation28 + $0x138] sm:$0xff] %v8732
    %8745 = vst [vmem:[#allocation28 + $0x140] sm:$0xff] %v8733
    %8746 = vst [vmem:[#allocation28 + $0x148] sm:$0xff] %v8734
    %8747 = vst [vmem:[#allocation28 + $0x150] sm:$0xff] %v8735
    %8748 = vst [vmem:[#allocation28 + $0x158] sm:$0xff] %v8736
    %8749 = vst [vmem:[#allocation28 + $0x160] sm:$0xff] %v8737
    %8750 = vst [vmem:[#allocation28 + $0x168] sm:$0xff] %v8738
    %8751 = vst [vmem:[#allocation28 + $0x170] sm:$0xff] %v8739
    %8752 = vst [vmem:[#allocation28 + $0x178] sm:$0xff] %v8740
    %v8753 = vld [vmem:[#allocation27 + $0x180] sm:$0xff]
    %v8754 = vld [vmem:[#allocation27 + $0x188] sm:$0xff]
    %v8755 = vld [vmem:[#allocation27 + $0x190] sm:$0xff]
    %v8756 = vld [vmem:[#allocation27 + $0x198] sm:$0xff]
    %v8757 = vld [vmem:[#allocation27 + $0x1a0] sm:$0xff]
    %v8758 = vld [vmem:[#allocation27 + $0x1a8] sm:$0xff]
    %v8759 = vld [vmem:[#allocation27 + $0x1b0] sm:$0xff]
    %v8760 = vld [vmem:[#allocation27 + $0x1b8] sm:$0xff]
    %v8761 = vld [vmem:[#allocation27 + $0x1c0] sm:$0xff]
    %v8762 = vld [vmem:[#allocation27 + $0x1c8] sm:$0xff]
    %v8763 = vld [vmem:[#allocation27 + $0x1d0] sm:$0xff]
    %v8764 = vld [vmem:[#allocation27 + $0x1d8] sm:$0xff]
    %v8765 = vadd.f32 %v8729, %v8753
    %v8766 = vadd.f32 %v8730, %v8754
    %v8767 = vadd.f32 %v8731, %v8755
    %v8768 = vadd.f32 %v8732, %v8756
    %v8769 = vadd.f32 %v8733, %v8757
    %v8770 = vadd.f32 %v8734, %v8758
    %v8771 = vadd.f32 %v8735, %v8759
    %v8772 = vadd.f32 %v8736, %v8760
    %v8773 = vadd.f32 %v8737, %v8761
    %v8774 = vadd.f32 %v8738, %v8762
    %v8775 = vadd.f32 %v8739, %v8763
    %v8776 = vadd.f32 %v8740, %v8764
    %8777 = vst [vmem:[#allocation28 + $0x180] sm:$0xff] %v8765
    %8778 = vst [vmem:[#allocation28 + $0x188] sm:$0xff] %v8766
    %8779 = vst [vmem:[#allocation28 + $0x190] sm:$0xff] %v8767
    %8780 = vst [vmem:[#allocation28 + $0x198] sm:$0xff] %v8768
    %8781 = vst [vmem:[#allocation28 + $0x1a0] sm:$0xff] %v8769
    %8782 = vst [vmem:[#allocation28 + $0x1a8] sm:$0xff] %v8770
    %8783 = vst [vmem:[#allocation28 + $0x1b0] sm:$0xff] %v8771
    %8784 = vst [vmem:[#allocation28 + $0x1b8] sm:$0xff] %v8772
    %8785 = vst [vmem:[#allocation28 + $0x1c0] sm:$0xff] %v8773
    %8786 = vst [vmem:[#allocation28 + $0x1c8] sm:$0xff] %v8774
    %8787 = vst [vmem:[#allocation28 + $0x1d0] sm:$0xff] %v8775
    %8788 = vst [vmem:[#allocation28 + $0x1d8] sm:$0xff] %v8776
    %v8789 = vld [vmem:[#allocation27 + $0x1e0] sm:$0xff]
    %v8790 = vld [vmem:[#allocation27 + $0x1e8] sm:$0xff]
    %v8791 = vld [vmem:[#allocation27 + $0x1f0] sm:$0xff]
    %v8792 = vld [vmem:[#allocation27 + $0x1f8] sm:$0xff]
    %v8793 = vld [vmem:[#allocation27 + $0x200] sm:$0xff]
    %v8794 = vld [vmem:[#allocation27 + $0x208] sm:$0xff]
    %v8795 = vld [vmem:[#allocation27 + $0x210] sm:$0xff]
    %v8796 = vld [vmem:[#allocation27 + $0x218] sm:$0xff]
    %v8797 = vld [vmem:[#allocation27 + $0x220] sm:$0xff]
    %v8798 = vld [vmem:[#allocation27 + $0x228] sm:$0xff]
    %v8799 = vld [vmem:[#allocation27 + $0x230] sm:$0xff]
    %v8800 = vld [vmem:[#allocation27 + $0x238] sm:$0xff]
    %v8801 = vadd.f32 %v8765, %v8789
    %v8802 = vadd.f32 %v8766, %v8790
    %v8803 = vadd.f32 %v8767, %v8791
    %v8804 = vadd.f32 %v8768, %v8792
    %v8805 = vadd.f32 %v8769, %v8793
    %v8806 = vadd.f32 %v8770, %v8794
    %v8807 = vadd.f32 %v8771, %v8795
    %v8808 = vadd.f32 %v8772, %v8796
    %v8809 = vadd.f32 %v8773, %v8797
    %v8810 = vadd.f32 %v8774, %v8798
    %v8811 = vadd.f32 %v8775, %v8799
    %v8812 = vadd.f32 %v8776, %v8800
    %8813 = vst [vmem:[#allocation28 + $0x1e0] sm:$0xff] %v8801
    %8814 = vst [vmem:[#allocation28 + $0x1e8] sm:$0xff] %v8802
    %8815 = vst [vmem:[#allocation28 + $0x1f0] sm:$0xff] %v8803
    %8816 = vst [vmem:[#allocation28 + $0x1f8] sm:$0xff] %v8804
    %8817 = vst [vmem:[#allocation28 + $0x200] sm:$0xff] %v8805
    %8818 = vst [vmem:[#allocation28 + $0x208] sm:$0xff] %v8806
    %8819 = vst [vmem:[#allocation28 + $0x210] sm:$0xff] %v8807
    %8820 = vst [vmem:[#allocation28 + $0x218] sm:$0xff] %v8808
    %8821 = vst [vmem:[#allocation28 + $0x220] sm:$0xff] %v8809
    %8822 = vst [vmem:[#allocation28 + $0x228] sm:$0xff] %v8810
    %8823 = vst [vmem:[#allocation28 + $0x230] sm:$0xff] %v8811
    %8824 = vst [vmem:[#allocation28 + $0x238] sm:$0xff] %v8812
    // Predicated region
    $region166: #{tpu_custom_call.1} parent=1 // pred_check
      _
    $region167: #{tpu_custom_call.1} parent=1 // pred_check_branch
      %8826 = sbr.rel (0) target = $region169
    $region168: #{tpu_custom_call.1} parent=1 // pred_region
      %s8828 = ssub.s32 128, 128
      %8829 = vsyncadd [#allocation5], %s8828
      %s8831 = sshll.u32 [#allocation21], 4
      %s8832 = int_to_ptr.vmem [resolvable:$true] %s8831
      %8834 = dma.vmem_to_hbm [thread:$0]  %s8832, 128, %s61, [#allocation5]
    $region169: #{tpu_custom_call.1} parent=1 // pred_fallthru
      _
    // Predicated region
    $region170: #{tpu_custom_call.1} parent=1 // pred_check
      _
    $region171: #{tpu_custom_call.1} parent=1 // pred_check_branch
      %8836 = sbr.rel (0) target = $region173
    $region172: #{tpu_custom_call.1} parent=1 // pred_region
      %s8838 = ssub.s32 128, 128
      %8839 = vsyncadd [#allocation23], %s8838
      %s8841 = sshll.u32 [#allocation22], 4
      %s8842 = int_to_ptr.vmem [resolvable:$true] %s8841
      %8844 = dma.vmem_to_hbm [thread:$0]  %s8842, 128, %s63, [#allocation23]
    $region173: #{tpu_custom_call.1} parent=1 // pred_fallthru
      _
    // Predicated region
    $region174: #{tpu_custom_call.1} parent=1 // pred_check
      _
    $region175: #{tpu_custom_call.1} parent=1 // pred_check_branch
      %8846 = sbr.rel (0) target = $region177
    $region176: #{tpu_custom_call.1} parent=1 // pred_region
      %s8848 = ssub.s32 128, 128
      %8849 = vsyncadd [#allocation23], %s8848
      %s8851 = sshll.u32 [#allocation24], 4
      %s8852 = int_to_ptr.vmem [resolvable:$true] %s8851
      %8854 = dma.vmem_to_hbm [thread:$0]  %s8852, 128, %s65, [#allocation23]
    $region177: #{tpu_custom_call.1} parent=1 // pred_fallthru
      _
    // Predicated region
    $region178: #{tpu_custom_call.1} parent=1 // pred_check
      _
    $region179: #{tpu_custom_call.1} parent=1 // pred_check_branch
      %8856 = sbr.rel (0) target = $region181
    $region180: #{tpu_custom_call.1} parent=1 // pred_region
      %s8858 = ssub.s32 1536, 1536
      %8859 = vsyncadd [#allocation26], %s8858
      %s8860 = sshll.u32 [#allocation25], 4
      %s8861 = int_to_ptr.vmem [resolvable:$true] %s8860
      %8866 = dma.vmem_to_hbm [thread:$0]  %s8861, 1536, %s67, [#allocation26], 128, 128, 8
    $region181: #{tpu_custom_call.1} parent=1 // pred_fallthru
      _
    // Predicated region
    $region182: #{tpu_custom_call.1} parent=1 // pred_check
      _
    $region183: #{tpu_custom_call.1} parent=1 // pred_check_branch
      %8868 = sbr.rel (0) target = $region185
    $region184: #{tpu_custom_call.1} parent=1 // pred_region
      %s8870 = ssub.s32 9216, 9216
      %8871 = vsyncadd [#allocation26], %s8870
      %s8872 = sshll.u32 [#allocation27], 4
      %s8873 = int_to_ptr.vmem [resolvable:$true] %s8872
      %8878 = dma.vmem_to_hbm [thread:$0]  %s8873, 9216, %s69, [#allocation26], 128, 128, 8
    $region185: #{tpu_custom_call.1} parent=1 // pred_fallthru
      _
    // Predicated region
    $region186: #{tpu_custom_call.1} parent=1 // pred_check
      _
    $region187: #{tpu_custom_call.1} parent=1 // pred_check_branch
      %8880 = sbr.rel (0) target = $region189
    $region188: #{tpu_custom_call.1} parent=1 // pred_region
      %s8882 = ssub.s32 9216, 9216
      %8883 = vsyncadd [#allocation29], %s8882
      %s8884 = sshll.u32 [#allocation28], 4
      %s8885 = int_to_ptr.vmem [resolvable:$true] %s8884
      %8890 = dma.vmem_to_hbm [thread:$0]  %s8885, 9216, %s71, [#allocation29], 128, 128, 8
    $region189: #{tpu_custom_call.1} parent=1 // pred_fallthru
      _
    // Predicated region
    $region190: #{tpu_custom_call.1} parent=1 // pred_check
      _
    $region191: #{tpu_custom_call.1} parent=1 // pred_check_branch
      %8892 = sbr.rel (0) target = $region193
    $region192: #{tpu_custom_call.1} parent=1 // pred_region
      %8893 = dma.done [#allocation5], 128
    $region193: #{tpu_custom_call.1} parent=1 // pred_fallthru
      _
    // Predicated region
    $region194: #{tpu_custom_call.1} parent=1 // pred_check
      _
    $region195: #{tpu_custom_call.1} parent=1 // pred_check_branch
      %8895 = sbr.rel (0) target = $region197
    $region196: #{tpu_custom_call.1} parent=1 // pred_region
      %8896 = dma.done [#allocation23], 128
    $region197: #{tpu_custom_call.1} parent=1 // pred_fallthru
      _
    // Predicated region
    $region198: #{tpu_custom_call.1} parent=1 // pred_check
      _
    $region199: #{tpu_custom_call.1} parent=1 // pred_check_branch
      %8898 = sbr.rel (0) target = $region201
    $region200: #{tpu_custom_call.1} parent=1 // pred_region
      %8899 = dma.done [#allocation23], 128
    $region201: #{tpu_custom_call.1} parent=1 // pred_fallthru
      _
    // Predicated region
    $region202: #{tpu_custom_call.1} parent=1 // pred_check
      _
    $region203: #{tpu_custom_call.1} parent=1 // pred_check_branch
      %8901 = sbr.rel (0) target = $region205
    $region204: #{tpu_custom_call.1} parent=1 // pred_region
      %8902 = dma.done [#allocation26], 1536
    $region205: #{tpu_custom_call.1} parent=1 // pred_fallthru
      _
    // Predicated region
    $region206: #{tpu_custom_call.1} parent=1 // pred_check
      _
    $region207: #{tpu_custom_call.1} parent=1 // pred_check_branch
      %8904 = sbr.rel (0) target = $region209
    $region208: #{tpu_custom_call.1} parent=1 // pred_region
      %8905 = dma.done [#allocation26], 9216
    $region209: #{tpu_custom_call.1} parent=1 // pred_fallthru
      _
    // Predicated region
    $region210: #{tpu_custom_call.1} parent=1 // pred_check
      _
    $region211: #{tpu_custom_call.1} parent=1 // pred_check_branch
      %8907 = sbr.rel (0) target = $region213
    $region212: #{tpu_custom_call.1} parent=1 // pred_region
      %8908 = dma.done [#allocation29], 9216
    $region213: #{tpu_custom_call.1} parent=1 // pred_fallthru
      _
    %8909 = vsyncpa [#allocation4], 1
    %8910 = vsyncpa [#allocation7], 1
    %8911 = vsyncpa [#allocation10], 1
    %8912 = vsyncpa [#allocation13], 1
    %8913 = vsyncpa [#allocation16], 1
    %8914 = vsyncpa [#allocation19], 1
    %8915 = vsyncpa [#allocation5], 1
    %8916 = vsyncpa [#allocation23], 1
    %8917 = vsyncpa [#allocation26], 1
    %8918 = vsyncpa [#allocation29], 1

</llo_original>
